<compile_context>
chip_gen: v5e
topology: v5e:2x2
jax: 0.10.0
libtpu: 0.0.40
codegen_flags: <defaults>
</compile_context>

<pallas_src>
import jax
import jax.numpy as jnp
from jax.experimental import pallas as pl
from jax.experimental.pallas import tpu as pltpu

N_EMBD = 384          # n_embd in the module
NUM_HEADS = 6
HEAD_SIZE = 64        # num_heads * head_size == n_embd
BLOCK_SIZE = 256      # causal-mask capacity (T <= BLOCK_SIZE)


def _mha_kernel(x_ref, wqkv_ref, wp_ref, bp_ref, out_ref):
    # x_ref   : (1, T, C)        bf16 block for one batch element
    # wqkv_ref: (C, 3*H*hs)      bf16, [Q | K | V], scale folded into Q
    # wp_ref  : (H, hs, C)       bf16, per-head slices of the output projection
    # bp_ref  : (1, C)           f32 projection bias
    # out_ref : (1, T, C)        f32 output block
    x = x_ref[0]                                   # (T, C) bf16
    T = x.shape[0]
    H = wp_ref.shape[0]
    hs = wp_ref.shape[1]
    C = wp_ref.shape[2]
    Hhs = H * hs

    # Fused QKV projection: one lane-dense (T, C) @ (C, 3*H*hs) MXU matmul.
    qkv = jnp.dot(x, wqkv_ref[...],
                  preferred_element_type=jnp.float32).astype(jnp.bfloat16)

    # Additive causal mask (large finite negative instead of -inf).
    row = jax.lax.broadcasted_iota(jnp.int32, (T, T), 0)
    col = jax.lax.broadcasted_iota(jnp.int32, (T, T), 1)
    mask_bias = jnp.where(col <= row, 0.0, -1e30).astype(jnp.float32)

    acc = jnp.zeros((T, C), jnp.float32)
    for h in range(H):                             # static unroll over heads
        q = qkv[:, h * hs:(h + 1) * hs]                            # (T, hs) bf16 (scale folded in)
        k = qkv[:, Hhs + h * hs:Hhs + (h + 1) * hs]                # (T, hs) bf16
        v = qkv[:, 2 * Hhs + h * hs:2 * Hhs + (h + 1) * hs]        # (T, hs) bf16

        # scores: q @ k^T via dot_general over last dims (no XLU transpose)
        s = jax.lax.dot_general(q, k, (((1,), (1,)), ((), ())),
                                preferred_element_type=jnp.float32)  # (T, T) f32
        s = s + mask_bias

        # numerically-stable softmax in f32
        s = s - jnp.max(s, axis=-1, keepdims=True)
        p = jnp.exp(s)
        p = p * pl.reciprocal(jnp.sum(p, axis=-1, keepdims=True), approx=True)

        o = jnp.dot(p.astype(jnp.bfloat16), v,
                    preferred_element_type=jnp.float32)              # (T, hs) f32

        # per-head partial output projection, accumulated in f32 (no concat)
        acc = acc + jnp.dot(o.astype(jnp.bfloat16), wp_ref[h],
                            preferred_element_type=jnp.float32)      # (T, C) f32

    out_ref[0] = (acc + bp_ref[...]).astype(out_ref.dtype)


def multi_head_attention(x, wq, wk, wv, w_proj, b_proj):
    """x: (B, T, C) f32; wq/wk/wv: (H, C, hs); w_proj: (H*hs, C); b_proj: (C,)."""
    B, T, C = x.shape
    H, _, hs = wq.shape
    scale = jnp.float32(C) ** jnp.float32(-0.5)   # C**-0.5, C = n_embd (as in PyTorch ref)

    # Fold the score scale into Wq and fuse per-head Q/K/V weights into one
    # (C, 3*H*hs) matrix laid out as [Q | K | V].
    def _cat_heads(w):                            # (H, C, hs) -> (C, H*hs)
        return jnp.transpose(w, (1, 0, 2)).reshape(C, H * hs)

    wqkv = jnp.concatenate(
        [_cat_heads(wq * scale), _cat_heads(wk), _cat_heads(wv)], axis=-1
    ).astype(jnp.bfloat16)                        # (C, 3*H*hs)
    wp = w_proj.reshape(H, hs, C).astype(jnp.bfloat16)   # per-head projection slices
    bp = b_proj.reshape(1, C).astype(jnp.float32)
    x_bf = x.astype(jnp.bfloat16)

    return pl.pallas_call(
        _mha_kernel,
        out_shape=jax.ShapeDtypeStruct((B, T, C), x.dtype),
        grid_spec=pltpu.PrefetchScalarGridSpec(
            num_scalar_prefetch=0,
            grid=(B,),
            in_specs=[
                pl.BlockSpec((1, T, C), lambda b: (b, 0, 0)),          # x (one batch elem)
                pl.BlockSpec((C, 3 * H * hs), lambda b: (0, 0)),       # fused Wqkv
                pl.BlockSpec((H, hs, C), lambda b: (0, 0, 0)),         # W_proj (H, hs, C)
                pl.BlockSpec((1, C), lambda b: (0, 0)),                # b_proj
            ],
            out_specs=pl.BlockSpec((1, T, C), lambda b: (b, 0, 0)),
        ),
        compiler_params=pltpu.CompilerParams(
            dimension_semantics=("parallel",),
        ),
    )(x_bf, wqkv, wp, bp)


def _reference(x, wq, wk, wv, w_proj, b_proj):
    """Plain-JAX f32 reference matching the PyTorch forward (eval mode)."""
    B, T, C = x.shape
    scale = C ** (-0.5)
    mask = jnp.tril(jnp.ones((T, T), dtype=bool))
    outs = []
    for h in range(wq.shape[0]):
        q = x @ wq[h]
        k = x @ wk[h]
        v = x @ wv[h]
        wei = (q @ jnp.swapaxes(k, -1, -2)) * scale
        wei = jnp.where(mask, wei, -jnp.inf)
        wei = jax.nn.softmax(wei, axis=-1)
        outs.append(wei @ v)
    cat = jnp.concatenate(outs, axis=-1)
    return cat @ w_proj + b_proj


if __name__ == "__main__":
    key = jax.random.PRNGKey(0)
    B, T = 2, 128  # T <= block_size (256)

    k_x, k_q, k_k, k_v, k_p, k_b = jax.random.split(key, 6)
    x = jax.random.normal(k_x, (B, T, N_EMBD), dtype=jnp.float32)

    # Deterministic synthetic parameters (pre-transposed for x @ W).
    wq = 0.02 * jax.random.normal(k_q, (NUM_HEADS, N_EMBD, HEAD_SIZE), dtype=jnp.float32)
    wk = 0.02 * jax.random.normal(k_k, (NUM_HEADS, N_EMBD, HEAD_SIZE), dtype=jnp.float32)
    wv = 0.02 * jax.random.normal(k_v, (NUM_HEADS, N_EMBD, HEAD_SIZE), dtype=jnp.float32)
    w_proj = 0.02 * jax.random.normal(k_p, (NUM_HEADS * HEAD_SIZE, N_EMBD), dtype=jnp.float32)
    b_proj = 0.02 * jax.random.normal(k_b, (N_EMBD,), dtype=jnp.float32)

    out = multi_head_attention(x, wq, wk, wv, w_proj, b_proj)
    out = jax.block_until_ready(out)

    ref = _reference(x, wq, wk, wv, w_proj, b_proj)
    assert out.shape == (B, T, N_EMBD)
    # bf16 MXU operands (f32 accumulation) -> loose tolerance vs the f32 reference
    assert jnp.allclose(out, ref, atol=2e-2, rtol=2e-2), "mismatch vs reference"

    print("KERNEL_OK")
</pallas_src>

<mosaic_0001>
module attributes {stable_mosaic.version = 11 : i64} {
  func.func @_mha_kernel(%arg0: i32, %arg1: memref<1x128x384xbf16, #tpu.memory_space<vmem>>, %arg2: memref<384x1152xbf16, #tpu.memory_space<vmem>>, %arg3: memref<6x64x384xbf16, #tpu.memory_space<vmem>>, %arg4: memref<1x384xf32, #tpu.memory_space<vmem>>, %arg5: memref<1x128x384xf32, #tpu.memory_space<vmem>>) attributes {dimension_semantics = [#tpu.dimension_semantics<parallel>], iteration_bounds = array<i64: 2>, scalar_prefetch = 0 : i64, scratch_operands = 0 : i64, tpu.core_type = #tpu.core_type<tc>, window_params = [{transform_indices = @transform_0, window_bounds = array<i64: 1, 128, 384>}, {pipeline_mode = #tpu.pipeline_mode<synchronous>, transform_indices = @transform_1, window_bounds = array<i64: 384, 1152>}, {pipeline_mode = #tpu.pipeline_mode<synchronous>, transform_indices = @transform_2, window_bounds = array<i64: 6, 64, 384>}, {pipeline_mode = #tpu.pipeline_mode<synchronous>, transform_indices = @transform_3, window_bounds = array<i64: 1, 384>}, {transform_indices = @transform_4, window_bounds = array<i64: 1, 128, 384>}]} {
    %c0 = arith.constant 0 : index
    %c0_0 = arith.constant 0 : index
    %c0_1 = arith.constant 0 : index
    %0 = vector.load %arg1[%c0, %c0_0, %c0_1] : memref<1x128x384xbf16, #tpu.memory_space<vmem>>, vector<1x128x384xbf16>
    %1 = vector.shape_cast %0 : vector<1x128x384xbf16> to vector<128x384xbf16>
    %c0_2 = arith.constant 0 : index
    %c0_3 = arith.constant 0 : index
    %2 = vector.load %arg2[%c0_2, %c0_3] : memref<384x1152xbf16, #tpu.memory_space<vmem>>, vector<384x1152xbf16>
    %cst = arith.constant dense<0.000000e+00> : vector<128x1152xf32>
    %3 = tpu.matmul %1, %2, %cst {dimension_numbers = #tpu.dot_dimension_numbers<[1], [0], [0], [1], [0, 0, 1, 1], [], []>} : vector<128x384xbf16>, vector<384x1152xbf16>, vector<128x1152xf32> -> vector<128x1152xf32>
    %4 = arith.truncf %3 : vector<128x1152xf32> to vector<128x1152xbf16>
    %5 = tpu.iota {dimensions = array<i32: 0>} : vector<128x128xi32>
    %6 = tpu.iota {dimensions = array<i32: 1>} : vector<128x128xi32>
    %7 = arith.cmpi sle, %6, %5 : vector<128x128xi32>
    %cst_4 = arith.constant 0.000000e+00 : f32
    %cst_5 = arith.constant -1.000000e+30 : f32
    %8 = vector.broadcast %cst_4 : f32 to vector<128x128xf32>
    %9 = vector.broadcast %cst_5 : f32 to vector<128x128xf32>
    %10 = arith.select %7, %8, %9 : vector<128x128xi1>, vector<128x128xf32>
    %cst_6 = arith.constant 0.000000e+00 : f32
    %11 = vector.broadcast %cst_6 : f32 to vector<128x384xf32>
    %12 = vector.extract_strided_slice %4 {offsets = [0, 0], sizes = [128, 64], strides = [1, 1]} : vector<128x1152xbf16> to vector<128x64xbf16>
    %13 = vector.extract_strided_slice %4 {offsets = [0, 384], sizes = [128, 64], strides = [1, 1]} : vector<128x1152xbf16> to vector<128x64xbf16>
    %14 = vector.extract_strided_slice %4 {offsets = [0, 768], sizes = [128, 64], strides = [1, 1]} : vector<128x1152xbf16> to vector<128x64xbf16>
    %cst_7 = arith.constant dense<0.000000e+00> : vector<128x128xf32>
    %15 = tpu.matmul %12, %13, %cst_7 {dimension_numbers = #tpu.dot_dimension_numbers<[1], [1], [0], [0], [0, 0, 1, 0], [], []>} : vector<128x64xbf16>, vector<128x64xbf16>, vector<128x128xf32> -> vector<128x128xf32>
    %16 = arith.addf %15, %10 : vector<128x128xf32>
    %cst_8 = arith.constant dense<0xFF800000> : vector<128xf32>
    %17 = vector.multi_reduction <maximumf>, %16, %cst_8 [1] : vector<128x128xf32> to vector<128xf32>
    %18 = vector.shape_cast %17 : vector<128xf32> to vector<128x1xf32>
    %19 = vector.broadcast %18 : vector<128x1xf32> to vector<128x128xf32>
    %20 = arith.subf %16, %19 : vector<128x128xf32>
    %21 = math.exp %20 : vector<128x128xf32>
    %cst_9 = arith.constant dense<0.000000e+00> : vector<128xf32>
    %22 = vector.multi_reduction <add>, %21, %cst_9 [1] : vector<128x128xf32> to vector<128xf32>
    %23 = vector.shape_cast %22 : vector<128xf32> to vector<128x1xf32>
    %24 = tpu.reciprocal %23 {approx = true} : vector<128x1xf32> -> vector<128x1xf32>
    %25 = vector.broadcast %24 : vector<128x1xf32> to vector<128x128xf32>
    %26 = arith.mulf %21, %25 : vector<128x128xf32>
    %27 = arith.truncf %26 : vector<128x128xf32> to vector<128x128xbf16>
    %cst_10 = arith.constant dense<0.000000e+00> : vector<128x64xf32>
    %28 = tpu.matmul %27, %14, %cst_10 {dimension_numbers = #tpu.dot_dimension_numbers<[1], [0], [0], [1], [0, 0, 1, 1], [], []>} : vector<128x128xbf16>, vector<128x64xbf16>, vector<128x64xf32> -> vector<128x64xf32>
    %29 = arith.truncf %28 : vector<128x64xf32> to vector<128x64xbf16>
    %c0_11 = arith.constant 0 : index
    %c0_12 = arith.constant 0 : index
    %c0_13 = arith.constant 0 : index
    %30 = vector.load %arg3[%c0_11, %c0_12, %c0_13] : memref<6x64x384xbf16, #tpu.memory_space<vmem>>, vector<1x64x384xbf16>
    %31 = vector.shape_cast %30 : vector<1x64x384xbf16> to vector<64x384xbf16>
    %cst_14 = arith.constant dense<0.000000e+00> : vector<128x384xf32>
    %32 = tpu.matmul %29, %31, %cst_14 {dimension_numbers = #tpu.dot_dimension_numbers<[1], [0], [0], [1], [0, 0, 1, 1], [], []>} : vector<128x64xbf16>, vector<64x384xbf16>, vector<128x384xf32> -> vector<128x384xf32>
    %33 = arith.addf %11, %32 : vector<128x384xf32>
    %34 = vector.extract_strided_slice %4 {offsets = [0, 64], sizes = [128, 64], strides = [1, 1]} : vector<128x1152xbf16> to vector<128x64xbf16>
    %35 = vector.extract_strided_slice %4 {offsets = [0, 448], sizes = [128, 64], strides = [1, 1]} : vector<128x1152xbf16> to vector<128x64xbf16>
    %36 = vector.extract_strided_slice %4 {offsets = [0, 832], sizes = [128, 64], strides = [1, 1]} : vector<128x1152xbf16> to vector<128x64xbf16>
    %cst_15 = arith.constant dense<0.000000e+00> : vector<128x128xf32>
    %37 = tpu.matmul %34, %35, %cst_15 {dimension_numbers = #tpu.dot_dimension_numbers<[1], [1], [0], [0], [0, 0, 1, 0], [], []>} : vector<128x64xbf16>, vector<128x64xbf16>, vector<128x128xf32> -> vector<128x128xf32>
    %38 = arith.addf %37, %10 : vector<128x128xf32>
    %cst_16 = arith.constant dense<0xFF800000> : vector<128xf32>
    %39 = vector.multi_reduction <maximumf>, %38, %cst_16 [1] : vector<128x128xf32> to vector<128xf32>
    %40 = vector.shape_cast %39 : vector<128xf32> to vector<128x1xf32>
    %41 = vector.broadcast %40 : vector<128x1xf32> to vector<128x128xf32>
    %42 = arith.subf %38, %41 : vector<128x128xf32>
    %43 = math.exp %42 : vector<128x128xf32>
    %cst_17 = arith.constant dense<0.000000e+00> : vector<128xf32>
    %44 = vector.multi_reduction <add>, %43, %cst_17 [1] : vector<128x128xf32> to vector<128xf32>
    %45 = vector.shape_cast %44 : vector<128xf32> to vector<128x1xf32>
    %46 = tpu.reciprocal %45 {approx = true} : vector<128x1xf32> -> vector<128x1xf32>
    %47 = vector.broadcast %46 : vector<128x1xf32> to vector<128x128xf32>
    %48 = arith.mulf %43, %47 : vector<128x128xf32>
    %49 = arith.truncf %48 : vector<128x128xf32> to vector<128x128xbf16>
    %cst_18 = arith.constant dense<0.000000e+00> : vector<128x64xf32>
    %50 = tpu.matmul %49, %36, %cst_18 {dimension_numbers = #tpu.dot_dimension_numbers<[1], [0], [0], [1], [0, 0, 1, 1], [], []>} : vector<128x128xbf16>, vector<128x64xbf16>, vector<128x64xf32> -> vector<128x64xf32>
    %51 = arith.truncf %50 : vector<128x64xf32> to vector<128x64xbf16>
    %c1 = arith.constant 1 : index
    %c0_19 = arith.constant 0 : index
    %c0_20 = arith.constant 0 : index
    %52 = vector.load %arg3[%c1, %c0_19, %c0_20] : memref<6x64x384xbf16, #tpu.memory_space<vmem>>, vector<1x64x384xbf16>
    %53 = vector.shape_cast %52 : vector<1x64x384xbf16> to vector<64x384xbf16>
    %cst_21 = arith.constant dense<0.000000e+00> : vector<128x384xf32>
    %54 = tpu.matmul %51, %53, %cst_21 {dimension_numbers = #tpu.dot_dimension_numbers<[1], [0], [0], [1], [0, 0, 1, 1], [], []>} : vector<128x64xbf16>, vector<64x384xbf16>, vector<128x384xf32> -> vector<128x384xf32>
    %55 = arith.addf %33, %54 : vector<128x384xf32>
    %56 = vector.extract_strided_slice %4 {offsets = [0, 128], sizes = [128, 64], strides = [1, 1]} : vector<128x1152xbf16> to vector<128x64xbf16>
    %57 = vector.extract_strided_slice %4 {offsets = [0, 512], sizes = [128, 64], strides = [1, 1]} : vector<128x1152xbf16> to vector<128x64xbf16>
    %58 = vector.extract_strided_slice %4 {offsets = [0, 896], sizes = [128, 64], strides = [1, 1]} : vector<128x1152xbf16> to vector<128x64xbf16>
    %cst_22 = arith.constant dense<0.000000e+00> : vector<128x128xf32>
    %59 = tpu.matmul %56, %57, %cst_22 {dimension_numbers = #tpu.dot_dimension_numbers<[1], [1], [0], [0], [0, 0, 1, 0], [], []>} : vector<128x64xbf16>, vector<128x64xbf16>, vector<128x128xf32> -> vector<128x128xf32>
    %60 = arith.addf %59, %10 : vector<128x128xf32>
    %cst_23 = arith.constant dense<0xFF800000> : vector<128xf32>
    %61 = vector.multi_reduction <maximumf>, %60, %cst_23 [1] : vector<128x128xf32> to vector<128xf32>
    %62 = vector.shape_cast %61 : vector<128xf32> to vector<128x1xf32>
    %63 = vector.broadcast %62 : vector<128x1xf32> to vector<128x128xf32>
    %64 = arith.subf %60, %63 : vector<128x128xf32>
    %65 = math.exp %64 : vector<128x128xf32>
    %cst_24 = arith.constant dense<0.000000e+00> : vector<128xf32>
    %66 = vector.multi_reduction <add>, %65, %cst_24 [1] : vector<128x128xf32> to vector<128xf32>
    %67 = vector.shape_cast %66 : vector<128xf32> to vector<128x1xf32>
    %68 = tpu.reciprocal %67 {approx = true} : vector<128x1xf32> -> vector<128x1xf32>
    %69 = vector.broadcast %68 : vector<128x1xf32> to vector<128x128xf32>
    %70 = arith.mulf %65, %69 : vector<128x128xf32>
    %71 = arith.truncf %70 : vector<128x128xf32> to vector<128x128xbf16>
    %cst_25 = arith.constant dense<0.000000e+00> : vector<128x64xf32>
    %72 = tpu.matmul %71, %58, %cst_25 {dimension_numbers = #tpu.dot_dimension_numbers<[1], [0], [0], [1], [0, 0, 1, 1], [], []>} : vector<128x128xbf16>, vector<128x64xbf16>, vector<128x64xf32> -> vector<128x64xf32>
    %73 = arith.truncf %72 : vector<128x64xf32> to vector<128x64xbf16>
    %c2 = arith.constant 2 : index
    %c0_26 = arith.constant 0 : index
    %c0_27 = arith.constant 0 : index
    %74 = vector.load %arg3[%c2, %c0_26, %c0_27] : memref<6x64x384xbf16, #tpu.memory_space<vmem>>, vector<1x64x384xbf16>
    %75 = vector.shape_cast %74 : vector<1x64x384xbf16> to vector<64x384xbf16>
    %cst_28 = arith.constant dense<0.000000e+00> : vector<128x384xf32>
    %76 = tpu.matmul %73, %75, %cst_28 {dimension_numbers = #tpu.dot_dimension_numbers<[1], [0], [0], [1], [0, 0, 1, 1], [], []>} : vector<128x64xbf16>, vector<64x384xbf16>, vector<128x384xf32> -> vector<128x384xf32>
    %77 = arith.addf %55, %76 : vector<128x384xf32>
    %78 = vector.extract_strided_slice %4 {offsets = [0, 192], sizes = [128, 64], strides = [1, 1]} : vector<128x1152xbf16> to vector<128x64xbf16>
    %79 = vector.extract_strided_slice %4 {offsets = [0, 576], sizes = [128, 64], strides = [1, 1]} : vector<128x1152xbf16> to vector<128x64xbf16>
    %80 = vector.extract_strided_slice %4 {offsets = [0, 960], sizes = [128, 64], strides = [1, 1]} : vector<128x1152xbf16> to vector<128x64xbf16>
    %cst_29 = arith.constant dense<0.000000e+00> : vector<128x128xf32>
    %81 = tpu.matmul %78, %79, %cst_29 {dimension_numbers = #tpu.dot_dimension_numbers<[1], [1], [0], [0], [0, 0, 1, 0], [], []>} : vector<128x64xbf16>, vector<128x64xbf16>, vector<128x128xf32> -> vector<128x128xf32>
    %82 = arith.addf %81, %10 : vector<128x128xf32>
    %cst_30 = arith.constant dense<0xFF800000> : vector<128xf32>
    %83 = vector.multi_reduction <maximumf>, %82, %cst_30 [1] : vector<128x128xf32> to vector<128xf32>
    %84 = vector.shape_cast %83 : vector<128xf32> to vector<128x1xf32>
    %85 = vector.broadcast %84 : vector<128x1xf32> to vector<128x128xf32>
    %86 = arith.subf %82, %85 : vector<128x128xf32>
    %87 = math.exp %86 : vector<128x128xf32>
    %cst_31 = arith.constant dense<0.000000e+00> : vector<128xf32>
    %88 = vector.multi_reduction <add>, %87, %cst_31 [1] : vector<128x128xf32> to vector<128xf32>
    %89 = vector.shape_cast %88 : vector<128xf32> to vector<128x1xf32>
    %90 = tpu.reciprocal %89 {approx = true} : vector<128x1xf32> -> vector<128x1xf32>
    %91 = vector.broadcast %90 : vector<128x1xf32> to vector<128x128xf32>
    %92 = arith.mulf %87, %91 : vector<128x128xf32>
    %93 = arith.truncf %92 : vector<128x128xf32> to vector<128x128xbf16>
    %cst_32 = arith.constant dense<0.000000e+00> : vector<128x64xf32>
    %94 = tpu.matmul %93, %80, %cst_32 {dimension_numbers = #tpu.dot_dimension_numbers<[1], [0], [0], [1], [0, 0, 1, 1], [], []>} : vector<128x128xbf16>, vector<128x64xbf16>, vector<128x64xf32> -> vector<128x64xf32>
    %95 = arith.truncf %94 : vector<128x64xf32> to vector<128x64xbf16>
    %c3 = arith.constant 3 : index
    %c0_33 = arith.constant 0 : index
    %c0_34 = arith.constant 0 : index
    %96 = vector.load %arg3[%c3, %c0_33, %c0_34] : memref<6x64x384xbf16, #tpu.memory_space<vmem>>, vector<1x64x384xbf16>
    %97 = vector.shape_cast %96 : vector<1x64x384xbf16> to vector<64x384xbf16>
    %cst_35 = arith.constant dense<0.000000e+00> : vector<128x384xf32>
    %98 = tpu.matmul %95, %97, %cst_35 {dimension_numbers = #tpu.dot_dimension_numbers<[1], [0], [0], [1], [0, 0, 1, 1], [], []>} : vector<128x64xbf16>, vector<64x384xbf16>, vector<128x384xf32> -> vector<128x384xf32>
    %99 = arith.addf %77, %98 : vector<128x384xf32>
    %100 = vector.extract_strided_slice %4 {offsets = [0, 256], sizes = [128, 64], strides = [1, 1]} : vector<128x1152xbf16> to vector<128x64xbf16>
    %101 = vector.extract_strided_slice %4 {offsets = [0, 640], sizes = [128, 64], strides = [1, 1]} : vector<128x1152xbf16> to vector<128x64xbf16>
    %102 = vector.extract_strided_slice %4 {offsets = [0, 1024], sizes = [128, 64], strides = [1, 1]} : vector<128x1152xbf16> to vector<128x64xbf16>
    %cst_36 = arith.constant dense<0.000000e+00> : vector<128x128xf32>
    %103 = tpu.matmul %100, %101, %cst_36 {dimension_numbers = #tpu.dot_dimension_numbers<[1], [1], [0], [0], [0, 0, 1, 0], [], []>} : vector<128x64xbf16>, vector<128x64xbf16>, vector<128x128xf32> -> vector<128x128xf32>
    %104 = arith.addf %103, %10 : vector<128x128xf32>
    %cst_37 = arith.constant dense<0xFF800000> : vector<128xf32>
    %105 = vector.multi_reduction <maximumf>, %104, %cst_37 [1] : vector<128x128xf32> to vector<128xf32>
    %106 = vector.shape_cast %105 : vector<128xf32> to vector<128x1xf32>
    %107 = vector.broadcast %106 : vector<128x1xf32> to vector<128x128xf32>
    %108 = arith.subf %104, %107 : vector<128x128xf32>
    %109 = math.exp %108 : vector<128x128xf32>
    %cst_38 = arith.constant dense<0.000000e+00> : vector<128xf32>
    %110 = vector.multi_reduction <add>, %109, %cst_38 [1] : vector<128x128xf32> to vector<128xf32>
    %111 = vector.shape_cast %110 : vector<128xf32> to vector<128x1xf32>
    %112 = tpu.reciprocal %111 {approx = true} : vector<128x1xf32> -> vector<128x1xf32>
    %113 = vector.broadcast %112 : vector<128x1xf32> to vector<128x128xf32>
    %114 = arith.mulf %109, %113 : vector<128x128xf32>
    %115 = arith.truncf %114 : vector<128x128xf32> to vector<128x128xbf16>
    %cst_39 = arith.constant dense<0.000000e+00> : vector<128x64xf32>
    %116 = tpu.matmul %115, %102, %cst_39 {dimension_numbers = #tpu.dot_dimension_numbers<[1], [0], [0], [1], [0, 0, 1, 1], [], []>} : vector<128x128xbf16>, vector<128x64xbf16>, vector<128x64xf32> -> vector<128x64xf32>
    %117 = arith.truncf %116 : vector<128x64xf32> to vector<128x64xbf16>
    %c4 = arith.constant 4 : index
    %c0_40 = arith.constant 0 : index
    %c0_41 = arith.constant 0 : index
    %118 = vector.load %arg3[%c4, %c0_40, %c0_41] : memref<6x64x384xbf16, #tpu.memory_space<vmem>>, vector<1x64x384xbf16>
    %119 = vector.shape_cast %118 : vector<1x64x384xbf16> to vector<64x384xbf16>
    %cst_42 = arith.constant dense<0.000000e+00> : vector<128x384xf32>
    %120 = tpu.matmul %117, %119, %cst_42 {dimension_numbers = #tpu.dot_dimension_numbers<[1], [0], [0], [1], [0, 0, 1, 1], [], []>} : vector<128x64xbf16>, vector<64x384xbf16>, vector<128x384xf32> -> vector<128x384xf32>
    %121 = arith.addf %99, %120 : vector<128x384xf32>
    %122 = vector.extract_strided_slice %4 {offsets = [0, 320], sizes = [128, 64], strides = [1, 1]} : vector<128x1152xbf16> to vector<128x64xbf16>
    %123 = vector.extract_strided_slice %4 {offsets = [0, 704], sizes = [128, 64], strides = [1, 1]} : vector<128x1152xbf16> to vector<128x64xbf16>
    %124 = vector.extract_strided_slice %4 {offsets = [0, 1088], sizes = [128, 64], strides = [1, 1]} : vector<128x1152xbf16> to vector<128x64xbf16>
    %cst_43 = arith.constant dense<0.000000e+00> : vector<128x128xf32>
    %125 = tpu.matmul %122, %123, %cst_43 {dimension_numbers = #tpu.dot_dimension_numbers<[1], [1], [0], [0], [0, 0, 1, 0], [], []>} : vector<128x64xbf16>, vector<128x64xbf16>, vector<128x128xf32> -> vector<128x128xf32>
    %126 = arith.addf %125, %10 : vector<128x128xf32>
    %cst_44 = arith.constant dense<0xFF800000> : vector<128xf32>
    %127 = vector.multi_reduction <maximumf>, %126, %cst_44 [1] : vector<128x128xf32> to vector<128xf32>
    %128 = vector.shape_cast %127 : vector<128xf32> to vector<128x1xf32>
    %129 = vector.broadcast %128 : vector<128x1xf32> to vector<128x128xf32>
    %130 = arith.subf %126, %129 : vector<128x128xf32>
    %131 = math.exp %130 : vector<128x128xf32>
    %cst_45 = arith.constant dense<0.000000e+00> : vector<128xf32>
    %132 = vector.multi_reduction <add>, %131, %cst_45 [1] : vector<128x128xf32> to vector<128xf32>
    %133 = vector.shape_cast %132 : vector<128xf32> to vector<128x1xf32>
    %134 = tpu.reciprocal %133 {approx = true} : vector<128x1xf32> -> vector<128x1xf32>
    %135 = vector.broadcast %134 : vector<128x1xf32> to vector<128x128xf32>
    %136 = arith.mulf %131, %135 : vector<128x128xf32>
    %137 = arith.truncf %136 : vector<128x128xf32> to vector<128x128xbf16>
    %cst_46 = arith.constant dense<0.000000e+00> : vector<128x64xf32>
    %138 = tpu.matmul %137, %124, %cst_46 {dimension_numbers = #tpu.dot_dimension_numbers<[1], [0], [0], [1], [0, 0, 1, 1], [], []>} : vector<128x128xbf16>, vector<128x64xbf16>, vector<128x64xf32> -> vector<128x64xf32>
    %139 = arith.truncf %138 : vector<128x64xf32> to vector<128x64xbf16>
    %c5 = arith.constant 5 : index
    %c0_47 = arith.constant 0 : index
    %c0_48 = arith.constant 0 : index
    %140 = vector.load %arg3[%c5, %c0_47, %c0_48] : memref<6x64x384xbf16, #tpu.memory_space<vmem>>, vector<1x64x384xbf16>
    %141 = vector.shape_cast %140 : vector<1x64x384xbf16> to vector<64x384xbf16>
    %cst_49 = arith.constant dense<0.000000e+00> : vector<128x384xf32>
    %142 = tpu.matmul %139, %141, %cst_49 {dimension_numbers = #tpu.dot_dimension_numbers<[1], [0], [0], [1], [0, 0, 1, 1], [], []>} : vector<128x64xbf16>, vector<64x384xbf16>, vector<128x384xf32> -> vector<128x384xf32>
    %143 = arith.addf %121, %142 : vector<128x384xf32>
    %c0_50 = arith.constant 0 : index
    %c0_51 = arith.constant 0 : index
    %144 = vector.load %arg4[%c0_50, %c0_51] : memref<1x384xf32, #tpu.memory_space<vmem>>, vector<1x384xf32>
    %145 = vector.broadcast %144 : vector<1x384xf32> to vector<128x384xf32>
    %146 = arith.addf %143, %145 : vector<128x384xf32>
    %c0_52 = arith.constant 0 : index
    %c0_53 = arith.constant 0 : index
    %c0_54 = arith.constant 0 : index
    %147 = vector.load %arg5[%c0_52, %c0_53, %c0_54] : memref<1x128x384xf32, #tpu.memory_space<vmem>>, vector<1x128x384xf32>
    %148 = vector.shape_cast %147 : vector<1x128x384xf32> to vector<128x384xf32>
    %149 = vector.shape_cast %146 : vector<128x384xf32> to vector<1x128x384xf32>
    tpu.vector_store %arg5[%c0_52, %c0_53, %c0_54], %149 {strides = array<i32>} : memref<1x128x384xf32, #tpu.memory_space<vmem>>, vector<1x128x384xf32>,
    return
  }
  func.func @transform_0(%arg0: i32) -> (i32, i32, i32) {
    %c0_i32 = arith.constant 0 : i32
    %c0_i32_0 = arith.constant 0 : i32
    %c0_i32_1 = arith.constant 0 : i32
    return %arg0, %c0_i32, %c0_i32_0 : i32, i32, i32
  }
  func.func @transform_1(%arg0: i32) -> (i32, i32) {
    %c0_i32 = arith.constant 0 : i32
    %c0_i32_0 = arith.constant 0 : i32
    %c0_i32_1 = arith.constant 0 : i32
    return %c0_i32, %c0_i32_0 : i32, i32
  }
  func.func @transform_2(%arg0: i32) -> (i32, i32, i32) {
    %c0_i32 = arith.constant 0 : i32
    %c0_i32_0 = arith.constant 0 : i32
    %c0_i32_1 = arith.constant 0 : i32
    %c0_i32_2 = arith.constant 0 : i32
    return %c0_i32, %c0_i32_0, %c0_i32_1 : i32, i32, i32
  }
  func.func @transform_3(%arg0: i32) -> (i32, i32) {
    %c0_i32 = arith.constant 0 : i32
    %c0_i32_0 = arith.constant 0 : i32
    %c0_i32_1 = arith.constant 0 : i32
    return %c0_i32, %c0_i32_0 : i32, i32
  }
  func.func @transform_4(%arg0: i32) -> (i32, i32, i32) {
    %c0_i32 = arith.constant 0 : i32
    %c0_i32_0 = arith.constant 0 : i32
    %c0_i32_1 = arith.constant 0 : i32
    return %arg0, %c0_i32, %c0_i32_0 : i32, i32, i32
  }
}

</mosaic_0001>

<llo_original>
// kernel: tpu_custom_call.1
$region0: #{tpu_custom_call.1}
  #allocation0 [shape = 'u32[]', space=smem, size = 0x4, offset = 0x4, fixed_abs, tag = 'smem constant byte address 0x4 - core index']
  #allocation1 [shape = 'u32[72,128]{1,0:T(1,128)}', space=vmem, size = 0x9000, scoped, tag = 'internal scratch']
  %s0 = inlined_call_operand.hbm [shape: bf16[2,128,384], index: 0, kind: input, shape index: {}]
  %s1 = inlined_call_operand.hbm [shape: bf16[384,1152], index: 1, kind: input, shape index: {}]
  %s2 = inlined_call_operand.hbm [shape: bf16[6,64,384], index: 2, kind: input, shape index: {}]
  %s3 = inlined_call_operand.hbm [shape: f32[1,384], index: 3, kind: input, shape index: {}]
  %s4 = inlined_call_operand.hbm [shape: f32[2,128,384], index: 4, kind: output, shape index: {}]
  %s5 = sld [smem:[#allocation0]]
  $region65: #{tpu_custom_call.1} parent=0
    _
  %s7 = ssub.s32 1, %s5
  %s8 = scalar_select 0, %s7, %s5
  $region1: #{tpu_custom_call.1} parent=0
    #allocation2 [shape = 'u8[196608]{0}', space=vmem, size = 0x30000, scoped, tag = 'input window, operand 0']
    #allocation3 [shape = 's32[2]{0}', space=sflag, size = 0x8, scoped, tag = 'scoped memory for tpu_custom_call.1']
    #allocation4 [shape = 's32[2]{0}', space=sflag, size = 0x8, scoped, tag = 'scoped memory for tpu_custom_call.1']
    #allocation5 [shape = 'u8[884736]{0}', space=vmem, size = 0xd8000, scoped, tag = 'input window, operand 1, single buffered']
    #allocation6 [shape = 's32[1]{0}', space=sflag, size = 0x4, scoped, tag = 'scoped memory for tpu_custom_call.1']
    #allocation7 [shape = 'u8[294912]{0}', space=vmem, size = 0x48000, scoped, tag = 'input window, operand 2, single buffered']
    #allocation8 [shape = 'u8[1536]{0}', space=vmem, size = 0x800, scoped, tag = 'input window, operand 3, single buffered']
    #allocation9 [shape = 's32[1]{0}', space=sflag, size = 0x4, scoped, tag = 'scoped memory for tpu_custom_call.1']
    #allocation10 [shape = 'u8[393216]{0}', space=vmem, size = 0x60000, scoped, tag = 'output window, operand 0']
    %9 = vsyncpa [#allocation3], 0
    %s10 = scalar_lea.sflag [#allocation3], 1
    %11 = vsyncpa %s10, 0
    %12 = vsyncpa [#allocation6], 0
    %13 = vsyncpa [#allocation9], 0
    %14 = vsyncpa [#allocation4], 0
    %s15 = scalar_lea.sflag [#allocation4], 1
    %16 = vsyncpa %s15, 0
    loop: start=0, step=1, limit=4
    $region2: #{tpu_custom_call.1} parent=1 // loop_pre_header
      _
    $region3: #{tpu_custom_call.1} parent=1 // loop_header
      %s18 = sphi 0, %s22
      %p19 = scmp.ge.s32.totalorder %s18, 4
      %s28 = sphi 0, %s30
      %s31 = sphi 0, %s28
      %s32 = sphi 0, %s31
      %s48 = sphi 0, %s32
      %s52 = sphi 0, %s52
      %s54 = sphi 0, %s52
      %s55 = sphi 0, %s54
      %s69 = sphi 0, %s55
      %s73 = sphi 0, %s73
      %s75 = sphi 0, %s73
      %s76 = sphi 0, %s75
      %s90 = sphi 0, %s76
      %s94 = sphi 0, %s94
      %s96 = sphi 0, %s94
      %s97 = sphi 0, %s96
      %s111 = sphi 0, %s97
      %s117 = sphi 0, %s119
      %s120 = sphi 0, %s117
      %s121 = sphi 0, %s120
      %s137 = sphi 0, %s121
    $region4: #{tpu_custom_call.1} parent=1 // loop_header_branch
      %21 = sbr.rel (%p19) target = $region8
    $region5: #{tpu_custom_call.1} parent=1 // loop_body
      %s23 = ssub.s32 %s18, 1
      %s24 = ssub.s32 %s18, 2
      %s25 = sadd.s32 %s18, 1
      %s26 = ssub.s32 %s18, %s25
      %p27 = scmp.eq.s32.totalorder %s26, 0
      %s29 = sadd.s32 %s28, 1
      %s30 = scalar_select %p27, %s28, %s29
      %p33 = pneg %p27
      %p34 = scmp.eq.s32.totalorder %s18, 1
      %p35 = por %p33, %p34
      %p36 = scmp.ne.s32.totalorder %s28, %s31
      %p37 = scmp.eq.s32.totalorder %s18, 0
      %p38 = por %p36, %p37
      %p39 = scmp.ne.s32.totalorder %s28, %s31
      %p40 = scmp.eq.s32.totalorder %s23, 1
      %p41 = por %p39, %p40
      %p42 = scmp.ne.s32.totalorder %s31, %s32
      %p43 = scmp.eq.s32.totalorder %s23, 0
      %p44 = por %p42, %p43
      %p45 = scmp.ne.s32.totalorder %s31, %s32
      %p46 = scmp.eq.s32.totalorder %s24, 1
      %p47 = por %p45, %p46
      %p49 = scmp.ne.s32.totalorder %s32, %s48
      %p50 = scmp.eq.s32.totalorder %s24, 0
      %p51 = por %p49, %p50
      %s53 = sadd.s32 %s52, 1
      %p56 = scmp.eq.s32.totalorder %s18, 1
      %p57 = scmp.ne.s32.totalorder %s52, %s54
      %p58 = scmp.eq.s32.totalorder %s18, 0
      %p59 = por %p57, %p58
      %p60 = scmp.ne.s32.totalorder %s52, %s54
      %p61 = scmp.eq.s32.totalorder %s23, 1
      %p62 = por %p60, %p61
      %p63 = scmp.ne.s32.totalorder %s54, %s55
      %p64 = scmp.eq.s32.totalorder %s23, 0
      %p65 = por %p63, %p64
      %p66 = scmp.ne.s32.totalorder %s54, %s55
      %p67 = scmp.eq.s32.totalorder %s24, 1
      %p68 = por %p66, %p67
      %p70 = scmp.ne.s32.totalorder %s55, %s69
      %p71 = scmp.eq.s32.totalorder %s24, 0
      %p72 = por %p70, %p71
      %s74 = sadd.s32 %s73, 1
      %p77 = scmp.eq.s32.totalorder %s18, 1
      %p78 = scmp.ne.s32.totalorder %s73, %s75
      %p79 = scmp.eq.s32.totalorder %s18, 0
      %p80 = por %p78, %p79
      %p81 = scmp.ne.s32.totalorder %s73, %s75
      %p82 = scmp.eq.s32.totalorder %s23, 1
      %p83 = por %p81, %p82
      %p84 = scmp.ne.s32.totalorder %s75, %s76
      %p85 = scmp.eq.s32.totalorder %s23, 0
      %p86 = por %p84, %p85
      %p87 = scmp.ne.s32.totalorder %s75, %s76
      %p88 = scmp.eq.s32.totalorder %s24, 1
      %p89 = por %p87, %p88
      %p91 = scmp.ne.s32.totalorder %s76, %s90
      %p92 = scmp.eq.s32.totalorder %s24, 0
      %p93 = por %p91, %p92
      %s95 = sadd.s32 %s94, 1
      %p98 = scmp.eq.s32.totalorder %s18, 1
      %p99 = scmp.ne.s32.totalorder %s94, %s96
      %p100 = scmp.eq.s32.totalorder %s18, 0
      %p101 = por %p99, %p100
      %p102 = scmp.ne.s32.totalorder %s94, %s96
      %p103 = scmp.eq.s32.totalorder %s23, 1
      %p104 = por %p102, %p103
      %p105 = scmp.ne.s32.totalorder %s96, %s97
      %p106 = scmp.eq.s32.totalorder %s23, 0
      %p107 = por %p105, %p106
      %p108 = scmp.ne.s32.totalorder %s96, %s97
      %p109 = scmp.eq.s32.totalorder %s24, 1
      %p110 = por %p108, %p109
      %p112 = scmp.ne.s32.totalorder %s97, %s111
      %p113 = scmp.eq.s32.totalorder %s24, 0
      %p114 = por %p112, %p113
      %s115 = ssub.s32 %s18, %s25
      %p116 = scmp.eq.s32.totalorder %s115, 0
      %s118 = sadd.s32 %s117, 1
      %s119 = scalar_select %p116, %s117, %s118
      %p122 = pneg %p116
      %p123 = scmp.eq.s32.totalorder %s18, 1
      %p124 = por %p122, %p123
      %p125 = scmp.ne.s32.totalorder %s117, %s120
      %p126 = scmp.eq.s32.totalorder %s18, 0
      %p127 = por %p125, %p126
      %p128 = scmp.ne.s32.totalorder %s117, %s120
      %p129 = scmp.eq.s32.totalorder %s23, 1
      %p130 = por %p128, %p129
      %p131 = scmp.ne.s32.totalorder %s120, %s121
      %p132 = scmp.eq.s32.totalorder %s23, 0
      %p133 = por %p131, %p132
      %p134 = scmp.ne.s32.totalorder %s120, %s121
      %p135 = scmp.eq.s32.totalorder %s24, 1
      %p136 = por %p134, %p135
      %p138 = scmp.ne.s32.totalorder %s121, %s137
      %p139 = scmp.eq.s32.totalorder %s24, 0
      %p140 = por %p138, %p139
      %p141 = scmp.le.s32.totalorder 1, %s18
      %p142 = scmp.lt.s32.totalorder %s18, 3
      %p143 = pnand %p141, %p142
      %p144 = pneg %p143
      // Predicated region
      $region9: #{tpu_custom_call.1} parent=5 // pred_check
        _
      $region10: #{tpu_custom_call.1} parent=5 // pred_check_branch
        %146 = sbr.rel (%p143) target = $region12
      $region11: #{tpu_custom_call.1} parent=5 // pred_region
        %s147 = ssub.s32 %s18, 1
        // Predicated region
        $region13: #{tpu_custom_call.1} parent=11 // pred_check
          %p148 = pneg %p65
        $region14: #{tpu_custom_call.1} parent=11 // pred_check_branch
          %150 = sbr.rel (%p148) target = $region16
        $region15: #{tpu_custom_call.1} parent=11 // pred_region
          %152 = vsyncadd [#allocation6], 0
          %s153 = sshll.u32 %s1, 4
          %s154 = int_to_ptr.hbm [resolvable:$true] %s153
          %s155 = sshll.u32 [#allocation5], 4
          %s156 = int_to_ptr.vmem [resolvable:$true] %s155
          %161 = dma.hbm_to_vmem [thread:$0]  %s154, 27648, %s156, [#allocation6], 576, 576, 36
        $region16: #{tpu_custom_call.1} parent=11 // pred_fallthru
          _
        // Predicated region
        $region17: #{tpu_custom_call.1} parent=11 // pred_check
          %p162 = pneg %p86
        $region18: #{tpu_custom_call.1} parent=11 // pred_check_branch
          %164 = sbr.rel (%p162) target = $region20
        $region19: #{tpu_custom_call.1} parent=11 // pred_region
          %166 = vsyncadd [#allocation6], 0
          %s167 = sshll.u32 %s2, 4
          %s168 = int_to_ptr.hbm [resolvable:$true] %s167
          %s169 = sshll.u32 [#allocation7], 4
          %s170 = int_to_ptr.vmem [resolvable:$true] %s169
          %175 = dma.hbm_to_vmem [thread:$0]  %s168, 9216, %s170, [#allocation6], 192, 192, 12
        $region20: #{tpu_custom_call.1} parent=11 // pred_fallthru
          _
        // Predicated region
        $region21: #{tpu_custom_call.1} parent=11 // pred_check
          %p176 = pneg %p107
        $region22: #{tpu_custom_call.1} parent=11 // pred_check_branch
          %178 = sbr.rel (%p176) target = $region24
        $region23: #{tpu_custom_call.1} parent=11 // pred_region
          %180 = vsyncadd [#allocation9], 0
          %s182 = sshll.u32 %s3, 4
          %s183 = int_to_ptr.hbm [resolvable:$true] %s182
          %s184 = sshll.u32 [#allocation8], 4
          %s185 = int_to_ptr.vmem [resolvable:$true] %s184
          %187 = dma.hbm_to_vmem [thread:$0]  %s183, 48, %s185, [#allocation9]
        $region24: #{tpu_custom_call.1} parent=11 // pred_fallthru
          _
      $region12: #{tpu_custom_call.1} parent=5 // pred_fallthru
        _
      %p188 = scmp.lt.s32.totalorder %s18, 2
      // Predicated region
      $region25: #{tpu_custom_call.1} parent=5 // pred_check
        %p189 = pneg %p188
      $region26: #{tpu_custom_call.1} parent=5 // pred_check_branch
        %191 = sbr.rel (%p189) target = $region28
      $region27: #{tpu_custom_call.1} parent=5 // pred_region
        // Predicated region
        $region29: #{tpu_custom_call.1} parent=27 // pred_check
          %p192 = pneg %p38
        $region30: #{tpu_custom_call.1} parent=27 // pred_check_branch
          %194 = sbr.rel (%p192) target = $region32
        $region31: #{tpu_custom_call.1} parent=27 // pred_region
          %s195 = sand.u32 %s28, 1
          %s196 = scalar_lea.sflag [#allocation3], %s195
          %s197 = sand.u32 %s28, 1
          %s198 = smul.addr %s197, 192
          %s199 = scalar_lea.vmem [#allocation2], %s198
          %201 = vsyncadd %s196, 0
          %s202 = smul.addr %s18, 48
          %s203 = smul.addr %s202, 4
          %s204 = scalar_lea.hbm %s0, %s203
          %s205 = sshll.u32 %s204, 4
          %s206 = int_to_ptr.hbm [resolvable:$true] %s205
          %s207 = sshll.u32 %s199, 4
          %s208 = int_to_ptr.vmem [resolvable:$true] %s207
          %213 = dma.hbm_to_vmem [thread:$0]  %s206, 3072, %s208, %s196, 192, 192, 12
        $region32: #{tpu_custom_call.1} parent=27 // pred_fallthru
          _
      $region28: #{tpu_custom_call.1} parent=5 // pred_fallthru
        _
      %p214 = scmp.le.s32.totalorder 1, %s18
      %p215 = scmp.lt.s32.totalorder %s18, 3
      %p216 = pnand %p214, %p215
      %p217 = pneg %p216
      // Predicated region
      $region33: #{tpu_custom_call.1} parent=5 // pred_check
        _
      $region34: #{tpu_custom_call.1} parent=5 // pred_check_branch
        %219 = sbr.rel (%p216) target = $region36
      $region35: #{tpu_custom_call.1} parent=5 // pred_region
        %s220 = ssub.s32 %s18, 1
        %s221 = sand.u32 %s31, 1
        %s222 = scalar_lea.sflag [#allocation3], %s221
        %s223 = sand.u32 %s31, 1
        %s224 = smul.addr %s223, 192
        %s225 = scalar_lea.vmem [#allocation2], %s224
        // Predicated region
        $region37: #{tpu_custom_call.1} parent=35 // pred_check
          %p226 = pneg %p44
        $region38: #{tpu_custom_call.1} parent=35 // pred_check_branch
          %228 = sbr.rel (%p226) target = $region40
        $region39: #{tpu_custom_call.1} parent=35 // pred_region
          %230 = dma.done %s222, 3072
        $region40: #{tpu_custom_call.1} parent=35 // pred_fallthru
          _
        // Predicated region
        $region41: #{tpu_custom_call.1} parent=35 // pred_check
          %p231 = pneg %p65
        $region42: #{tpu_custom_call.1} parent=35 // pred_check_branch
          %233 = sbr.rel (%p231) target = $region44
        $region43: #{tpu_custom_call.1} parent=35 // pred_region
          %235 = dma.done [#allocation6], 27648
        $region44: #{tpu_custom_call.1} parent=35 // pred_fallthru
          _
        // Predicated region
        $region45: #{tpu_custom_call.1} parent=35 // pred_check
          %p236 = pneg %p86
        $region46: #{tpu_custom_call.1} parent=35 // pred_check_branch
          %238 = sbr.rel (%p236) target = $region48
        $region47: #{tpu_custom_call.1} parent=35 // pred_region
          %240 = dma.done [#allocation6], 9216
        $region48: #{tpu_custom_call.1} parent=35 // pred_fallthru
          _
        // Predicated region
        $region49: #{tpu_custom_call.1} parent=35 // pred_check
          %p241 = pneg %p107
        $region50: #{tpu_custom_call.1} parent=35 // pred_check_branch
          %243 = sbr.rel (%p241) target = $region52
        $region51: #{tpu_custom_call.1} parent=35 // pred_region
          %245 = dma.done [#allocation9], 48
        $region52: #{tpu_custom_call.1} parent=35 // pred_fallthru
          _
        %s246 = sand.u32 %s31, 1
        %s247 = scalar_lea.sflag [#allocation3], %s246
        %s248 = sand.u32 %s31, 1
        %s249 = smul.addr %s248, 192
        %s250 = scalar_lea.vmem [#allocation2], %s249
        %p251 = pneg %p44
        %p252 = pneg %p41
        %p253 = pneg %p65
        %p254 = pneg %p62
        %p255 = pneg %p86
        %p256 = pneg %p83
        %p257 = pneg %p107
        %p258 = pneg %p104
        %p259 = pneg %p133
        %p260 = pneg %p130
        %s261 = sand.u32 %s120, 1
        %s262 = scalar_lea.sflag [#allocation4], %s261
        %s263 = sand.u32 %s120, 1
        %s264 = smul.addr %s263, 384
        %s265 = scalar_lea.vmem [#allocation10], %s264
        %v267 = vld [vmem:[%s225] sm:$0xff]
        %v268 = vld [vmem:[%s225 + $0x8] sm:$0xf]
        %v269 = vld [vmem:[%s225 + $0xc] sm:$0xff]
        %v270 = vld [vmem:[%s225 + $0x14] sm:$0xf]
        %v271 = vld [vmem:[%s225 + $0x18] sm:$0xff]
        %v272 = vld [vmem:[%s225 + $0x20] sm:$0xf]
        %v273 = vld [vmem:[%s225 + $0x24] sm:$0xff]
        %v274 = vld [vmem:[%s225 + $0x2c] sm:$0xf]
        %v275 = vld [vmem:[%s225 + $0x30] sm:$0xff]
        %v276 = vld [vmem:[%s225 + $0x38] sm:$0xf]
        %v277 = vld [vmem:[%s225 + $0x3c] sm:$0xff]
        %v278 = vld [vmem:[%s225 + $0x44] sm:$0xf]
        %v279 = vld [vmem:[%s225 + $0x48] sm:$0xff]
        %v280 = vld [vmem:[%s225 + $0x50] sm:$0xf]
        %v281 = vld [vmem:[%s225 + $0x54] sm:$0xff]
        %v282 = vld [vmem:[%s225 + $0x5c] sm:$0xf]
        %v283 = vld [vmem:[%s225 + $0x60] sm:$0xff]
        %v284 = vld [vmem:[%s225 + $0x68] sm:$0xf]
        %v285 = vld [vmem:[%s225 + $0x6c] sm:$0xff]
        %v286 = vld [vmem:[%s225 + $0x74] sm:$0xf]
        %v287 = vld [vmem:[%s225 + $0x78] sm:$0xff]
        %v288 = vld [vmem:[%s225 + $0x80] sm:$0xf]
        %v289 = vld [vmem:[%s225 + $0x84] sm:$0xff]
        %v290 = vld [vmem:[%s225 + $0x8c] sm:$0xf]
        %v291 = vld [vmem:[%s225 + $0x90] sm:$0xff]
        %v292 = vld [vmem:[%s225 + $0x98] sm:$0xf]
        %v293 = vld [vmem:[%s225 + $0x9c] sm:$0xff]
        %v294 = vld [vmem:[%s225 + $0xa4] sm:$0xf]
        %v295 = vld [vmem:[%s225 + $0xa8] sm:$0xff]
        %v296 = vld [vmem:[%s225 + $0xb0] sm:$0xf]
        %v297 = vld [vmem:[%s225 + $0xb4] sm:$0xff]
        %v298 = vld [vmem:[%s225 + $0xbc] sm:$0xf]
        %v299 = vld [vmem:[#allocation5] sm:$0xff]
        %v300 = vld [vmem:[#allocation5 + $0x8] sm:$0xff]
        %v301 = vld [vmem:[#allocation5 + $0x10] sm:$0xff]
        %v302 = vld [vmem:[#allocation5 + $0x18] sm:$0xff]
        %v303 = vld [vmem:[#allocation5 + $0x20] sm:$0xf]
        %v304 = vld [vmem:[#allocation5 + $0x24] sm:$0xff]
        %v305 = vld [vmem:[#allocation5 + $0x2c] sm:$0xff]
        %v306 = vld [vmem:[#allocation5 + $0x34] sm:$0xff]
        %v307 = vld [vmem:[#allocation5 + $0x3c] sm:$0xff]
        %v308 = vld [vmem:[#allocation5 + $0x44] sm:$0xf]
        %v309 = vld [vmem:[#allocation5 + $0x48] sm:$0xff]
        %v310 = vld [vmem:[#allocation5 + $0x50] sm:$0xff]
        %v311 = vld [vmem:[#allocation5 + $0x58] sm:$0xff]
        %v312 = vld [vmem:[#allocation5 + $0x60] sm:$0xff]
        %v313 = vld [vmem:[#allocation5 + $0x68] sm:$0xf]
        %v314 = vld [vmem:[#allocation5 + $0x6c] sm:$0xff]
        %v315 = vld [vmem:[#allocation5 + $0x74] sm:$0xff]
        %v316 = vld [vmem:[#allocation5 + $0x7c] sm:$0xff]
        %v317 = vld [vmem:[#allocation5 + $0x84] sm:$0xff]
        %v318 = vld [vmem:[#allocation5 + $0x8c] sm:$0xf]
        %v319 = vld [vmem:[#allocation5 + $0x90] sm:$0xff]
        %v320 = vld [vmem:[#allocation5 + $0x98] sm:$0xff]
        %v321 = vld [vmem:[#allocation5 + $0xa0] sm:$0xff]
        %v322 = vld [vmem:[#allocation5 + $0xa8] sm:$0xff]
        %v323 = vld [vmem:[#allocation5 + $0xb0] sm:$0xf]
        %v324 = vld [vmem:[#allocation5 + $0xb4] sm:$0xff]
        %v325 = vld [vmem:[#allocation5 + $0xbc] sm:$0xff]
        %v326 = vld [vmem:[#allocation5 + $0xc4] sm:$0xff]
        %v327 = vld [vmem:[#allocation5 + $0xcc] sm:$0xff]
        %v328 = vld [vmem:[#allocation5 + $0xd4] sm:$0xf]
        %v329 = vld [vmem:[#allocation5 + $0xd8] sm:$0xff]
        %v330 = vld [vmem:[#allocation5 + $0xe0] sm:$0xff]
        %v331 = vld [vmem:[#allocation5 + $0xe8] sm:$0xff]
        %v332 = vld [vmem:[#allocation5 + $0xf0] sm:$0xff]
        %v333 = vld [vmem:[#allocation5 + $0xf8] sm:$0xf]
        %v334 = vld [vmem:[#allocation5 + $0xfc] sm:$0xff]
        %v335 = vld [vmem:[#allocation5 + $0x104] sm:$0xff]
        %v336 = vld [vmem:[#allocation5 + $0x10c] sm:$0xff]
        %v337 = vld [vmem:[#allocation5 + $0x114] sm:$0xff]
        %v338 = vld [vmem:[#allocation5 + $0x11c] sm:$0xf]
        %v339 = vld [vmem:[#allocation5 + $0x120] sm:$0xff]
        %v340 = vld [vmem:[#allocation5 + $0x128] sm:$0xff]
        %v341 = vld [vmem:[#allocation5 + $0x130] sm:$0xff]
        %v342 = vld [vmem:[#allocation5 + $0x138] sm:$0xff]
        %v343 = vld [vmem:[#allocation5 + $0x140] sm:$0xf]
        %v344 = vld [vmem:[#allocation5 + $0x144] sm:$0xff]
        %v345 = vld [vmem:[#allocation5 + $0x14c] sm:$0xff]
        %v346 = vld [vmem:[#allocation5 + $0x154] sm:$0xff]
        %v347 = vld [vmem:[#allocation5 + $0x15c] sm:$0xff]
        %v348 = vld [vmem:[#allocation5 + $0x164] sm:$0xf]
        %v349 = vld [vmem:[#allocation5 + $0x168] sm:$0xff]
        %v350 = vld [vmem:[#allocation5 + $0x170] sm:$0xff]
        %v351 = vld [vmem:[#allocation5 + $0x178] sm:$0xff]
        %v352 = vld [vmem:[#allocation5 + $0x180] sm:$0xff]
        %v353 = vld [vmem:[#allocation5 + $0x188] sm:$0xf]
        %v354 = vld [vmem:[#allocation5 + $0x18c] sm:$0xff]
        %v355 = vld [vmem:[#allocation5 + $0x194] sm:$0xff]
        %v356 = vld [vmem:[#allocation5 + $0x19c] sm:$0xff]
        %v357 = vld [vmem:[#allocation5 + $0x1a4] sm:$0xff]
        %v358 = vld [vmem:[#allocation5 + $0x1ac] sm:$0xf]
        %v359 = vld [vmem:[#allocation5 + $0x1b0] sm:$0xff]
        %v360 = vld [vmem:[#allocation5 + $0x1b8] sm:$0xff]
        %v361 = vld [vmem:[#allocation5 + $0x1c0] sm:$0xff]
        %v362 = vld [vmem:[#allocation5 + $0x1c8] sm:$0xff]
        %v363 = vld [vmem:[#allocation5 + $0x1d0] sm:$0xf]
        %v364 = vld [vmem:[#allocation5 + $0x1d4] sm:$0xff]
        %v365 = vld [vmem:[#allocation5 + $0x1dc] sm:$0xff]
        %v366 = vld [vmem:[#allocation5 + $0x1e4] sm:$0xff]
        %v367 = vld [vmem:[#allocation5 + $0x1ec] sm:$0xff]
        %v368 = vld [vmem:[#allocation5 + $0x1f4] sm:$0xf]
        %v369 = vld [vmem:[#allocation5 + $0x1f8] sm:$0xff]
        %v370 = vld [vmem:[#allocation5 + $0x200] sm:$0xff]
        %v371 = vld [vmem:[#allocation5 + $0x208] sm:$0xff]
        %v372 = vld [vmem:[#allocation5 + $0x210] sm:$0xff]
        %v373 = vld [vmem:[#allocation5 + $0x218] sm:$0xf]
        %v374 = vld [vmem:[#allocation5 + $0x21c] sm:$0xff]
        %v375 = vld [vmem:[#allocation5 + $0x224] sm:$0xff]
        %v376 = vld [vmem:[#allocation5 + $0x22c] sm:$0xff]
        %v377 = vld [vmem:[#allocation5 + $0x234] sm:$0xff]
        %v378 = vld [vmem:[#allocation5 + $0x23c] sm:$0xf]
        %v379 = vld [vmem:[#allocation5 + $0x240] sm:$0xff]
        %v380 = vld [vmem:[#allocation5 + $0x248] sm:$0xff]
        %v381 = vld [vmem:[#allocation5 + $0x250] sm:$0xff]
        %v382 = vld [vmem:[#allocation5 + $0x258] sm:$0xff]
        %v383 = vld [vmem:[#allocation5 + $0x260] sm:$0xf]
        %v384 = vld [vmem:[#allocation5 + $0x264] sm:$0xff]
        %v385 = vld [vmem:[#allocation5 + $0x26c] sm:$0xff]
        %v386 = vld [vmem:[#allocation5 + $0x274] sm:$0xff]
        %v387 = vld [vmem:[#allocation5 + $0x27c] sm:$0xff]
        %v388 = vld [vmem:[#allocation5 + $0x284] sm:$0xf]
        %v389 = vld [vmem:[#allocation5 + $0x288] sm:$0xff]
        %v390 = vld [vmem:[#allocation5 + $0x290] sm:$0xff]
        %v391 = vld [vmem:[#allocation5 + $0x298] sm:$0xff]
        %v392 = vld [vmem:[#allocation5 + $0x2a0] sm:$0xff]
        %v393 = vld [vmem:[#allocation5 + $0x2a8] sm:$0xf]
        %v394 = vld [vmem:[#allocation5 + $0x2ac] sm:$0xff]
        %v395 = vld [vmem:[#allocation5 + $0x2b4] sm:$0xff]
        %v396 = vld [vmem:[#allocation5 + $0x2bc] sm:$0xff]
        %v397 = vld [vmem:[#allocation5 + $0x2c4] sm:$0xff]
        %v398 = vld [vmem:[#allocation5 + $0x2cc] sm:$0xf]
        %v399 = vld [vmem:[#allocation5 + $0x2d0] sm:$0xff]
        %v400 = vld [vmem:[#allocation5 + $0x2d8] sm:$0xff]
        %v401 = vld [vmem:[#allocation5 + $0x2e0] sm:$0xff]
        %v402 = vld [vmem:[#allocation5 + $0x2e8] sm:$0xff]
        %v403 = vld [vmem:[#allocation5 + $0x2f0] sm:$0xf]
        %v404 = vld [vmem:[#allocation5 + $0x2f4] sm:$0xff]
        %v405 = vld [vmem:[#allocation5 + $0x2fc] sm:$0xff]
        %v406 = vld [vmem:[#allocation5 + $0x304] sm:$0xff]
        %v407 = vld [vmem:[#allocation5 + $0x30c] sm:$0xff]
        %v408 = vld [vmem:[#allocation5 + $0x314] sm:$0xf]
        %v409 = vld [vmem:[#allocation5 + $0x318] sm:$0xff]
        %v410 = vld [vmem:[#allocation5 + $0x320] sm:$0xff]
        %v411 = vld [vmem:[#allocation5 + $0x328] sm:$0xff]
        %v412 = vld [vmem:[#allocation5 + $0x330] sm:$0xff]
        %v413 = vld [vmem:[#allocation5 + $0x338] sm:$0xf]
        %v414 = vld [vmem:[#allocation5 + $0x33c] sm:$0xff]
        %v415 = vld [vmem:[#allocation5 + $0x344] sm:$0xff]
        %v416 = vld [vmem:[#allocation5 + $0x34c] sm:$0xff]
        %v417 = vld [vmem:[#allocation5 + $0x354] sm:$0xff]
        %v418 = vld [vmem:[#allocation5 + $0x35c] sm:$0xf]
        %v419 = vld [vmem:[#allocation5 + $0x360] sm:$0xff]
        %v420 = vld [vmem:[#allocation5 + $0x368] sm:$0xff]
        %v421 = vld [vmem:[#allocation5 + $0x370] sm:$0xff]
        %v422 = vld [vmem:[#allocation5 + $0x378] sm:$0xff]
        %v423 = vld [vmem:[#allocation5 + $0x380] sm:$0xf]
        %v424 = vld [vmem:[#allocation5 + $0x384] sm:$0xff]
        %v425 = vld [vmem:[#allocation5 + $0x38c] sm:$0xff]
        %v426 = vld [vmem:[#allocation5 + $0x394] sm:$0xff]
        %v427 = vld [vmem:[#allocation5 + $0x39c] sm:$0xff]
        %v428 = vld [vmem:[#allocation5 + $0x3a4] sm:$0xf]
        %v429 = vld [vmem:[#allocation5 + $0x3a8] sm:$0xff]
        %v430 = vld [vmem:[#allocation5 + $0x3b0] sm:$0xff]
        %v431 = vld [vmem:[#allocation5 + $0x3b8] sm:$0xff]
        %v432 = vld [vmem:[#allocation5 + $0x3c0] sm:$0xff]
        %v433 = vld [vmem:[#allocation5 + $0x3c8] sm:$0xf]
        %v434 = vld [vmem:[#allocation5 + $0x3cc] sm:$0xff]
        %v435 = vld [vmem:[#allocation5 + $0x3d4] sm:$0xff]
        %v436 = vld [vmem:[#allocation5 + $0x3dc] sm:$0xff]
        %v437 = vld [vmem:[#allocation5 + $0x3e4] sm:$0xff]
        %v438 = vld [vmem:[#allocation5 + $0x3ec] sm:$0xf]
        %v439 = vld [vmem:[#allocation5 + $0x3f0] sm:$0xff]
        %v440 = vld [vmem:[#allocation5 + $0x3f8] sm:$0xff]
        %v441 = vld [vmem:[#allocation5 + $0x400] sm:$0xff]
        %v442 = vld [vmem:[#allocation5 + $0x408] sm:$0xff]
        %v443 = vld [vmem:[#allocation5 + $0x410] sm:$0xf]
        %v444 = vld [vmem:[#allocation5 + $0x414] sm:$0xff]
        %v445 = vld [vmem:[#allocation5 + $0x41c] sm:$0xff]
        %v446 = vld [vmem:[#allocation5 + $0x424] sm:$0xff]
        %v447 = vld [vmem:[#allocation5 + $0x42c] sm:$0xff]
        %v448 = vld [vmem:[#allocation5 + $0x434] sm:$0xf]
        %v449 = vld [vmem:[#allocation5 + $0x438] sm:$0xff]
        %v450 = vld [vmem:[#allocation5 + $0x440] sm:$0xff]
        %v451 = vld [vmem:[#allocation5 + $0x448] sm:$0xff]
        %v452 = vld [vmem:[#allocation5 + $0x450] sm:$0xff]
        %v453 = vld [vmem:[#allocation5 + $0x458] sm:$0xf]
        %v454 = vld [vmem:[#allocation5 + $0x45c] sm:$0xff]
        %v455 = vld [vmem:[#allocation5 + $0x464] sm:$0xff]
        %v456 = vld [vmem:[#allocation5 + $0x46c] sm:$0xff]
        %v457 = vld [vmem:[#allocation5 + $0x474] sm:$0xff]
        %v458 = vld [vmem:[#allocation5 + $0x47c] sm:$0xf]
        %v459 = vld [vmem:[#allocation5 + $0x480] sm:$0xff]
        %v460 = vld [vmem:[#allocation5 + $0x488] sm:$0xff]
        %v461 = vld [vmem:[#allocation5 + $0x490] sm:$0xff]
        %v462 = vld [vmem:[#allocation5 + $0x498] sm:$0xff]
        %v463 = vld [vmem:[#allocation5 + $0x4a0] sm:$0xf]
        %v464 = vld [vmem:[#allocation5 + $0x4a4] sm:$0xff]
        %v465 = vld [vmem:[#allocation5 + $0x4ac] sm:$0xff]
        %v466 = vld [vmem:[#allocation5 + $0x4b4] sm:$0xff]
        %v467 = vld [vmem:[#allocation5 + $0x4bc] sm:$0xff]
        %v468 = vld [vmem:[#allocation5 + $0x4c4] sm:$0xf]
        %v469 = vld [vmem:[#allocation5 + $0x4c8] sm:$0xff]
        %v470 = vld [vmem:[#allocation5 + $0x4d0] sm:$0xff]
        %v471 = vld [vmem:[#allocation5 + $0x4d8] sm:$0xff]
        %v472 = vld [vmem:[#allocation5 + $0x4e0] sm:$0xff]
        %v473 = vld [vmem:[#allocation5 + $0x4e8] sm:$0xf]
        %v474 = vld [vmem:[#allocation5 + $0x4ec] sm:$0xff]
        %v475 = vld [vmem:[#allocation5 + $0x4f4] sm:$0xff]
        %v476 = vld [vmem:[#allocation5 + $0x4fc] sm:$0xff]
        %v477 = vld [vmem:[#allocation5 + $0x504] sm:$0xff]
        %v478 = vld [vmem:[#allocation5 + $0x50c] sm:$0xf]
        %v479 = vld [vmem:[#allocation5 + $0x510] sm:$0xff]
        %v480 = vld [vmem:[#allocation5 + $0x518] sm:$0xff]
        %v481 = vld [vmem:[#allocation5 + $0x520] sm:$0xff]
        %v482 = vld [vmem:[#allocation5 + $0x528] sm:$0xff]
        %v483 = vld [vmem:[#allocation5 + $0x530] sm:$0xf]
        %v484 = vld [vmem:[#allocation5 + $0x534] sm:$0xff]
        %v485 = vld [vmem:[#allocation5 + $0x53c] sm:$0xff]
        %v486 = vld [vmem:[#allocation5 + $0x544] sm:$0xff]
        %v487 = vld [vmem:[#allocation5 + $0x54c] sm:$0xff]
        %v488 = vld [vmem:[#allocation5 + $0x554] sm:$0xf]
        %v489 = vld [vmem:[#allocation5 + $0x558] sm:$0xff]
        %v490 = vld [vmem:[#allocation5 + $0x560] sm:$0xff]
        %v491 = vld [vmem:[#allocation5 + $0x568] sm:$0xff]
        %v492 = vld [vmem:[#allocation5 + $0x570] sm:$0xff]
        %v493 = vld [vmem:[#allocation5 + $0x578] sm:$0xf]
        %v494 = vld [vmem:[#allocation5 + $0x57c] sm:$0xff]
        %v495 = vld [vmem:[#allocation5 + $0x584] sm:$0xff]
        %v496 = vld [vmem:[#allocation5 + $0x58c] sm:$0xff]
        %v497 = vld [vmem:[#allocation5 + $0x594] sm:$0xff]
        %v498 = vld [vmem:[#allocation5 + $0x59c] sm:$0xf]
        %v499 = vld [vmem:[#allocation5 + $0x5a0] sm:$0xff]
        %v500 = vld [vmem:[#allocation5 + $0x5a8] sm:$0xff]
        %v501 = vld [vmem:[#allocation5 + $0x5b0] sm:$0xff]
        %v502 = vld [vmem:[#allocation5 + $0x5b8] sm:$0xff]
        %v503 = vld [vmem:[#allocation5 + $0x5c0] sm:$0xf]
        %v504 = vld [vmem:[#allocation5 + $0x5c4] sm:$0xff]
        %v505 = vld [vmem:[#allocation5 + $0x5cc] sm:$0xff]
        %v506 = vld [vmem:[#allocation5 + $0x5d4] sm:$0xff]
        %v507 = vld [vmem:[#allocation5 + $0x5dc] sm:$0xff]
        %v508 = vld [vmem:[#allocation5 + $0x5e4] sm:$0xf]
        %v509 = vld [vmem:[#allocation5 + $0x5e8] sm:$0xff]
        %v510 = vld [vmem:[#allocation5 + $0x5f0] sm:$0xff]
        %v511 = vld [vmem:[#allocation5 + $0x5f8] sm:$0xff]
        %v512 = vld [vmem:[#allocation5 + $0x600] sm:$0xff]
        %v513 = vld [vmem:[#allocation5 + $0x608] sm:$0xf]
        %v514 = vld [vmem:[#allocation5 + $0x60c] sm:$0xff]
        %v515 = vld [vmem:[#allocation5 + $0x614] sm:$0xff]
        %v516 = vld [vmem:[#allocation5 + $0x61c] sm:$0xff]
        %v517 = vld [vmem:[#allocation5 + $0x624] sm:$0xff]
        %v518 = vld [vmem:[#allocation5 + $0x62c] sm:$0xf]
        %v519 = vld [vmem:[#allocation5 + $0x630] sm:$0xff]
        %v520 = vld [vmem:[#allocation5 + $0x638] sm:$0xff]
        %v521 = vld [vmem:[#allocation5 + $0x640] sm:$0xff]
        %v522 = vld [vmem:[#allocation5 + $0x648] sm:$0xff]
        %v523 = vld [vmem:[#allocation5 + $0x650] sm:$0xf]
        %v524 = vld [vmem:[#allocation5 + $0x654] sm:$0xff]
        %v525 = vld [vmem:[#allocation5 + $0x65c] sm:$0xff]
        %v526 = vld [vmem:[#allocation5 + $0x664] sm:$0xff]
        %v527 = vld [vmem:[#allocation5 + $0x66c] sm:$0xff]
        %v528 = vld [vmem:[#allocation5 + $0x674] sm:$0xf]
        %v529 = vld [vmem:[#allocation5 + $0x678] sm:$0xff]
        %v530 = vld [vmem:[#allocation5 + $0x680] sm:$0xff]
        %v531 = vld [vmem:[#allocation5 + $0x688] sm:$0xff]
        %v532 = vld [vmem:[#allocation5 + $0x690] sm:$0xff]
        %v533 = vld [vmem:[#allocation5 + $0x698] sm:$0xf]
        %v534 = vld [vmem:[#allocation5 + $0x69c] sm:$0xff]
        %v535 = vld [vmem:[#allocation5 + $0x6a4] sm:$0xff]
        %v536 = vld [vmem:[#allocation5 + $0x6ac] sm:$0xff]
        %v537 = vld [vmem:[#allocation5 + $0x6b4] sm:$0xff]
        %v538 = vld [vmem:[#allocation5 + $0x6bc] sm:$0xf]
        %v571 = vunpack.c.l.b16 %v267
        %v572 = vunpack.c.h.b16 %v267
        %v573 = vunpack.c.l.b16 %v268
        %v574 = vunpack.c.l.b16 %v269
        %v575 = vunpack.c.h.b16 %v269
        %v576 = vunpack.c.l.b16 %v270
        %v577 = vunpack.c.l.b16 %v271
        %v578 = vunpack.c.h.b16 %v271
        %v579 = vunpack.c.l.b16 %v272
        %v580 = vunpack.c.l.b16 %v273
        %v581 = vunpack.c.h.b16 %v273
        %v582 = vunpack.c.l.b16 %v274
        %v583 = vunpack.c.l.b16 %v275
        %v584 = vunpack.c.h.b16 %v275
        %v585 = vunpack.c.l.b16 %v276
        %v586 = vunpack.c.l.b16 %v277
        %v587 = vunpack.c.h.b16 %v277
        %v588 = vunpack.c.l.b16 %v278
        %v589 = vunpack.c.l.b16 %v279
        %v590 = vunpack.c.h.b16 %v279
        %v591 = vunpack.c.l.b16 %v280
        %v592 = vunpack.c.l.b16 %v281
        %v593 = vunpack.c.h.b16 %v281
        %v594 = vunpack.c.l.b16 %v282
        %v595 = vunpack.c.l.b16 %v283
        %v596 = vunpack.c.h.b16 %v283
        %v597 = vunpack.c.l.b16 %v284
        %v598 = vunpack.c.l.b16 %v285
        %v599 = vunpack.c.h.b16 %v285
        %v600 = vunpack.c.l.b16 %v286
        %v601 = vunpack.c.l.b16 %v287
        %v602 = vunpack.c.h.b16 %v287
        %v603 = vunpack.c.l.b16 %v288
        %v604 = vunpack.c.l.b16 %v289
        %v605 = vunpack.c.h.b16 %v289
        %v606 = vunpack.c.l.b16 %v290
        %v607 = vunpack.c.l.b16 %v291
        %v608 = vunpack.c.h.b16 %v291
        %v609 = vunpack.c.l.b16 %v292
        %v610 = vunpack.c.l.b16 %v293
        %v611 = vunpack.c.h.b16 %v293
        %v612 = vunpack.c.l.b16 %v294
        %v613 = vunpack.c.l.b16 %v295
        %v614 = vunpack.c.h.b16 %v295
        %v615 = vunpack.c.l.b16 %v296
        %v616 = vunpack.c.l.b16 %v297
        %v617 = vunpack.c.h.b16 %v297
        %v618 = vunpack.c.l.b16 %v298
        %v619 = vpack.c.b16 %v574, %v571
        %v620 = vpack.c.b16 %v575, %v572
        %v621 = vpack.c.b16 %v576, %v573
        %v622 = vpack.c.b16 %v580, %v577
        %v623 = vpack.c.b16 %v581, %v578
        %v624 = vpack.c.b16 %v582, %v579
        %v625 = vpack.c.b16 %v586, %v583
        %v626 = vpack.c.b16 %v587, %v584
        %v627 = vpack.c.b16 %v588, %v585
        %v628 = vpack.c.b16 %v592, %v589
        %v629 = vpack.c.b16 %v593, %v590
        %v630 = vpack.c.b16 %v594, %v591
        %v631 = vpack.c.b16 %v598, %v595
        %v632 = vpack.c.b16 %v599, %v596
        %v633 = vpack.c.b16 %v600, %v597
        %v634 = vpack.c.b16 %v604, %v601
        %v635 = vpack.c.b16 %v605, %v602
        %v636 = vpack.c.b16 %v606, %v603
        %v637 = vpack.c.b16 %v610, %v607
        %v638 = vpack.c.b16 %v611, %v608
        %v639 = vpack.c.b16 %v612, %v609
        %v640 = vpack.c.b16 %v616, %v613
        %v641 = vpack.c.b16 %v617, %v614
        %v642 = vpack.c.b16 %v618, %v615
        %v907 = vunpack.c.l.b16 %v299
        %v908 = vunpack.c.h.b16 %v299
        %v909 = vunpack.c.l.b16 %v300
        %v910 = vunpack.c.h.b16 %v300
        %v911 = vunpack.c.l.b16 %v301
        %v912 = vunpack.c.h.b16 %v301
        %v913 = vunpack.c.l.b16 %v302
        %v914 = vunpack.c.h.b16 %v302
        %v915 = vunpack.c.l.b16 %v303
        %v916 = vunpack.c.l.b16 %v304
        %v917 = vunpack.c.h.b16 %v304
        %v918 = vunpack.c.l.b16 %v305
        %v919 = vunpack.c.h.b16 %v305
        %v920 = vunpack.c.l.b16 %v306
        %v921 = vunpack.c.h.b16 %v306
        %v922 = vunpack.c.l.b16 %v307
        %v923 = vunpack.c.h.b16 %v307
        %v924 = vunpack.c.l.b16 %v308
        %v925 = vunpack.c.l.b16 %v309
        %v926 = vunpack.c.h.b16 %v309
        %v927 = vunpack.c.l.b16 %v310
        %v928 = vunpack.c.h.b16 %v310
        %v929 = vunpack.c.l.b16 %v311
        %v930 = vunpack.c.h.b16 %v311
        %v931 = vunpack.c.l.b16 %v312
        %v932 = vunpack.c.h.b16 %v312
        %v933 = vunpack.c.l.b16 %v313
        %v934 = vunpack.c.l.b16 %v314
        %v935 = vunpack.c.h.b16 %v314
        %v936 = vunpack.c.l.b16 %v315
        %v937 = vunpack.c.h.b16 %v315
        %v938 = vunpack.c.l.b16 %v316
        %v939 = vunpack.c.h.b16 %v316
        %v940 = vunpack.c.l.b16 %v317
        %v941 = vunpack.c.h.b16 %v317
        %v942 = vunpack.c.l.b16 %v318
        %v943 = vunpack.c.l.b16 %v319
        %v944 = vunpack.c.h.b16 %v319
        %v945 = vunpack.c.l.b16 %v320
        %v946 = vunpack.c.h.b16 %v320
        %v947 = vunpack.c.l.b16 %v321
        %v948 = vunpack.c.h.b16 %v321
        %v949 = vunpack.c.l.b16 %v322
        %v950 = vunpack.c.h.b16 %v322
        %v951 = vunpack.c.l.b16 %v323
        %v952 = vunpack.c.l.b16 %v324
        %v953 = vunpack.c.h.b16 %v324
        %v954 = vunpack.c.l.b16 %v325
        %v955 = vunpack.c.h.b16 %v325
        %v956 = vunpack.c.l.b16 %v326
        %v957 = vunpack.c.h.b16 %v326
        %v958 = vunpack.c.l.b16 %v327
        %v959 = vunpack.c.h.b16 %v327
        %v960 = vunpack.c.l.b16 %v328
        %v961 = vunpack.c.l.b16 %v329
        %v962 = vunpack.c.h.b16 %v329
        %v963 = vunpack.c.l.b16 %v330
        %v964 = vunpack.c.h.b16 %v330
        %v965 = vunpack.c.l.b16 %v331
        %v966 = vunpack.c.h.b16 %v331
        %v967 = vunpack.c.l.b16 %v332
        %v968 = vunpack.c.h.b16 %v332
        %v969 = vunpack.c.l.b16 %v333
        %v970 = vunpack.c.l.b16 %v334
        %v971 = vunpack.c.h.b16 %v334
        %v972 = vunpack.c.l.b16 %v335
        %v973 = vunpack.c.h.b16 %v335
        %v974 = vunpack.c.l.b16 %v336
        %v975 = vunpack.c.h.b16 %v336
        %v976 = vunpack.c.l.b16 %v337
        %v977 = vunpack.c.h.b16 %v337
        %v978 = vunpack.c.l.b16 %v338
        %v979 = vunpack.c.l.b16 %v339
        %v980 = vunpack.c.h.b16 %v339
        %v981 = vunpack.c.l.b16 %v340
        %v982 = vunpack.c.h.b16 %v340
        %v983 = vunpack.c.l.b16 %v341
        %v984 = vunpack.c.h.b16 %v341
        %v985 = vunpack.c.l.b16 %v342
        %v986 = vunpack.c.h.b16 %v342
        %v987 = vunpack.c.l.b16 %v343
        %v988 = vunpack.c.l.b16 %v344
        %v989 = vunpack.c.h.b16 %v344
        %v990 = vunpack.c.l.b16 %v345
        %v991 = vunpack.c.h.b16 %v345
        %v992 = vunpack.c.l.b16 %v346
        %v993 = vunpack.c.h.b16 %v346
        %v994 = vunpack.c.l.b16 %v347
        %v995 = vunpack.c.h.b16 %v347
        %v996 = vunpack.c.l.b16 %v348
        %v997 = vunpack.c.l.b16 %v349
        %v998 = vunpack.c.h.b16 %v349
        %v999 = vunpack.c.l.b16 %v350
        %v1000 = vunpack.c.h.b16 %v350
        %v1001 = vunpack.c.l.b16 %v351
        %v1002 = vunpack.c.h.b16 %v351
        %v1003 = vunpack.c.l.b16 %v352
        %v1004 = vunpack.c.h.b16 %v352
        %v1005 = vunpack.c.l.b16 %v353
        %v1006 = vunpack.c.l.b16 %v354
        %v1007 = vunpack.c.h.b16 %v354
        %v1008 = vunpack.c.l.b16 %v355
        %v1009 = vunpack.c.h.b16 %v355
        %v1010 = vunpack.c.l.b16 %v356
        %v1011 = vunpack.c.h.b16 %v356
        %v1012 = vunpack.c.l.b16 %v357
        %v1013 = vunpack.c.h.b16 %v357
        %v1014 = vunpack.c.l.b16 %v358
        %v1015 = vunpack.c.l.b16 %v359
        %v1016 = vunpack.c.h.b16 %v359
        %v1017 = vunpack.c.l.b16 %v360
        %v1018 = vunpack.c.h.b16 %v360
        %v1019 = vunpack.c.l.b16 %v361
        %v1020 = vunpack.c.h.b16 %v361
        %v1021 = vunpack.c.l.b16 %v362
        %v1022 = vunpack.c.h.b16 %v362
        %v1023 = vunpack.c.l.b16 %v363
        %v1024 = vunpack.c.l.b16 %v364
        %v1025 = vunpack.c.h.b16 %v364
        %v1026 = vunpack.c.l.b16 %v365
        %v1027 = vunpack.c.h.b16 %v365
        %v1028 = vunpack.c.l.b16 %v366
        %v1029 = vunpack.c.h.b16 %v366
        %v1030 = vunpack.c.l.b16 %v367
        %v1031 = vunpack.c.h.b16 %v367
        %v1032 = vunpack.c.l.b16 %v368
        %v1033 = vunpack.c.l.b16 %v369
        %v1034 = vunpack.c.h.b16 %v369
        %v1035 = vunpack.c.l.b16 %v370
        %v1036 = vunpack.c.h.b16 %v370
        %v1037 = vunpack.c.l.b16 %v371
        %v1038 = vunpack.c.h.b16 %v371
        %v1039 = vunpack.c.l.b16 %v372
        %v1040 = vunpack.c.h.b16 %v372
        %v1041 = vunpack.c.l.b16 %v373
        %v1042 = vunpack.c.l.b16 %v374
        %v1043 = vunpack.c.h.b16 %v374
        %v1044 = vunpack.c.l.b16 %v375
        %v1045 = vunpack.c.h.b16 %v375
        %v1046 = vunpack.c.l.b16 %v376
        %v1047 = vunpack.c.h.b16 %v376
        %v1048 = vunpack.c.l.b16 %v377
        %v1049 = vunpack.c.h.b16 %v377
        %v1050 = vunpack.c.l.b16 %v378
        %v1051 = vunpack.c.l.b16 %v379
        %v1052 = vunpack.c.h.b16 %v379
        %v1053 = vunpack.c.l.b16 %v380
        %v1054 = vunpack.c.h.b16 %v380
        %v1055 = vunpack.c.l.b16 %v381
        %v1056 = vunpack.c.h.b16 %v381
        %v1057 = vunpack.c.l.b16 %v382
        %v1058 = vunpack.c.h.b16 %v382
        %v1059 = vunpack.c.l.b16 %v383
        %v1060 = vunpack.c.l.b16 %v384
        %v1061 = vunpack.c.h.b16 %v384
        %v1062 = vunpack.c.l.b16 %v385
        %v1063 = vunpack.c.h.b16 %v385
        %v1064 = vunpack.c.l.b16 %v386
        %v1065 = vunpack.c.h.b16 %v386
        %v1066 = vunpack.c.l.b16 %v387
        %v1067 = vunpack.c.h.b16 %v387
        %v1068 = vunpack.c.l.b16 %v388
        %v1069 = vunpack.c.l.b16 %v389
        %v1070 = vunpack.c.h.b16 %v389
        %v1071 = vunpack.c.l.b16 %v390
        %v1072 = vunpack.c.h.b16 %v390
        %v1073 = vunpack.c.l.b16 %v391
        %v1074 = vunpack.c.h.b16 %v391
        %v1075 = vunpack.c.l.b16 %v392
        %v1076 = vunpack.c.h.b16 %v392
        %v1077 = vunpack.c.l.b16 %v393
        %v1078 = vunpack.c.l.b16 %v394
        %v1079 = vunpack.c.h.b16 %v394
        %v1080 = vunpack.c.l.b16 %v395
        %v1081 = vunpack.c.h.b16 %v395
        %v1082 = vunpack.c.l.b16 %v396
        %v1083 = vunpack.c.h.b16 %v396
        %v1084 = vunpack.c.l.b16 %v397
        %v1085 = vunpack.c.h.b16 %v397
        %v1086 = vunpack.c.l.b16 %v398
        %v1087 = vunpack.c.l.b16 %v399
        %v1088 = vunpack.c.h.b16 %v399
        %v1089 = vunpack.c.l.b16 %v400
        %v1090 = vunpack.c.h.b16 %v400
        %v1091 = vunpack.c.l.b16 %v401
        %v1092 = vunpack.c.h.b16 %v401
        %v1093 = vunpack.c.l.b16 %v402
        %v1094 = vunpack.c.h.b16 %v402
        %v1095 = vunpack.c.l.b16 %v403
        %v1096 = vunpack.c.l.b16 %v404
        %v1097 = vunpack.c.h.b16 %v404
        %v1098 = vunpack.c.l.b16 %v405
        %v1099 = vunpack.c.h.b16 %v405
        %v1100 = vunpack.c.l.b16 %v406
        %v1101 = vunpack.c.h.b16 %v406
        %v1102 = vunpack.c.l.b16 %v407
        %v1103 = vunpack.c.h.b16 %v407
        %v1104 = vunpack.c.l.b16 %v408
        %v1105 = vunpack.c.l.b16 %v409
        %v1106 = vunpack.c.h.b16 %v409
        %v1107 = vunpack.c.l.b16 %v410
        %v1108 = vunpack.c.h.b16 %v410
        %v1109 = vunpack.c.l.b16 %v411
        %v1110 = vunpack.c.h.b16 %v411
        %v1111 = vunpack.c.l.b16 %v412
        %v1112 = vunpack.c.h.b16 %v412
        %v1113 = vunpack.c.l.b16 %v413
        %v1114 = vunpack.c.l.b16 %v414
        %v1115 = vunpack.c.h.b16 %v414
        %v1116 = vunpack.c.l.b16 %v415
        %v1117 = vunpack.c.h.b16 %v415
        %v1118 = vunpack.c.l.b16 %v416
        %v1119 = vunpack.c.h.b16 %v416
        %v1120 = vunpack.c.l.b16 %v417
        %v1121 = vunpack.c.h.b16 %v417
        %v1122 = vunpack.c.l.b16 %v418
        %v1123 = vunpack.c.l.b16 %v419
        %v1124 = vunpack.c.h.b16 %v419
        %v1125 = vunpack.c.l.b16 %v420
        %v1126 = vunpack.c.h.b16 %v420
        %v1127 = vunpack.c.l.b16 %v421
        %v1128 = vunpack.c.h.b16 %v421
        %v1129 = vunpack.c.l.b16 %v422
        %v1130 = vunpack.c.h.b16 %v422
        %v1131 = vunpack.c.l.b16 %v423
        %v1132 = vunpack.c.l.b16 %v424
        %v1133 = vunpack.c.h.b16 %v424
        %v1134 = vunpack.c.l.b16 %v425
        %v1135 = vunpack.c.h.b16 %v425
        %v1136 = vunpack.c.l.b16 %v426
        %v1137 = vunpack.c.h.b16 %v426
        %v1138 = vunpack.c.l.b16 %v427
        %v1139 = vunpack.c.h.b16 %v427
        %v1140 = vunpack.c.l.b16 %v428
        %v1141 = vunpack.c.l.b16 %v429
        %v1142 = vunpack.c.h.b16 %v429
        %v1143 = vunpack.c.l.b16 %v430
        %v1144 = vunpack.c.h.b16 %v430
        %v1145 = vunpack.c.l.b16 %v431
        %v1146 = vunpack.c.h.b16 %v431
        %v1147 = vunpack.c.l.b16 %v432
        %v1148 = vunpack.c.h.b16 %v432
        %v1149 = vunpack.c.l.b16 %v433
        %v1150 = vunpack.c.l.b16 %v434
        %v1151 = vunpack.c.h.b16 %v434
        %v1152 = vunpack.c.l.b16 %v435
        %v1153 = vunpack.c.h.b16 %v435
        %v1154 = vunpack.c.l.b16 %v436
        %v1155 = vunpack.c.h.b16 %v436
        %v1156 = vunpack.c.l.b16 %v437
        %v1157 = vunpack.c.h.b16 %v437
        %v1158 = vunpack.c.l.b16 %v438
        %v1159 = vunpack.c.l.b16 %v439
        %v1160 = vunpack.c.h.b16 %v439
        %v1161 = vunpack.c.l.b16 %v440
        %v1162 = vunpack.c.h.b16 %v440
        %v1163 = vunpack.c.l.b16 %v441
        %v1164 = vunpack.c.h.b16 %v441
        %v1165 = vunpack.c.l.b16 %v442
        %v1166 = vunpack.c.h.b16 %v442
        %v1167 = vunpack.c.l.b16 %v443
        %v1168 = vunpack.c.l.b16 %v444
        %v1169 = vunpack.c.h.b16 %v444
        %v1170 = vunpack.c.l.b16 %v445
        %v1171 = vunpack.c.h.b16 %v445
        %v1172 = vunpack.c.l.b16 %v446
        %v1173 = vunpack.c.h.b16 %v446
        %v1174 = vunpack.c.l.b16 %v447
        %v1175 = vunpack.c.h.b16 %v447
        %v1176 = vunpack.c.l.b16 %v448
        %v1177 = vunpack.c.l.b16 %v449
        %v1178 = vunpack.c.h.b16 %v449
        %v1179 = vunpack.c.l.b16 %v450
        %v1180 = vunpack.c.h.b16 %v450
        %v1181 = vunpack.c.l.b16 %v451
        %v1182 = vunpack.c.h.b16 %v451
        %v1183 = vunpack.c.l.b16 %v452
        %v1184 = vunpack.c.h.b16 %v452
        %v1185 = vunpack.c.l.b16 %v453
        %v1186 = vunpack.c.l.b16 %v454
        %v1187 = vunpack.c.h.b16 %v454
        %v1188 = vunpack.c.l.b16 %v455
        %v1189 = vunpack.c.h.b16 %v455
        %v1190 = vunpack.c.l.b16 %v456
        %v1191 = vunpack.c.h.b16 %v456
        %v1192 = vunpack.c.l.b16 %v457
        %v1193 = vunpack.c.h.b16 %v457
        %v1194 = vunpack.c.l.b16 %v458
        %v1195 = vunpack.c.l.b16 %v459
        %v1196 = vunpack.c.h.b16 %v459
        %v1197 = vunpack.c.l.b16 %v460
        %v1198 = vunpack.c.h.b16 %v460
        %v1199 = vunpack.c.l.b16 %v461
        %v1200 = vunpack.c.h.b16 %v461
        %v1201 = vunpack.c.l.b16 %v462
        %v1202 = vunpack.c.h.b16 %v462
        %v1203 = vunpack.c.l.b16 %v463
        %v1204 = vunpack.c.l.b16 %v464
        %v1205 = vunpack.c.h.b16 %v464
        %v1206 = vunpack.c.l.b16 %v465
        %v1207 = vunpack.c.h.b16 %v465
        %v1208 = vunpack.c.l.b16 %v466
        %v1209 = vunpack.c.h.b16 %v466
        %v1210 = vunpack.c.l.b16 %v467
        %v1211 = vunpack.c.h.b16 %v467
        %v1212 = vunpack.c.l.b16 %v468
        %v1213 = vunpack.c.l.b16 %v469
        %v1214 = vunpack.c.h.b16 %v469
        %v1215 = vunpack.c.l.b16 %v470
        %v1216 = vunpack.c.h.b16 %v470
        %v1217 = vunpack.c.l.b16 %v471
        %v1218 = vunpack.c.h.b16 %v471
        %v1219 = vunpack.c.l.b16 %v472
        %v1220 = vunpack.c.h.b16 %v472
        %v1221 = vunpack.c.l.b16 %v473
        %v1222 = vunpack.c.l.b16 %v474
        %v1223 = vunpack.c.h.b16 %v474
        %v1224 = vunpack.c.l.b16 %v475
        %v1225 = vunpack.c.h.b16 %v475
        %v1226 = vunpack.c.l.b16 %v476
        %v1227 = vunpack.c.h.b16 %v476
        %v1228 = vunpack.c.l.b16 %v477
        %v1229 = vunpack.c.h.b16 %v477
        %v1230 = vunpack.c.l.b16 %v478
        %v1231 = vunpack.c.l.b16 %v479
        %v1232 = vunpack.c.h.b16 %v479
        %v1233 = vunpack.c.l.b16 %v480
        %v1234 = vunpack.c.h.b16 %v480
        %v1235 = vunpack.c.l.b16 %v481
        %v1236 = vunpack.c.h.b16 %v481
        %v1237 = vunpack.c.l.b16 %v482
        %v1238 = vunpack.c.h.b16 %v482
        %v1239 = vunpack.c.l.b16 %v483
        %v1240 = vunpack.c.l.b16 %v484
        %v1241 = vunpack.c.h.b16 %v484
        %v1242 = vunpack.c.l.b16 %v485
        %v1243 = vunpack.c.h.b16 %v485
        %v1244 = vunpack.c.l.b16 %v486
        %v1245 = vunpack.c.h.b16 %v486
        %v1246 = vunpack.c.l.b16 %v487
        %v1247 = vunpack.c.h.b16 %v487
        %v1248 = vunpack.c.l.b16 %v488
        %v1249 = vunpack.c.l.b16 %v489
        %v1250 = vunpack.c.h.b16 %v489
        %v1251 = vunpack.c.l.b16 %v490
        %v1252 = vunpack.c.h.b16 %v490
        %v1253 = vunpack.c.l.b16 %v491
        %v1254 = vunpack.c.h.b16 %v491
        %v1255 = vunpack.c.l.b16 %v492
        %v1256 = vunpack.c.h.b16 %v492
        %v1257 = vunpack.c.l.b16 %v493
        %v1258 = vunpack.c.l.b16 %v494
        %v1259 = vunpack.c.h.b16 %v494
        %v1260 = vunpack.c.l.b16 %v495
        %v1261 = vunpack.c.h.b16 %v495
        %v1262 = vunpack.c.l.b16 %v496
        %v1263 = vunpack.c.h.b16 %v496
        %v1264 = vunpack.c.l.b16 %v497
        %v1265 = vunpack.c.h.b16 %v497
        %v1266 = vunpack.c.l.b16 %v498
        %v1267 = vunpack.c.l.b16 %v499
        %v1268 = vunpack.c.h.b16 %v499
        %v1269 = vunpack.c.l.b16 %v500
        %v1270 = vunpack.c.h.b16 %v500
        %v1271 = vunpack.c.l.b16 %v501
        %v1272 = vunpack.c.h.b16 %v501
        %v1273 = vunpack.c.l.b16 %v502
        %v1274 = vunpack.c.h.b16 %v502
        %v1275 = vunpack.c.l.b16 %v503
        %v1276 = vunpack.c.l.b16 %v504
        %v1277 = vunpack.c.h.b16 %v504
        %v1278 = vunpack.c.l.b16 %v505
        %v1279 = vunpack.c.h.b16 %v505
        %v1280 = vunpack.c.l.b16 %v506
        %v1281 = vunpack.c.h.b16 %v506
        %v1282 = vunpack.c.l.b16 %v507
        %v1283 = vunpack.c.h.b16 %v507
        %v1284 = vunpack.c.l.b16 %v508
        %v1285 = vunpack.c.l.b16 %v509
        %v1286 = vunpack.c.h.b16 %v509
        %v1287 = vunpack.c.l.b16 %v510
        %v1288 = vunpack.c.h.b16 %v510
        %v1289 = vunpack.c.l.b16 %v511
        %v1290 = vunpack.c.h.b16 %v511
        %v1291 = vunpack.c.l.b16 %v512
        %v1292 = vunpack.c.h.b16 %v512
        %v1293 = vunpack.c.l.b16 %v513
        %v1294 = vunpack.c.l.b16 %v514
        %v1295 = vunpack.c.h.b16 %v514
        %v1296 = vunpack.c.l.b16 %v515
        %v1297 = vunpack.c.h.b16 %v515
        %v1298 = vunpack.c.l.b16 %v516
        %v1299 = vunpack.c.h.b16 %v516
        %v1300 = vunpack.c.l.b16 %v517
        %v1301 = vunpack.c.h.b16 %v517
        %v1302 = vunpack.c.l.b16 %v518
        %v1303 = vunpack.c.l.b16 %v519
        %v1304 = vunpack.c.h.b16 %v519
        %v1305 = vunpack.c.l.b16 %v520
        %v1306 = vunpack.c.h.b16 %v520
        %v1307 = vunpack.c.l.b16 %v521
        %v1308 = vunpack.c.h.b16 %v521
        %v1309 = vunpack.c.l.b16 %v522
        %v1310 = vunpack.c.h.b16 %v522
        %v1311 = vunpack.c.l.b16 %v523
        %v1312 = vunpack.c.l.b16 %v524
        %v1313 = vunpack.c.h.b16 %v524
        %v1314 = vunpack.c.l.b16 %v525
        %v1315 = vunpack.c.h.b16 %v525
        %v1316 = vunpack.c.l.b16 %v526
        %v1317 = vunpack.c.h.b16 %v526
        %v1318 = vunpack.c.l.b16 %v527
        %v1319 = vunpack.c.h.b16 %v527
        %v1320 = vunpack.c.l.b16 %v528
        %v1321 = vunpack.c.l.b16 %v529
        %v1322 = vunpack.c.h.b16 %v529
        %v1323 = vunpack.c.l.b16 %v530
        %v1324 = vunpack.c.h.b16 %v530
        %v1325 = vunpack.c.l.b16 %v531
        %v1326 = vunpack.c.h.b16 %v531
        %v1327 = vunpack.c.l.b16 %v532
        %v1328 = vunpack.c.h.b16 %v532
        %v1329 = vunpack.c.l.b16 %v533
        %v1330 = vunpack.c.l.b16 %v534
        %v1331 = vunpack.c.h.b16 %v534
        %v1332 = vunpack.c.l.b16 %v535
        %v1333 = vunpack.c.h.b16 %v535
        %v1334 = vunpack.c.l.b16 %v536
        %v1335 = vunpack.c.h.b16 %v536
        %v1336 = vunpack.c.l.b16 %v537
        %v1337 = vunpack.c.h.b16 %v537
        %v1338 = vunpack.c.l.b16 %v538
        %v1339 = vpack.c.b16 %v916, %v907
        %v1340 = vpack.c.b16 %v917, %v908
        %v1341 = vpack.c.b16 %v918, %v909
        %v1342 = vpack.c.b16 %v919, %v910
        %v1343 = vpack.c.b16 %v920, %v911
        %v1344 = vpack.c.b16 %v921, %v912
        %v1345 = vpack.c.b16 %v922, %v913
        %v1346 = vpack.c.b16 %v923, %v914
        %v1347 = vpack.c.b16 %v924, %v915
        %v1348 = vpack.c.b16 %v934, %v925
        %v1349 = vpack.c.b16 %v935, %v926
        %v1350 = vpack.c.b16 %v936, %v927
        %v1351 = vpack.c.b16 %v937, %v928
        %v1352 = vpack.c.b16 %v938, %v929
        %v1353 = vpack.c.b16 %v939, %v930
        %v1354 = vpack.c.b16 %v940, %v931
        %v1355 = vpack.c.b16 %v941, %v932
        %v1356 = vpack.c.b16 %v942, %v933
        %v1357 = vpack.c.b16 %v952, %v943
        %v1358 = vpack.c.b16 %v953, %v944
        %v1359 = vpack.c.b16 %v954, %v945
        %v1360 = vpack.c.b16 %v955, %v946
        %v1361 = vpack.c.b16 %v956, %v947
        %v1362 = vpack.c.b16 %v957, %v948
        %v1363 = vpack.c.b16 %v958, %v949
        %v1364 = vpack.c.b16 %v959, %v950
        %v1365 = vpack.c.b16 %v960, %v951
        %v1366 = vpack.c.b16 %v970, %v961
        %v1367 = vpack.c.b16 %v971, %v962
        %v1368 = vpack.c.b16 %v972, %v963
        %v1369 = vpack.c.b16 %v973, %v964
        %v1370 = vpack.c.b16 %v974, %v965
        %v1371 = vpack.c.b16 %v975, %v966
        %v1372 = vpack.c.b16 %v976, %v967
        %v1373 = vpack.c.b16 %v977, %v968
        %v1374 = vpack.c.b16 %v978, %v969
        %v1375 = vpack.c.b16 %v988, %v979
        %v1376 = vpack.c.b16 %v989, %v980
        %v1377 = vpack.c.b16 %v990, %v981
        %v1378 = vpack.c.b16 %v991, %v982
        %v1379 = vpack.c.b16 %v992, %v983
        %v1380 = vpack.c.b16 %v993, %v984
        %v1381 = vpack.c.b16 %v994, %v985
        %v1382 = vpack.c.b16 %v995, %v986
        %v1383 = vpack.c.b16 %v996, %v987
        %v1384 = vpack.c.b16 %v1006, %v997
        %v1385 = vpack.c.b16 %v1007, %v998
        %v1386 = vpack.c.b16 %v1008, %v999
        %v1387 = vpack.c.b16 %v1009, %v1000
        %v1388 = vpack.c.b16 %v1010, %v1001
        %v1389 = vpack.c.b16 %v1011, %v1002
        %v1390 = vpack.c.b16 %v1012, %v1003
        %v1391 = vpack.c.b16 %v1013, %v1004
        %v1392 = vpack.c.b16 %v1014, %v1005
        %v1393 = vpack.c.b16 %v1024, %v1015
        %v1394 = vpack.c.b16 %v1025, %v1016
        %v1395 = vpack.c.b16 %v1026, %v1017
        %v1396 = vpack.c.b16 %v1027, %v1018
        %v1397 = vpack.c.b16 %v1028, %v1019
        %v1398 = vpack.c.b16 %v1029, %v1020
        %v1399 = vpack.c.b16 %v1030, %v1021
        %v1400 = vpack.c.b16 %v1031, %v1022
        %v1401 = vpack.c.b16 %v1032, %v1023
        %v1402 = vpack.c.b16 %v1042, %v1033
        %v1403 = vpack.c.b16 %v1043, %v1034
        %v1404 = vpack.c.b16 %v1044, %v1035
        %v1405 = vpack.c.b16 %v1045, %v1036
        %v1406 = vpack.c.b16 %v1046, %v1037
        %v1407 = vpack.c.b16 %v1047, %v1038
        %v1408 = vpack.c.b16 %v1048, %v1039
        %v1409 = vpack.c.b16 %v1049, %v1040
        %v1410 = vpack.c.b16 %v1050, %v1041
        %v1411 = vpack.c.b16 %v1060, %v1051
        %v1412 = vpack.c.b16 %v1061, %v1052
        %v1413 = vpack.c.b16 %v1062, %v1053
        %v1414 = vpack.c.b16 %v1063, %v1054
        %v1415 = vpack.c.b16 %v1064, %v1055
        %v1416 = vpack.c.b16 %v1065, %v1056
        %v1417 = vpack.c.b16 %v1066, %v1057
        %v1418 = vpack.c.b16 %v1067, %v1058
        %v1419 = vpack.c.b16 %v1068, %v1059
        %v1420 = vpack.c.b16 %v1078, %v1069
        %v1421 = vpack.c.b16 %v1079, %v1070
        %v1422 = vpack.c.b16 %v1080, %v1071
        %v1423 = vpack.c.b16 %v1081, %v1072
        %v1424 = vpack.c.b16 %v1082, %v1073
        %v1425 = vpack.c.b16 %v1083, %v1074
        %v1426 = vpack.c.b16 %v1084, %v1075
        %v1427 = vpack.c.b16 %v1085, %v1076
        %v1428 = vpack.c.b16 %v1086, %v1077
        %v1429 = vpack.c.b16 %v1096, %v1087
        %v1430 = vpack.c.b16 %v1097, %v1088
        %v1431 = vpack.c.b16 %v1098, %v1089
        %v1432 = vpack.c.b16 %v1099, %v1090
        %v1433 = vpack.c.b16 %v1100, %v1091
        %v1434 = vpack.c.b16 %v1101, %v1092
        %v1435 = vpack.c.b16 %v1102, %v1093
        %v1436 = vpack.c.b16 %v1103, %v1094
        %v1437 = vpack.c.b16 %v1104, %v1095
        %v1438 = vpack.c.b16 %v1114, %v1105
        %v1439 = vpack.c.b16 %v1115, %v1106
        %v1440 = vpack.c.b16 %v1116, %v1107
        %v1441 = vpack.c.b16 %v1117, %v1108
        %v1442 = vpack.c.b16 %v1118, %v1109
        %v1443 = vpack.c.b16 %v1119, %v1110
        %v1444 = vpack.c.b16 %v1120, %v1111
        %v1445 = vpack.c.b16 %v1121, %v1112
        %v1446 = vpack.c.b16 %v1122, %v1113
        %v1447 = vpack.c.b16 %v1132, %v1123
        %v1448 = vpack.c.b16 %v1133, %v1124
        %v1449 = vpack.c.b16 %v1134, %v1125
        %v1450 = vpack.c.b16 %v1135, %v1126
        %v1451 = vpack.c.b16 %v1136, %v1127
        %v1452 = vpack.c.b16 %v1137, %v1128
        %v1453 = vpack.c.b16 %v1138, %v1129
        %v1454 = vpack.c.b16 %v1139, %v1130
        %v1455 = vpack.c.b16 %v1140, %v1131
        %v1456 = vpack.c.b16 %v1150, %v1141
        %v1457 = vpack.c.b16 %v1151, %v1142
        %v1458 = vpack.c.b16 %v1152, %v1143
        %v1459 = vpack.c.b16 %v1153, %v1144
        %v1460 = vpack.c.b16 %v1154, %v1145
        %v1461 = vpack.c.b16 %v1155, %v1146
        %v1462 = vpack.c.b16 %v1156, %v1147
        %v1463 = vpack.c.b16 %v1157, %v1148
        %v1464 = vpack.c.b16 %v1158, %v1149
        %v1465 = vpack.c.b16 %v1168, %v1159
        %v1466 = vpack.c.b16 %v1169, %v1160
        %v1467 = vpack.c.b16 %v1170, %v1161
        %v1468 = vpack.c.b16 %v1171, %v1162
        %v1469 = vpack.c.b16 %v1172, %v1163
        %v1470 = vpack.c.b16 %v1173, %v1164
        %v1471 = vpack.c.b16 %v1174, %v1165
        %v1472 = vpack.c.b16 %v1175, %v1166
        %v1473 = vpack.c.b16 %v1176, %v1167
        %v1474 = vpack.c.b16 %v1186, %v1177
        %v1475 = vpack.c.b16 %v1187, %v1178
        %v1476 = vpack.c.b16 %v1188, %v1179
        %v1477 = vpack.c.b16 %v1189, %v1180
        %v1478 = vpack.c.b16 %v1190, %v1181
        %v1479 = vpack.c.b16 %v1191, %v1182
        %v1480 = vpack.c.b16 %v1192, %v1183
        %v1481 = vpack.c.b16 %v1193, %v1184
        %v1482 = vpack.c.b16 %v1194, %v1185
        %v1483 = vpack.c.b16 %v1204, %v1195
        %v1484 = vpack.c.b16 %v1205, %v1196
        %v1485 = vpack.c.b16 %v1206, %v1197
        %v1486 = vpack.c.b16 %v1207, %v1198
        %v1487 = vpack.c.b16 %v1208, %v1199
        %v1488 = vpack.c.b16 %v1209, %v1200
        %v1489 = vpack.c.b16 %v1210, %v1201
        %v1490 = vpack.c.b16 %v1211, %v1202
        %v1491 = vpack.c.b16 %v1212, %v1203
        %v1492 = vpack.c.b16 %v1222, %v1213
        %v1493 = vpack.c.b16 %v1223, %v1214
        %v1494 = vpack.c.b16 %v1224, %v1215
        %v1495 = vpack.c.b16 %v1225, %v1216
        %v1496 = vpack.c.b16 %v1226, %v1217
        %v1497 = vpack.c.b16 %v1227, %v1218
        %v1498 = vpack.c.b16 %v1228, %v1219
        %v1499 = vpack.c.b16 %v1229, %v1220
        %v1500 = vpack.c.b16 %v1230, %v1221
        %v1501 = vpack.c.b16 %v1240, %v1231
        %v1502 = vpack.c.b16 %v1241, %v1232
        %v1503 = vpack.c.b16 %v1242, %v1233
        %v1504 = vpack.c.b16 %v1243, %v1234
        %v1505 = vpack.c.b16 %v1244, %v1235
        %v1506 = vpack.c.b16 %v1245, %v1236
        %v1507 = vpack.c.b16 %v1246, %v1237
        %v1508 = vpack.c.b16 %v1247, %v1238
        %v1509 = vpack.c.b16 %v1248, %v1239
        %v1510 = vpack.c.b16 %v1258, %v1249
        %v1511 = vpack.c.b16 %v1259, %v1250
        %v1512 = vpack.c.b16 %v1260, %v1251
        %v1513 = vpack.c.b16 %v1261, %v1252
        %v1514 = vpack.c.b16 %v1262, %v1253
        %v1515 = vpack.c.b16 %v1263, %v1254
        %v1516 = vpack.c.b16 %v1264, %v1255
        %v1517 = vpack.c.b16 %v1265, %v1256
        %v1518 = vpack.c.b16 %v1266, %v1257
        %v1519 = vpack.c.b16 %v1276, %v1267
        %v1520 = vpack.c.b16 %v1277, %v1268
        %v1521 = vpack.c.b16 %v1278, %v1269
        %v1522 = vpack.c.b16 %v1279, %v1270
        %v1523 = vpack.c.b16 %v1280, %v1271
        %v1524 = vpack.c.b16 %v1281, %v1272
        %v1525 = vpack.c.b16 %v1282, %v1273
        %v1526 = vpack.c.b16 %v1283, %v1274
        %v1527 = vpack.c.b16 %v1284, %v1275
        %v1528 = vpack.c.b16 %v1294, %v1285
        %v1529 = vpack.c.b16 %v1295, %v1286
        %v1530 = vpack.c.b16 %v1296, %v1287
        %v1531 = vpack.c.b16 %v1297, %v1288
        %v1532 = vpack.c.b16 %v1298, %v1289
        %v1533 = vpack.c.b16 %v1299, %v1290
        %v1534 = vpack.c.b16 %v1300, %v1291
        %v1535 = vpack.c.b16 %v1301, %v1292
        %v1536 = vpack.c.b16 %v1302, %v1293
        %v1537 = vpack.c.b16 %v1312, %v1303
        %v1538 = vpack.c.b16 %v1313, %v1304
        %v1539 = vpack.c.b16 %v1314, %v1305
        %v1540 = vpack.c.b16 %v1315, %v1306
        %v1541 = vpack.c.b16 %v1316, %v1307
        %v1542 = vpack.c.b16 %v1317, %v1308
        %v1543 = vpack.c.b16 %v1318, %v1309
        %v1544 = vpack.c.b16 %v1319, %v1310
        %v1545 = vpack.c.b16 %v1320, %v1311
        %v1546 = vpack.c.b16 %v1330, %v1321
        %v1547 = vpack.c.b16 %v1331, %v1322
        %v1548 = vpack.c.b16 %v1332, %v1323
        %v1549 = vpack.c.b16 %v1333, %v1324
        %v1550 = vpack.c.b16 %v1334, %v1325
        %v1551 = vpack.c.b16 %v1335, %v1326
        %v1552 = vpack.c.b16 %v1336, %v1327
        %v1553 = vpack.c.b16 %v1337, %v1328
        %v1554 = vpack.c.b16 %v1338, %v1329
        %1771 = vmatpush.bf16.msra.mxu0 %v1402
        %1772 = vmatpush.bf16.msra.mxu0 %v1393
        %1773 = vmatpush.bf16.msra.mxu0 %v1384
        %1774 = vmatpush.bf16.msra.mxu0 %v1375
        %1775 = vmatpush.bf16.msra.mxu0 %v1366
        %1776 = vmatpush.bf16.msra.mxu0 %v1357
        %1777 = vmatpush.bf16.msra.mxu0 %v1348
        %1778 = vmatpush.bf16.msra.mxu0 %v1339
        %1779 = vmatmul.bf16.gmra.mxu0 %v619
        %v1780 = vpop.f32.mrf.mxu0
        %v1781 = vadd.f32 0.0, %v1780
        %v1782 = vpop.f32.mrf.mxu0
        %v1783 = vadd.f32 0.0, %v1782
        %1784 = vmatmul.bf16.gmra.mxu0 %v622
        %v1785 = vpop.f32.mrf.mxu0
        %v1786 = vadd.f32 0.0, %v1785
        %v1787 = vpop.f32.mrf.mxu0
        %v1788 = vadd.f32 0.0, %v1787
        %1789 = vmatmul.bf16.gmra.mxu0 %v625
        %v1790 = vpop.f32.mrf.mxu0
        %v1791 = vadd.f32 0.0, %v1790
        %v1792 = vpop.f32.mrf.mxu0
        %v1793 = vadd.f32 0.0, %v1792
        %1794 = vmatmul.bf16.gmra.mxu0 %v628
        %v1795 = vpop.f32.mrf.mxu0
        %v1796 = vadd.f32 0.0, %v1795
        %v1797 = vpop.f32.mrf.mxu0
        %v1798 = vadd.f32 0.0, %v1797
        %1799 = vmatmul.bf16.gmra.mxu0 %v631
        %v1800 = vpop.f32.mrf.mxu0
        %v1801 = vadd.f32 0.0, %v1800
        %v1802 = vpop.f32.mrf.mxu0
        %v1803 = vadd.f32 0.0, %v1802
        %1804 = vmatmul.bf16.gmra.mxu0 %v634
        %v1805 = vpop.f32.mrf.mxu0
        %v1806 = vadd.f32 0.0, %v1805
        %v1807 = vpop.f32.mrf.mxu0
        %v1808 = vadd.f32 0.0, %v1807
        %1809 = vmatmul.bf16.gmra.mxu0 %v637
        %v1810 = vpop.f32.mrf.mxu0
        %v1811 = vadd.f32 0.0, %v1810
        %v1812 = vpop.f32.mrf.mxu0
        %v1813 = vadd.f32 0.0, %v1812
        %1814 = vmatmul.bf16.gmra.mxu0 %v640
        %v1815 = vpop.f32.mrf.mxu0
        %v1816 = vadd.f32 0.0, %v1815
        %v1817 = vpop.f32.mrf.mxu0
        %v1818 = vadd.f32 0.0, %v1817
        %1819 = vdwg.mxu0
        %1820 = vmatpush.bf16.msra.mxu0 %v1474
        %1821 = vmatpush.bf16.msra.mxu0 %v1465
        %1822 = vmatpush.bf16.msra.mxu0 %v1456
        %1823 = vmatpush.bf16.msra.mxu0 %v1447
        %1824 = vmatpush.bf16.msra.mxu0 %v1438
        %1825 = vmatpush.bf16.msra.mxu0 %v1429
        %1826 = vmatpush.bf16.msra.mxu0 %v1420
        %1827 = vmatpush.bf16.msra.mxu0 %v1411
        %1828 = vmatmul.bf16.gmra.mxu0 %v620
        %v1829 = vpop.f32.mrf.mxu0
        %v1830 = vadd.f32 %v1781, %v1829
        %v1831 = vpop.f32.mrf.mxu0
        %v1832 = vadd.f32 %v1783, %v1831
        %1833 = vmatmul.bf16.gmra.mxu0 %v623
        %v1834 = vpop.f32.mrf.mxu0
        %v1835 = vadd.f32 %v1786, %v1834
        %v1836 = vpop.f32.mrf.mxu0
        %v1837 = vadd.f32 %v1788, %v1836
        %1838 = vmatmul.bf16.gmra.mxu0 %v626
        %v1839 = vpop.f32.mrf.mxu0
        %v1840 = vadd.f32 %v1791, %v1839
        %v1841 = vpop.f32.mrf.mxu0
        %v1842 = vadd.f32 %v1793, %v1841
        %1843 = vmatmul.bf16.gmra.mxu0 %v629
        %v1844 = vpop.f32.mrf.mxu0
        %v1845 = vadd.f32 %v1796, %v1844
        %v1846 = vpop.f32.mrf.mxu0
        %v1847 = vadd.f32 %v1798, %v1846
        %1848 = vmatmul.bf16.gmra.mxu0 %v632
        %v1849 = vpop.f32.mrf.mxu0
        %v1850 = vadd.f32 %v1801, %v1849
        %v1851 = vpop.f32.mrf.mxu0
        %v1852 = vadd.f32 %v1803, %v1851
        %1853 = vmatmul.bf16.gmra.mxu0 %v635
        %v1854 = vpop.f32.mrf.mxu0
        %v1855 = vadd.f32 %v1806, %v1854
        %v1856 = vpop.f32.mrf.mxu0
        %v1857 = vadd.f32 %v1808, %v1856
        %1858 = vmatmul.bf16.gmra.mxu0 %v638
        %v1859 = vpop.f32.mrf.mxu0
        %v1860 = vadd.f32 %v1811, %v1859
        %v1861 = vpop.f32.mrf.mxu0
        %v1862 = vadd.f32 %v1813, %v1861
        %1863 = vmatmul.bf16.gmra.mxu0 %v641
        %v1864 = vpop.f32.mrf.mxu0
        %v1865 = vadd.f32 %v1816, %v1864
        %v1866 = vpop.f32.mrf.mxu0
        %v1867 = vadd.f32 %v1818, %v1866
        %1868 = vdwg.mxu0
        %1869 = vmatpush.bf16.msra.mxu0 %v1546
        %1870 = vmatpush.bf16.msra.mxu0 %v1537
        %1871 = vmatpush.bf16.msra.mxu0 %v1528
        %1872 = vmatpush.bf16.msra.mxu0 %v1519
        %1873 = vmatpush.bf16.msra.mxu0 %v1510
        %1874 = vmatpush.bf16.msra.mxu0 %v1501
        %1875 = vmatpush.bf16.msra.mxu0 %v1492
        %1876 = vmatpush.bf16.msra.mxu0 %v1483
        %1877 = vmatmul.bf16.gmra.mxu0 %v621
        %v1878 = vpop.f32.mrf.mxu0
        %v1879 = vadd.f32 %v1830, %v1878
        %v1880 = vpop.f32.mrf.mxu0
        %v1881 = vadd.f32 %v1832, %v1880
        %1882 = vmatmul.bf16.gmra.mxu0 %v624
        %v1883 = vpop.f32.mrf.mxu0
        %v1884 = vadd.f32 %v1835, %v1883
        %v1885 = vpop.f32.mrf.mxu0
        %v1886 = vadd.f32 %v1837, %v1885
        %1887 = vmatmul.bf16.gmra.mxu0 %v627
        %v1888 = vpop.f32.mrf.mxu0
        %v1889 = vadd.f32 %v1840, %v1888
        %v1890 = vpop.f32.mrf.mxu0
        %v1891 = vadd.f32 %v1842, %v1890
        %1892 = vmatmul.bf16.gmra.mxu0 %v630
        %v1893 = vpop.f32.mrf.mxu0
        %v1894 = vadd.f32 %v1845, %v1893
        %v1895 = vpop.f32.mrf.mxu0
        %v1896 = vadd.f32 %v1847, %v1895
        %1897 = vmatmul.bf16.gmra.mxu0 %v633
        %v1898 = vpop.f32.mrf.mxu0
        %v1899 = vadd.f32 %v1850, %v1898
        %v1900 = vpop.f32.mrf.mxu0
        %v1901 = vadd.f32 %v1852, %v1900
        %1902 = vmatmul.bf16.gmra.mxu0 %v636
        %v1903 = vpop.f32.mrf.mxu0
        %v1904 = vadd.f32 %v1855, %v1903
        %v1905 = vpop.f32.mrf.mxu0
        %v1906 = vadd.f32 %v1857, %v1905
        %1907 = vmatmul.bf16.gmra.mxu0 %v639
        %v1908 = vpop.f32.mrf.mxu0
        %v1909 = vadd.f32 %v1860, %v1908
        %v1910 = vpop.f32.mrf.mxu0
        %v1911 = vadd.f32 %v1862, %v1910
        %1912 = vmatmul.bf16.gmra.mxu0 %v642
        %v1913 = vpop.f32.mrf.mxu0
        %v1914 = vadd.f32 %v1865, %v1913
        %v1915 = vpop.f32.mrf.mxu0
        %v1916 = vadd.f32 %v1867, %v1915
        %1917 = vdwg.mxu0
        %1918 = vmatpush.bf16.msra.mxu0 %v1403
        %1919 = vmatpush.bf16.msra.mxu0 %v1394
        %1920 = vmatpush.bf16.msra.mxu0 %v1385
        %1921 = vmatpush.bf16.msra.mxu0 %v1376
        %1922 = vmatpush.bf16.msra.mxu0 %v1367
        %1923 = vmatpush.bf16.msra.mxu0 %v1358
        %1924 = vmatpush.bf16.msra.mxu0 %v1349
        %1925 = vmatpush.bf16.msra.mxu0 %v1340
        %1926 = vmatmul.bf16.gmra.mxu0 %v619
        %v1927 = vpop.f32.mrf.mxu0
        %v1928 = vadd.f32 0.0, %v1927
        %v1929 = vpop.f32.mrf.mxu0
        %v1930 = vadd.f32 0.0, %v1929
        %1931 = vmatmul.bf16.gmra.mxu0 %v622
        %v1932 = vpop.f32.mrf.mxu0
        %v1933 = vadd.f32 0.0, %v1932
        %v1934 = vpop.f32.mrf.mxu0
        %v1935 = vadd.f32 0.0, %v1934
        %1936 = vmatmul.bf16.gmra.mxu0 %v625
        %v1937 = vpop.f32.mrf.mxu0
        %v1938 = vadd.f32 0.0, %v1937
        %v1939 = vpop.f32.mrf.mxu0
        %v1940 = vadd.f32 0.0, %v1939
        %1941 = vmatmul.bf16.gmra.mxu0 %v628
        %v1942 = vpop.f32.mrf.mxu0
        %v1943 = vadd.f32 0.0, %v1942
        %v1944 = vpop.f32.mrf.mxu0
        %v1945 = vadd.f32 0.0, %v1944
        %1946 = vmatmul.bf16.gmra.mxu0 %v631
        %v1947 = vpop.f32.mrf.mxu0
        %v1948 = vadd.f32 0.0, %v1947
        %v1949 = vpop.f32.mrf.mxu0
        %v1950 = vadd.f32 0.0, %v1949
        %1951 = vmatmul.bf16.gmra.mxu0 %v634
        %v1952 = vpop.f32.mrf.mxu0
        %v1953 = vadd.f32 0.0, %v1952
        %v1954 = vpop.f32.mrf.mxu0
        %v1955 = vadd.f32 0.0, %v1954
        %1956 = vmatmul.bf16.gmra.mxu0 %v637
        %v1957 = vpop.f32.mrf.mxu0
        %v1958 = vadd.f32 0.0, %v1957
        %v1959 = vpop.f32.mrf.mxu0
        %v1960 = vadd.f32 0.0, %v1959
        %1961 = vmatmul.bf16.gmra.mxu0 %v640
        %v1962 = vpop.f32.mrf.mxu0
        %v1963 = vadd.f32 0.0, %v1962
        %v1964 = vpop.f32.mrf.mxu0
        %v1965 = vadd.f32 0.0, %v1964
        %1966 = vdwg.mxu0
        %1967 = vmatpush.bf16.msra.mxu0 %v1475
        %1968 = vmatpush.bf16.msra.mxu0 %v1466
        %1969 = vmatpush.bf16.msra.mxu0 %v1457
        %1970 = vmatpush.bf16.msra.mxu0 %v1448
        %1971 = vmatpush.bf16.msra.mxu0 %v1439
        %1972 = vmatpush.bf16.msra.mxu0 %v1430
        %1973 = vmatpush.bf16.msra.mxu0 %v1421
        %1974 = vmatpush.bf16.msra.mxu0 %v1412
        %1975 = vmatmul.bf16.gmra.mxu0 %v620
        %v1976 = vpop.f32.mrf.mxu0
        %v1977 = vadd.f32 %v1928, %v1976
        %v1978 = vpop.f32.mrf.mxu0
        %v1979 = vadd.f32 %v1930, %v1978
        %1980 = vmatmul.bf16.gmra.mxu0 %v623
        %v1981 = vpop.f32.mrf.mxu0
        %v1982 = vadd.f32 %v1933, %v1981
        %v1983 = vpop.f32.mrf.mxu0
        %v1984 = vadd.f32 %v1935, %v1983
        %1985 = vmatmul.bf16.gmra.mxu0 %v626
        %v1986 = vpop.f32.mrf.mxu0
        %v1987 = vadd.f32 %v1938, %v1986
        %v1988 = vpop.f32.mrf.mxu0
        %v1989 = vadd.f32 %v1940, %v1988
        %1990 = vmatmul.bf16.gmra.mxu0 %v629
        %v1991 = vpop.f32.mrf.mxu0
        %v1992 = vadd.f32 %v1943, %v1991
        %v1993 = vpop.f32.mrf.mxu0
        %v1994 = vadd.f32 %v1945, %v1993
        %1995 = vmatmul.bf16.gmra.mxu0 %v632
        %v1996 = vpop.f32.mrf.mxu0
        %v1997 = vadd.f32 %v1948, %v1996
        %v1998 = vpop.f32.mrf.mxu0
        %v1999 = vadd.f32 %v1950, %v1998
        %2000 = vmatmul.bf16.gmra.mxu0 %v635
        %v2001 = vpop.f32.mrf.mxu0
        %v2002 = vadd.f32 %v1953, %v2001
        %v2003 = vpop.f32.mrf.mxu0
        %v2004 = vadd.f32 %v1955, %v2003
        %2005 = vmatmul.bf16.gmra.mxu0 %v638
        %v2006 = vpop.f32.mrf.mxu0
        %v2007 = vadd.f32 %v1958, %v2006
        %v2008 = vpop.f32.mrf.mxu0
        %v2009 = vadd.f32 %v1960, %v2008
        %2010 = vmatmul.bf16.gmra.mxu0 %v641
        %v2011 = vpop.f32.mrf.mxu0
        %v2012 = vadd.f32 %v1963, %v2011
        %v2013 = vpop.f32.mrf.mxu0
        %v2014 = vadd.f32 %v1965, %v2013
        %2015 = vdwg.mxu0
        %2016 = vmatpush.bf16.msra.mxu0 %v1547
        %2017 = vmatpush.bf16.msra.mxu0 %v1538
        %2018 = vmatpush.bf16.msra.mxu0 %v1529
        %2019 = vmatpush.bf16.msra.mxu0 %v1520
        %2020 = vmatpush.bf16.msra.mxu0 %v1511
        %2021 = vmatpush.bf16.msra.mxu0 %v1502
        %2022 = vmatpush.bf16.msra.mxu0 %v1493
        %2023 = vmatpush.bf16.msra.mxu0 %v1484
        %2024 = vmatmul.bf16.gmra.mxu0 %v621
        %v2025 = vpop.f32.mrf.mxu0
        %v2026 = vadd.f32 %v1977, %v2025
        %v2027 = vpop.f32.mrf.mxu0
        %v2028 = vadd.f32 %v1979, %v2027
        %2029 = vmatmul.bf16.gmra.mxu0 %v624
        %v2030 = vpop.f32.mrf.mxu0
        %v2031 = vadd.f32 %v1982, %v2030
        %v2032 = vpop.f32.mrf.mxu0
        %v2033 = vadd.f32 %v1984, %v2032
        %2034 = vmatmul.bf16.gmra.mxu0 %v627
        %v2035 = vpop.f32.mrf.mxu0
        %v2036 = vadd.f32 %v1987, %v2035
        %v2037 = vpop.f32.mrf.mxu0
        %v2038 = vadd.f32 %v1989, %v2037
        %2039 = vmatmul.bf16.gmra.mxu0 %v630
        %v2040 = vpop.f32.mrf.mxu0
        %v2041 = vadd.f32 %v1992, %v2040
        %v2042 = vpop.f32.mrf.mxu0
        %v2043 = vadd.f32 %v1994, %v2042
        %2044 = vmatmul.bf16.gmra.mxu0 %v633
        %v2045 = vpop.f32.mrf.mxu0
        %v2046 = vadd.f32 %v1997, %v2045
        %v2047 = vpop.f32.mrf.mxu0
        %v2048 = vadd.f32 %v1999, %v2047
        %2049 = vmatmul.bf16.gmra.mxu0 %v636
        %v2050 = vpop.f32.mrf.mxu0
        %v2051 = vadd.f32 %v2002, %v2050
        %v2052 = vpop.f32.mrf.mxu0
        %v2053 = vadd.f32 %v2004, %v2052
        %2054 = vmatmul.bf16.gmra.mxu0 %v639
        %v2055 = vpop.f32.mrf.mxu0
        %v2056 = vadd.f32 %v2007, %v2055
        %v2057 = vpop.f32.mrf.mxu0
        %v2058 = vadd.f32 %v2009, %v2057
        %2059 = vmatmul.bf16.gmra.mxu0 %v642
        %v2060 = vpop.f32.mrf.mxu0
        %v2061 = vadd.f32 %v2012, %v2060
        %v2062 = vpop.f32.mrf.mxu0
        %v2063 = vadd.f32 %v2014, %v2062
        %2064 = vdwg.mxu0
        %2065 = vmatpush.bf16.msra.mxu0 %v1404
        %2066 = vmatpush.bf16.msra.mxu0 %v1395
        %2067 = vmatpush.bf16.msra.mxu0 %v1386
        %2068 = vmatpush.bf16.msra.mxu0 %v1377
        %2069 = vmatpush.bf16.msra.mxu0 %v1368
        %2070 = vmatpush.bf16.msra.mxu0 %v1359
        %2071 = vmatpush.bf16.msra.mxu0 %v1350
        %2072 = vmatpush.bf16.msra.mxu0 %v1341
        %2073 = vmatmul.bf16.gmra.mxu0 %v619
        %v2074 = vpop.f32.mrf.mxu0
        %v2075 = vadd.f32 0.0, %v2074
        %v2076 = vpop.f32.mrf.mxu0
        %v2077 = vadd.f32 0.0, %v2076
        %2078 = vmatmul.bf16.gmra.mxu0 %v622
        %v2079 = vpop.f32.mrf.mxu0
        %v2080 = vadd.f32 0.0, %v2079
        %v2081 = vpop.f32.mrf.mxu0
        %v2082 = vadd.f32 0.0, %v2081
        %2083 = vmatmul.bf16.gmra.mxu0 %v625
        %v2084 = vpop.f32.mrf.mxu0
        %v2085 = vadd.f32 0.0, %v2084
        %v2086 = vpop.f32.mrf.mxu0
        %v2087 = vadd.f32 0.0, %v2086
        %2088 = vmatmul.bf16.gmra.mxu0 %v628
        %v2089 = vpop.f32.mrf.mxu0
        %v2090 = vadd.f32 0.0, %v2089
        %v2091 = vpop.f32.mrf.mxu0
        %v2092 = vadd.f32 0.0, %v2091
        %2093 = vmatmul.bf16.gmra.mxu0 %v631
        %v2094 = vpop.f32.mrf.mxu0
        %v2095 = vadd.f32 0.0, %v2094
        %v2096 = vpop.f32.mrf.mxu0
        %v2097 = vadd.f32 0.0, %v2096
        %2098 = vmatmul.bf16.gmra.mxu0 %v634
        %v2099 = vpop.f32.mrf.mxu0
        %v2100 = vadd.f32 0.0, %v2099
        %v2101 = vpop.f32.mrf.mxu0
        %v2102 = vadd.f32 0.0, %v2101
        %2103 = vmatmul.bf16.gmra.mxu0 %v637
        %v2104 = vpop.f32.mrf.mxu0
        %v2105 = vadd.f32 0.0, %v2104
        %v2106 = vpop.f32.mrf.mxu0
        %v2107 = vadd.f32 0.0, %v2106
        %2108 = vmatmul.bf16.gmra.mxu0 %v640
        %v2109 = vpop.f32.mrf.mxu0
        %v2110 = vadd.f32 0.0, %v2109
        %v2111 = vpop.f32.mrf.mxu0
        %v2112 = vadd.f32 0.0, %v2111
        %2113 = vdwg.mxu0
        %2114 = vmatpush.bf16.msra.mxu0 %v1476
        %2115 = vmatpush.bf16.msra.mxu0 %v1467
        %2116 = vmatpush.bf16.msra.mxu0 %v1458
        %2117 = vmatpush.bf16.msra.mxu0 %v1449
        %2118 = vmatpush.bf16.msra.mxu0 %v1440
        %2119 = vmatpush.bf16.msra.mxu0 %v1431
        %2120 = vmatpush.bf16.msra.mxu0 %v1422
        %2121 = vmatpush.bf16.msra.mxu0 %v1413
        %2122 = vmatmul.bf16.gmra.mxu0 %v620
        %v2123 = vpop.f32.mrf.mxu0
        %v2124 = vadd.f32 %v2075, %v2123
        %v2125 = vpop.f32.mrf.mxu0
        %v2126 = vadd.f32 %v2077, %v2125
        %2127 = vmatmul.bf16.gmra.mxu0 %v623
        %v2128 = vpop.f32.mrf.mxu0
        %v2129 = vadd.f32 %v2080, %v2128
        %v2130 = vpop.f32.mrf.mxu0
        %v2131 = vadd.f32 %v2082, %v2130
        %2132 = vmatmul.bf16.gmra.mxu0 %v626
        %v2133 = vpop.f32.mrf.mxu0
        %v2134 = vadd.f32 %v2085, %v2133
        %v2135 = vpop.f32.mrf.mxu0
        %v2136 = vadd.f32 %v2087, %v2135
        %2137 = vmatmul.bf16.gmra.mxu0 %v629
        %v2138 = vpop.f32.mrf.mxu0
        %v2139 = vadd.f32 %v2090, %v2138
        %v2140 = vpop.f32.mrf.mxu0
        %v2141 = vadd.f32 %v2092, %v2140
        %2142 = vmatmul.bf16.gmra.mxu0 %v632
        %v2143 = vpop.f32.mrf.mxu0
        %v2144 = vadd.f32 %v2095, %v2143
        %v2145 = vpop.f32.mrf.mxu0
        %v2146 = vadd.f32 %v2097, %v2145
        %2147 = vmatmul.bf16.gmra.mxu0 %v635
        %v2148 = vpop.f32.mrf.mxu0
        %v2149 = vadd.f32 %v2100, %v2148
        %v2150 = vpop.f32.mrf.mxu0
        %v2151 = vadd.f32 %v2102, %v2150
        %2152 = vmatmul.bf16.gmra.mxu0 %v638
        %v2153 = vpop.f32.mrf.mxu0
        %v2154 = vadd.f32 %v2105, %v2153
        %v2155 = vpop.f32.mrf.mxu0
        %v2156 = vadd.f32 %v2107, %v2155
        %2157 = vmatmul.bf16.gmra.mxu0 %v641
        %v2158 = vpop.f32.mrf.mxu0
        %v2159 = vadd.f32 %v2110, %v2158
        %v2160 = vpop.f32.mrf.mxu0
        %v2161 = vadd.f32 %v2112, %v2160
        %2162 = vdwg.mxu0
        %2163 = vmatpush.bf16.msra.mxu0 %v1548
        %2164 = vmatpush.bf16.msra.mxu0 %v1539
        %2165 = vmatpush.bf16.msra.mxu0 %v1530
        %2166 = vmatpush.bf16.msra.mxu0 %v1521
        %2167 = vmatpush.bf16.msra.mxu0 %v1512
        %2168 = vmatpush.bf16.msra.mxu0 %v1503
        %2169 = vmatpush.bf16.msra.mxu0 %v1494
        %2170 = vmatpush.bf16.msra.mxu0 %v1485
        %2171 = vmatmul.bf16.gmra.mxu0 %v621
        %v2172 = vpop.f32.mrf.mxu0
        %v2173 = vadd.f32 %v2124, %v2172
        %v2174 = vpop.f32.mrf.mxu0
        %v2175 = vadd.f32 %v2126, %v2174
        %2176 = vmatmul.bf16.gmra.mxu0 %v624
        %v2177 = vpop.f32.mrf.mxu0
        %v2178 = vadd.f32 %v2129, %v2177
        %v2179 = vpop.f32.mrf.mxu0
        %v2180 = vadd.f32 %v2131, %v2179
        %2181 = vmatmul.bf16.gmra.mxu0 %v627
        %v2182 = vpop.f32.mrf.mxu0
        %v2183 = vadd.f32 %v2134, %v2182
        %v2184 = vpop.f32.mrf.mxu0
        %v2185 = vadd.f32 %v2136, %v2184
        %2186 = vmatmul.bf16.gmra.mxu0 %v630
        %v2187 = vpop.f32.mrf.mxu0
        %v2188 = vadd.f32 %v2139, %v2187
        %v2189 = vpop.f32.mrf.mxu0
        %v2190 = vadd.f32 %v2141, %v2189
        %2191 = vmatmul.bf16.gmra.mxu0 %v633
        %v2192 = vpop.f32.mrf.mxu0
        %v2193 = vadd.f32 %v2144, %v2192
        %v2194 = vpop.f32.mrf.mxu0
        %v2195 = vadd.f32 %v2146, %v2194
        %2196 = vmatmul.bf16.gmra.mxu0 %v636
        %v2197 = vpop.f32.mrf.mxu0
        %v2198 = vadd.f32 %v2149, %v2197
        %v2199 = vpop.f32.mrf.mxu0
        %v2200 = vadd.f32 %v2151, %v2199
        %2201 = vmatmul.bf16.gmra.mxu0 %v639
        %v2202 = vpop.f32.mrf.mxu0
        %v2203 = vadd.f32 %v2154, %v2202
        %v2204 = vpop.f32.mrf.mxu0
        %v2205 = vadd.f32 %v2156, %v2204
        %2206 = vmatmul.bf16.gmra.mxu0 %v642
        %v2207 = vpop.f32.mrf.mxu0
        %v2208 = vadd.f32 %v2159, %v2207
        %v2209 = vpop.f32.mrf.mxu0
        %v2210 = vadd.f32 %v2161, %v2209
        %2211 = vdwg.mxu0
        %2212 = vmatpush.bf16.msra.mxu0 %v1405
        %2213 = vmatpush.bf16.msra.mxu0 %v1396
        %2214 = vmatpush.bf16.msra.mxu0 %v1387
        %2215 = vmatpush.bf16.msra.mxu0 %v1378
        %2216 = vmatpush.bf16.msra.mxu0 %v1369
        %2217 = vmatpush.bf16.msra.mxu0 %v1360
        %2218 = vmatpush.bf16.msra.mxu0 %v1351
        %2219 = vmatpush.bf16.msra.mxu0 %v1342
        %2220 = vmatmul.bf16.gmra.mxu0 %v619
        %v2221 = vpop.f32.mrf.mxu0
        %v2222 = vadd.f32 0.0, %v2221
        %v2223 = vpop.f32.mrf.mxu0
        %v2224 = vadd.f32 0.0, %v2223
        %2225 = vmatmul.bf16.gmra.mxu0 %v622
        %v2226 = vpop.f32.mrf.mxu0
        %v2227 = vadd.f32 0.0, %v2226
        %v2228 = vpop.f32.mrf.mxu0
        %v2229 = vadd.f32 0.0, %v2228
        %2230 = vmatmul.bf16.gmra.mxu0 %v625
        %v2231 = vpop.f32.mrf.mxu0
        %v2232 = vadd.f32 0.0, %v2231
        %v2233 = vpop.f32.mrf.mxu0
        %v2234 = vadd.f32 0.0, %v2233
        %2235 = vmatmul.bf16.gmra.mxu0 %v628
        %v2236 = vpop.f32.mrf.mxu0
        %v2237 = vadd.f32 0.0, %v2236
        %v2238 = vpop.f32.mrf.mxu0
        %v2239 = vadd.f32 0.0, %v2238
        %2240 = vmatmul.bf16.gmra.mxu0 %v631
        %v2241 = vpop.f32.mrf.mxu0
        %v2242 = vadd.f32 0.0, %v2241
        %v2243 = vpop.f32.mrf.mxu0
        %v2244 = vadd.f32 0.0, %v2243
        %2245 = vmatmul.bf16.gmra.mxu0 %v634
        %v2246 = vpop.f32.mrf.mxu0
        %v2247 = vadd.f32 0.0, %v2246
        %v2248 = vpop.f32.mrf.mxu0
        %v2249 = vadd.f32 0.0, %v2248
        %2250 = vmatmul.bf16.gmra.mxu0 %v637
        %v2251 = vpop.f32.mrf.mxu0
        %v2252 = vadd.f32 0.0, %v2251
        %v2253 = vpop.f32.mrf.mxu0
        %v2254 = vadd.f32 0.0, %v2253
        %2255 = vmatmul.bf16.gmra.mxu0 %v640
        %v2256 = vpop.f32.mrf.mxu0
        %v2257 = vadd.f32 0.0, %v2256
        %v2258 = vpop.f32.mrf.mxu0
        %v2259 = vadd.f32 0.0, %v2258
        %2260 = vdwg.mxu0
        %2261 = vmatpush.bf16.msra.mxu0 %v1477
        %2262 = vmatpush.bf16.msra.mxu0 %v1468
        %2263 = vmatpush.bf16.msra.mxu0 %v1459
        %2264 = vmatpush.bf16.msra.mxu0 %v1450
        %2265 = vmatpush.bf16.msra.mxu0 %v1441
        %2266 = vmatpush.bf16.msra.mxu0 %v1432
        %2267 = vmatpush.bf16.msra.mxu0 %v1423
        %2268 = vmatpush.bf16.msra.mxu0 %v1414
        %2269 = vmatmul.bf16.gmra.mxu0 %v620
        %v2270 = vpop.f32.mrf.mxu0
        %v2271 = vadd.f32 %v2222, %v2270
        %v2272 = vpop.f32.mrf.mxu0
        %v2273 = vadd.f32 %v2224, %v2272
        %2274 = vmatmul.bf16.gmra.mxu0 %v623
        %v2275 = vpop.f32.mrf.mxu0
        %v2276 = vadd.f32 %v2227, %v2275
        %v2277 = vpop.f32.mrf.mxu0
        %v2278 = vadd.f32 %v2229, %v2277
        %2279 = vmatmul.bf16.gmra.mxu0 %v626
        %v2280 = vpop.f32.mrf.mxu0
        %v2281 = vadd.f32 %v2232, %v2280
        %v2282 = vpop.f32.mrf.mxu0
        %v2283 = vadd.f32 %v2234, %v2282
        %2284 = vmatmul.bf16.gmra.mxu0 %v629
        %v2285 = vpop.f32.mrf.mxu0
        %v2286 = vadd.f32 %v2237, %v2285
        %v2287 = vpop.f32.mrf.mxu0
        %v2288 = vadd.f32 %v2239, %v2287
        %2289 = vmatmul.bf16.gmra.mxu0 %v632
        %v2290 = vpop.f32.mrf.mxu0
        %v2291 = vadd.f32 %v2242, %v2290
        %v2292 = vpop.f32.mrf.mxu0
        %v2293 = vadd.f32 %v2244, %v2292
        %2294 = vmatmul.bf16.gmra.mxu0 %v635
        %v2295 = vpop.f32.mrf.mxu0
        %v2296 = vadd.f32 %v2247, %v2295
        %v2297 = vpop.f32.mrf.mxu0
        %v2298 = vadd.f32 %v2249, %v2297
        %2299 = vmatmul.bf16.gmra.mxu0 %v638
        %v2300 = vpop.f32.mrf.mxu0
        %v2301 = vadd.f32 %v2252, %v2300
        %v2302 = vpop.f32.mrf.mxu0
        %v2303 = vadd.f32 %v2254, %v2302
        %2304 = vmatmul.bf16.gmra.mxu0 %v641
        %v2305 = vpop.f32.mrf.mxu0
        %v2306 = vadd.f32 %v2257, %v2305
        %v2307 = vpop.f32.mrf.mxu0
        %v2308 = vadd.f32 %v2259, %v2307
        %2309 = vdwg.mxu0
        %2310 = vmatpush.bf16.msra.mxu0 %v1549
        %2311 = vmatpush.bf16.msra.mxu0 %v1540
        %2312 = vmatpush.bf16.msra.mxu0 %v1531
        %2313 = vmatpush.bf16.msra.mxu0 %v1522
        %2314 = vmatpush.bf16.msra.mxu0 %v1513
        %2315 = vmatpush.bf16.msra.mxu0 %v1504
        %2316 = vmatpush.bf16.msra.mxu0 %v1495
        %2317 = vmatpush.bf16.msra.mxu0 %v1486
        %2318 = vmatmul.bf16.gmra.mxu0 %v621
        %v2319 = vpop.f32.mrf.mxu0
        %v2320 = vadd.f32 %v2271, %v2319
        %v2321 = vpop.f32.mrf.mxu0
        %v2322 = vadd.f32 %v2273, %v2321
        %2323 = vmatmul.bf16.gmra.mxu0 %v624
        %v2324 = vpop.f32.mrf.mxu0
        %v2325 = vadd.f32 %v2276, %v2324
        %v2326 = vpop.f32.mrf.mxu0
        %v2327 = vadd.f32 %v2278, %v2326
        %2328 = vmatmul.bf16.gmra.mxu0 %v627
        %v2329 = vpop.f32.mrf.mxu0
        %v2330 = vadd.f32 %v2281, %v2329
        %v2331 = vpop.f32.mrf.mxu0
        %v2332 = vadd.f32 %v2283, %v2331
        %2333 = vmatmul.bf16.gmra.mxu0 %v630
        %v2334 = vpop.f32.mrf.mxu0
        %v2335 = vadd.f32 %v2286, %v2334
        %v2336 = vpop.f32.mrf.mxu0
        %v2337 = vadd.f32 %v2288, %v2336
        %2338 = vmatmul.bf16.gmra.mxu0 %v633
        %v2339 = vpop.f32.mrf.mxu0
        %v2340 = vadd.f32 %v2291, %v2339
        %v2341 = vpop.f32.mrf.mxu0
        %v2342 = vadd.f32 %v2293, %v2341
        %2343 = vmatmul.bf16.gmra.mxu0 %v636
        %v2344 = vpop.f32.mrf.mxu0
        %v2345 = vadd.f32 %v2296, %v2344
        %v2346 = vpop.f32.mrf.mxu0
        %v2347 = vadd.f32 %v2298, %v2346
        %2348 = vmatmul.bf16.gmra.mxu0 %v639
        %v2349 = vpop.f32.mrf.mxu0
        %v2350 = vadd.f32 %v2301, %v2349
        %v2351 = vpop.f32.mrf.mxu0
        %v2352 = vadd.f32 %v2303, %v2351
        %2353 = vmatmul.bf16.gmra.mxu0 %v642
        %v2354 = vpop.f32.mrf.mxu0
        %v2355 = vadd.f32 %v2306, %v2354
        %v2356 = vpop.f32.mrf.mxu0
        %v2357 = vadd.f32 %v2308, %v2356
        %2358 = vdwg.mxu0
        %2359 = vmatpush.bf16.msra.mxu0 %v1406
        %2360 = vmatpush.bf16.msra.mxu0 %v1397
        %2361 = vmatpush.bf16.msra.mxu0 %v1388
        %2362 = vmatpush.bf16.msra.mxu0 %v1379
        %2363 = vmatpush.bf16.msra.mxu0 %v1370
        %2364 = vmatpush.bf16.msra.mxu0 %v1361
        %2365 = vmatpush.bf16.msra.mxu0 %v1352
        %2366 = vmatpush.bf16.msra.mxu0 %v1343
        %2367 = vmatmul.bf16.gmra.mxu0 %v619
        %v2368 = vpop.f32.mrf.mxu0
        %v2369 = vadd.f32 0.0, %v2368
        %v2370 = vpop.f32.mrf.mxu0
        %v2371 = vadd.f32 0.0, %v2370
        %2372 = vmatmul.bf16.gmra.mxu0 %v622
        %v2373 = vpop.f32.mrf.mxu0
        %v2374 = vadd.f32 0.0, %v2373
        %v2375 = vpop.f32.mrf.mxu0
        %v2376 = vadd.f32 0.0, %v2375
        %2377 = vmatmul.bf16.gmra.mxu0 %v625
        %v2378 = vpop.f32.mrf.mxu0
        %v2379 = vadd.f32 0.0, %v2378
        %v2380 = vpop.f32.mrf.mxu0
        %v2381 = vadd.f32 0.0, %v2380
        %2382 = vmatmul.bf16.gmra.mxu0 %v628
        %v2383 = vpop.f32.mrf.mxu0
        %v2384 = vadd.f32 0.0, %v2383
        %v2385 = vpop.f32.mrf.mxu0
        %v2386 = vadd.f32 0.0, %v2385
        %2387 = vmatmul.bf16.gmra.mxu0 %v631
        %v2388 = vpop.f32.mrf.mxu0
        %v2389 = vadd.f32 0.0, %v2388
        %v2390 = vpop.f32.mrf.mxu0
        %v2391 = vadd.f32 0.0, %v2390
        %2392 = vmatmul.bf16.gmra.mxu0 %v634
        %v2393 = vpop.f32.mrf.mxu0
        %v2394 = vadd.f32 0.0, %v2393
        %v2395 = vpop.f32.mrf.mxu0
        %v2396 = vadd.f32 0.0, %v2395
        %2397 = vmatmul.bf16.gmra.mxu0 %v637
        %v2398 = vpop.f32.mrf.mxu0
        %v2399 = vadd.f32 0.0, %v2398
        %v2400 = vpop.f32.mrf.mxu0
        %v2401 = vadd.f32 0.0, %v2400
        %2402 = vmatmul.bf16.gmra.mxu0 %v640
        %v2403 = vpop.f32.mrf.mxu0
        %v2404 = vadd.f32 0.0, %v2403
        %v2405 = vpop.f32.mrf.mxu0
        %v2406 = vadd.f32 0.0, %v2405
        %2407 = vdwg.mxu0
        %2408 = vmatpush.bf16.msra.mxu0 %v1478
        %2409 = vmatpush.bf16.msra.mxu0 %v1469
        %2410 = vmatpush.bf16.msra.mxu0 %v1460
        %2411 = vmatpush.bf16.msra.mxu0 %v1451
        %2412 = vmatpush.bf16.msra.mxu0 %v1442
        %2413 = vmatpush.bf16.msra.mxu0 %v1433
        %2414 = vmatpush.bf16.msra.mxu0 %v1424
        %2415 = vmatpush.bf16.msra.mxu0 %v1415
        %2416 = vmatmul.bf16.gmra.mxu0 %v620
        %v2417 = vpop.f32.mrf.mxu0
        %v2418 = vadd.f32 %v2369, %v2417
        %v2419 = vpop.f32.mrf.mxu0
        %v2420 = vadd.f32 %v2371, %v2419
        %2421 = vmatmul.bf16.gmra.mxu0 %v623
        %v2422 = vpop.f32.mrf.mxu0
        %v2423 = vadd.f32 %v2374, %v2422
        %v2424 = vpop.f32.mrf.mxu0
        %v2425 = vadd.f32 %v2376, %v2424
        %2426 = vmatmul.bf16.gmra.mxu0 %v626
        %v2427 = vpop.f32.mrf.mxu0
        %v2428 = vadd.f32 %v2379, %v2427
        %v2429 = vpop.f32.mrf.mxu0
        %v2430 = vadd.f32 %v2381, %v2429
        %2431 = vmatmul.bf16.gmra.mxu0 %v629
        %v2432 = vpop.f32.mrf.mxu0
        %v2433 = vadd.f32 %v2384, %v2432
        %v2434 = vpop.f32.mrf.mxu0
        %v2435 = vadd.f32 %v2386, %v2434
        %2436 = vmatmul.bf16.gmra.mxu0 %v632
        %v2437 = vpop.f32.mrf.mxu0
        %v2438 = vadd.f32 %v2389, %v2437
        %v2439 = vpop.f32.mrf.mxu0
        %v2440 = vadd.f32 %v2391, %v2439
        %2441 = vmatmul.bf16.gmra.mxu0 %v635
        %v2442 = vpop.f32.mrf.mxu0
        %v2443 = vadd.f32 %v2394, %v2442
        %v2444 = vpop.f32.mrf.mxu0
        %v2445 = vadd.f32 %v2396, %v2444
        %2446 = vmatmul.bf16.gmra.mxu0 %v638
        %v2447 = vpop.f32.mrf.mxu0
        %v2448 = vadd.f32 %v2399, %v2447
        %v2449 = vpop.f32.mrf.mxu0
        %v2450 = vadd.f32 %v2401, %v2449
        %2451 = vmatmul.bf16.gmra.mxu0 %v641
        %v2452 = vpop.f32.mrf.mxu0
        %v2453 = vadd.f32 %v2404, %v2452
        %v2454 = vpop.f32.mrf.mxu0
        %v2455 = vadd.f32 %v2406, %v2454
        %2456 = vdwg.mxu0
        %2457 = vmatpush.bf16.msra.mxu0 %v1550
        %2458 = vmatpush.bf16.msra.mxu0 %v1541
        %2459 = vmatpush.bf16.msra.mxu0 %v1532
        %2460 = vmatpush.bf16.msra.mxu0 %v1523
        %2461 = vmatpush.bf16.msra.mxu0 %v1514
        %2462 = vmatpush.bf16.msra.mxu0 %v1505
        %2463 = vmatpush.bf16.msra.mxu0 %v1496
        %2464 = vmatpush.bf16.msra.mxu0 %v1487
        %2465 = vmatmul.bf16.gmra.mxu0 %v621
        %v2466 = vpop.f32.mrf.mxu0
        %v2467 = vadd.f32 %v2418, %v2466
        %v2468 = vpop.f32.mrf.mxu0
        %v2469 = vadd.f32 %v2420, %v2468
        %2470 = vmatmul.bf16.gmra.mxu0 %v624
        %v2471 = vpop.f32.mrf.mxu0
        %v2472 = vadd.f32 %v2423, %v2471
        %v2473 = vpop.f32.mrf.mxu0
        %v2474 = vadd.f32 %v2425, %v2473
        %2475 = vmatmul.bf16.gmra.mxu0 %v627
        %v2476 = vpop.f32.mrf.mxu0
        %v2477 = vadd.f32 %v2428, %v2476
        %v2478 = vpop.f32.mrf.mxu0
        %v2479 = vadd.f32 %v2430, %v2478
        %2480 = vmatmul.bf16.gmra.mxu0 %v630
        %v2481 = vpop.f32.mrf.mxu0
        %v2482 = vadd.f32 %v2433, %v2481
        %v2483 = vpop.f32.mrf.mxu0
        %v2484 = vadd.f32 %v2435, %v2483
        %2485 = vmatmul.bf16.gmra.mxu0 %v633
        %v2486 = vpop.f32.mrf.mxu0
        %v2487 = vadd.f32 %v2438, %v2486
        %v2488 = vpop.f32.mrf.mxu0
        %v2489 = vadd.f32 %v2440, %v2488
        %2490 = vmatmul.bf16.gmra.mxu0 %v636
        %v2491 = vpop.f32.mrf.mxu0
        %v2492 = vadd.f32 %v2443, %v2491
        %v2493 = vpop.f32.mrf.mxu0
        %v2494 = vadd.f32 %v2445, %v2493
        %2495 = vmatmul.bf16.gmra.mxu0 %v639
        %v2496 = vpop.f32.mrf.mxu0
        %v2497 = vadd.f32 %v2448, %v2496
        %v2498 = vpop.f32.mrf.mxu0
        %v2499 = vadd.f32 %v2450, %v2498
        %2500 = vmatmul.bf16.gmra.mxu0 %v642
        %v2501 = vpop.f32.mrf.mxu0
        %v2502 = vadd.f32 %v2453, %v2501
        %v2503 = vpop.f32.mrf.mxu0
        %v2504 = vadd.f32 %v2455, %v2503
        %2505 = vdwg.mxu0
        %2506 = vmatpush.bf16.msra.mxu0 %v1407
        %2507 = vmatpush.bf16.msra.mxu0 %v1398
        %2508 = vmatpush.bf16.msra.mxu0 %v1389
        %2509 = vmatpush.bf16.msra.mxu0 %v1380
        %2510 = vmatpush.bf16.msra.mxu0 %v1371
        %2511 = vmatpush.bf16.msra.mxu0 %v1362
        %2512 = vmatpush.bf16.msra.mxu0 %v1353
        %2513 = vmatpush.bf16.msra.mxu0 %v1344
        %2514 = vmatmul.bf16.gmra.mxu0 %v619
        %v2515 = vpop.f32.mrf.mxu0
        %v2516 = vadd.f32 0.0, %v2515
        %v2517 = vpop.f32.mrf.mxu0
        %v2518 = vadd.f32 0.0, %v2517
        %2519 = vmatmul.bf16.gmra.mxu0 %v622
        %v2520 = vpop.f32.mrf.mxu0
        %v2521 = vadd.f32 0.0, %v2520
        %v2522 = vpop.f32.mrf.mxu0
        %v2523 = vadd.f32 0.0, %v2522
        %2524 = vmatmul.bf16.gmra.mxu0 %v625
        %v2525 = vpop.f32.mrf.mxu0
        %v2526 = vadd.f32 0.0, %v2525
        %v2527 = vpop.f32.mrf.mxu0
        %v2528 = vadd.f32 0.0, %v2527
        %2529 = vmatmul.bf16.gmra.mxu0 %v628
        %v2530 = vpop.f32.mrf.mxu0
        %v2531 = vadd.f32 0.0, %v2530
        %v2532 = vpop.f32.mrf.mxu0
        %v2533 = vadd.f32 0.0, %v2532
        %2534 = vmatmul.bf16.gmra.mxu0 %v631
        %v2535 = vpop.f32.mrf.mxu0
        %v2536 = vadd.f32 0.0, %v2535
        %v2537 = vpop.f32.mrf.mxu0
        %v2538 = vadd.f32 0.0, %v2537
        %2539 = vmatmul.bf16.gmra.mxu0 %v634
        %v2540 = vpop.f32.mrf.mxu0
        %v2541 = vadd.f32 0.0, %v2540
        %v2542 = vpop.f32.mrf.mxu0
        %v2543 = vadd.f32 0.0, %v2542
        %2544 = vmatmul.bf16.gmra.mxu0 %v637
        %v2545 = vpop.f32.mrf.mxu0
        %v2546 = vadd.f32 0.0, %v2545
        %v2547 = vpop.f32.mrf.mxu0
        %v2548 = vadd.f32 0.0, %v2547
        %2549 = vmatmul.bf16.gmra.mxu0 %v640
        %v2550 = vpop.f32.mrf.mxu0
        %v2551 = vadd.f32 0.0, %v2550
        %v2552 = vpop.f32.mrf.mxu0
        %v2553 = vadd.f32 0.0, %v2552
        %2554 = vdwg.mxu0
        %2555 = vmatpush.bf16.msra.mxu0 %v1479
        %2556 = vmatpush.bf16.msra.mxu0 %v1470
        %2557 = vmatpush.bf16.msra.mxu0 %v1461
        %2558 = vmatpush.bf16.msra.mxu0 %v1452
        %2559 = vmatpush.bf16.msra.mxu0 %v1443
        %2560 = vmatpush.bf16.msra.mxu0 %v1434
        %2561 = vmatpush.bf16.msra.mxu0 %v1425
        %2562 = vmatpush.bf16.msra.mxu0 %v1416
        %2563 = vmatmul.bf16.gmra.mxu0 %v620
        %v2564 = vpop.f32.mrf.mxu0
        %v2565 = vadd.f32 %v2516, %v2564
        %v2566 = vpop.f32.mrf.mxu0
        %v2567 = vadd.f32 %v2518, %v2566
        %2568 = vmatmul.bf16.gmra.mxu0 %v623
        %v2569 = vpop.f32.mrf.mxu0
        %v2570 = vadd.f32 %v2521, %v2569
        %v2571 = vpop.f32.mrf.mxu0
        %v2572 = vadd.f32 %v2523, %v2571
        %2573 = vmatmul.bf16.gmra.mxu0 %v626
        %v2574 = vpop.f32.mrf.mxu0
        %v2575 = vadd.f32 %v2526, %v2574
        %v2576 = vpop.f32.mrf.mxu0
        %v2577 = vadd.f32 %v2528, %v2576
        %2578 = vmatmul.bf16.gmra.mxu0 %v629
        %v2579 = vpop.f32.mrf.mxu0
        %v2580 = vadd.f32 %v2531, %v2579
        %v2581 = vpop.f32.mrf.mxu0
        %v2582 = vadd.f32 %v2533, %v2581
        %2583 = vmatmul.bf16.gmra.mxu0 %v632
        %v2584 = vpop.f32.mrf.mxu0
        %v2585 = vadd.f32 %v2536, %v2584
        %v2586 = vpop.f32.mrf.mxu0
        %v2587 = vadd.f32 %v2538, %v2586
        %2588 = vmatmul.bf16.gmra.mxu0 %v635
        %v2589 = vpop.f32.mrf.mxu0
        %v2590 = vadd.f32 %v2541, %v2589
        %v2591 = vpop.f32.mrf.mxu0
        %v2592 = vadd.f32 %v2543, %v2591
        %2593 = vmatmul.bf16.gmra.mxu0 %v638
        %v2594 = vpop.f32.mrf.mxu0
        %v2595 = vadd.f32 %v2546, %v2594
        %v2596 = vpop.f32.mrf.mxu0
        %v2597 = vadd.f32 %v2548, %v2596
        %2598 = vmatmul.bf16.gmra.mxu0 %v641
        %v2599 = vpop.f32.mrf.mxu0
        %v2600 = vadd.f32 %v2551, %v2599
        %v2601 = vpop.f32.mrf.mxu0
        %v2602 = vadd.f32 %v2553, %v2601
        %2603 = vdwg.mxu0
        %2604 = vmatpush.bf16.msra.mxu0 %v1551
        %2605 = vmatpush.bf16.msra.mxu0 %v1542
        %2606 = vmatpush.bf16.msra.mxu0 %v1533
        %2607 = vmatpush.bf16.msra.mxu0 %v1524
        %2608 = vmatpush.bf16.msra.mxu0 %v1515
        %2609 = vmatpush.bf16.msra.mxu0 %v1506
        %2610 = vmatpush.bf16.msra.mxu0 %v1497
        %2611 = vmatpush.bf16.msra.mxu0 %v1488
        %2612 = vmatmul.bf16.gmra.mxu0 %v621
        %v2613 = vpop.f32.mrf.mxu0
        %v2614 = vadd.f32 %v2565, %v2613
        %v2615 = vpop.f32.mrf.mxu0
        %v2616 = vadd.f32 %v2567, %v2615
        %2617 = vmatmul.bf16.gmra.mxu0 %v624
        %v2618 = vpop.f32.mrf.mxu0
        %v2619 = vadd.f32 %v2570, %v2618
        %v2620 = vpop.f32.mrf.mxu0
        %v2621 = vadd.f32 %v2572, %v2620
        %2622 = vmatmul.bf16.gmra.mxu0 %v627
        %v2623 = vpop.f32.mrf.mxu0
        %v2624 = vadd.f32 %v2575, %v2623
        %v2625 = vpop.f32.mrf.mxu0
        %v2626 = vadd.f32 %v2577, %v2625
        %2627 = vmatmul.bf16.gmra.mxu0 %v630
        %v2628 = vpop.f32.mrf.mxu0
        %v2629 = vadd.f32 %v2580, %v2628
        %v2630 = vpop.f32.mrf.mxu0
        %v2631 = vadd.f32 %v2582, %v2630
        %2632 = vmatmul.bf16.gmra.mxu0 %v633
        %v2633 = vpop.f32.mrf.mxu0
        %v2634 = vadd.f32 %v2585, %v2633
        %v2635 = vpop.f32.mrf.mxu0
        %v2636 = vadd.f32 %v2587, %v2635
        %2637 = vmatmul.bf16.gmra.mxu0 %v636
        %v2638 = vpop.f32.mrf.mxu0
        %v2639 = vadd.f32 %v2590, %v2638
        %v2640 = vpop.f32.mrf.mxu0
        %v2641 = vadd.f32 %v2592, %v2640
        %2642 = vmatmul.bf16.gmra.mxu0 %v639
        %v2643 = vpop.f32.mrf.mxu0
        %v2644 = vadd.f32 %v2595, %v2643
        %v2645 = vpop.f32.mrf.mxu0
        %v2646 = vadd.f32 %v2597, %v2645
        %2647 = vmatmul.bf16.gmra.mxu0 %v642
        %v2648 = vpop.f32.mrf.mxu0
        %v2649 = vadd.f32 %v2600, %v2648
        %v2650 = vpop.f32.mrf.mxu0
        %v2651 = vadd.f32 %v2602, %v2650
        %2652 = vdwg.mxu0
        %2653 = vmatpush.bf16.msra.mxu0 %v1408
        %2654 = vmatpush.bf16.msra.mxu0 %v1399
        %2655 = vmatpush.bf16.msra.mxu0 %v1390
        %2656 = vmatpush.bf16.msra.mxu0 %v1381
        %2657 = vmatpush.bf16.msra.mxu0 %v1372
        %2658 = vmatpush.bf16.msra.mxu0 %v1363
        %2659 = vmatpush.bf16.msra.mxu0 %v1354
        %2660 = vmatpush.bf16.msra.mxu0 %v1345
        %2661 = vmatmul.bf16.gmra.mxu0 %v619
        %v2662 = vpop.f32.mrf.mxu0
        %v2663 = vadd.f32 0.0, %v2662
        %v2664 = vpop.f32.mrf.mxu0
        %v2665 = vadd.f32 0.0, %v2664
        %2666 = vmatmul.bf16.gmra.mxu0 %v622
        %v2667 = vpop.f32.mrf.mxu0
        %v2668 = vadd.f32 0.0, %v2667
        %v2669 = vpop.f32.mrf.mxu0
        %v2670 = vadd.f32 0.0, %v2669
        %2671 = vmatmul.bf16.gmra.mxu0 %v625
        %v2672 = vpop.f32.mrf.mxu0
        %v2673 = vadd.f32 0.0, %v2672
        %v2674 = vpop.f32.mrf.mxu0
        %v2675 = vadd.f32 0.0, %v2674
        %2676 = vmatmul.bf16.gmra.mxu0 %v628
        %v2677 = vpop.f32.mrf.mxu0
        %v2678 = vadd.f32 0.0, %v2677
        %v2679 = vpop.f32.mrf.mxu0
        %v2680 = vadd.f32 0.0, %v2679
        %2681 = vmatmul.bf16.gmra.mxu0 %v631
        %v2682 = vpop.f32.mrf.mxu0
        %v2683 = vadd.f32 0.0, %v2682
        %v2684 = vpop.f32.mrf.mxu0
        %v2685 = vadd.f32 0.0, %v2684
        %2686 = vmatmul.bf16.gmra.mxu0 %v634
        %v2687 = vpop.f32.mrf.mxu0
        %v2688 = vadd.f32 0.0, %v2687
        %v2689 = vpop.f32.mrf.mxu0
        %v2690 = vadd.f32 0.0, %v2689
        %2691 = vmatmul.bf16.gmra.mxu0 %v637
        %v2692 = vpop.f32.mrf.mxu0
        %v2693 = vadd.f32 0.0, %v2692
        %v2694 = vpop.f32.mrf.mxu0
        %v2695 = vadd.f32 0.0, %v2694
        %2696 = vmatmul.bf16.gmra.mxu0 %v640
        %v2697 = vpop.f32.mrf.mxu0
        %v2698 = vadd.f32 0.0, %v2697
        %v2699 = vpop.f32.mrf.mxu0
        %v2700 = vadd.f32 0.0, %v2699
        %2701 = vdwg.mxu0
        %2702 = vmatpush.bf16.msra.mxu0 %v1480
        %2703 = vmatpush.bf16.msra.mxu0 %v1471
        %2704 = vmatpush.bf16.msra.mxu0 %v1462
        %2705 = vmatpush.bf16.msra.mxu0 %v1453
        %2706 = vmatpush.bf16.msra.mxu0 %v1444
        %2707 = vmatpush.bf16.msra.mxu0 %v1435
        %2708 = vmatpush.bf16.msra.mxu0 %v1426
        %2709 = vmatpush.bf16.msra.mxu0 %v1417
        %2710 = vmatmul.bf16.gmra.mxu0 %v620
        %v2711 = vpop.f32.mrf.mxu0
        %v2712 = vadd.f32 %v2663, %v2711
        %v2713 = vpop.f32.mrf.mxu0
        %v2714 = vadd.f32 %v2665, %v2713
        %2715 = vmatmul.bf16.gmra.mxu0 %v623
        %v2716 = vpop.f32.mrf.mxu0
        %v2717 = vadd.f32 %v2668, %v2716
        %v2718 = vpop.f32.mrf.mxu0
        %v2719 = vadd.f32 %v2670, %v2718
        %2720 = vmatmul.bf16.gmra.mxu0 %v626
        %v2721 = vpop.f32.mrf.mxu0
        %v2722 = vadd.f32 %v2673, %v2721
        %v2723 = vpop.f32.mrf.mxu0
        %v2724 = vadd.f32 %v2675, %v2723
        %2725 = vmatmul.bf16.gmra.mxu0 %v629
        %v2726 = vpop.f32.mrf.mxu0
        %v2727 = vadd.f32 %v2678, %v2726
        %v2728 = vpop.f32.mrf.mxu0
        %v2729 = vadd.f32 %v2680, %v2728
        %2730 = vmatmul.bf16.gmra.mxu0 %v632
        %v2731 = vpop.f32.mrf.mxu0
        %v2732 = vadd.f32 %v2683, %v2731
        %v2733 = vpop.f32.mrf.mxu0
        %v2734 = vadd.f32 %v2685, %v2733
        %2735 = vmatmul.bf16.gmra.mxu0 %v635
        %v2736 = vpop.f32.mrf.mxu0
        %v2737 = vadd.f32 %v2688, %v2736
        %v2738 = vpop.f32.mrf.mxu0
        %v2739 = vadd.f32 %v2690, %v2738
        %2740 = vmatmul.bf16.gmra.mxu0 %v638
        %v2741 = vpop.f32.mrf.mxu0
        %v2742 = vadd.f32 %v2693, %v2741
        %v2743 = vpop.f32.mrf.mxu0
        %v2744 = vadd.f32 %v2695, %v2743
        %2745 = vmatmul.bf16.gmra.mxu0 %v641
        %v2746 = vpop.f32.mrf.mxu0
        %v2747 = vadd.f32 %v2698, %v2746
        %v2748 = vpop.f32.mrf.mxu0
        %v2749 = vadd.f32 %v2700, %v2748
        %2750 = vdwg.mxu0
        %2751 = vmatpush.bf16.msra.mxu0 %v1552
        %2752 = vmatpush.bf16.msra.mxu0 %v1543
        %2753 = vmatpush.bf16.msra.mxu0 %v1534
        %2754 = vmatpush.bf16.msra.mxu0 %v1525
        %2755 = vmatpush.bf16.msra.mxu0 %v1516
        %2756 = vmatpush.bf16.msra.mxu0 %v1507
        %2757 = vmatpush.bf16.msra.mxu0 %v1498
        %2758 = vmatpush.bf16.msra.mxu0 %v1489
        %2759 = vmatmul.bf16.gmra.mxu0 %v621
        %v2760 = vpop.f32.mrf.mxu0
        %v2761 = vadd.f32 %v2712, %v2760
        %v2762 = vpop.f32.mrf.mxu0
        %v2763 = vadd.f32 %v2714, %v2762
        %2764 = vmatmul.bf16.gmra.mxu0 %v624
        %v2765 = vpop.f32.mrf.mxu0
        %v2766 = vadd.f32 %v2717, %v2765
        %v2767 = vpop.f32.mrf.mxu0
        %v2768 = vadd.f32 %v2719, %v2767
        %2769 = vmatmul.bf16.gmra.mxu0 %v627
        %v2770 = vpop.f32.mrf.mxu0
        %v2771 = vadd.f32 %v2722, %v2770
        %v2772 = vpop.f32.mrf.mxu0
        %v2773 = vadd.f32 %v2724, %v2772
        %2774 = vmatmul.bf16.gmra.mxu0 %v630
        %v2775 = vpop.f32.mrf.mxu0
        %v2776 = vadd.f32 %v2727, %v2775
        %v2777 = vpop.f32.mrf.mxu0
        %v2778 = vadd.f32 %v2729, %v2777
        %2779 = vmatmul.bf16.gmra.mxu0 %v633
        %v2780 = vpop.f32.mrf.mxu0
        %v2781 = vadd.f32 %v2732, %v2780
        %v2782 = vpop.f32.mrf.mxu0
        %v2783 = vadd.f32 %v2734, %v2782
        %2784 = vmatmul.bf16.gmra.mxu0 %v636
        %v2785 = vpop.f32.mrf.mxu0
        %v2786 = vadd.f32 %v2737, %v2785
        %v2787 = vpop.f32.mrf.mxu0
        %v2788 = vadd.f32 %v2739, %v2787
        %2789 = vmatmul.bf16.gmra.mxu0 %v639
        %v2790 = vpop.f32.mrf.mxu0
        %v2791 = vadd.f32 %v2742, %v2790
        %v2792 = vpop.f32.mrf.mxu0
        %v2793 = vadd.f32 %v2744, %v2792
        %2794 = vmatmul.bf16.gmra.mxu0 %v642
        %v2795 = vpop.f32.mrf.mxu0
        %v2796 = vadd.f32 %v2747, %v2795
        %v2797 = vpop.f32.mrf.mxu0
        %v2798 = vadd.f32 %v2749, %v2797
        %2799 = vdwg.mxu0
        %2800 = vmatpush.bf16.msra.mxu0 %v1409
        %2801 = vmatpush.bf16.msra.mxu0 %v1400
        %2802 = vmatpush.bf16.msra.mxu0 %v1391
        %2803 = vmatpush.bf16.msra.mxu0 %v1382
        %2804 = vmatpush.bf16.msra.mxu0 %v1373
        %2805 = vmatpush.bf16.msra.mxu0 %v1364
        %2806 = vmatpush.bf16.msra.mxu0 %v1355
        %2807 = vmatpush.bf16.msra.mxu0 %v1346
        %2808 = vmatmul.bf16.gmra.mxu0 %v619
        %v2809 = vpop.f32.mrf.mxu0
        %v2810 = vadd.f32 0.0, %v2809
        %v2811 = vpop.f32.mrf.mxu0
        %v2812 = vadd.f32 0.0, %v2811
        %2813 = vmatmul.bf16.gmra.mxu0 %v622
        %v2814 = vpop.f32.mrf.mxu0
        %v2815 = vadd.f32 0.0, %v2814
        %v2816 = vpop.f32.mrf.mxu0
        %v2817 = vadd.f32 0.0, %v2816
        %2818 = vmatmul.bf16.gmra.mxu0 %v625
        %v2819 = vpop.f32.mrf.mxu0
        %v2820 = vadd.f32 0.0, %v2819
        %v2821 = vpop.f32.mrf.mxu0
        %v2822 = vadd.f32 0.0, %v2821
        %2823 = vmatmul.bf16.gmra.mxu0 %v628
        %v2824 = vpop.f32.mrf.mxu0
        %v2825 = vadd.f32 0.0, %v2824
        %v2826 = vpop.f32.mrf.mxu0
        %v2827 = vadd.f32 0.0, %v2826
        %2828 = vmatmul.bf16.gmra.mxu0 %v631
        %v2829 = vpop.f32.mrf.mxu0
        %v2830 = vadd.f32 0.0, %v2829
        %v2831 = vpop.f32.mrf.mxu0
        %v2832 = vadd.f32 0.0, %v2831
        %2833 = vmatmul.bf16.gmra.mxu0 %v634
        %v2834 = vpop.f32.mrf.mxu0
        %v2835 = vadd.f32 0.0, %v2834
        %v2836 = vpop.f32.mrf.mxu0
        %v2837 = vadd.f32 0.0, %v2836
        %2838 = vmatmul.bf16.gmra.mxu0 %v637
        %v2839 = vpop.f32.mrf.mxu0
        %v2840 = vadd.f32 0.0, %v2839
        %v2841 = vpop.f32.mrf.mxu0
        %v2842 = vadd.f32 0.0, %v2841
        %2843 = vmatmul.bf16.gmra.mxu0 %v640
        %v2844 = vpop.f32.mrf.mxu0
        %v2845 = vadd.f32 0.0, %v2844
        %v2846 = vpop.f32.mrf.mxu0
        %v2847 = vadd.f32 0.0, %v2846
        %2848 = vdwg.mxu0
        %2849 = vmatpush.bf16.msra.mxu0 %v1481
        %2850 = vmatpush.bf16.msra.mxu0 %v1472
        %2851 = vmatpush.bf16.msra.mxu0 %v1463
        %2852 = vmatpush.bf16.msra.mxu0 %v1454
        %2853 = vmatpush.bf16.msra.mxu0 %v1445
        %2854 = vmatpush.bf16.msra.mxu0 %v1436
        %2855 = vmatpush.bf16.msra.mxu0 %v1427
        %2856 = vmatpush.bf16.msra.mxu0 %v1418
        %2857 = vmatmul.bf16.gmra.mxu0 %v620
        %v2858 = vpop.f32.mrf.mxu0
        %v2859 = vadd.f32 %v2810, %v2858
        %v2860 = vpop.f32.mrf.mxu0
        %v2861 = vadd.f32 %v2812, %v2860
        %2862 = vmatmul.bf16.gmra.mxu0 %v623
        %v2863 = vpop.f32.mrf.mxu0
        %v2864 = vadd.f32 %v2815, %v2863
        %v2865 = vpop.f32.mrf.mxu0
        %v2866 = vadd.f32 %v2817, %v2865
        %2867 = vmatmul.bf16.gmra.mxu0 %v626
        %v2868 = vpop.f32.mrf.mxu0
        %v2869 = vadd.f32 %v2820, %v2868
        %v2870 = vpop.f32.mrf.mxu0
        %v2871 = vadd.f32 %v2822, %v2870
        %2872 = vmatmul.bf16.gmra.mxu0 %v629
        %v2873 = vpop.f32.mrf.mxu0
        %v2874 = vadd.f32 %v2825, %v2873
        %v2875 = vpop.f32.mrf.mxu0
        %v2876 = vadd.f32 %v2827, %v2875
        %2877 = vmatmul.bf16.gmra.mxu0 %v632
        %v2878 = vpop.f32.mrf.mxu0
        %v2879 = vadd.f32 %v2830, %v2878
        %v2880 = vpop.f32.mrf.mxu0
        %v2881 = vadd.f32 %v2832, %v2880
        %2882 = vmatmul.bf16.gmra.mxu0 %v635
        %v2883 = vpop.f32.mrf.mxu0
        %v2884 = vadd.f32 %v2835, %v2883
        %v2885 = vpop.f32.mrf.mxu0
        %v2886 = vadd.f32 %v2837, %v2885
        %2887 = vmatmul.bf16.gmra.mxu0 %v638
        %v2888 = vpop.f32.mrf.mxu0
        %v2889 = vadd.f32 %v2840, %v2888
        %v2890 = vpop.f32.mrf.mxu0
        %v2891 = vadd.f32 %v2842, %v2890
        %2892 = vmatmul.bf16.gmra.mxu0 %v641
        %v2893 = vpop.f32.mrf.mxu0
        %v2894 = vadd.f32 %v2845, %v2893
        %v2895 = vpop.f32.mrf.mxu0
        %v2896 = vadd.f32 %v2847, %v2895
        %2897 = vdwg.mxu0
        %2898 = vmatpush.bf16.msra.mxu0 %v1553
        %2899 = vmatpush.bf16.msra.mxu0 %v1544
        %2900 = vmatpush.bf16.msra.mxu0 %v1535
        %2901 = vmatpush.bf16.msra.mxu0 %v1526
        %2902 = vmatpush.bf16.msra.mxu0 %v1517
        %2903 = vmatpush.bf16.msra.mxu0 %v1508
        %2904 = vmatpush.bf16.msra.mxu0 %v1499
        %2905 = vmatpush.bf16.msra.mxu0 %v1490
        %2906 = vmatmul.bf16.gmra.mxu0 %v621
        %v2907 = vpop.f32.mrf.mxu0
        %v2908 = vadd.f32 %v2859, %v2907
        %v2909 = vpop.f32.mrf.mxu0
        %v2910 = vadd.f32 %v2861, %v2909
        %2911 = vmatmul.bf16.gmra.mxu0 %v624
        %v2912 = vpop.f32.mrf.mxu0
        %v2913 = vadd.f32 %v2864, %v2912
        %v2914 = vpop.f32.mrf.mxu0
        %v2915 = vadd.f32 %v2866, %v2914
        %2916 = vmatmul.bf16.gmra.mxu0 %v627
        %v2917 = vpop.f32.mrf.mxu0
        %v2918 = vadd.f32 %v2869, %v2917
        %v2919 = vpop.f32.mrf.mxu0
        %v2920 = vadd.f32 %v2871, %v2919
        %2921 = vmatmul.bf16.gmra.mxu0 %v630
        %v2922 = vpop.f32.mrf.mxu0
        %v2923 = vadd.f32 %v2874, %v2922
        %v2924 = vpop.f32.mrf.mxu0
        %v2925 = vadd.f32 %v2876, %v2924
        %2926 = vmatmul.bf16.gmra.mxu0 %v633
        %v2927 = vpop.f32.mrf.mxu0
        %v2928 = vadd.f32 %v2879, %v2927
        %v2929 = vpop.f32.mrf.mxu0
        %v2930 = vadd.f32 %v2881, %v2929
        %2931 = vmatmul.bf16.gmra.mxu0 %v636
        %v2932 = vpop.f32.mrf.mxu0
        %v2933 = vadd.f32 %v2884, %v2932
        %v2934 = vpop.f32.mrf.mxu0
        %v2935 = vadd.f32 %v2886, %v2934
        %2936 = vmatmul.bf16.gmra.mxu0 %v639
        %v2937 = vpop.f32.mrf.mxu0
        %v2938 = vadd.f32 %v2889, %v2937
        %v2939 = vpop.f32.mrf.mxu0
        %v2940 = vadd.f32 %v2891, %v2939
        %2941 = vmatmul.bf16.gmra.mxu0 %v642
        %v2942 = vpop.f32.mrf.mxu0
        %v2943 = vadd.f32 %v2894, %v2942
        %v2944 = vpop.f32.mrf.mxu0
        %v2945 = vadd.f32 %v2896, %v2944
        %2946 = vdwg.mxu0
        %2947 = vmatpush.bf16.msra.mxu0 %v1410
        %2948 = vmatpush.bf16.msra.mxu0 %v1401
        %2949 = vmatpush.bf16.msra.mxu0 %v1392
        %2950 = vmatpush.bf16.msra.mxu0 %v1383
        %2951 = vmatpush.bf16.msra.mxu0 %v1374
        %2952 = vmatpush.bf16.msra.mxu0 %v1365
        %2953 = vmatpush.bf16.msra.mxu0 %v1356
        %2954 = vmatpush.bf16.msra.mxu0 %v1347
        %2955 = vmatmul.bf16.gmra.mxu0 %v619
        %v2956 = vpop.f32.mrf.mxu0
        %v2957 = vadd.f32 0.0, %v2956
        %v2958 = vpop.f32.mrf.mxu0
        %v2959 = vadd.f32 0.0, %v2958
        %2960 = vmatmul.bf16.gmra.mxu0 %v622
        %v2961 = vpop.f32.mrf.mxu0
        %v2962 = vadd.f32 0.0, %v2961
        %v2963 = vpop.f32.mrf.mxu0
        %v2964 = vadd.f32 0.0, %v2963
        %2965 = vmatmul.bf16.gmra.mxu0 %v625
        %v2966 = vpop.f32.mrf.mxu0
        %v2967 = vadd.f32 0.0, %v2966
        %v2968 = vpop.f32.mrf.mxu0
        %v2969 = vadd.f32 0.0, %v2968
        %2970 = vmatmul.bf16.gmra.mxu0 %v628
        %v2971 = vpop.f32.mrf.mxu0
        %v2972 = vadd.f32 0.0, %v2971
        %v2973 = vpop.f32.mrf.mxu0
        %v2974 = vadd.f32 0.0, %v2973
        %2975 = vmatmul.bf16.gmra.mxu0 %v631
        %v2976 = vpop.f32.mrf.mxu0
        %v2977 = vadd.f32 0.0, %v2976
        %v2978 = vpop.f32.mrf.mxu0
        %v2979 = vadd.f32 0.0, %v2978
        %2980 = vmatmul.bf16.gmra.mxu0 %v634
        %v2981 = vpop.f32.mrf.mxu0
        %v2982 = vadd.f32 0.0, %v2981
        %v2983 = vpop.f32.mrf.mxu0
        %v2984 = vadd.f32 0.0, %v2983
        %2985 = vmatmul.bf16.gmra.mxu0 %v637
        %v2986 = vpop.f32.mrf.mxu0
        %v2987 = vadd.f32 0.0, %v2986
        %v2988 = vpop.f32.mrf.mxu0
        %v2989 = vadd.f32 0.0, %v2988
        %2990 = vmatmul.bf16.gmra.mxu0 %v640
        %v2991 = vpop.f32.mrf.mxu0
        %v2992 = vadd.f32 0.0, %v2991
        %v2993 = vpop.f32.mrf.mxu0
        %v2994 = vadd.f32 0.0, %v2993
        %2995 = vdwg.mxu0
        %2996 = vmatpush.bf16.msra.mxu0 %v1482
        %2997 = vmatpush.bf16.msra.mxu0 %v1473
        %2998 = vmatpush.bf16.msra.mxu0 %v1464
        %2999 = vmatpush.bf16.msra.mxu0 %v1455
        %3000 = vmatpush.bf16.msra.mxu0 %v1446
        %3001 = vmatpush.bf16.msra.mxu0 %v1437
        %3002 = vmatpush.bf16.msra.mxu0 %v1428
        %3003 = vmatpush.bf16.msra.mxu0 %v1419
        %3004 = vmatmul.bf16.gmra.mxu0 %v620
        %v3005 = vpop.f32.mrf.mxu0
        %v3006 = vadd.f32 %v2957, %v3005
        %v3007 = vpop.f32.mrf.mxu0
        %v3008 = vadd.f32 %v2959, %v3007
        %3009 = vmatmul.bf16.gmra.mxu0 %v623
        %v3010 = vpop.f32.mrf.mxu0
        %v3011 = vadd.f32 %v2962, %v3010
        %v3012 = vpop.f32.mrf.mxu0
        %v3013 = vadd.f32 %v2964, %v3012
        %3014 = vmatmul.bf16.gmra.mxu0 %v626
        %v3015 = vpop.f32.mrf.mxu0
        %v3016 = vadd.f32 %v2967, %v3015
        %v3017 = vpop.f32.mrf.mxu0
        %v3018 = vadd.f32 %v2969, %v3017
        %3019 = vmatmul.bf16.gmra.mxu0 %v629
        %v3020 = vpop.f32.mrf.mxu0
        %v3021 = vadd.f32 %v2972, %v3020
        %v3022 = vpop.f32.mrf.mxu0
        %v3023 = vadd.f32 %v2974, %v3022
        %3024 = vmatmul.bf16.gmra.mxu0 %v632
        %v3025 = vpop.f32.mrf.mxu0
        %v3026 = vadd.f32 %v2977, %v3025
        %v3027 = vpop.f32.mrf.mxu0
        %v3028 = vadd.f32 %v2979, %v3027
        %3029 = vmatmul.bf16.gmra.mxu0 %v635
        %v3030 = vpop.f32.mrf.mxu0
        %v3031 = vadd.f32 %v2982, %v3030
        %v3032 = vpop.f32.mrf.mxu0
        %v3033 = vadd.f32 %v2984, %v3032
        %3034 = vmatmul.bf16.gmra.mxu0 %v638
        %v3035 = vpop.f32.mrf.mxu0
        %v3036 = vadd.f32 %v2987, %v3035
        %v3037 = vpop.f32.mrf.mxu0
        %v3038 = vadd.f32 %v2989, %v3037
        %3039 = vmatmul.bf16.gmra.mxu0 %v641
        %v3040 = vpop.f32.mrf.mxu0
        %v3041 = vadd.f32 %v2992, %v3040
        %v3042 = vpop.f32.mrf.mxu0
        %v3043 = vadd.f32 %v2994, %v3042
        %3044 = vdwg.mxu0
        %3045 = vmatpush.bf16.msra.mxu0 %v1554
        %3046 = vmatpush.bf16.msra.mxu0 %v1545
        %3047 = vmatpush.bf16.msra.mxu0 %v1536
        %3048 = vmatpush.bf16.msra.mxu0 %v1527
        %3049 = vmatpush.bf16.msra.mxu0 %v1518
        %3050 = vmatpush.bf16.msra.mxu0 %v1509
        %3051 = vmatpush.bf16.msra.mxu0 %v1500
        %3052 = vmatpush.bf16.msra.mxu0 %v1491
        %3053 = vmatmul.bf16.gmra.mxu0 %v621
        %v3054 = vpop.f32.mrf.mxu0
        %v3055 = vadd.f32 %v3006, %v3054
        %v3056 = vpop.f32.mrf.mxu0
        %v3057 = vadd.f32 %v3008, %v3056
        %3058 = vmatmul.bf16.gmra.mxu0 %v624
        %v3059 = vpop.f32.mrf.mxu0
        %v3060 = vadd.f32 %v3011, %v3059
        %v3061 = vpop.f32.mrf.mxu0
        %v3062 = vadd.f32 %v3013, %v3061
        %3063 = vmatmul.bf16.gmra.mxu0 %v627
        %v3064 = vpop.f32.mrf.mxu0
        %v3065 = vadd.f32 %v3016, %v3064
        %v3066 = vpop.f32.mrf.mxu0
        %v3067 = vadd.f32 %v3018, %v3066
        %3068 = vmatmul.bf16.gmra.mxu0 %v630
        %v3069 = vpop.f32.mrf.mxu0
        %v3070 = vadd.f32 %v3021, %v3069
        %v3071 = vpop.f32.mrf.mxu0
        %v3072 = vadd.f32 %v3023, %v3071
        %3073 = vmatmul.bf16.gmra.mxu0 %v633
        %v3074 = vpop.f32.mrf.mxu0
        %v3075 = vadd.f32 %v3026, %v3074
        %v3076 = vpop.f32.mrf.mxu0
        %v3077 = vadd.f32 %v3028, %v3076
        %3078 = vmatmul.bf16.gmra.mxu0 %v636
        %v3079 = vpop.f32.mrf.mxu0
        %v3080 = vadd.f32 %v3031, %v3079
        %v3081 = vpop.f32.mrf.mxu0
        %v3082 = vadd.f32 %v3033, %v3081
        %3083 = vmatmul.bf16.gmra.mxu0 %v639
        %v3084 = vpop.f32.mrf.mxu0
        %v3085 = vadd.f32 %v3036, %v3084
        %v3086 = vpop.f32.mrf.mxu0
        %v3087 = vadd.f32 %v3038, %v3086
        %3088 = vmatmul.bf16.gmra.mxu0 %v642
        %v3089 = vpop.f32.mrf.mxu0
        %v3090 = vadd.f32 %v3041, %v3089
        %v3091 = vpop.f32.mrf.mxu0
        %v3092 = vadd.f32 %v3043, %v3091
        %3093 = vdwg.mxu0
        %v3094 = vpack.c.bf16 %v2026, %v1879
        %v3095 = vpack.c.bf16 %v2320, %v2173
        %v3096 = vpack.c.bf16 %v2614, %v2467
        %v3097 = vpack.c.bf16 %v2908, %v2761
        %v3098 = vpack.c.bf16 %v3055, %v3055
        %v3099 = vpack.c.bf16 %v2028, %v1881
        %v3100 = vpack.c.bf16 %v2322, %v2175
        %v3101 = vpack.c.bf16 %v2616, %v2469
        %v3102 = vpack.c.bf16 %v2910, %v2763
        %v3103 = vpack.c.bf16 %v3057, %v3057
        %v3104 = vpack.c.bf16 %v2031, %v1884
        %v3105 = vpack.c.bf16 %v2325, %v2178
        %v3106 = vpack.c.bf16 %v2619, %v2472
        %v3107 = vpack.c.bf16 %v2913, %v2766
        %v3108 = vpack.c.bf16 %v3060, %v3060
        %v3109 = vpack.c.bf16 %v2033, %v1886
        %v3110 = vpack.c.bf16 %v2327, %v2180
        %v3111 = vpack.c.bf16 %v2621, %v2474
        %v3112 = vpack.c.bf16 %v2915, %v2768
        %v3113 = vpack.c.bf16 %v3062, %v3062
        %v3114 = vpack.c.bf16 %v2036, %v1889
        %v3115 = vpack.c.bf16 %v2330, %v2183
        %v3116 = vpack.c.bf16 %v2624, %v2477
        %v3117 = vpack.c.bf16 %v2918, %v2771
        %v3118 = vpack.c.bf16 %v3065, %v3065
        %v3119 = vpack.c.bf16 %v2038, %v1891
        %v3120 = vpack.c.bf16 %v2332, %v2185
        %v3121 = vpack.c.bf16 %v2626, %v2479
        %v3122 = vpack.c.bf16 %v2920, %v2773
        %v3123 = vpack.c.bf16 %v3067, %v3067
        %v3124 = vpack.c.bf16 %v2041, %v1894
        %v3125 = vpack.c.bf16 %v2335, %v2188
        %v3126 = vpack.c.bf16 %v2629, %v2482
        %v3127 = vpack.c.bf16 %v2923, %v2776
        %v3128 = vpack.c.bf16 %v3070, %v3070
        %v3129 = vpack.c.bf16 %v2043, %v1896
        %v3130 = vpack.c.bf16 %v2337, %v2190
        %v3131 = vpack.c.bf16 %v2631, %v2484
        %v3132 = vpack.c.bf16 %v2925, %v2778
        %v3133 = vpack.c.bf16 %v3072, %v3072
        %v3134 = vpack.c.bf16 %v2046, %v1899
        %v3135 = vpack.c.bf16 %v2340, %v2193
        %v3136 = vpack.c.bf16 %v2634, %v2487
        %v3137 = vpack.c.bf16 %v2928, %v2781
        %v3138 = vpack.c.bf16 %v3075, %v3075
        %v3139 = vpack.c.bf16 %v2048, %v1901
        %v3140 = vpack.c.bf16 %v2342, %v2195
        %v3141 = vpack.c.bf16 %v2636, %v2489
        %v3142 = vpack.c.bf16 %v2930, %v2783
        %v3143 = vpack.c.bf16 %v3077, %v3077
        %v3144 = vpack.c.bf16 %v2051, %v1904
        %v3145 = vpack.c.bf16 %v2345, %v2198
        %v3146 = vpack.c.bf16 %v2639, %v2492
        %v3147 = vpack.c.bf16 %v2933, %v2786
        %v3148 = vpack.c.bf16 %v3080, %v3080
        %v3149 = vpack.c.bf16 %v2053, %v1906
        %v3150 = vpack.c.bf16 %v2347, %v2200
        %v3151 = vpack.c.bf16 %v2641, %v2494
        %v3152 = vpack.c.bf16 %v2935, %v2788
        %v3153 = vpack.c.bf16 %v3082, %v3082
        %v3154 = vpack.c.bf16 %v2056, %v1909
        %v3155 = vpack.c.bf16 %v2350, %v2203
        %v3156 = vpack.c.bf16 %v2644, %v2497
        %v3157 = vpack.c.bf16 %v2938, %v2791
        %v3158 = vpack.c.bf16 %v3085, %v3085
        %v3159 = vpack.c.bf16 %v2058, %v1911
        %v3160 = vpack.c.bf16 %v2352, %v2205
        %v3161 = vpack.c.bf16 %v2646, %v2499
        %v3162 = vpack.c.bf16 %v2940, %v2793
        %v3163 = vpack.c.bf16 %v3087, %v3087
        %v3164 = vpack.c.bf16 %v2061, %v1914
        %v3165 = vpack.c.bf16 %v2355, %v2208
        %v3166 = vpack.c.bf16 %v2649, %v2502
        %v3167 = vpack.c.bf16 %v2943, %v2796
        %v3168 = vpack.c.bf16 %v3090, %v3090
        %v3169 = vpack.c.bf16 %v2063, %v1916
        %v3170 = vpack.c.bf16 %v2357, %v2210
        %v3171 = vpack.c.bf16 %v2651, %v2504
        %v3172 = vpack.c.bf16 %v2945, %v2798
        %v3173 = vpack.c.bf16 %v3092, %v3092
        %v3174 = vlaneseq
        %v3175 = vshrl.u32 %v3174, 7
        %v3176 = vadd.s32 %v3175, 8
        %v3177 = vadd.s32 %v3175, 16
        %v3178 = vadd.s32 %v3175, 24
        %v3179 = vadd.s32 %v3175, 32
        %v3180 = vadd.s32 %v3175, 40
        %v3181 = vadd.s32 %v3175, 48
        %v3182 = vadd.s32 %v3175, 56
        %v3183 = vadd.s32 %v3175, 64
        %v3184 = vadd.s32 %v3175, 72
        %v3185 = vadd.s32 %v3175, 80
        %v3186 = vadd.s32 %v3175, 88
        %v3187 = vadd.s32 %v3175, 96
        %v3188 = vadd.s32 %v3175, 104
        %v3189 = vadd.s32 %v3175, 112
        %v3190 = vadd.s32 %v3175, 120
        %v3191 = vlaneseq
        %v3192 = vand.u32 %v3191, 127
        %vm3193 = vcmp.le.s32.totalorder %v3192, %v3175
        %vm3194 = vcmp.le.s32.totalorder %v3192, %v3176
        %vm3195 = vcmp.le.s32.totalorder %v3192, %v3177
        %vm3196 = vcmp.le.s32.totalorder %v3192, %v3178
        %vm3197 = vcmp.le.s32.totalorder %v3192, %v3179
        %vm3198 = vcmp.le.s32.totalorder %v3192, %v3180
        %vm3199 = vcmp.le.s32.totalorder %v3192, %v3181
        %vm3200 = vcmp.le.s32.totalorder %v3192, %v3182
        %vm3201 = vcmp.le.s32.totalorder %v3192, %v3183
        %vm3202 = vcmp.le.s32.totalorder %v3192, %v3184
        %vm3203 = vcmp.le.s32.totalorder %v3192, %v3185
        %vm3204 = vcmp.le.s32.totalorder %v3192, %v3186
        %vm3205 = vcmp.le.s32.totalorder %v3192, %v3187
        %vm3206 = vcmp.le.s32.totalorder %v3192, %v3188
        %vm3207 = vcmp.le.s32.totalorder %v3192, %v3189
        %vm3208 = vcmp.le.s32.totalorder %v3192, %v3190
        %v3209 = vsel %vm3193, 0.0, -1e+30
        %v3210 = vsel %vm3194, 0.0, -1e+30
        %v3211 = vsel %vm3195, 0.0, -1e+30
        %v3212 = vsel %vm3196, 0.0, -1e+30
        %v3213 = vsel %vm3197, 0.0, -1e+30
        %v3214 = vsel %vm3198, 0.0, -1e+30
        %v3215 = vsel %vm3199, 0.0, -1e+30
        %v3216 = vsel %vm3200, 0.0, -1e+30
        %v3217 = vsel %vm3201, 0.0, -1e+30
        %v3218 = vsel %vm3202, 0.0, -1e+30
        %v3219 = vsel %vm3203, 0.0, -1e+30
        %v3220 = vsel %vm3204, 0.0, -1e+30
        %v3221 = vsel %vm3205, 0.0, -1e+30
        %v3222 = vsel %vm3206, 0.0, -1e+30
        %v3223 = vsel %vm3207, 0.0, -1e+30
        %v3224 = vsel %vm3208, 0.0, -1e+30
        %v3241 = vunpack.c.l.b16 %v3094
        %v3242 = vunpack.c.l.b16 %v3099
        %v3243 = vunpack.c.l.b16 %v3104
        %v3244 = vunpack.c.l.b16 %v3109
        %v3245 = vunpack.c.l.b16 %v3114
        %v3246 = vunpack.c.l.b16 %v3119
        %v3247 = vunpack.c.l.b16 %v3124
        %v3248 = vunpack.c.l.b16 %v3129
        %v3249 = vunpack.c.l.b16 %v3134
        %v3250 = vunpack.c.l.b16 %v3139
        %v3251 = vunpack.c.l.b16 %v3144
        %v3252 = vunpack.c.l.b16 %v3149
        %v3253 = vunpack.c.l.b16 %v3154
        %v3254 = vunpack.c.l.b16 %v3159
        %v3255 = vunpack.c.l.b16 %v3164
        %v3256 = vunpack.c.l.b16 %v3169
        %v3257 = vpack.c.b16 %v3242, %v3241
        %v3258 = vpack.c.b16 %v3244, %v3243
        %v3259 = vpack.c.b16 %v3246, %v3245
        %v3260 = vpack.c.b16 %v3248, %v3247
        %v3261 = vpack.c.b16 %v3250, %v3249
        %v3262 = vpack.c.b16 %v3252, %v3251
        %v3263 = vpack.c.b16 %v3254, %v3253
        %v3264 = vpack.c.b16 %v3256, %v3255
        %v3281 = vunpack.c.h.b16 %v3095
        %v3282 = vunpack.c.h.b16 %v3100
        %v3283 = vunpack.c.h.b16 %v3105
        %v3284 = vunpack.c.h.b16 %v3110
        %v3285 = vunpack.c.h.b16 %v3115
        %v3286 = vunpack.c.h.b16 %v3120
        %v3287 = vunpack.c.h.b16 %v3125
        %v3288 = vunpack.c.h.b16 %v3130
        %v3289 = vunpack.c.h.b16 %v3135
        %v3290 = vunpack.c.h.b16 %v3140
        %v3291 = vunpack.c.h.b16 %v3145
        %v3292 = vunpack.c.h.b16 %v3150
        %v3293 = vunpack.c.h.b16 %v3155
        %v3294 = vunpack.c.h.b16 %v3160
        %v3295 = vunpack.c.h.b16 %v3165
        %v3296 = vunpack.c.h.b16 %v3170
        %v3297 = vpack.c.b16 %v3282, %v3281
        %v3298 = vpack.c.b16 %v3284, %v3283
        %v3299 = vpack.c.b16 %v3286, %v3285
        %v3300 = vpack.c.b16 %v3288, %v3287
        %v3301 = vpack.c.b16 %v3290, %v3289
        %v3302 = vpack.c.b16 %v3292, %v3291
        %v3303 = vpack.c.b16 %v3294, %v3293
        %v3304 = vpack.c.b16 %v3296, %v3295
        %vm3305 = vcmask 523264
        %v3307 = vsel %vm3305, %v3257, 0
        %v3310 = vsel %vm3305, %v3258, 0
        %v3313 = vsel %vm3305, %v3259, 0
        %v3316 = vsel %vm3305, %v3260, 0
        %v3319 = vsel %vm3305, %v3261, 0
        %v3322 = vsel %vm3305, %v3262, 0
        %v3325 = vsel %vm3305, %v3263, 0
        %v3328 = vsel %vm3305, %v3264, 0
        %v3331 = vsel %vm3305, %v3297, 0
        %v3334 = vsel %vm3305, %v3298, 0
        %v3337 = vsel %vm3305, %v3299, 0
        %v3340 = vsel %vm3305, %v3300, 0
        %v3343 = vsel %vm3305, %v3301, 0
        %v3346 = vsel %vm3305, %v3302, 0
        %v3349 = vsel %vm3305, %v3303, 0
        %v3352 = vsel %vm3305, %v3304, 0
        %3354 = vmatpush.bf16.xpose.msra.mxu0 %v3352
        %3355 = vmatpush.bf16.xpose.msra.mxu0 %v3349
        %3356 = vmatpush.bf16.xpose.msra.mxu0 %v3346
        %3357 = vmatpush.bf16.xpose.msra.mxu0 %v3343
        %3358 = vmatpush.bf16.xpose.msra.mxu0 %v3340
        %3359 = vmatpush.bf16.xpose.msra.mxu0 %v3337
        %3360 = vmatpush.bf16.xpose.msra.mxu0 %v3334
        %3361 = vmatpush.bf16.xpose.msra.mxu0 %v3331
        %3362 = vmatmul.bf16.gmra.mxu0 %v3307
        %v3363 = vpop.f32.mrf.mxu0
        %v3364 = vadd.f32 %v3209, %v3363
        %v3365 = vpop.f32.mrf.mxu0
        %v3366 = vadd.f32 %v3210, %v3365
        %3367 = vmatmul.bf16.gmra.mxu0 %v3310
        %v3368 = vpop.f32.mrf.mxu0
        %v3369 = vadd.f32 %v3211, %v3368
        %v3370 = vpop.f32.mrf.mxu0
        %v3371 = vadd.f32 %v3212, %v3370
        %3372 = vmatmul.bf16.gmra.mxu0 %v3313
        %v3373 = vpop.f32.mrf.mxu0
        %v3374 = vadd.f32 %v3213, %v3373
        %v3375 = vpop.f32.mrf.mxu0
        %v3376 = vadd.f32 %v3214, %v3375
        %3377 = vmatmul.bf16.gmra.mxu0 %v3316
        %v3378 = vpop.f32.mrf.mxu0
        %v3379 = vadd.f32 %v3215, %v3378
        %v3380 = vpop.f32.mrf.mxu0
        %v3381 = vadd.f32 %v3216, %v3380
        %3382 = vmatmul.bf16.gmra.mxu0 %v3319
        %v3383 = vpop.f32.mrf.mxu0
        %v3384 = vadd.f32 %v3217, %v3383
        %v3385 = vpop.f32.mrf.mxu0
        %v3386 = vadd.f32 %v3218, %v3385
        %3387 = vmatmul.bf16.gmra.mxu0 %v3322
        %v3388 = vpop.f32.mrf.mxu0
        %v3389 = vadd.f32 %v3219, %v3388
        %v3390 = vpop.f32.mrf.mxu0
        %v3391 = vadd.f32 %v3220, %v3390
        %3392 = vmatmul.bf16.gmra.mxu0 %v3325
        %v3393 = vpop.f32.mrf.mxu0
        %v3394 = vadd.f32 %v3221, %v3393
        %v3395 = vpop.f32.mrf.mxu0
        %v3396 = vadd.f32 %v3222, %v3395
        %3397 = vmatmul.bf16.gmra.mxu0 %v3328
        %v3398 = vpop.f32.mrf.mxu0
        %v3399 = vadd.f32 %v3223, %v3398
        %v3400 = vpop.f32.mrf.mxu0
        %v3401 = vadd.f32 %v3224, %v3400
        %3402 = vdwg.mxu0
        %3403 = vmax.xlane.f32.xlu0 %v3364
        %v3404 = vpop.xlane.xlu0 %3403
        %3405 = vmax.xlane.f32.xlu0 %v3366
        %v3406 = vpop.xlane.xlu0 %3405
        %3407 = vmax.xlane.f32.xlu0 %v3369
        %v3408 = vpop.xlane.xlu0 %3407
        %3409 = vmax.xlane.f32.xlu0 %v3371
        %v3410 = vpop.xlane.xlu0 %3409
        %3411 = vmax.xlane.f32.xlu0 %v3374
        %v3412 = vpop.xlane.xlu0 %3411
        %3413 = vmax.xlane.f32.xlu0 %v3376
        %v3414 = vpop.xlane.xlu0 %3413
        %3415 = vmax.xlane.f32.xlu0 %v3379
        %v3416 = vpop.xlane.xlu0 %3415
        %3417 = vmax.xlane.f32.xlu0 %v3381
        %v3418 = vpop.xlane.xlu0 %3417
        %3419 = vmax.xlane.f32.xlu0 %v3384
        %v3420 = vpop.xlane.xlu0 %3419
        %3421 = vmax.xlane.f32.xlu0 %v3386
        %v3422 = vpop.xlane.xlu0 %3421
        %3423 = vmax.xlane.f32.xlu0 %v3389
        %v3424 = vpop.xlane.xlu0 %3423
        %3425 = vmax.xlane.f32.xlu0 %v3391
        %v3426 = vpop.xlane.xlu0 %3425
        %3427 = vmax.xlane.f32.xlu0 %v3394
        %v3428 = vpop.xlane.xlu0 %3427
        %3429 = vmax.xlane.f32.xlu0 %v3396
        %v3430 = vpop.xlane.xlu0 %3429
        %3431 = vmax.xlane.f32.xlu0 %v3399
        %v3432 = vpop.xlane.xlu0 %3431
        %3433 = vmax.xlane.f32.xlu0 %v3401
        %v3434 = vpop.xlane.xlu0 %3433
        %v3435 = vsub.f32 %v3364, %v3404
        %v3436 = vsub.f32 %v3366, %v3406
        %v3437 = vsub.f32 %v3369, %v3408
        %v3438 = vsub.f32 %v3371, %v3410
        %v3439 = vsub.f32 %v3374, %v3412
        %v3440 = vsub.f32 %v3376, %v3414
        %v3441 = vsub.f32 %v3379, %v3416
        %v3442 = vsub.f32 %v3381, %v3418
        %v3443 = vsub.f32 %v3384, %v3420
        %v3444 = vsub.f32 %v3386, %v3422
        %v3445 = vsub.f32 %v3389, %v3424
        %v3446 = vsub.f32 %v3391, %v3426
        %v3447 = vsub.f32 %v3394, %v3428
        %v3448 = vsub.f32 %v3396, %v3430
        %v3449 = vsub.f32 %v3399, %v3432
        %v3450 = vsub.f32 %v3401, %v3434
        %v3451 = vmul.f32 %v3435, 1.442695
        %v3452 = vpow.pop %v3451
        %v3453 = vmul.f32 %v3436, 1.442695
        %v3454 = vpow.pop %v3453
        %v3455 = vmul.f32 %v3437, 1.442695
        %v3456 = vpow.pop %v3455
        %v3457 = vmul.f32 %v3438, 1.442695
        %v3458 = vpow.pop %v3457
        %v3459 = vmul.f32 %v3439, 1.442695
        %v3460 = vpow.pop %v3459
        %v3461 = vmul.f32 %v3440, 1.442695
        %v3462 = vpow.pop %v3461
        %v3463 = vmul.f32 %v3441, 1.442695
        %v3464 = vpow.pop %v3463
        %v3465 = vmul.f32 %v3442, 1.442695
        %v3466 = vpow.pop %v3465
        %v3467 = vmul.f32 %v3443, 1.442695
        %v3468 = vpow.pop %v3467
        %v3469 = vmul.f32 %v3444, 1.442695
        %v3470 = vpow.pop %v3469
        %v3471 = vmul.f32 %v3445, 1.442695
        %v3472 = vpow.pop %v3471
        %v3473 = vmul.f32 %v3446, 1.442695
        %v3474 = vpow.pop %v3473
        %v3475 = vmul.f32 %v3447, 1.442695
        %v3476 = vpow.pop %v3475
        %v3477 = vmul.f32 %v3448, 1.442695
        %v3478 = vpow.pop %v3477
        %v3479 = vmul.f32 %v3449, 1.442695
        %v3480 = vpow.pop %v3479
        %v3481 = vmul.f32 %v3450, 1.442695
        %v3482 = vpow.pop %v3481
        %3483 = vadd.xlane.f32.xlu0 %v3452
        %v3484 = vpop.xlane.xlu0 %3483
        %3485 = vadd.xlane.f32.xlu0 %v3454
        %v3486 = vpop.xlane.xlu0 %3485
        %3487 = vadd.xlane.f32.xlu0 %v3456
        %v3488 = vpop.xlane.xlu0 %3487
        %3489 = vadd.xlane.f32.xlu0 %v3458
        %v3490 = vpop.xlane.xlu0 %3489
        %3491 = vadd.xlane.f32.xlu0 %v3460
        %v3492 = vpop.xlane.xlu0 %3491
        %3493 = vadd.xlane.f32.xlu0 %v3462
        %v3494 = vpop.xlane.xlu0 %3493
        %3495 = vadd.xlane.f32.xlu0 %v3464
        %v3496 = vpop.xlane.xlu0 %3495
        %3497 = vadd.xlane.f32.xlu0 %v3466
        %v3498 = vpop.xlane.xlu0 %3497
        %3499 = vadd.xlane.f32.xlu0 %v3468
        %v3500 = vpop.xlane.xlu0 %3499
        %3501 = vadd.xlane.f32.xlu0 %v3470
        %v3502 = vpop.xlane.xlu0 %3501
        %3503 = vadd.xlane.f32.xlu0 %v3472
        %v3504 = vpop.xlane.xlu0 %3503
        %3505 = vadd.xlane.f32.xlu0 %v3474
        %v3506 = vpop.xlane.xlu0 %3505
        %3507 = vadd.xlane.f32.xlu0 %v3476
        %v3508 = vpop.xlane.xlu0 %3507
        %3509 = vadd.xlane.f32.xlu0 %v3478
        %v3510 = vpop.xlane.xlu0 %3509
        %3511 = vadd.xlane.f32.xlu0 %v3480
        %v3512 = vpop.xlane.xlu0 %3511
        %3513 = vadd.xlane.f32.xlu0 %v3482
        %v3514 = vpop.xlane.xlu0 %3513
        %v3515 = vrcp.pop %v3484
        %v3516 = vrcp.pop %v3486
        %v3517 = vrcp.pop %v3488
        %v3518 = vrcp.pop %v3490
        %v3519 = vrcp.pop %v3492
        %v3520 = vrcp.pop %v3494
        %v3521 = vrcp.pop %v3496
        %v3522 = vrcp.pop %v3498
        %v3523 = vrcp.pop %v3500
        %v3524 = vrcp.pop %v3502
        %v3525 = vrcp.pop %v3504
        %v3526 = vrcp.pop %v3506
        %v3527 = vrcp.pop %v3508
        %v3528 = vrcp.pop %v3510
        %v3529 = vrcp.pop %v3512
        %v3530 = vrcp.pop %v3514
        %v3531 = vmul.f32 %v3452, %v3515
        %v3532 = vmul.f32 %v3454, %v3516
        %v3533 = vmul.f32 %v3456, %v3517
        %v3534 = vmul.f32 %v3458, %v3518
        %v3535 = vmul.f32 %v3460, %v3519
        %v3536 = vmul.f32 %v3462, %v3520
        %v3537 = vmul.f32 %v3464, %v3521
        %v3538 = vmul.f32 %v3466, %v3522
        %v3539 = vmul.f32 %v3468, %v3523
        %v3540 = vmul.f32 %v3470, %v3524
        %v3541 = vmul.f32 %v3472, %v3525
        %v3542 = vmul.f32 %v3474, %v3526
        %v3543 = vmul.f32 %v3476, %v3527
        %v3544 = vmul.f32 %v3478, %v3528
        %v3545 = vmul.f32 %v3480, %v3529
        %v3546 = vmul.f32 %v3482, %v3530
        %v3547 = vpack.c.bf16 %v3532, %v3531
        %v3548 = vpack.c.bf16 %v3534, %v3533
        %v3549 = vpack.c.bf16 %v3536, %v3535
        %v3550 = vpack.c.bf16 %v3538, %v3537
        %v3551 = vpack.c.bf16 %v3540, %v3539
        %v3552 = vpack.c.bf16 %v3542, %v3541
        %v3553 = vpack.c.bf16 %v3544, %v3543
        %v3554 = vpack.c.bf16 %v3546, %v3545
        %v3571 = vunpack.c.l.b16 %v3097
        %v3572 = vunpack.c.l.b16 %v3102
        %v3573 = vunpack.c.l.b16 %v3107
        %v3574 = vunpack.c.l.b16 %v3112
        %v3575 = vunpack.c.l.b16 %v3117
        %v3576 = vunpack.c.l.b16 %v3122
        %v3577 = vunpack.c.l.b16 %v3127
        %v3578 = vunpack.c.l.b16 %v3132
        %v3579 = vunpack.c.l.b16 %v3137
        %v3580 = vunpack.c.l.b16 %v3142
        %v3581 = vunpack.c.l.b16 %v3147
        %v3582 = vunpack.c.l.b16 %v3152
        %v3583 = vunpack.c.l.b16 %v3157
        %v3584 = vunpack.c.l.b16 %v3162
        %v3585 = vunpack.c.l.b16 %v3167
        %v3586 = vunpack.c.l.b16 %v3172
        %v3587 = vpack.c.b16 %v3572, %v3571
        %v3588 = vpack.c.b16 %v3574, %v3573
        %v3589 = vpack.c.b16 %v3576, %v3575
        %v3590 = vpack.c.b16 %v3578, %v3577
        %v3591 = vpack.c.b16 %v3580, %v3579
        %v3592 = vpack.c.b16 %v3582, %v3581
        %v3593 = vpack.c.b16 %v3584, %v3583
        %v3594 = vpack.c.b16 %v3586, %v3585
        %3603 = vmatpush.bf16.msra.mxu0 %v3594
        %3604 = vmatpush.bf16.msra.mxu0 %v3593
        %3605 = vmatpush.bf16.msra.mxu0 %v3592
        %3606 = vmatpush.bf16.msra.mxu0 %v3591
        %3607 = vmatpush.bf16.msra.mxu0 %v3590
        %3608 = vmatpush.bf16.msra.mxu0 %v3589
        %3609 = vmatpush.bf16.msra.mxu0 %v3588
        %3610 = vmatpush.bf16.msra.mxu0 %v3587
        %3611 = vmatmul.bf16.gmra.mxu0 %v3547
        %v3612 = vpop.f32.mrf.mxu0
        %v3613 = vadd.f32 0.0, %v3612
        %v3614 = vpop.f32.mrf.mxu0
        %v3615 = vadd.f32 0.0, %v3614
        %3616 = vmatmul.bf16.gmra.mxu0 %v3548
        %v3617 = vpop.f32.mrf.mxu0
        %v3618 = vadd.f32 0.0, %v3617
        %v3619 = vpop.f32.mrf.mxu0
        %v3620 = vadd.f32 0.0, %v3619
        %3621 = vmatmul.bf16.gmra.mxu0 %v3549
        %v3622 = vpop.f32.mrf.mxu0
        %v3623 = vadd.f32 0.0, %v3622
        %v3624 = vpop.f32.mrf.mxu0
        %v3625 = vadd.f32 0.0, %v3624
        %3626 = vmatmul.bf16.gmra.mxu0 %v3550
        %v3627 = vpop.f32.mrf.mxu0
        %v3628 = vadd.f32 0.0, %v3627
        %v3629 = vpop.f32.mrf.mxu0
        %v3630 = vadd.f32 0.0, %v3629
        %3631 = vmatmul.bf16.gmra.mxu0 %v3551
        %v3632 = vpop.f32.mrf.mxu0
        %v3633 = vadd.f32 0.0, %v3632
        %v3634 = vpop.f32.mrf.mxu0
        %v3635 = vadd.f32 0.0, %v3634
        %3636 = vmatmul.bf16.gmra.mxu0 %v3552
        %v3637 = vpop.f32.mrf.mxu0
        %v3638 = vadd.f32 0.0, %v3637
        %v3639 = vpop.f32.mrf.mxu0
        %v3640 = vadd.f32 0.0, %v3639
        %3641 = vmatmul.bf16.gmra.mxu0 %v3553
        %v3642 = vpop.f32.mrf.mxu0
        %v3643 = vadd.f32 0.0, %v3642
        %v3644 = vpop.f32.mrf.mxu0
        %v3645 = vadd.f32 0.0, %v3644
        %3646 = vmatmul.bf16.gmra.mxu0 %v3554
        %v3647 = vpop.f32.mrf.mxu0
        %v3648 = vadd.f32 0.0, %v3647
        %v3649 = vpop.f32.mrf.mxu0
        %v3650 = vadd.f32 0.0, %v3649
        %3651 = vdwg.mxu0
        %v3652 = vpack.c.bf16 %v3615, %v3613
        %v3653 = vpack.c.bf16 %v3620, %v3618
        %v3654 = vpack.c.bf16 %v3625, %v3623
        %v3655 = vpack.c.bf16 %v3630, %v3628
        %v3656 = vpack.c.bf16 %v3635, %v3633
        %v3657 = vpack.c.bf16 %v3640, %v3638
        %v3658 = vpack.c.bf16 %v3645, %v3643
        %v3659 = vpack.c.bf16 %v3650, %v3648
        %v3660 = vld [vmem:[#allocation7] sm:$0xff]
        %v3661 = vld [vmem:[#allocation7 + $0x8] sm:$0xf]
        %v3662 = vld [vmem:[#allocation7 + $0xc] sm:$0xff]
        %v3663 = vld [vmem:[#allocation7 + $0x14] sm:$0xf]
        %v3664 = vld [vmem:[#allocation7 + $0x18] sm:$0xff]
        %v3665 = vld [vmem:[#allocation7 + $0x20] sm:$0xf]
        %v3666 = vld [vmem:[#allocation7 + $0x24] sm:$0xff]
        %v3667 = vld [vmem:[#allocation7 + $0x2c] sm:$0xf]
        %v3668 = vld [vmem:[#allocation7 + $0x30] sm:$0xff]
        %v3669 = vld [vmem:[#allocation7 + $0x38] sm:$0xf]
        %v3670 = vld [vmem:[#allocation7 + $0x3c] sm:$0xff]
        %v3671 = vld [vmem:[#allocation7 + $0x44] sm:$0xf]
        %v3672 = vld [vmem:[#allocation7 + $0x48] sm:$0xff]
        %v3673 = vld [vmem:[#allocation7 + $0x50] sm:$0xf]
        %v3674 = vld [vmem:[#allocation7 + $0x54] sm:$0xff]
        %v3675 = vld [vmem:[#allocation7 + $0x5c] sm:$0xf]
        %3676 = vrot.lane.b32.xlu0 %v3257, 64
        %v3677 = vpop.permute.xlu0 %3676
        %3678 = vrot.lane.b32.xlu0 %v3258, 64
        %v3679 = vpop.permute.xlu0 %3678
        %3680 = vrot.lane.b32.xlu0 %v3259, 64
        %v3681 = vpop.permute.xlu0 %3680
        %3682 = vrot.lane.b32.xlu0 %v3260, 64
        %v3683 = vpop.permute.xlu0 %3682
        %3684 = vrot.lane.b32.xlu0 %v3261, 64
        %v3685 = vpop.permute.xlu0 %3684
        %3686 = vrot.lane.b32.xlu0 %v3262, 64
        %v3687 = vpop.permute.xlu0 %3686
        %3688 = vrot.lane.b32.xlu0 %v3263, 64
        %v3689 = vpop.permute.xlu0 %3688
        %3690 = vrot.lane.b32.xlu0 %v3264, 64
        %v3691 = vpop.permute.xlu0 %3690
        %3692 = vrot.lane.b32.xlu0 %v3297, 64
        %v3693 = vpop.permute.xlu0 %3692
        %3694 = vrot.lane.b32.xlu0 %v3298, 64
        %v3695 = vpop.permute.xlu0 %3694
        %3696 = vrot.lane.b32.xlu0 %v3299, 64
        %v3697 = vpop.permute.xlu0 %3696
        %3698 = vrot.lane.b32.xlu0 %v3300, 64
        %v3699 = vpop.permute.xlu0 %3698
        %3700 = vrot.lane.b32.xlu0 %v3301, 64
        %v3701 = vpop.permute.xlu0 %3700
        %3702 = vrot.lane.b32.xlu0 %v3302, 64
        %v3703 = vpop.permute.xlu0 %3702
        %3704 = vrot.lane.b32.xlu0 %v3303, 64
        %v3705 = vpop.permute.xlu0 %3704
        %3706 = vrot.lane.b32.xlu0 %v3304, 64
        %v3707 = vpop.permute.xlu0 %3706
        %v3709 = vsel %vm3305, %v3677, 0
        %v3712 = vsel %vm3305, %v3679, 0
        %v3715 = vsel %vm3305, %v3681, 0
        %v3718 = vsel %vm3305, %v3683, 0
        %v3721 = vsel %vm3305, %v3685, 0
        %v3724 = vsel %vm3305, %v3687, 0
        %v3727 = vsel %vm3305, %v3689, 0
        %v3730 = vsel %vm3305, %v3691, 0
        %v3733 = vsel %vm3305, %v3693, 0
        %v3736 = vsel %vm3305, %v3695, 0
        %v3739 = vsel %vm3305, %v3697, 0
        %v3742 = vsel %vm3305, %v3699, 0
        %v3745 = vsel %vm3305, %v3701, 0
        %v3748 = vsel %vm3305, %v3703, 0
        %v3751 = vsel %vm3305, %v3705, 0
        %v3754 = vsel %vm3305, %v3707, 0
        %3756 = vmatpush.bf16.xpose.msra.mxu0 %v3754
        %3757 = vmatpush.bf16.xpose.msra.mxu0 %v3751
        %3758 = vmatpush.bf16.xpose.msra.mxu0 %v3748
        %3759 = vmatpush.bf16.xpose.msra.mxu0 %v3745
        %3760 = vmatpush.bf16.xpose.msra.mxu0 %v3742
        %3761 = vmatpush.bf16.xpose.msra.mxu0 %v3739
        %3762 = vmatpush.bf16.xpose.msra.mxu0 %v3736
        %3763 = vmatpush.bf16.xpose.msra.mxu0 %v3733
        %3764 = vmatmul.bf16.gmra.mxu0 %v3709
        %v3765 = vpop.f32.mrf.mxu0
        %v3766 = vadd.f32 %v3209, %v3765
        %v3767 = vpop.f32.mrf.mxu0
        %v3768 = vadd.f32 %v3210, %v3767
        %3769 = vmatmul.bf16.gmra.mxu0 %v3712
        %v3770 = vpop.f32.mrf.mxu0
        %v3771 = vadd.f32 %v3211, %v3770
        %v3772 = vpop.f32.mrf.mxu0
        %v3773 = vadd.f32 %v3212, %v3772
        %3774 = vmatmul.bf16.gmra.mxu0 %v3715
        %v3775 = vpop.f32.mrf.mxu0
        %v3776 = vadd.f32 %v3213, %v3775
        %v3777 = vpop.f32.mrf.mxu0
        %v3778 = vadd.f32 %v3214, %v3777
        %3779 = vmatmul.bf16.gmra.mxu0 %v3718
        %v3780 = vpop.f32.mrf.mxu0
        %v3781 = vadd.f32 %v3215, %v3780
        %v3782 = vpop.f32.mrf.mxu0
        %v3783 = vadd.f32 %v3216, %v3782
        %3784 = vmatmul.bf16.gmra.mxu0 %v3721
        %v3785 = vpop.f32.mrf.mxu0
        %v3786 = vadd.f32 %v3217, %v3785
        %v3787 = vpop.f32.mrf.mxu0
        %v3788 = vadd.f32 %v3218, %v3787
        %3789 = vmatmul.bf16.gmra.mxu0 %v3724
        %v3790 = vpop.f32.mrf.mxu0
        %v3791 = vadd.f32 %v3219, %v3790
        %v3792 = vpop.f32.mrf.mxu0
        %v3793 = vadd.f32 %v3220, %v3792
        %3794 = vmatmul.bf16.gmra.mxu0 %v3727
        %v3795 = vpop.f32.mrf.mxu0
        %v3796 = vadd.f32 %v3221, %v3795
        %v3797 = vpop.f32.mrf.mxu0
        %v3798 = vadd.f32 %v3222, %v3797
        %3799 = vmatmul.bf16.gmra.mxu0 %v3730
        %v3800 = vpop.f32.mrf.mxu0
        %v3801 = vadd.f32 %v3223, %v3800
        %v3802 = vpop.f32.mrf.mxu0
        %v3803 = vadd.f32 %v3224, %v3802
        %3804 = vdwg.mxu0
        %3805 = vmax.xlane.f32.xlu0 %v3766
        %v3806 = vpop.xlane.xlu0 %3805
        %3807 = vmax.xlane.f32.xlu0 %v3768
        %v3808 = vpop.xlane.xlu0 %3807
        %3809 = vmax.xlane.f32.xlu0 %v3771
        %v3810 = vpop.xlane.xlu0 %3809
        %3811 = vmax.xlane.f32.xlu0 %v3773
        %v3812 = vpop.xlane.xlu0 %3811
        %3813 = vmax.xlane.f32.xlu0 %v3776
        %v3814 = vpop.xlane.xlu0 %3813
        %3815 = vmax.xlane.f32.xlu0 %v3778
        %v3816 = vpop.xlane.xlu0 %3815
        %3817 = vmax.xlane.f32.xlu0 %v3781
        %v3818 = vpop.xlane.xlu0 %3817
        %3819 = vmax.xlane.f32.xlu0 %v3783
        %v3820 = vpop.xlane.xlu0 %3819
        %3821 = vmax.xlane.f32.xlu0 %v3786
        %v3822 = vpop.xlane.xlu0 %3821
        %3823 = vmax.xlane.f32.xlu0 %v3788
        %v3824 = vpop.xlane.xlu0 %3823
        %3825 = vmax.xlane.f32.xlu0 %v3791
        %v3826 = vpop.xlane.xlu0 %3825
        %3827 = vmax.xlane.f32.xlu0 %v3793
        %v3828 = vpop.xlane.xlu0 %3827
        %3829 = vmax.xlane.f32.xlu0 %v3796
        %v3830 = vpop.xlane.xlu0 %3829
        %3831 = vmax.xlane.f32.xlu0 %v3798
        %v3832 = vpop.xlane.xlu0 %3831
        %3833 = vmax.xlane.f32.xlu0 %v3801
        %v3834 = vpop.xlane.xlu0 %3833
        %3835 = vmax.xlane.f32.xlu0 %v3803
        %v3836 = vpop.xlane.xlu0 %3835
        %v3837 = vsub.f32 %v3766, %v3806
        %v3838 = vsub.f32 %v3768, %v3808
        %v3839 = vsub.f32 %v3771, %v3810
        %v3840 = vsub.f32 %v3773, %v3812
        %v3841 = vsub.f32 %v3776, %v3814
        %v3842 = vsub.f32 %v3778, %v3816
        %v3843 = vsub.f32 %v3781, %v3818
        %v3844 = vsub.f32 %v3783, %v3820
        %v3845 = vsub.f32 %v3786, %v3822
        %v3846 = vsub.f32 %v3788, %v3824
        %v3847 = vsub.f32 %v3791, %v3826
        %v3848 = vsub.f32 %v3793, %v3828
        %v3849 = vsub.f32 %v3796, %v3830
        %v3850 = vsub.f32 %v3798, %v3832
        %v3851 = vsub.f32 %v3801, %v3834
        %v3852 = vsub.f32 %v3803, %v3836
        %v3853 = vmul.f32 %v3837, 1.442695
        %v3854 = vpow.pop %v3853
        %v3855 = vmul.f32 %v3838, 1.442695
        %v3856 = vpow.pop %v3855
        %v3857 = vmul.f32 %v3839, 1.442695
        %v3858 = vpow.pop %v3857
        %v3859 = vmul.f32 %v3840, 1.442695
        %v3860 = vpow.pop %v3859
        %v3861 = vmul.f32 %v3841, 1.442695
        %v3862 = vpow.pop %v3861
        %v3863 = vmul.f32 %v3842, 1.442695
        %v3864 = vpow.pop %v3863
        %v3865 = vmul.f32 %v3843, 1.442695
        %v3866 = vpow.pop %v3865
        %v3867 = vmul.f32 %v3844, 1.442695
        %v3868 = vpow.pop %v3867
        %v3869 = vmul.f32 %v3845, 1.442695
        %v3870 = vpow.pop %v3869
        %v3871 = vmul.f32 %v3846, 1.442695
        %v3872 = vpow.pop %v3871
        %v3873 = vmul.f32 %v3847, 1.442695
        %v3874 = vpow.pop %v3873
        %v3875 = vmul.f32 %v3848, 1.442695
        %v3876 = vpow.pop %v3875
        %v3877 = vmul.f32 %v3849, 1.442695
        %v3878 = vpow.pop %v3877
        %v3879 = vmul.f32 %v3850, 1.442695
        %v3880 = vpow.pop %v3879
        %v3881 = vmul.f32 %v3851, 1.442695
        %v3882 = vpow.pop %v3881
        %v3883 = vmul.f32 %v3852, 1.442695
        %v3884 = vpow.pop %v3883
        %3885 = vadd.xlane.f32.xlu0 %v3854
        %v3886 = vpop.xlane.xlu0 %3885
        %3887 = vadd.xlane.f32.xlu0 %v3856
        %v3888 = vpop.xlane.xlu0 %3887
        %3889 = vadd.xlane.f32.xlu0 %v3858
        %v3890 = vpop.xlane.xlu0 %3889
        %3891 = vadd.xlane.f32.xlu0 %v3860
        %v3892 = vpop.xlane.xlu0 %3891
        %3893 = vadd.xlane.f32.xlu0 %v3862
        %v3894 = vpop.xlane.xlu0 %3893
        %3895 = vadd.xlane.f32.xlu0 %v3864
        %v3896 = vpop.xlane.xlu0 %3895
        %3897 = vadd.xlane.f32.xlu0 %v3866
        %v3898 = vpop.xlane.xlu0 %3897
        %3899 = vadd.xlane.f32.xlu0 %v3868
        %v3900 = vpop.xlane.xlu0 %3899
        %3901 = vadd.xlane.f32.xlu0 %v3870
        %v3902 = vpop.xlane.xlu0 %3901
        %3903 = vadd.xlane.f32.xlu0 %v3872
        %v3904 = vpop.xlane.xlu0 %3903
        %3905 = vadd.xlane.f32.xlu0 %v3874
        %v3906 = vpop.xlane.xlu0 %3905
        %3907 = vadd.xlane.f32.xlu0 %v3876
        %v3908 = vpop.xlane.xlu0 %3907
        %3909 = vadd.xlane.f32.xlu0 %v3878
        %v3910 = vpop.xlane.xlu0 %3909
        %3911 = vadd.xlane.f32.xlu0 %v3880
        %v3912 = vpop.xlane.xlu0 %3911
        %3913 = vadd.xlane.f32.xlu0 %v3882
        %v3914 = vpop.xlane.xlu0 %3913
        %3915 = vadd.xlane.f32.xlu0 %v3884
        %v3916 = vpop.xlane.xlu0 %3915
        %v3917 = vrcp.pop %v3886
        %v3918 = vrcp.pop %v3888
        %v3919 = vrcp.pop %v3890
        %v3920 = vrcp.pop %v3892
        %v3921 = vrcp.pop %v3894
        %v3922 = vrcp.pop %v3896
        %v3923 = vrcp.pop %v3898
        %v3924 = vrcp.pop %v3900
        %v3925 = vrcp.pop %v3902
        %v3926 = vrcp.pop %v3904
        %v3927 = vrcp.pop %v3906
        %v3928 = vrcp.pop %v3908
        %v3929 = vrcp.pop %v3910
        %v3930 = vrcp.pop %v3912
        %v3931 = vrcp.pop %v3914
        %v3932 = vrcp.pop %v3916
        %v3933 = vmul.f32 %v3854, %v3917
        %v3934 = vmul.f32 %v3856, %v3918
        %v3935 = vmul.f32 %v3858, %v3919
        %v3936 = vmul.f32 %v3860, %v3920
        %v3937 = vmul.f32 %v3862, %v3921
        %v3938 = vmul.f32 %v3864, %v3922
        %v3939 = vmul.f32 %v3866, %v3923
        %v3940 = vmul.f32 %v3868, %v3924
        %v3941 = vmul.f32 %v3870, %v3925
        %v3942 = vmul.f32 %v3872, %v3926
        %v3943 = vmul.f32 %v3874, %v3927
        %v3944 = vmul.f32 %v3876, %v3928
        %v3945 = vmul.f32 %v3878, %v3929
        %v3946 = vmul.f32 %v3880, %v3930
        %v3947 = vmul.f32 %v3882, %v3931
        %v3948 = vmul.f32 %v3884, %v3932
        %v3949 = vpack.c.bf16 %v3934, %v3933
        %v3950 = vpack.c.bf16 %v3936, %v3935
        %v3951 = vpack.c.bf16 %v3938, %v3937
        %v3952 = vpack.c.bf16 %v3940, %v3939
        %v3953 = vpack.c.bf16 %v3942, %v3941
        %v3954 = vpack.c.bf16 %v3944, %v3943
        %v3955 = vpack.c.bf16 %v3946, %v3945
        %v3956 = vpack.c.bf16 %v3948, %v3947
        %3957 = vrot.lane.b32.xlu0 %v3587, 64
        %v3958 = vpop.permute.xlu0 %3957
        %3959 = vrot.lane.b32.xlu0 %v3588, 64
        %v3960 = vpop.permute.xlu0 %3959
        %3961 = vrot.lane.b32.xlu0 %v3589, 64
        %v3962 = vpop.permute.xlu0 %3961
        %3963 = vrot.lane.b32.xlu0 %v3590, 64
        %v3964 = vpop.permute.xlu0 %3963
        %3965 = vrot.lane.b32.xlu0 %v3591, 64
        %v3966 = vpop.permute.xlu0 %3965
        %3967 = vrot.lane.b32.xlu0 %v3592, 64
        %v3968 = vpop.permute.xlu0 %3967
        %3969 = vrot.lane.b32.xlu0 %v3593, 64
        %v3970 = vpop.permute.xlu0 %3969
        %3971 = vrot.lane.b32.xlu0 %v3594, 64
        %v3972 = vpop.permute.xlu0 %3971
        %3981 = vmatpush.bf16.msra.mxu0 %v3972
        %3982 = vmatpush.bf16.msra.mxu0 %v3970
        %3983 = vmatpush.bf16.msra.mxu0 %v3968
        %3984 = vmatpush.bf16.msra.mxu0 %v3966
        %3985 = vmatpush.bf16.msra.mxu0 %v3964
        %3986 = vmatpush.bf16.msra.mxu0 %v3962
        %3987 = vmatpush.bf16.msra.mxu0 %v3960
        %3988 = vmatpush.bf16.msra.mxu0 %v3958
        %3989 = vmatmul.bf16.gmra.mxu0 %v3949
        %v3990 = vpop.f32.mrf.mxu0
        %v3991 = vadd.f32 0.0, %v3990
        %v3992 = vpop.f32.mrf.mxu0
        %v3993 = vadd.f32 0.0, %v3992
        %3994 = vmatmul.bf16.gmra.mxu0 %v3950
        %v3995 = vpop.f32.mrf.mxu0
        %v3996 = vadd.f32 0.0, %v3995
        %v3997 = vpop.f32.mrf.mxu0
        %v3998 = vadd.f32 0.0, %v3997
        %3999 = vmatmul.bf16.gmra.mxu0 %v3951
        %v4000 = vpop.f32.mrf.mxu0
        %v4001 = vadd.f32 0.0, %v4000
        %v4002 = vpop.f32.mrf.mxu0
        %v4003 = vadd.f32 0.0, %v4002
        %4004 = vmatmul.bf16.gmra.mxu0 %v3952
        %v4005 = vpop.f32.mrf.mxu0
        %v4006 = vadd.f32 0.0, %v4005
        %v4007 = vpop.f32.mrf.mxu0
        %v4008 = vadd.f32 0.0, %v4007
        %4009 = vmatmul.bf16.gmra.mxu0 %v3953
        %v4010 = vpop.f32.mrf.mxu0
        %v4011 = vadd.f32 0.0, %v4010
        %v4012 = vpop.f32.mrf.mxu0
        %v4013 = vadd.f32 0.0, %v4012
        %4014 = vmatmul.bf16.gmra.mxu0 %v3954
        %v4015 = vpop.f32.mrf.mxu0
        %v4016 = vadd.f32 0.0, %v4015
        %v4017 = vpop.f32.mrf.mxu0
        %v4018 = vadd.f32 0.0, %v4017
        %4019 = vmatmul.bf16.gmra.mxu0 %v3955
        %v4020 = vpop.f32.mrf.mxu0
        %v4021 = vadd.f32 0.0, %v4020
        %v4022 = vpop.f32.mrf.mxu0
        %v4023 = vadd.f32 0.0, %v4022
        %4024 = vmatmul.bf16.gmra.mxu0 %v3956
        %v4025 = vpop.f32.mrf.mxu0
        %v4026 = vadd.f32 0.0, %v4025
        %v4027 = vpop.f32.mrf.mxu0
        %v4028 = vadd.f32 0.0, %v4027
        %4029 = vdwg.mxu0
        %v4030 = vpack.c.bf16 %v3993, %v3991
        %v4031 = vpack.c.bf16 %v3998, %v3996
        %v4032 = vpack.c.bf16 %v4003, %v4001
        %v4033 = vpack.c.bf16 %v4008, %v4006
        %v4034 = vpack.c.bf16 %v4013, %v4011
        %v4035 = vpack.c.bf16 %v4018, %v4016
        %v4036 = vpack.c.bf16 %v4023, %v4021
        %v4037 = vpack.c.bf16 %v4028, %v4026
        %s4038 = scalar_lea.vmem [#allocation7], 96
        %v4039 = vld [vmem:[%s4038] sm:$0xff]
        %v4040 = vld [vmem:[%s4038 + $0x8] sm:$0xf]
        %v4041 = vld [vmem:[%s4038 + $0xc] sm:$0xff]
        %v4042 = vld [vmem:[%s4038 + $0x14] sm:$0xf]
        %v4043 = vld [vmem:[%s4038 + $0x18] sm:$0xff]
        %v4044 = vld [vmem:[%s4038 + $0x20] sm:$0xf]
        %v4045 = vld [vmem:[%s4038 + $0x24] sm:$0xff]
        %v4046 = vld [vmem:[%s4038 + $0x2c] sm:$0xf]
        %v4047 = vld [vmem:[%s4038 + $0x30] sm:$0xff]
        %v4048 = vld [vmem:[%s4038 + $0x38] sm:$0xf]
        %v4049 = vld [vmem:[%s4038 + $0x3c] sm:$0xff]
        %v4050 = vld [vmem:[%s4038 + $0x44] sm:$0xf]
        %v4051 = vld [vmem:[%s4038 + $0x48] sm:$0xff]
        %v4052 = vld [vmem:[%s4038 + $0x50] sm:$0xf]
        %v4053 = vld [vmem:[%s4038 + $0x54] sm:$0xff]
        %v4054 = vld [vmem:[%s4038 + $0x5c] sm:$0xf]
        %v4071 = vunpack.c.l.b16 %v4039
        %v4072 = vunpack.c.h.b16 %v4039
        %v4073 = vunpack.c.l.b16 %v4040
        %v4074 = vunpack.c.l.b16 %v4041
        %v4075 = vunpack.c.h.b16 %v4041
        %v4076 = vunpack.c.l.b16 %v4042
        %v4077 = vunpack.c.l.b16 %v4043
        %v4078 = vunpack.c.h.b16 %v4043
        %v4079 = vunpack.c.l.b16 %v4044
        %v4080 = vunpack.c.l.b16 %v4045
        %v4081 = vunpack.c.h.b16 %v4045
        %v4082 = vunpack.c.l.b16 %v4046
        %v4083 = vunpack.c.l.b16 %v4047
        %v4084 = vunpack.c.h.b16 %v4047
        %v4085 = vunpack.c.l.b16 %v4048
        %v4086 = vunpack.c.l.b16 %v4049
        %v4087 = vunpack.c.h.b16 %v4049
        %v4088 = vunpack.c.l.b16 %v4050
        %v4089 = vunpack.c.l.b16 %v4051
        %v4090 = vunpack.c.h.b16 %v4051
        %v4091 = vunpack.c.l.b16 %v4052
        %v4092 = vunpack.c.l.b16 %v4053
        %v4093 = vunpack.c.h.b16 %v4053
        %v4094 = vunpack.c.l.b16 %v4054
        %v4095 = vpack.c.b16 %v4074, %v4071
        %v4096 = vpack.c.b16 %v4075, %v4072
        %v4097 = vpack.c.b16 %v4076, %v4073
        %v4098 = vpack.c.b16 %v4080, %v4077
        %v4099 = vpack.c.b16 %v4081, %v4078
        %v4100 = vpack.c.b16 %v4082, %v4079
        %v4101 = vpack.c.b16 %v4086, %v4083
        %v4102 = vpack.c.b16 %v4087, %v4084
        %v4103 = vpack.c.b16 %v4088, %v4085
        %v4104 = vpack.c.b16 %v4092, %v4089
        %v4105 = vpack.c.b16 %v4093, %v4090
        %v4106 = vpack.c.b16 %v4094, %v4091
        %v4120 = vsel %vm3305, %v4030, 0
        %v4123 = vsel %vm3305, %v4031, 0
        %v4126 = vsel %vm3305, %v4032, 0
        %v4129 = vsel %vm3305, %v4033, 0
        %v4132 = vsel %vm3305, %v4034, 0
        %v4135 = vsel %vm3305, %v4035, 0
        %v4138 = vsel %vm3305, %v4036, 0
        %v4141 = vsel %vm3305, %v4037, 0
        %4143 = vmatpush.bf16.msra.mxu0 0
        %4144 = vmatpush.bf16.msra.mxu0 0
        %4145 = vmatpush.bf16.msra.mxu0 0
        %4146 = vmatpush.bf16.msra.mxu0 0
        %4147 = vmatpush.bf16.msra.mxu0 %v4104
        %4148 = vmatpush.bf16.msra.mxu0 %v4101
        %4149 = vmatpush.bf16.msra.mxu0 %v4098
        %4150 = vmatpush.bf16.msra.mxu0 %v4095
        %4151 = vmatmul.bf16.gmra.mxu0 %v4120
        %v4152 = vpop.f32.mrf.mxu0
        %v4153 = vadd.f32 0.0, %v4152
        %v4154 = vpop.f32.mrf.mxu0
        %v4155 = vadd.f32 0.0, %v4154
        %4156 = vmatmul.bf16.gmra.mxu0 %v4123
        %v4157 = vpop.f32.mrf.mxu0
        %v4158 = vadd.f32 0.0, %v4157
        %v4159 = vpop.f32.mrf.mxu0
        %v4160 = vadd.f32 0.0, %v4159
        %4161 = vmatmul.bf16.gmra.mxu0 %v4126
        %v4162 = vpop.f32.mrf.mxu0
        %v4163 = vadd.f32 0.0, %v4162
        %v4164 = vpop.f32.mrf.mxu0
        %v4165 = vadd.f32 0.0, %v4164
        %4166 = vmatmul.bf16.gmra.mxu0 %v4129
        %v4167 = vpop.f32.mrf.mxu0
        %v4168 = vadd.f32 0.0, %v4167
        %v4169 = vpop.f32.mrf.mxu0
        %v4170 = vadd.f32 0.0, %v4169
        %4171 = vmatmul.bf16.gmra.mxu0 %v4132
        %v4172 = vpop.f32.mrf.mxu0
        %v4173 = vadd.f32 0.0, %v4172
        %v4174 = vpop.f32.mrf.mxu0
        %v4175 = vadd.f32 0.0, %v4174
        %4176 = vmatmul.bf16.gmra.mxu0 %v4135
        %v4177 = vpop.f32.mrf.mxu0
        %v4178 = vadd.f32 0.0, %v4177
        %v4179 = vpop.f32.mrf.mxu0
        %v4180 = vadd.f32 0.0, %v4179
        %4181 = vmatmul.bf16.gmra.mxu0 %v4138
        %v4182 = vpop.f32.mrf.mxu0
        %v4183 = vadd.f32 0.0, %v4182
        %v4184 = vpop.f32.mrf.mxu0
        %v4185 = vadd.f32 0.0, %v4184
        %4186 = vmatmul.bf16.gmra.mxu0 %v4141
        %v4187 = vpop.f32.mrf.mxu0
        %v4188 = vadd.f32 0.0, %v4187
        %v4189 = vpop.f32.mrf.mxu0
        %v4190 = vadd.f32 0.0, %v4189
        %4191 = vdwg.mxu0
        %4192 = vmatpush.bf16.msra.mxu0 0
        %4193 = vmatpush.bf16.msra.mxu0 0
        %4194 = vmatpush.bf16.msra.mxu0 0
        %4195 = vmatpush.bf16.msra.mxu0 0
        %4196 = vmatpush.bf16.msra.mxu0 %v4105
        %4197 = vmatpush.bf16.msra.mxu0 %v4102
        %4198 = vmatpush.bf16.msra.mxu0 %v4099
        %4199 = vmatpush.bf16.msra.mxu0 %v4096
        %4200 = vmatmul.bf16.gmra.mxu0 %v4120
        %v4201 = vpop.f32.mrf.mxu0
        %v4202 = vadd.f32 0.0, %v4201
        %v4203 = vpop.f32.mrf.mxu0
        %v4204 = vadd.f32 0.0, %v4203
        %4205 = vmatmul.bf16.gmra.mxu0 %v4123
        %v4206 = vpop.f32.mrf.mxu0
        %v4207 = vadd.f32 0.0, %v4206
        %v4208 = vpop.f32.mrf.mxu0
        %v4209 = vadd.f32 0.0, %v4208
        %4210 = vmatmul.bf16.gmra.mxu0 %v4126
        %v4211 = vpop.f32.mrf.mxu0
        %v4212 = vadd.f32 0.0, %v4211
        %v4213 = vpop.f32.mrf.mxu0
        %v4214 = vadd.f32 0.0, %v4213
        %4215 = vmatmul.bf16.gmra.mxu0 %v4129
        %v4216 = vpop.f32.mrf.mxu0
        %v4217 = vadd.f32 0.0, %v4216
        %v4218 = vpop.f32.mrf.mxu0
        %v4219 = vadd.f32 0.0, %v4218
        %4220 = vmatmul.bf16.gmra.mxu0 %v4132
        %v4221 = vpop.f32.mrf.mxu0
        %v4222 = vadd.f32 0.0, %v4221
        %v4223 = vpop.f32.mrf.mxu0
        %v4224 = vadd.f32 0.0, %v4223
        %4225 = vmatmul.bf16.gmra.mxu0 %v4135
        %v4226 = vpop.f32.mrf.mxu0
        %v4227 = vadd.f32 0.0, %v4226
        %v4228 = vpop.f32.mrf.mxu0
        %v4229 = vadd.f32 0.0, %v4228
        %4230 = vmatmul.bf16.gmra.mxu0 %v4138
        %v4231 = vpop.f32.mrf.mxu0
        %v4232 = vadd.f32 0.0, %v4231
        %v4233 = vpop.f32.mrf.mxu0
        %v4234 = vadd.f32 0.0, %v4233
        %4235 = vmatmul.bf16.gmra.mxu0 %v4141
        %v4236 = vpop.f32.mrf.mxu0
        %v4237 = vadd.f32 0.0, %v4236
        %v4238 = vpop.f32.mrf.mxu0
        %v4239 = vadd.f32 0.0, %v4238
        %4240 = vdwg.mxu0
        %4241 = vmatpush.bf16.msra.mxu0 0
        %4242 = vmatpush.bf16.msra.mxu0 0
        %4243 = vmatpush.bf16.msra.mxu0 0
        %4244 = vmatpush.bf16.msra.mxu0 0
        %4245 = vmatpush.bf16.msra.mxu0 %v4106
        %4246 = vmatpush.bf16.msra.mxu0 %v4103
        %4247 = vmatpush.bf16.msra.mxu0 %v4100
        %4248 = vmatpush.bf16.msra.mxu0 %v4097
        %4249 = vmatmul.bf16.gmra.mxu0 %v4120
        %v4250 = vpop.f32.mrf.mxu0
        %v4251 = vadd.f32 0.0, %v4250
        %v4252 = vpop.f32.mrf.mxu0
        %v4253 = vadd.f32 0.0, %v4252
        %4254 = vmatmul.bf16.gmra.mxu0 %v4123
        %v4255 = vpop.f32.mrf.mxu0
        %v4256 = vadd.f32 0.0, %v4255
        %v4257 = vpop.f32.mrf.mxu0
        %v4258 = vadd.f32 0.0, %v4257
        %4259 = vmatmul.bf16.gmra.mxu0 %v4126
        %v4260 = vpop.f32.mrf.mxu0
        %v4261 = vadd.f32 0.0, %v4260
        %v4262 = vpop.f32.mrf.mxu0
        %v4263 = vadd.f32 0.0, %v4262
        %4264 = vmatmul.bf16.gmra.mxu0 %v4129
        %v4265 = vpop.f32.mrf.mxu0
        %v4266 = vadd.f32 0.0, %v4265
        %v4267 = vpop.f32.mrf.mxu0
        %v4268 = vadd.f32 0.0, %v4267
        %4269 = vmatmul.bf16.gmra.mxu0 %v4132
        %v4270 = vpop.f32.mrf.mxu0
        %v4271 = vadd.f32 0.0, %v4270
        %v4272 = vpop.f32.mrf.mxu0
        %v4273 = vadd.f32 0.0, %v4272
        %4274 = vmatmul.bf16.gmra.mxu0 %v4135
        %v4275 = vpop.f32.mrf.mxu0
        %v4276 = vadd.f32 0.0, %v4275
        %v4277 = vpop.f32.mrf.mxu0
        %v4278 = vadd.f32 0.0, %v4277
        %4279 = vmatmul.bf16.gmra.mxu0 %v4138
        %v4280 = vpop.f32.mrf.mxu0
        %v4281 = vadd.f32 0.0, %v4280
        %v4282 = vpop.f32.mrf.mxu0
        %v4283 = vadd.f32 0.0, %v4282
        %4284 = vmatmul.bf16.gmra.mxu0 %v4141
        %v4285 = vpop.f32.mrf.mxu0
        %v4286 = vadd.f32 0.0, %v4285
        %v4287 = vpop.f32.mrf.mxu0
        %v4288 = vadd.f32 0.0, %v4287
        %4289 = vdwg.mxu0
        %v4306 = vunpack.c.l.b16 %v3660
        %v4307 = vunpack.c.h.b16 %v3660
        %v4308 = vunpack.c.l.b16 %v3661
        %v4309 = vunpack.c.l.b16 %v3662
        %v4310 = vunpack.c.h.b16 %v3662
        %v4311 = vunpack.c.l.b16 %v3663
        %v4312 = vunpack.c.l.b16 %v3664
        %v4313 = vunpack.c.h.b16 %v3664
        %v4314 = vunpack.c.l.b16 %v3665
        %v4315 = vunpack.c.l.b16 %v3666
        %v4316 = vunpack.c.h.b16 %v3666
        %v4317 = vunpack.c.l.b16 %v3667
        %v4318 = vunpack.c.l.b16 %v3668
        %v4319 = vunpack.c.h.b16 %v3668
        %v4320 = vunpack.c.l.b16 %v3669
        %v4321 = vunpack.c.l.b16 %v3670
        %v4322 = vunpack.c.h.b16 %v3670
        %v4323 = vunpack.c.l.b16 %v3671
        %v4324 = vunpack.c.l.b16 %v3672
        %v4325 = vunpack.c.h.b16 %v3672
        %v4326 = vunpack.c.l.b16 %v3673
        %v4327 = vunpack.c.l.b16 %v3674
        %v4328 = vunpack.c.h.b16 %v3674
        %v4329 = vunpack.c.l.b16 %v3675
        %v4330 = vpack.c.b16 %v4309, %v4306
        %v4331 = vpack.c.b16 %v4310, %v4307
        %v4332 = vpack.c.b16 %v4311, %v4308
        %v4333 = vpack.c.b16 %v4315, %v4312
        %v4334 = vpack.c.b16 %v4316, %v4313
        %v4335 = vpack.c.b16 %v4317, %v4314
        %v4336 = vpack.c.b16 %v4321, %v4318
        %v4337 = vpack.c.b16 %v4322, %v4319
        %v4338 = vpack.c.b16 %v4323, %v4320
        %v4339 = vpack.c.b16 %v4327, %v4324
        %v4340 = vpack.c.b16 %v4328, %v4325
        %v4341 = vpack.c.b16 %v4329, %v4326
        %v4355 = vsel %vm3305, %v3652, 0
        %v4358 = vsel %vm3305, %v3653, 0
        %v4361 = vsel %vm3305, %v3654, 0
        %v4364 = vsel %vm3305, %v3655, 0
        %v4367 = vsel %vm3305, %v3656, 0
        %v4370 = vsel %vm3305, %v3657, 0
        %v4373 = vsel %vm3305, %v3658, 0
        %v4376 = vsel %vm3305, %v3659, 0
        %4378 = vmatpush.bf16.msra.mxu0 0
        %4379 = vmatpush.bf16.msra.mxu0 0
        %4380 = vmatpush.bf16.msra.mxu0 0
        %4381 = vmatpush.bf16.msra.mxu0 0
        %4382 = vmatpush.bf16.msra.mxu0 %v4339
        %4383 = vmatpush.bf16.msra.mxu0 %v4336
        %4384 = vmatpush.bf16.msra.mxu0 %v4333
        %4385 = vmatpush.bf16.msra.mxu0 %v4330
        %4386 = vmatmul.bf16.gmra.mxu0 %v4355
        %v4387 = vpop.f32.mrf.mxu0
        %v4388 = vadd.f32 %v4153, %v4387
        %v4389 = vpop.f32.mrf.mxu0
        %v4390 = vadd.f32 %v4155, %v4389
        %4391 = vmatmul.bf16.gmra.mxu0 %v4358
        %v4392 = vpop.f32.mrf.mxu0
        %v4393 = vadd.f32 %v4158, %v4392
        %v4394 = vpop.f32.mrf.mxu0
        %v4395 = vadd.f32 %v4160, %v4394
        %4396 = vmatmul.bf16.gmra.mxu0 %v4361
        %v4397 = vpop.f32.mrf.mxu0
        %v4398 = vadd.f32 %v4163, %v4397
        %v4399 = vpop.f32.mrf.mxu0
        %v4400 = vadd.f32 %v4165, %v4399
        %4401 = vmatmul.bf16.gmra.mxu0 %v4364
        %v4402 = vpop.f32.mrf.mxu0
        %v4403 = vadd.f32 %v4168, %v4402
        %v4404 = vpop.f32.mrf.mxu0
        %v4405 = vadd.f32 %v4170, %v4404
        %4406 = vmatmul.bf16.gmra.mxu0 %v4367
        %v4407 = vpop.f32.mrf.mxu0
        %v4408 = vadd.f32 %v4173, %v4407
        %v4409 = vpop.f32.mrf.mxu0
        %v4410 = vadd.f32 %v4175, %v4409
        %4411 = vmatmul.bf16.gmra.mxu0 %v4370
        %v4412 = vpop.f32.mrf.mxu0
        %v4413 = vadd.f32 %v4178, %v4412
        %v4414 = vpop.f32.mrf.mxu0
        %v4415 = vadd.f32 %v4180, %v4414
        %4416 = vmatmul.bf16.gmra.mxu0 %v4373
        %v4417 = vpop.f32.mrf.mxu0
        %v4418 = vadd.f32 %v4183, %v4417
        %v4419 = vpop.f32.mrf.mxu0
        %v4420 = vadd.f32 %v4185, %v4419
        %4421 = vmatmul.bf16.gmra.mxu0 %v4376
        %v4422 = vpop.f32.mrf.mxu0
        %v4423 = vadd.f32 %v4188, %v4422
        %v4424 = vpop.f32.mrf.mxu0
        %v4425 = vadd.f32 %v4190, %v4424
        %4426 = vdwg.mxu0
        %4427 = vmatpush.bf16.msra.mxu0 0
        %4428 = vmatpush.bf16.msra.mxu0 0
        %4429 = vmatpush.bf16.msra.mxu0 0
        %4430 = vmatpush.bf16.msra.mxu0 0
        %4431 = vmatpush.bf16.msra.mxu0 %v4340
        %4432 = vmatpush.bf16.msra.mxu0 %v4337
        %4433 = vmatpush.bf16.msra.mxu0 %v4334
        %4434 = vmatpush.bf16.msra.mxu0 %v4331
        %4435 = vmatmul.bf16.gmra.mxu0 %v4355
        %v4436 = vpop.f32.mrf.mxu0
        %v4437 = vadd.f32 %v4202, %v4436
        %v4438 = vpop.f32.mrf.mxu0
        %v4439 = vadd.f32 %v4204, %v4438
        %4440 = vmatmul.bf16.gmra.mxu0 %v4358
        %v4441 = vpop.f32.mrf.mxu0
        %v4442 = vadd.f32 %v4207, %v4441
        %v4443 = vpop.f32.mrf.mxu0
        %v4444 = vadd.f32 %v4209, %v4443
        %4445 = vmatmul.bf16.gmra.mxu0 %v4361
        %v4446 = vpop.f32.mrf.mxu0
        %v4447 = vadd.f32 %v4212, %v4446
        %v4448 = vpop.f32.mrf.mxu0
        %v4449 = vadd.f32 %v4214, %v4448
        %4450 = vmatmul.bf16.gmra.mxu0 %v4364
        %v4451 = vpop.f32.mrf.mxu0
        %v4452 = vadd.f32 %v4217, %v4451
        %v4453 = vpop.f32.mrf.mxu0
        %v4454 = vadd.f32 %v4219, %v4453
        %4455 = vmatmul.bf16.gmra.mxu0 %v4367
        %v4456 = vpop.f32.mrf.mxu0
        %v4457 = vadd.f32 %v4222, %v4456
        %v4458 = vpop.f32.mrf.mxu0
        %v4459 = vadd.f32 %v4224, %v4458
        %4460 = vmatmul.bf16.gmra.mxu0 %v4370
        %v4461 = vpop.f32.mrf.mxu0
        %v4462 = vadd.f32 %v4227, %v4461
        %v4463 = vpop.f32.mrf.mxu0
        %v4464 = vadd.f32 %v4229, %v4463
        %4465 = vmatmul.bf16.gmra.mxu0 %v4373
        %v4466 = vpop.f32.mrf.mxu0
        %v4467 = vadd.f32 %v4232, %v4466
        %v4468 = vpop.f32.mrf.mxu0
        %v4469 = vadd.f32 %v4234, %v4468
        %4470 = vmatmul.bf16.gmra.mxu0 %v4376
        %v4471 = vpop.f32.mrf.mxu0
        %v4472 = vadd.f32 %v4237, %v4471
        %v4473 = vpop.f32.mrf.mxu0
        %v4474 = vadd.f32 %v4239, %v4473
        %4475 = vdwg.mxu0
        %4476 = vmatpush.bf16.msra.mxu0 0
        %4477 = vmatpush.bf16.msra.mxu0 0
        %4478 = vmatpush.bf16.msra.mxu0 0
        %4479 = vmatpush.bf16.msra.mxu0 0
        %4480 = vmatpush.bf16.msra.mxu0 %v4341
        %4481 = vmatpush.bf16.msra.mxu0 %v4338
        %4482 = vmatpush.bf16.msra.mxu0 %v4335
        %4483 = vmatpush.bf16.msra.mxu0 %v4332
        %4484 = vmatmul.bf16.gmra.mxu0 %v4355
        %v4485 = vpop.f32.mrf.mxu0
        %v4486 = vadd.f32 %v4251, %v4485
        %v4487 = vpop.f32.mrf.mxu0
        %v4488 = vadd.f32 %v4253, %v4487
        %4489 = vmatmul.bf16.gmra.mxu0 %v4358
        %v4490 = vpop.f32.mrf.mxu0
        %v4491 = vadd.f32 %v4256, %v4490
        %v4492 = vpop.f32.mrf.mxu0
        %v4493 = vadd.f32 %v4258, %v4492
        %4494 = vmatmul.bf16.gmra.mxu0 %v4361
        %v4495 = vpop.f32.mrf.mxu0
        %v4496 = vadd.f32 %v4261, %v4495
        %v4497 = vpop.f32.mrf.mxu0
        %v4498 = vadd.f32 %v4263, %v4497
        %4499 = vmatmul.bf16.gmra.mxu0 %v4364
        %v4500 = vpop.f32.mrf.mxu0
        %v4501 = vadd.f32 %v4266, %v4500
        %v4502 = vpop.f32.mrf.mxu0
        %v4503 = vadd.f32 %v4268, %v4502
        %4504 = vmatmul.bf16.gmra.mxu0 %v4367
        %v4505 = vpop.f32.mrf.mxu0
        %v4506 = vadd.f32 %v4271, %v4505
        %v4507 = vpop.f32.mrf.mxu0
        %v4508 = vadd.f32 %v4273, %v4507
        %4509 = vmatmul.bf16.gmra.mxu0 %v4370
        %v4510 = vpop.f32.mrf.mxu0
        %v4511 = vadd.f32 %v4276, %v4510
        %v4512 = vpop.f32.mrf.mxu0
        %v4513 = vadd.f32 %v4278, %v4512
        %4514 = vmatmul.bf16.gmra.mxu0 %v4373
        %v4515 = vpop.f32.mrf.mxu0
        %v4516 = vadd.f32 %v4281, %v4515
        %v4517 = vpop.f32.mrf.mxu0
        %v4518 = vadd.f32 %v4283, %v4517
        %4519 = vmatmul.bf16.gmra.mxu0 %v4376
        %v4520 = vpop.f32.mrf.mxu0
        %v4521 = vadd.f32 %v4286, %v4520
        %v4522 = vpop.f32.mrf.mxu0
        %v4523 = vadd.f32 %v4288, %v4522
        %4524 = vdwg.mxu0
        %v4525 = vunpack.c.h.b16 %v3094
        %v4526 = vunpack.c.h.b16 %v3099
        %v4527 = vunpack.c.h.b16 %v3104
        %v4528 = vunpack.c.h.b16 %v3109
        %v4529 = vunpack.c.h.b16 %v3114
        %v4530 = vunpack.c.h.b16 %v3119
        %v4531 = vunpack.c.h.b16 %v3124
        %v4532 = vunpack.c.h.b16 %v3129
        %v4533 = vunpack.c.h.b16 %v3134
        %v4534 = vunpack.c.h.b16 %v3139
        %v4535 = vunpack.c.h.b16 %v3144
        %v4536 = vunpack.c.h.b16 %v3149
        %v4537 = vunpack.c.h.b16 %v3154
        %v4538 = vunpack.c.h.b16 %v3159
        %v4539 = vunpack.c.h.b16 %v3164
        %v4540 = vunpack.c.h.b16 %v3169
        %v4541 = vpack.c.b16 %v4526, %v4525
        %v4542 = vpack.c.b16 %v4528, %v4527
        %v4543 = vpack.c.b16 %v4530, %v4529
        %v4544 = vpack.c.b16 %v4532, %v4531
        %v4545 = vpack.c.b16 %v4534, %v4533
        %v4546 = vpack.c.b16 %v4536, %v4535
        %v4547 = vpack.c.b16 %v4538, %v4537
        %v4548 = vpack.c.b16 %v4540, %v4539
        %v4565 = vunpack.c.l.b16 %v3096
        %v4566 = vunpack.c.l.b16 %v3101
        %v4567 = vunpack.c.l.b16 %v3106
        %v4568 = vunpack.c.l.b16 %v3111
        %v4569 = vunpack.c.l.b16 %v3116
        %v4570 = vunpack.c.l.b16 %v3121
        %v4571 = vunpack.c.l.b16 %v3126
        %v4572 = vunpack.c.l.b16 %v3131
        %v4573 = vunpack.c.l.b16 %v3136
        %v4574 = vunpack.c.l.b16 %v3141
        %v4575 = vunpack.c.l.b16 %v3146
        %v4576 = vunpack.c.l.b16 %v3151
        %v4577 = vunpack.c.l.b16 %v3156
        %v4578 = vunpack.c.l.b16 %v3161
        %v4579 = vunpack.c.l.b16 %v3166
        %v4580 = vunpack.c.l.b16 %v3171
        %v4581 = vpack.c.b16 %v4566, %v4565
        %v4582 = vpack.c.b16 %v4568, %v4567
        %v4583 = vpack.c.b16 %v4570, %v4569
        %v4584 = vpack.c.b16 %v4572, %v4571
        %v4585 = vpack.c.b16 %v4574, %v4573
        %v4586 = vpack.c.b16 %v4576, %v4575
        %v4587 = vpack.c.b16 %v4578, %v4577
        %v4588 = vpack.c.b16 %v4580, %v4579
        %v4590 = vsel %vm3305, %v4541, 0
        %v4593 = vsel %vm3305, %v4542, 0
        %v4596 = vsel %vm3305, %v4543, 0
        %v4599 = vsel %vm3305, %v4544, 0
        %v4602 = vsel %vm3305, %v4545, 0
        %v4605 = vsel %vm3305, %v4546, 0
        %v4608 = vsel %vm3305, %v4547, 0
        %v4611 = vsel %vm3305, %v4548, 0
        %v4614 = vsel %vm3305, %v4581, 0
        %v4617 = vsel %vm3305, %v4582, 0
        %v4620 = vsel %vm3305, %v4583, 0
        %v4623 = vsel %vm3305, %v4584, 0
        %v4626 = vsel %vm3305, %v4585, 0
        %v4629 = vsel %vm3305, %v4586, 0
        %v4632 = vsel %vm3305, %v4587, 0
        %v4635 = vsel %vm3305, %v4588, 0
        %4637 = vmatpush.bf16.xpose.msra.mxu0 %v4635
        %4638 = vmatpush.bf16.xpose.msra.mxu0 %v4632
        %4639 = vmatpush.bf16.xpose.msra.mxu0 %v4629
        %4640 = vmatpush.bf16.xpose.msra.mxu0 %v4626
        %4641 = vmatpush.bf16.xpose.msra.mxu0 %v4623
        %4642 = vmatpush.bf16.xpose.msra.mxu0 %v4620
        %4643 = vmatpush.bf16.xpose.msra.mxu0 %v4617
        %4644 = vmatpush.bf16.xpose.msra.mxu0 %v4614
        %4645 = vmatmul.bf16.gmra.mxu0 %v4590
        %v4646 = vpop.f32.mrf.mxu0
        %v4647 = vadd.f32 %v3209, %v4646
        %v4648 = vpop.f32.mrf.mxu0
        %v4649 = vadd.f32 %v3210, %v4648
        %4650 = vmatmul.bf16.gmra.mxu0 %v4593
        %v4651 = vpop.f32.mrf.mxu0
        %v4652 = vadd.f32 %v3211, %v4651
        %v4653 = vpop.f32.mrf.mxu0
        %v4654 = vadd.f32 %v3212, %v4653
        %4655 = vmatmul.bf16.gmra.mxu0 %v4596
        %v4656 = vpop.f32.mrf.mxu0
        %v4657 = vadd.f32 %v3213, %v4656
        %v4658 = vpop.f32.mrf.mxu0
        %v4659 = vadd.f32 %v3214, %v4658
        %4660 = vmatmul.bf16.gmra.mxu0 %v4599
        %v4661 = vpop.f32.mrf.mxu0
        %v4662 = vadd.f32 %v3215, %v4661
        %v4663 = vpop.f32.mrf.mxu0
        %v4664 = vadd.f32 %v3216, %v4663
        %4665 = vmatmul.bf16.gmra.mxu0 %v4602
        %v4666 = vpop.f32.mrf.mxu0
        %v4667 = vadd.f32 %v3217, %v4666
        %v4668 = vpop.f32.mrf.mxu0
        %v4669 = vadd.f32 %v3218, %v4668
        %4670 = vmatmul.bf16.gmra.mxu0 %v4605
        %v4671 = vpop.f32.mrf.mxu0
        %v4672 = vadd.f32 %v3219, %v4671
        %v4673 = vpop.f32.mrf.mxu0
        %v4674 = vadd.f32 %v3220, %v4673
        %4675 = vmatmul.bf16.gmra.mxu0 %v4608
        %v4676 = vpop.f32.mrf.mxu0
        %v4677 = vadd.f32 %v3221, %v4676
        %v4678 = vpop.f32.mrf.mxu0
        %v4679 = vadd.f32 %v3222, %v4678
        %4680 = vmatmul.bf16.gmra.mxu0 %v4611
        %v4681 = vpop.f32.mrf.mxu0
        %v4682 = vadd.f32 %v3223, %v4681
        %v4683 = vpop.f32.mrf.mxu0
        %v4684 = vadd.f32 %v3224, %v4683
        %4685 = vdwg.mxu0
        %4686 = vmax.xlane.f32.xlu0 %v4647
        %v4687 = vpop.xlane.xlu0 %4686
        %4688 = vmax.xlane.f32.xlu0 %v4649
        %v4689 = vpop.xlane.xlu0 %4688
        %4690 = vmax.xlane.f32.xlu0 %v4652
        %v4691 = vpop.xlane.xlu0 %4690
        %4692 = vmax.xlane.f32.xlu0 %v4654
        %v4693 = vpop.xlane.xlu0 %4692
        %4694 = vmax.xlane.f32.xlu0 %v4657
        %v4695 = vpop.xlane.xlu0 %4694
        %4696 = vmax.xlane.f32.xlu0 %v4659
        %v4697 = vpop.xlane.xlu0 %4696
        %4698 = vmax.xlane.f32.xlu0 %v4662
        %v4699 = vpop.xlane.xlu0 %4698
        %4700 = vmax.xlane.f32.xlu0 %v4664
        %v4701 = vpop.xlane.xlu0 %4700
        %4702 = vmax.xlane.f32.xlu0 %v4667
        %v4703 = vpop.xlane.xlu0 %4702
        %4704 = vmax.xlane.f32.xlu0 %v4669
        %v4705 = vpop.xlane.xlu0 %4704
        %4706 = vmax.xlane.f32.xlu0 %v4672
        %v4707 = vpop.xlane.xlu0 %4706
        %4708 = vmax.xlane.f32.xlu0 %v4674
        %v4709 = vpop.xlane.xlu0 %4708
        %4710 = vmax.xlane.f32.xlu0 %v4677
        %v4711 = vpop.xlane.xlu0 %4710
        %4712 = vmax.xlane.f32.xlu0 %v4679
        %v4713 = vpop.xlane.xlu0 %4712
        %4714 = vmax.xlane.f32.xlu0 %v4682
        %v4715 = vpop.xlane.xlu0 %4714
        %4716 = vmax.xlane.f32.xlu0 %v4684
        %v4717 = vpop.xlane.xlu0 %4716
        %v4718 = vsub.f32 %v4647, %v4687
        %v4719 = vsub.f32 %v4649, %v4689
        %v4720 = vsub.f32 %v4652, %v4691
        %v4721 = vsub.f32 %v4654, %v4693
        %v4722 = vsub.f32 %v4657, %v4695
        %v4723 = vsub.f32 %v4659, %v4697
        %v4724 = vsub.f32 %v4662, %v4699
        %v4725 = vsub.f32 %v4664, %v4701
        %v4726 = vsub.f32 %v4667, %v4703
        %v4727 = vsub.f32 %v4669, %v4705
        %v4728 = vsub.f32 %v4672, %v4707
        %v4729 = vsub.f32 %v4674, %v4709
        %v4730 = vsub.f32 %v4677, %v4711
        %v4731 = vsub.f32 %v4679, %v4713
        %v4732 = vsub.f32 %v4682, %v4715
        %v4733 = vsub.f32 %v4684, %v4717
        %v4734 = vmul.f32 %v4718, 1.442695
        %v4735 = vpow.pop %v4734
        %v4736 = vmul.f32 %v4719, 1.442695
        %v4737 = vpow.pop %v4736
        %v4738 = vmul.f32 %v4720, 1.442695
        %v4739 = vpow.pop %v4738
        %v4740 = vmul.f32 %v4721, 1.442695
        %v4741 = vpow.pop %v4740
        %v4742 = vmul.f32 %v4722, 1.442695
        %v4743 = vpow.pop %v4742
        %v4744 = vmul.f32 %v4723, 1.442695
        %v4745 = vpow.pop %v4744
        %v4746 = vmul.f32 %v4724, 1.442695
        %v4747 = vpow.pop %v4746
        %v4748 = vmul.f32 %v4725, 1.442695
        %v4749 = vpow.pop %v4748
        %v4750 = vmul.f32 %v4726, 1.442695
        %v4751 = vpow.pop %v4750
        %v4752 = vmul.f32 %v4727, 1.442695
        %v4753 = vpow.pop %v4752
        %v4754 = vmul.f32 %v4728, 1.442695
        %v4755 = vpow.pop %v4754
        %v4756 = vmul.f32 %v4729, 1.442695
        %v4757 = vpow.pop %v4756
        %v4758 = vmul.f32 %v4730, 1.442695
        %v4759 = vpow.pop %v4758
        %v4760 = vmul.f32 %v4731, 1.442695
        %v4761 = vpow.pop %v4760
        %v4762 = vmul.f32 %v4732, 1.442695
        %v4763 = vpow.pop %v4762
        %v4764 = vmul.f32 %v4733, 1.442695
        %v4765 = vpow.pop %v4764
        %4766 = vadd.xlane.f32.xlu0 %v4735
        %v4767 = vpop.xlane.xlu0 %4766
        %4768 = vadd.xlane.f32.xlu0 %v4737
        %v4769 = vpop.xlane.xlu0 %4768
        %4770 = vadd.xlane.f32.xlu0 %v4739
        %v4771 = vpop.xlane.xlu0 %4770
        %4772 = vadd.xlane.f32.xlu0 %v4741
        %v4773 = vpop.xlane.xlu0 %4772
        %4774 = vadd.xlane.f32.xlu0 %v4743
        %v4775 = vpop.xlane.xlu0 %4774
        %4776 = vadd.xlane.f32.xlu0 %v4745
        %v4777 = vpop.xlane.xlu0 %4776
        %4778 = vadd.xlane.f32.xlu0 %v4747
        %v4779 = vpop.xlane.xlu0 %4778
        %4780 = vadd.xlane.f32.xlu0 %v4749
        %v4781 = vpop.xlane.xlu0 %4780
        %4782 = vadd.xlane.f32.xlu0 %v4751
        %v4783 = vpop.xlane.xlu0 %4782
        %4784 = vadd.xlane.f32.xlu0 %v4753
        %v4785 = vpop.xlane.xlu0 %4784
        %4786 = vadd.xlane.f32.xlu0 %v4755
        %v4787 = vpop.xlane.xlu0 %4786
        %4788 = vadd.xlane.f32.xlu0 %v4757
        %v4789 = vpop.xlane.xlu0 %4788
        %4790 = vadd.xlane.f32.xlu0 %v4759
        %v4791 = vpop.xlane.xlu0 %4790
        %4792 = vadd.xlane.f32.xlu0 %v4761
        %v4793 = vpop.xlane.xlu0 %4792
        %4794 = vadd.xlane.f32.xlu0 %v4763
        %v4795 = vpop.xlane.xlu0 %4794
        %4796 = vadd.xlane.f32.xlu0 %v4765
        %v4797 = vpop.xlane.xlu0 %4796
        %v4798 = vrcp.pop %v4767
        %v4799 = vrcp.pop %v4769
        %v4800 = vrcp.pop %v4771
        %v4801 = vrcp.pop %v4773
        %v4802 = vrcp.pop %v4775
        %v4803 = vrcp.pop %v4777
        %v4804 = vrcp.pop %v4779
        %v4805 = vrcp.pop %v4781
        %v4806 = vrcp.pop %v4783
        %v4807 = vrcp.pop %v4785
        %v4808 = vrcp.pop %v4787
        %v4809 = vrcp.pop %v4789
        %v4810 = vrcp.pop %v4791
        %v4811 = vrcp.pop %v4793
        %v4812 = vrcp.pop %v4795
        %v4813 = vrcp.pop %v4797
        %v4814 = vmul.f32 %v4735, %v4798
        %v4815 = vmul.f32 %v4737, %v4799
        %v4816 = vmul.f32 %v4739, %v4800
        %v4817 = vmul.f32 %v4741, %v4801
        %v4818 = vmul.f32 %v4743, %v4802
        %v4819 = vmul.f32 %v4745, %v4803
        %v4820 = vmul.f32 %v4747, %v4804
        %v4821 = vmul.f32 %v4749, %v4805
        %v4822 = vmul.f32 %v4751, %v4806
        %v4823 = vmul.f32 %v4753, %v4807
        %v4824 = vmul.f32 %v4755, %v4808
        %v4825 = vmul.f32 %v4757, %v4809
        %v4826 = vmul.f32 %v4759, %v4810
        %v4827 = vmul.f32 %v4761, %v4811
        %v4828 = vmul.f32 %v4763, %v4812
        %v4829 = vmul.f32 %v4765, %v4813
        %v4830 = vpack.c.bf16 %v4815, %v4814
        %v4831 = vpack.c.bf16 %v4817, %v4816
        %v4832 = vpack.c.bf16 %v4819, %v4818
        %v4833 = vpack.c.bf16 %v4821, %v4820
        %v4834 = vpack.c.bf16 %v4823, %v4822
        %v4835 = vpack.c.bf16 %v4825, %v4824
        %v4836 = vpack.c.bf16 %v4827, %v4826
        %v4837 = vpack.c.bf16 %v4829, %v4828
        %v4838 = vunpack.c.h.b16 %v3097
        %v4839 = vunpack.c.h.b16 %v3102
        %v4840 = vunpack.c.h.b16 %v3107
        %v4841 = vunpack.c.h.b16 %v3112
        %v4842 = vunpack.c.h.b16 %v3117
        %v4843 = vunpack.c.h.b16 %v3122
        %v4844 = vunpack.c.h.b16 %v3127
        %v4845 = vunpack.c.h.b16 %v3132
        %v4846 = vunpack.c.h.b16 %v3137
        %v4847 = vunpack.c.h.b16 %v3142
        %v4848 = vunpack.c.h.b16 %v3147
        %v4849 = vunpack.c.h.b16 %v3152
        %v4850 = vunpack.c.h.b16 %v3157
        %v4851 = vunpack.c.h.b16 %v3162
        %v4852 = vunpack.c.h.b16 %v3167
        %v4853 = vunpack.c.h.b16 %v3172
        %v4854 = vpack.c.b16 %v4839, %v4838
        %v4855 = vpack.c.b16 %v4841, %v4840
        %v4856 = vpack.c.b16 %v4843, %v4842
        %v4857 = vpack.c.b16 %v4845, %v4844
        %v4858 = vpack.c.b16 %v4847, %v4846
        %v4859 = vpack.c.b16 %v4849, %v4848
        %v4860 = vpack.c.b16 %v4851, %v4850
        %v4861 = vpack.c.b16 %v4853, %v4852
        %4870 = vmatpush.bf16.msra.mxu0 %v4861
        %4871 = vmatpush.bf16.msra.mxu0 %v4860
        %4872 = vmatpush.bf16.msra.mxu0 %v4859
        %4873 = vmatpush.bf16.msra.mxu0 %v4858
        %4874 = vmatpush.bf16.msra.mxu0 %v4857
        %4875 = vmatpush.bf16.msra.mxu0 %v4856
        %4876 = vmatpush.bf16.msra.mxu0 %v4855
        %4877 = vmatpush.bf16.msra.mxu0 %v4854
        %4878 = vmatmul.bf16.gmra.mxu0 %v4830
        %v4879 = vpop.f32.mrf.mxu0
        %v4880 = vadd.f32 0.0, %v4879
        %v4881 = vpop.f32.mrf.mxu0
        %v4882 = vadd.f32 0.0, %v4881
        %4883 = vmatmul.bf16.gmra.mxu0 %v4831
        %v4884 = vpop.f32.mrf.mxu0
        %v4885 = vadd.f32 0.0, %v4884
        %v4886 = vpop.f32.mrf.mxu0
        %v4887 = vadd.f32 0.0, %v4886
        %4888 = vmatmul.bf16.gmra.mxu0 %v4832
        %v4889 = vpop.f32.mrf.mxu0
        %v4890 = vadd.f32 0.0, %v4889
        %v4891 = vpop.f32.mrf.mxu0
        %v4892 = vadd.f32 0.0, %v4891
        %4893 = vmatmul.bf16.gmra.mxu0 %v4833
        %v4894 = vpop.f32.mrf.mxu0
        %v4895 = vadd.f32 0.0, %v4894
        %v4896 = vpop.f32.mrf.mxu0
        %v4897 = vadd.f32 0.0, %v4896
        %4898 = vmatmul.bf16.gmra.mxu0 %v4834
        %v4899 = vpop.f32.mrf.mxu0
        %v4900 = vadd.f32 0.0, %v4899
        %v4901 = vpop.f32.mrf.mxu0
        %v4902 = vadd.f32 0.0, %v4901
        %4903 = vmatmul.bf16.gmra.mxu0 %v4835
        %v4904 = vpop.f32.mrf.mxu0
        %v4905 = vadd.f32 0.0, %v4904
        %v4906 = vpop.f32.mrf.mxu0
        %v4907 = vadd.f32 0.0, %v4906
        %4908 = vmatmul.bf16.gmra.mxu0 %v4836
        %v4909 = vpop.f32.mrf.mxu0
        %v4910 = vadd.f32 0.0, %v4909
        %v4911 = vpop.f32.mrf.mxu0
        %v4912 = vadd.f32 0.0, %v4911
        %4913 = vmatmul.bf16.gmra.mxu0 %v4837
        %v4914 = vpop.f32.mrf.mxu0
        %v4915 = vadd.f32 0.0, %v4914
        %v4916 = vpop.f32.mrf.mxu0
        %v4917 = vadd.f32 0.0, %v4916
        %4918 = vdwg.mxu0
        %v4919 = vpack.c.bf16 %v4882, %v4880
        %v4920 = vpack.c.bf16 %v4887, %v4885
        %v4921 = vpack.c.bf16 %v4892, %v4890
        %v4922 = vpack.c.bf16 %v4897, %v4895
        %v4923 = vpack.c.bf16 %v4902, %v4900
        %v4924 = vpack.c.bf16 %v4907, %v4905
        %v4925 = vpack.c.bf16 %v4912, %v4910
        %v4926 = vpack.c.bf16 %v4917, %v4915
        %s4927 = scalar_lea.vmem [#allocation7], 192
        %v4928 = vld [vmem:[%s4927] sm:$0xff]
        %v4929 = vld [vmem:[%s4927 + $0x8] sm:$0xf]
        %v4930 = vld [vmem:[%s4927 + $0xc] sm:$0xff]
        %v4931 = vld [vmem:[%s4927 + $0x14] sm:$0xf]
        %v4932 = vld [vmem:[%s4927 + $0x18] sm:$0xff]
        %v4933 = vld [vmem:[%s4927 + $0x20] sm:$0xf]
        %v4934 = vld [vmem:[%s4927 + $0x24] sm:$0xff]
        %v4935 = vld [vmem:[%s4927 + $0x2c] sm:$0xf]
        %v4936 = vld [vmem:[%s4927 + $0x30] sm:$0xff]
        %v4937 = vld [vmem:[%s4927 + $0x38] sm:$0xf]
        %v4938 = vld [vmem:[%s4927 + $0x3c] sm:$0xff]
        %v4939 = vld [vmem:[%s4927 + $0x44] sm:$0xf]
        %v4940 = vld [vmem:[%s4927 + $0x48] sm:$0xff]
        %v4941 = vld [vmem:[%s4927 + $0x50] sm:$0xf]
        %v4942 = vld [vmem:[%s4927 + $0x54] sm:$0xff]
        %v4943 = vld [vmem:[%s4927 + $0x5c] sm:$0xf]
        %v4960 = vunpack.c.l.b16 %v4928
        %v4961 = vunpack.c.h.b16 %v4928
        %v4962 = vunpack.c.l.b16 %v4929
        %v4963 = vunpack.c.l.b16 %v4930
        %v4964 = vunpack.c.h.b16 %v4930
        %v4965 = vunpack.c.l.b16 %v4931
        %v4966 = vunpack.c.l.b16 %v4932
        %v4967 = vunpack.c.h.b16 %v4932
        %v4968 = vunpack.c.l.b16 %v4933
        %v4969 = vunpack.c.l.b16 %v4934
        %v4970 = vunpack.c.h.b16 %v4934
        %v4971 = vunpack.c.l.b16 %v4935
        %v4972 = vunpack.c.l.b16 %v4936
        %v4973 = vunpack.c.h.b16 %v4936
        %v4974 = vunpack.c.l.b16 %v4937
        %v4975 = vunpack.c.l.b16 %v4938
        %v4976 = vunpack.c.h.b16 %v4938
        %v4977 = vunpack.c.l.b16 %v4939
        %v4978 = vunpack.c.l.b16 %v4940
        %v4979 = vunpack.c.h.b16 %v4940
        %v4980 = vunpack.c.l.b16 %v4941
        %v4981 = vunpack.c.l.b16 %v4942
        %v4982 = vunpack.c.h.b16 %v4942
        %v4983 = vunpack.c.l.b16 %v4943
        %v4984 = vpack.c.b16 %v4963, %v4960
        %v4985 = vpack.c.b16 %v4964, %v4961
        %v4986 = vpack.c.b16 %v4965, %v4962
        %v4987 = vpack.c.b16 %v4969, %v4966
        %v4988 = vpack.c.b16 %v4970, %v4967
        %v4989 = vpack.c.b16 %v4971, %v4968
        %v4990 = vpack.c.b16 %v4975, %v4972
        %v4991 = vpack.c.b16 %v4976, %v4973
        %v4992 = vpack.c.b16 %v4977, %v4974
        %v4993 = vpack.c.b16 %v4981, %v4978
        %v4994 = vpack.c.b16 %v4982, %v4979
        %v4995 = vpack.c.b16 %v4983, %v4980
        %v5009 = vsel %vm3305, %v4919, 0
        %v5012 = vsel %vm3305, %v4920, 0
        %v5015 = vsel %vm3305, %v4921, 0
        %v5018 = vsel %vm3305, %v4922, 0
        %v5021 = vsel %vm3305, %v4923, 0
        %v5024 = vsel %vm3305, %v4924, 0
        %v5027 = vsel %vm3305, %v4925, 0
        %v5030 = vsel %vm3305, %v4926, 0
        %5032 = vmatpush.bf16.msra.mxu0 0
        %5033 = vmatpush.bf16.msra.mxu0 0
        %5034 = vmatpush.bf16.msra.mxu0 0
        %5035 = vmatpush.bf16.msra.mxu0 0
        %5036 = vmatpush.bf16.msra.mxu0 %v4993
        %5037 = vmatpush.bf16.msra.mxu0 %v4990
        %5038 = vmatpush.bf16.msra.mxu0 %v4987
        %5039 = vmatpush.bf16.msra.mxu0 %v4984
        %5040 = vmatmul.bf16.gmra.mxu0 %v5009
        %v5041 = vpop.f32.mrf.mxu0
        %v5042 = vadd.f32 0.0, %v5041
        %v5043 = vpop.f32.mrf.mxu0
        %v5044 = vadd.f32 0.0, %v5043
        %5045 = vmatmul.bf16.gmra.mxu0 %v5012
        %v5046 = vpop.f32.mrf.mxu0
        %v5047 = vadd.f32 0.0, %v5046
        %v5048 = vpop.f32.mrf.mxu0
        %v5049 = vadd.f32 0.0, %v5048
        %5050 = vmatmul.bf16.gmra.mxu0 %v5015
        %v5051 = vpop.f32.mrf.mxu0
        %v5052 = vadd.f32 0.0, %v5051
        %v5053 = vpop.f32.mrf.mxu0
        %v5054 = vadd.f32 0.0, %v5053
        %5055 = vmatmul.bf16.gmra.mxu0 %v5018
        %v5056 = vpop.f32.mrf.mxu0
        %v5057 = vadd.f32 0.0, %v5056
        %v5058 = vpop.f32.mrf.mxu0
        %v5059 = vadd.f32 0.0, %v5058
        %5060 = vmatmul.bf16.gmra.mxu0 %v5021
        %v5061 = vpop.f32.mrf.mxu0
        %v5062 = vadd.f32 0.0, %v5061
        %v5063 = vpop.f32.mrf.mxu0
        %v5064 = vadd.f32 0.0, %v5063
        %5065 = vmatmul.bf16.gmra.mxu0 %v5024
        %v5066 = vpop.f32.mrf.mxu0
        %v5067 = vadd.f32 0.0, %v5066
        %v5068 = vpop.f32.mrf.mxu0
        %v5069 = vadd.f32 0.0, %v5068
        %5070 = vmatmul.bf16.gmra.mxu0 %v5027
        %v5071 = vpop.f32.mrf.mxu0
        %v5072 = vadd.f32 0.0, %v5071
        %v5073 = vpop.f32.mrf.mxu0
        %v5074 = vadd.f32 0.0, %v5073
        %5075 = vmatmul.bf16.gmra.mxu0 %v5030
        %v5076 = vpop.f32.mrf.mxu0
        %v5077 = vadd.f32 0.0, %v5076
        %v5078 = vpop.f32.mrf.mxu0
        %v5079 = vadd.f32 0.0, %v5078
        %5080 = vdwg.mxu0
        %5081 = vmatpush.bf16.msra.mxu0 0
        %5082 = vmatpush.bf16.msra.mxu0 0
        %5083 = vmatpush.bf16.msra.mxu0 0
        %5084 = vmatpush.bf16.msra.mxu0 0
        %5085 = vmatpush.bf16.msra.mxu0 %v4994
        %5086 = vmatpush.bf16.msra.mxu0 %v4991
        %5087 = vmatpush.bf16.msra.mxu0 %v4988
        %5088 = vmatpush.bf16.msra.mxu0 %v4985
        %5089 = vmatmul.bf16.gmra.mxu0 %v5009
        %v5090 = vpop.f32.mrf.mxu0
        %v5091 = vadd.f32 0.0, %v5090
        %v5092 = vpop.f32.mrf.mxu0
        %v5093 = vadd.f32 0.0, %v5092
        %5094 = vmatmul.bf16.gmra.mxu0 %v5012
        %v5095 = vpop.f32.mrf.mxu0
        %v5096 = vadd.f32 0.0, %v5095
        %v5097 = vpop.f32.mrf.mxu0
        %v5098 = vadd.f32 0.0, %v5097
        %5099 = vmatmul.bf16.gmra.mxu0 %v5015
        %v5100 = vpop.f32.mrf.mxu0
        %v5101 = vadd.f32 0.0, %v5100
        %v5102 = vpop.f32.mrf.mxu0
        %v5103 = vadd.f32 0.0, %v5102
        %5104 = vmatmul.bf16.gmra.mxu0 %v5018
        %v5105 = vpop.f32.mrf.mxu0
        %v5106 = vadd.f32 0.0, %v5105
        %v5107 = vpop.f32.mrf.mxu0
        %v5108 = vadd.f32 0.0, %v5107
        %5109 = vmatmul.bf16.gmra.mxu0 %v5021
        %v5110 = vpop.f32.mrf.mxu0
        %v5111 = vadd.f32 0.0, %v5110
        %v5112 = vpop.f32.mrf.mxu0
        %v5113 = vadd.f32 0.0, %v5112
        %5114 = vmatmul.bf16.gmra.mxu0 %v5024
        %v5115 = vpop.f32.mrf.mxu0
        %v5116 = vadd.f32 0.0, %v5115
        %v5117 = vpop.f32.mrf.mxu0
        %v5118 = vadd.f32 0.0, %v5117
        %5119 = vmatmul.bf16.gmra.mxu0 %v5027
        %v5120 = vpop.f32.mrf.mxu0
        %v5121 = vadd.f32 0.0, %v5120
        %v5122 = vpop.f32.mrf.mxu0
        %v5123 = vadd.f32 0.0, %v5122
        %5124 = vmatmul.bf16.gmra.mxu0 %v5030
        %v5125 = vpop.f32.mrf.mxu0
        %v5126 = vadd.f32 0.0, %v5125
        %v5127 = vpop.f32.mrf.mxu0
        %v5128 = vadd.f32 0.0, %v5127
        %5129 = vdwg.mxu0
        %5130 = vmatpush.bf16.msra.mxu0 0
        %5131 = vmatpush.bf16.msra.mxu0 0
        %5132 = vmatpush.bf16.msra.mxu0 0
        %5133 = vmatpush.bf16.msra.mxu0 0
        %5134 = vmatpush.bf16.msra.mxu0 %v4995
        %5135 = vmatpush.bf16.msra.mxu0 %v4992
        %5136 = vmatpush.bf16.msra.mxu0 %v4989
        %5137 = vmatpush.bf16.msra.mxu0 %v4986
        %5138 = vmatmul.bf16.gmra.mxu0 %v5009
        %v5139 = vpop.f32.mrf.mxu0
        %v5140 = vadd.f32 0.0, %v5139
        %v5141 = vpop.f32.mrf.mxu0
        %v5142 = vadd.f32 0.0, %v5141
        %5143 = vmatmul.bf16.gmra.mxu0 %v5012
        %v5144 = vpop.f32.mrf.mxu0
        %v5145 = vadd.f32 0.0, %v5144
        %v5146 = vpop.f32.mrf.mxu0
        %v5147 = vadd.f32 0.0, %v5146
        %5148 = vmatmul.bf16.gmra.mxu0 %v5015
        %v5149 = vpop.f32.mrf.mxu0
        %v5150 = vadd.f32 0.0, %v5149
        %v5151 = vpop.f32.mrf.mxu0
        %v5152 = vadd.f32 0.0, %v5151
        %5153 = vmatmul.bf16.gmra.mxu0 %v5018
        %v5154 = vpop.f32.mrf.mxu0
        %v5155 = vadd.f32 0.0, %v5154
        %v5156 = vpop.f32.mrf.mxu0
        %v5157 = vadd.f32 0.0, %v5156
        %5158 = vmatmul.bf16.gmra.mxu0 %v5021
        %v5159 = vpop.f32.mrf.mxu0
        %v5160 = vadd.f32 0.0, %v5159
        %v5161 = vpop.f32.mrf.mxu0
        %v5162 = vadd.f32 0.0, %v5161
        %5163 = vmatmul.bf16.gmra.mxu0 %v5024
        %v5164 = vpop.f32.mrf.mxu0
        %v5165 = vadd.f32 0.0, %v5164
        %v5166 = vpop.f32.mrf.mxu0
        %v5167 = vadd.f32 0.0, %v5166
        %5168 = vmatmul.bf16.gmra.mxu0 %v5027
        %v5169 = vpop.f32.mrf.mxu0
        %v5170 = vadd.f32 0.0, %v5169
        %v5171 = vpop.f32.mrf.mxu0
        %v5172 = vadd.f32 0.0, %v5171
        %5173 = vmatmul.bf16.gmra.mxu0 %v5030
        %v5174 = vpop.f32.mrf.mxu0
        %v5175 = vadd.f32 0.0, %v5174
        %v5176 = vpop.f32.mrf.mxu0
        %v5177 = vadd.f32 0.0, %v5176
        %5178 = vdwg.mxu0
        %v5179 = vadd.f32 %v4388, %v5042
        %v5180 = vadd.f32 %v4437, %v5091
        %v5181 = vadd.f32 %v4486, %v5140
        %v5182 = vadd.f32 %v4390, %v5044
        %v5183 = vadd.f32 %v4439, %v5093
        %v5184 = vadd.f32 %v4488, %v5142
        %v5185 = vadd.f32 %v4393, %v5047
        %v5186 = vadd.f32 %v4442, %v5096
        %v5187 = vadd.f32 %v4491, %v5145
        %v5188 = vadd.f32 %v4395, %v5049
        %v5189 = vadd.f32 %v4444, %v5098
        %v5190 = vadd.f32 %v4493, %v5147
        %v5191 = vadd.f32 %v4398, %v5052
        %v5192 = vadd.f32 %v4447, %v5101
        %v5193 = vadd.f32 %v4496, %v5150
        %v5194 = vadd.f32 %v4400, %v5054
        %v5195 = vadd.f32 %v4449, %v5103
        %v5196 = vadd.f32 %v4498, %v5152
        %v5197 = vadd.f32 %v4403, %v5057
        %v5198 = vadd.f32 %v4452, %v5106
        %v5199 = vadd.f32 %v4501, %v5155
        %v5200 = vadd.f32 %v4405, %v5059
        %v5201 = vadd.f32 %v4454, %v5108
        %v5202 = vadd.f32 %v4503, %v5157
        %v5203 = vadd.f32 %v4408, %v5062
        %v5204 = vadd.f32 %v4457, %v5111
        %v5205 = vadd.f32 %v4506, %v5160
        %v5206 = vadd.f32 %v4410, %v5064
        %v5207 = vadd.f32 %v4459, %v5113
        %v5208 = vadd.f32 %v4508, %v5162
        %v5209 = vadd.f32 %v4413, %v5067
        %v5210 = vadd.f32 %v4462, %v5116
        %v5211 = vadd.f32 %v4511, %v5165
        %v5212 = vadd.f32 %v4415, %v5069
        %v5213 = vadd.f32 %v4464, %v5118
        %v5214 = vadd.f32 %v4513, %v5167
        %v5215 = vadd.f32 %v4418, %v5072
        %v5216 = vadd.f32 %v4467, %v5121
        %v5217 = vadd.f32 %v4516, %v5170
        %v5218 = vadd.f32 %v4420, %v5074
        %v5219 = vadd.f32 %v4469, %v5123
        %v5220 = vadd.f32 %v4518, %v5172
        %v5221 = vadd.f32 %v4423, %v5077
        %v5222 = vadd.f32 %v4472, %v5126
        %v5223 = vadd.f32 %v4521, %v5175
        %v5224 = vadd.f32 %v4425, %v5079
        %v5225 = vadd.f32 %v4474, %v5128
        %v5226 = vadd.f32 %v4523, %v5177
        %5227 = vrot.lane.b32.xlu0 %v4541, 64
        %v5228 = vpop.permute.xlu0 %5227
        %5229 = vrot.lane.b32.xlu0 %v4542, 64
        %v5230 = vpop.permute.xlu0 %5229
        %5231 = vrot.lane.b32.xlu0 %v4543, 64
        %v5232 = vpop.permute.xlu0 %5231
        %5233 = vrot.lane.b32.xlu0 %v4544, 64
        %v5234 = vpop.permute.xlu0 %5233
        %5235 = vrot.lane.b32.xlu0 %v4545, 64
        %v5236 = vpop.permute.xlu0 %5235
        %5237 = vrot.lane.b32.xlu0 %v4546, 64
        %v5238 = vpop.permute.xlu0 %5237
        %5239 = vrot.lane.b32.xlu0 %v4547, 64
        %v5240 = vpop.permute.xlu0 %5239
        %5241 = vrot.lane.b32.xlu0 %v4548, 64
        %v5242 = vpop.permute.xlu0 %5241
        %5243 = vrot.lane.b32.xlu0 %v4581, 64
        %v5244 = vpop.permute.xlu0 %5243
        %5245 = vrot.lane.b32.xlu0 %v4582, 64
        %v5246 = vpop.permute.xlu0 %5245
        %5247 = vrot.lane.b32.xlu0 %v4583, 64
        %v5248 = vpop.permute.xlu0 %5247
        %5249 = vrot.lane.b32.xlu0 %v4584, 64
        %v5250 = vpop.permute.xlu0 %5249
        %5251 = vrot.lane.b32.xlu0 %v4585, 64
        %v5252 = vpop.permute.xlu0 %5251
        %5253 = vrot.lane.b32.xlu0 %v4586, 64
        %v5254 = vpop.permute.xlu0 %5253
        %5255 = vrot.lane.b32.xlu0 %v4587, 64
        %v5256 = vpop.permute.xlu0 %5255
        %5257 = vrot.lane.b32.xlu0 %v4588, 64
        %v5258 = vpop.permute.xlu0 %5257
        %v5260 = vsel %vm3305, %v5228, 0
        %v5263 = vsel %vm3305, %v5230, 0
        %v5266 = vsel %vm3305, %v5232, 0
        %v5269 = vsel %vm3305, %v5234, 0
        %v5272 = vsel %vm3305, %v5236, 0
        %v5275 = vsel %vm3305, %v5238, 0
        %v5278 = vsel %vm3305, %v5240, 0
        %v5281 = vsel %vm3305, %v5242, 0
        %v5284 = vsel %vm3305, %v5244, 0
        %v5287 = vsel %vm3305, %v5246, 0
        %v5290 = vsel %vm3305, %v5248, 0
        %v5293 = vsel %vm3305, %v5250, 0
        %v5296 = vsel %vm3305, %v5252, 0
        %v5299 = vsel %vm3305, %v5254, 0
        %v5302 = vsel %vm3305, %v5256, 0
        %v5305 = vsel %vm3305, %v5258, 0
        %5307 = vmatpush.bf16.xpose.msra.mxu0 %v5305
        %5308 = vmatpush.bf16.xpose.msra.mxu0 %v5302
        %5309 = vmatpush.bf16.xpose.msra.mxu0 %v5299
        %5310 = vmatpush.bf16.xpose.msra.mxu0 %v5296
        %5311 = vmatpush.bf16.xpose.msra.mxu0 %v5293
        %5312 = vmatpush.bf16.xpose.msra.mxu0 %v5290
        %5313 = vmatpush.bf16.xpose.msra.mxu0 %v5287
        %5314 = vmatpush.bf16.xpose.msra.mxu0 %v5284
        %5315 = vmatmul.bf16.gmra.mxu0 %v5260
        %v5316 = vpop.f32.mrf.mxu0
        %v5317 = vadd.f32 %v3209, %v5316
        %v5318 = vpop.f32.mrf.mxu0
        %v5319 = vadd.f32 %v3210, %v5318
        %5320 = vmatmul.bf16.gmra.mxu0 %v5263
        %v5321 = vpop.f32.mrf.mxu0
        %v5322 = vadd.f32 %v3211, %v5321
        %v5323 = vpop.f32.mrf.mxu0
        %v5324 = vadd.f32 %v3212, %v5323
        %5325 = vmatmul.bf16.gmra.mxu0 %v5266
        %v5326 = vpop.f32.mrf.mxu0
        %v5327 = vadd.f32 %v3213, %v5326
        %v5328 = vpop.f32.mrf.mxu0
        %v5329 = vadd.f32 %v3214, %v5328
        %5330 = vmatmul.bf16.gmra.mxu0 %v5269
        %v5331 = vpop.f32.mrf.mxu0
        %v5332 = vadd.f32 %v3215, %v5331
        %v5333 = vpop.f32.mrf.mxu0
        %v5334 = vadd.f32 %v3216, %v5333
        %5335 = vmatmul.bf16.gmra.mxu0 %v5272
        %v5336 = vpop.f32.mrf.mxu0
        %v5337 = vadd.f32 %v3217, %v5336
        %v5338 = vpop.f32.mrf.mxu0
        %v5339 = vadd.f32 %v3218, %v5338
        %5340 = vmatmul.bf16.gmra.mxu0 %v5275
        %v5341 = vpop.f32.mrf.mxu0
        %v5342 = vadd.f32 %v3219, %v5341
        %v5343 = vpop.f32.mrf.mxu0
        %v5344 = vadd.f32 %v3220, %v5343
        %5345 = vmatmul.bf16.gmra.mxu0 %v5278
        %v5346 = vpop.f32.mrf.mxu0
        %v5347 = vadd.f32 %v3221, %v5346
        %v5348 = vpop.f32.mrf.mxu0
        %v5349 = vadd.f32 %v3222, %v5348
        %5350 = vmatmul.bf16.gmra.mxu0 %v5281
        %v5351 = vpop.f32.mrf.mxu0
        %v5352 = vadd.f32 %v3223, %v5351
        %v5353 = vpop.f32.mrf.mxu0
        %v5354 = vadd.f32 %v3224, %v5353
        %5355 = vdwg.mxu0
        %5356 = vmax.xlane.f32.xlu0 %v5317
        %v5357 = vpop.xlane.xlu0 %5356
        %5358 = vmax.xlane.f32.xlu0 %v5319
        %v5359 = vpop.xlane.xlu0 %5358
        %5360 = vmax.xlane.f32.xlu0 %v5322
        %v5361 = vpop.xlane.xlu0 %5360
        %5362 = vmax.xlane.f32.xlu0 %v5324
        %v5363 = vpop.xlane.xlu0 %5362
        %5364 = vmax.xlane.f32.xlu0 %v5327
        %v5365 = vpop.xlane.xlu0 %5364
        %5366 = vmax.xlane.f32.xlu0 %v5329
        %v5367 = vpop.xlane.xlu0 %5366
        %5368 = vmax.xlane.f32.xlu0 %v5332
        %v5369 = vpop.xlane.xlu0 %5368
        %5370 = vmax.xlane.f32.xlu0 %v5334
        %v5371 = vpop.xlane.xlu0 %5370
        %5372 = vmax.xlane.f32.xlu0 %v5337
        %v5373 = vpop.xlane.xlu0 %5372
        %5374 = vmax.xlane.f32.xlu0 %v5339
        %v5375 = vpop.xlane.xlu0 %5374
        %5376 = vmax.xlane.f32.xlu0 %v5342
        %v5377 = vpop.xlane.xlu0 %5376
        %5378 = vmax.xlane.f32.xlu0 %v5344
        %v5379 = vpop.xlane.xlu0 %5378
        %5380 = vmax.xlane.f32.xlu0 %v5347
        %v5381 = vpop.xlane.xlu0 %5380
        %5382 = vmax.xlane.f32.xlu0 %v5349
        %v5383 = vpop.xlane.xlu0 %5382
        %5384 = vmax.xlane.f32.xlu0 %v5352
        %v5385 = vpop.xlane.xlu0 %5384
        %5386 = vmax.xlane.f32.xlu0 %v5354
        %v5387 = vpop.xlane.xlu0 %5386
        %v5388 = vsub.f32 %v5317, %v5357
        %v5389 = vsub.f32 %v5319, %v5359
        %v5390 = vsub.f32 %v5322, %v5361
        %v5391 = vsub.f32 %v5324, %v5363
        %v5392 = vsub.f32 %v5327, %v5365
        %v5393 = vsub.f32 %v5329, %v5367
        %v5394 = vsub.f32 %v5332, %v5369
        %v5395 = vsub.f32 %v5334, %v5371
        %v5396 = vsub.f32 %v5337, %v5373
        %v5397 = vsub.f32 %v5339, %v5375
        %v5398 = vsub.f32 %v5342, %v5377
        %v5399 = vsub.f32 %v5344, %v5379
        %v5400 = vsub.f32 %v5347, %v5381
        %v5401 = vsub.f32 %v5349, %v5383
        %v5402 = vsub.f32 %v5352, %v5385
        %v5403 = vsub.f32 %v5354, %v5387
        %v5404 = vmul.f32 %v5388, 1.442695
        %v5405 = vpow.pop %v5404
        %v5406 = vmul.f32 %v5389, 1.442695
        %v5407 = vpow.pop %v5406
        %v5408 = vmul.f32 %v5390, 1.442695
        %v5409 = vpow.pop %v5408
        %v5410 = vmul.f32 %v5391, 1.442695
        %v5411 = vpow.pop %v5410
        %v5412 = vmul.f32 %v5392, 1.442695
        %v5413 = vpow.pop %v5412
        %v5414 = vmul.f32 %v5393, 1.442695
        %v5415 = vpow.pop %v5414
        %v5416 = vmul.f32 %v5394, 1.442695
        %v5417 = vpow.pop %v5416
        %v5418 = vmul.f32 %v5395, 1.442695
        %v5419 = vpow.pop %v5418
        %v5420 = vmul.f32 %v5396, 1.442695
        %v5421 = vpow.pop %v5420
        %v5422 = vmul.f32 %v5397, 1.442695
        %v5423 = vpow.pop %v5422
        %v5424 = vmul.f32 %v5398, 1.442695
        %v5425 = vpow.pop %v5424
        %v5426 = vmul.f32 %v5399, 1.442695
        %v5427 = vpow.pop %v5426
        %v5428 = vmul.f32 %v5400, 1.442695
        %v5429 = vpow.pop %v5428
        %v5430 = vmul.f32 %v5401, 1.442695
        %v5431 = vpow.pop %v5430
        %v5432 = vmul.f32 %v5402, 1.442695
        %v5433 = vpow.pop %v5432
        %v5434 = vmul.f32 %v5403, 1.442695
        %v5435 = vpow.pop %v5434
        %5436 = vadd.xlane.f32.xlu0 %v5405
        %v5437 = vpop.xlane.xlu0 %5436
        %5438 = vadd.xlane.f32.xlu0 %v5407
        %v5439 = vpop.xlane.xlu0 %5438
        %5440 = vadd.xlane.f32.xlu0 %v5409
        %v5441 = vpop.xlane.xlu0 %5440
        %5442 = vadd.xlane.f32.xlu0 %v5411
        %v5443 = vpop.xlane.xlu0 %5442
        %5444 = vadd.xlane.f32.xlu0 %v5413
        %v5445 = vpop.xlane.xlu0 %5444
        %5446 = vadd.xlane.f32.xlu0 %v5415
        %v5447 = vpop.xlane.xlu0 %5446
        %5448 = vadd.xlane.f32.xlu0 %v5417
        %v5449 = vpop.xlane.xlu0 %5448
        %5450 = vadd.xlane.f32.xlu0 %v5419
        %v5451 = vpop.xlane.xlu0 %5450
        %5452 = vadd.xlane.f32.xlu0 %v5421
        %v5453 = vpop.xlane.xlu0 %5452
        %5454 = vadd.xlane.f32.xlu0 %v5423
        %v5455 = vpop.xlane.xlu0 %5454
        %5456 = vadd.xlane.f32.xlu0 %v5425
        %v5457 = vpop.xlane.xlu0 %5456
        %5458 = vadd.xlane.f32.xlu0 %v5427
        %v5459 = vpop.xlane.xlu0 %5458
        %5460 = vadd.xlane.f32.xlu0 %v5429
        %v5461 = vpop.xlane.xlu0 %5460
        %5462 = vadd.xlane.f32.xlu0 %v5431
        %v5463 = vpop.xlane.xlu0 %5462
        %5464 = vadd.xlane.f32.xlu0 %v5433
        %v5465 = vpop.xlane.xlu0 %5464
        %5466 = vadd.xlane.f32.xlu0 %v5435
        %v5467 = vpop.xlane.xlu0 %5466
        %v5468 = vrcp.pop %v5437
        %v5469 = vrcp.pop %v5439
        %v5470 = vrcp.pop %v5441
        %v5471 = vrcp.pop %v5443
        %v5472 = vrcp.pop %v5445
        %v5473 = vrcp.pop %v5447
        %v5474 = vrcp.pop %v5449
        %v5475 = vrcp.pop %v5451
        %v5476 = vrcp.pop %v5453
        %v5477 = vrcp.pop %v5455
        %v5478 = vrcp.pop %v5457
        %v5479 = vrcp.pop %v5459
        %v5480 = vrcp.pop %v5461
        %v5481 = vrcp.pop %v5463
        %v5482 = vrcp.pop %v5465
        %v5483 = vrcp.pop %v5467
        %v5484 = vmul.f32 %v5405, %v5468
        %v5485 = vmul.f32 %v5407, %v5469
        %v5486 = vmul.f32 %v5409, %v5470
        %v5487 = vmul.f32 %v5411, %v5471
        %v5488 = vmul.f32 %v5413, %v5472
        %v5489 = vmul.f32 %v5415, %v5473
        %v5490 = vmul.f32 %v5417, %v5474
        %v5491 = vmul.f32 %v5419, %v5475
        %v5492 = vmul.f32 %v5421, %v5476
        %v5493 = vmul.f32 %v5423, %v5477
        %v5494 = vmul.f32 %v5425, %v5478
        %v5495 = vmul.f32 %v5427, %v5479
        %v5496 = vmul.f32 %v5429, %v5480
        %v5497 = vmul.f32 %v5431, %v5481
        %v5498 = vmul.f32 %v5433, %v5482
        %v5499 = vmul.f32 %v5435, %v5483
        %v5500 = vpack.c.bf16 %v5485, %v5484
        %v5501 = vpack.c.bf16 %v5487, %v5486
        %v5502 = vpack.c.bf16 %v5489, %v5488
        %v5503 = vpack.c.bf16 %v5491, %v5490
        %v5504 = vpack.c.bf16 %v5493, %v5492
        %v5505 = vpack.c.bf16 %v5495, %v5494
        %v5506 = vpack.c.bf16 %v5497, %v5496
        %v5507 = vpack.c.bf16 %v5499, %v5498
        %5508 = vrot.lane.b32.xlu0 %v4854, 64
        %v5509 = vpop.permute.xlu0 %5508
        %5510 = vrot.lane.b32.xlu0 %v4855, 64
        %v5511 = vpop.permute.xlu0 %5510
        %5512 = vrot.lane.b32.xlu0 %v4856, 64
        %v5513 = vpop.permute.xlu0 %5512
        %5514 = vrot.lane.b32.xlu0 %v4857, 64
        %v5515 = vpop.permute.xlu0 %5514
        %5516 = vrot.lane.b32.xlu0 %v4858, 64
        %v5517 = vpop.permute.xlu0 %5516
        %5518 = vrot.lane.b32.xlu0 %v4859, 64
        %v5519 = vpop.permute.xlu0 %5518
        %5520 = vrot.lane.b32.xlu0 %v4860, 64
        %v5521 = vpop.permute.xlu0 %5520
        %5522 = vrot.lane.b32.xlu0 %v4861, 64
        %v5523 = vpop.permute.xlu0 %5522
        %5532 = vmatpush.bf16.msra.mxu0 %v5523
        %5533 = vmatpush.bf16.msra.mxu0 %v5521
        %5534 = vmatpush.bf16.msra.mxu0 %v5519
        %5535 = vmatpush.bf16.msra.mxu0 %v5517
        %5536 = vmatpush.bf16.msra.mxu0 %v5515
        %5537 = vmatpush.bf16.msra.mxu0 %v5513
        %5538 = vmatpush.bf16.msra.mxu0 %v5511
        %5539 = vmatpush.bf16.msra.mxu0 %v5509
        %5540 = vmatmul.bf16.gmra.mxu0 %v5500
        %v5541 = vpop.f32.mrf.mxu0
        %v5542 = vadd.f32 0.0, %v5541
        %v5543 = vpop.f32.mrf.mxu0
        %v5544 = vadd.f32 0.0, %v5543
        %5545 = vmatmul.bf16.gmra.mxu0 %v5501
        %v5546 = vpop.f32.mrf.mxu0
        %v5547 = vadd.f32 0.0, %v5546
        %v5548 = vpop.f32.mrf.mxu0
        %v5549 = vadd.f32 0.0, %v5548
        %5550 = vmatmul.bf16.gmra.mxu0 %v5502
        %v5551 = vpop.f32.mrf.mxu0
        %v5552 = vadd.f32 0.0, %v5551
        %v5553 = vpop.f32.mrf.mxu0
        %v5554 = vadd.f32 0.0, %v5553
        %5555 = vmatmul.bf16.gmra.mxu0 %v5503
        %v5556 = vpop.f32.mrf.mxu0
        %v5557 = vadd.f32 0.0, %v5556
        %v5558 = vpop.f32.mrf.mxu0
        %v5559 = vadd.f32 0.0, %v5558
        %5560 = vmatmul.bf16.gmra.mxu0 %v5504
        %v5561 = vpop.f32.mrf.mxu0
        %v5562 = vadd.f32 0.0, %v5561
        %v5563 = vpop.f32.mrf.mxu0
        %v5564 = vadd.f32 0.0, %v5563
        %5565 = vmatmul.bf16.gmra.mxu0 %v5505
        %v5566 = vpop.f32.mrf.mxu0
        %v5567 = vadd.f32 0.0, %v5566
        %v5568 = vpop.f32.mrf.mxu0
        %v5569 = vadd.f32 0.0, %v5568
        %5570 = vmatmul.bf16.gmra.mxu0 %v5506
        %v5571 = vpop.f32.mrf.mxu0
        %v5572 = vadd.f32 0.0, %v5571
        %v5573 = vpop.f32.mrf.mxu0
        %v5574 = vadd.f32 0.0, %v5573
        %5575 = vmatmul.bf16.gmra.mxu0 %v5507
        %v5576 = vpop.f32.mrf.mxu0
        %v5577 = vadd.f32 0.0, %v5576
        %v5578 = vpop.f32.mrf.mxu0
        %v5579 = vadd.f32 0.0, %v5578
        %5580 = vdwg.mxu0
        %v5581 = vpack.c.bf16 %v5544, %v5542
        %v5582 = vpack.c.bf16 %v5549, %v5547
        %v5583 = vpack.c.bf16 %v5554, %v5552
        %v5584 = vpack.c.bf16 %v5559, %v5557
        %v5585 = vpack.c.bf16 %v5564, %v5562
        %v5586 = vpack.c.bf16 %v5569, %v5567
        %v5587 = vpack.c.bf16 %v5574, %v5572
        %v5588 = vpack.c.bf16 %v5579, %v5577
        %s5589 = scalar_lea.vmem [#allocation7], 288
        %v5590 = vld [vmem:[%s5589] sm:$0xff]
        %v5591 = vld [vmem:[%s5589 + $0x8] sm:$0xf]
        %v5592 = vld [vmem:[%s5589 + $0xc] sm:$0xff]
        %v5593 = vld [vmem:[%s5589 + $0x14] sm:$0xf]
        %v5594 = vld [vmem:[%s5589 + $0x18] sm:$0xff]
        %v5595 = vld [vmem:[%s5589 + $0x20] sm:$0xf]
        %v5596 = vld [vmem:[%s5589 + $0x24] sm:$0xff]
        %v5597 = vld [vmem:[%s5589 + $0x2c] sm:$0xf]
        %v5598 = vld [vmem:[%s5589 + $0x30] sm:$0xff]
        %v5599 = vld [vmem:[%s5589 + $0x38] sm:$0xf]
        %v5600 = vld [vmem:[%s5589 + $0x3c] sm:$0xff]
        %v5601 = vld [vmem:[%s5589 + $0x44] sm:$0xf]
        %v5602 = vld [vmem:[%s5589 + $0x48] sm:$0xff]
        %v5603 = vld [vmem:[%s5589 + $0x50] sm:$0xf]
        %v5604 = vld [vmem:[%s5589 + $0x54] sm:$0xff]
        %v5605 = vld [vmem:[%s5589 + $0x5c] sm:$0xf]
        %v5622 = vunpack.c.l.b16 %v5590
        %v5623 = vunpack.c.h.b16 %v5590
        %v5624 = vunpack.c.l.b16 %v5591
        %v5625 = vunpack.c.l.b16 %v5592
        %v5626 = vunpack.c.h.b16 %v5592
        %v5627 = vunpack.c.l.b16 %v5593
        %v5628 = vunpack.c.l.b16 %v5594
        %v5629 = vunpack.c.h.b16 %v5594
        %v5630 = vunpack.c.l.b16 %v5595
        %v5631 = vunpack.c.l.b16 %v5596
        %v5632 = vunpack.c.h.b16 %v5596
        %v5633 = vunpack.c.l.b16 %v5597
        %v5634 = vunpack.c.l.b16 %v5598
        %v5635 = vunpack.c.h.b16 %v5598
        %v5636 = vunpack.c.l.b16 %v5599
        %v5637 = vunpack.c.l.b16 %v5600
        %v5638 = vunpack.c.h.b16 %v5600
        %v5639 = vunpack.c.l.b16 %v5601
        %v5640 = vunpack.c.l.b16 %v5602
        %v5641 = vunpack.c.h.b16 %v5602
        %v5642 = vunpack.c.l.b16 %v5603
        %v5643 = vunpack.c.l.b16 %v5604
        %v5644 = vunpack.c.h.b16 %v5604
        %v5645 = vunpack.c.l.b16 %v5605
        %v5646 = vpack.c.b16 %v5625, %v5622
        %v5647 = vpack.c.b16 %v5626, %v5623
        %v5648 = vpack.c.b16 %v5627, %v5624
        %v5649 = vpack.c.b16 %v5631, %v5628
        %v5650 = vpack.c.b16 %v5632, %v5629
        %v5651 = vpack.c.b16 %v5633, %v5630
        %v5652 = vpack.c.b16 %v5637, %v5634
        %v5653 = vpack.c.b16 %v5638, %v5635
        %v5654 = vpack.c.b16 %v5639, %v5636
        %v5655 = vpack.c.b16 %v5643, %v5640
        %v5656 = vpack.c.b16 %v5644, %v5641
        %v5657 = vpack.c.b16 %v5645, %v5642
        %v5671 = vsel %vm3305, %v5581, 0
        %v5674 = vsel %vm3305, %v5582, 0
        %v5677 = vsel %vm3305, %v5583, 0
        %v5680 = vsel %vm3305, %v5584, 0
        %v5683 = vsel %vm3305, %v5585, 0
        %v5686 = vsel %vm3305, %v5586, 0
        %v5689 = vsel %vm3305, %v5587, 0
        %v5692 = vsel %vm3305, %v5588, 0
        %5694 = vmatpush.bf16.msra.mxu0 0
        %5695 = vmatpush.bf16.msra.mxu0 0
        %5696 = vmatpush.bf16.msra.mxu0 0
        %5697 = vmatpush.bf16.msra.mxu0 0
        %5698 = vmatpush.bf16.msra.mxu0 %v5655
        %5699 = vmatpush.bf16.msra.mxu0 %v5652
        %5700 = vmatpush.bf16.msra.mxu0 %v5649
        %5701 = vmatpush.bf16.msra.mxu0 %v5646
        %5702 = vmatmul.bf16.gmra.mxu0 %v5671
        %v5703 = vpop.f32.mrf.mxu0
        %v5704 = vadd.f32 0.0, %v5703
        %v5705 = vpop.f32.mrf.mxu0
        %v5706 = vadd.f32 0.0, %v5705
        %5707 = vmatmul.bf16.gmra.mxu0 %v5674
        %v5708 = vpop.f32.mrf.mxu0
        %v5709 = vadd.f32 0.0, %v5708
        %v5710 = vpop.f32.mrf.mxu0
        %v5711 = vadd.f32 0.0, %v5710
        %5712 = vmatmul.bf16.gmra.mxu0 %v5677
        %v5713 = vpop.f32.mrf.mxu0
        %v5714 = vadd.f32 0.0, %v5713
        %v5715 = vpop.f32.mrf.mxu0
        %v5716 = vadd.f32 0.0, %v5715
        %5717 = vmatmul.bf16.gmra.mxu0 %v5680
        %v5718 = vpop.f32.mrf.mxu0
        %v5719 = vadd.f32 0.0, %v5718
        %v5720 = vpop.f32.mrf.mxu0
        %v5721 = vadd.f32 0.0, %v5720
        %5722 = vmatmul.bf16.gmra.mxu0 %v5683
        %v5723 = vpop.f32.mrf.mxu0
        %v5724 = vadd.f32 0.0, %v5723
        %v5725 = vpop.f32.mrf.mxu0
        %v5726 = vadd.f32 0.0, %v5725
        %5727 = vmatmul.bf16.gmra.mxu0 %v5686
        %v5728 = vpop.f32.mrf.mxu0
        %v5729 = vadd.f32 0.0, %v5728
        %v5730 = vpop.f32.mrf.mxu0
        %v5731 = vadd.f32 0.0, %v5730
        %5732 = vmatmul.bf16.gmra.mxu0 %v5689
        %v5733 = vpop.f32.mrf.mxu0
        %v5734 = vadd.f32 0.0, %v5733
        %v5735 = vpop.f32.mrf.mxu0
        %v5736 = vadd.f32 0.0, %v5735
        %5737 = vmatmul.bf16.gmra.mxu0 %v5692
        %v5738 = vpop.f32.mrf.mxu0
        %v5739 = vadd.f32 0.0, %v5738
        %v5740 = vpop.f32.mrf.mxu0
        %v5741 = vadd.f32 0.0, %v5740
        %5742 = vdwg.mxu0
        %5743 = vmatpush.bf16.msra.mxu0 0
        %5744 = vmatpush.bf16.msra.mxu0 0
        %5745 = vmatpush.bf16.msra.mxu0 0
        %5746 = vmatpush.bf16.msra.mxu0 0
        %5747 = vmatpush.bf16.msra.mxu0 %v5656
        %5748 = vmatpush.bf16.msra.mxu0 %v5653
        %5749 = vmatpush.bf16.msra.mxu0 %v5650
        %5750 = vmatpush.bf16.msra.mxu0 %v5647
        %5751 = vmatmul.bf16.gmra.mxu0 %v5671
        %v5752 = vpop.f32.mrf.mxu0
        %v5753 = vadd.f32 0.0, %v5752
        %v5754 = vpop.f32.mrf.mxu0
        %v5755 = vadd.f32 0.0, %v5754
        %5756 = vmatmul.bf16.gmra.mxu0 %v5674
        %v5757 = vpop.f32.mrf.mxu0
        %v5758 = vadd.f32 0.0, %v5757
        %v5759 = vpop.f32.mrf.mxu0
        %v5760 = vadd.f32 0.0, %v5759
        %5761 = vmatmul.bf16.gmra.mxu0 %v5677
        %v5762 = vpop.f32.mrf.mxu0
        %v5763 = vadd.f32 0.0, %v5762
        %v5764 = vpop.f32.mrf.mxu0
        %v5765 = vadd.f32 0.0, %v5764
        %5766 = vmatmul.bf16.gmra.mxu0 %v5680
        %v5767 = vpop.f32.mrf.mxu0
        %v5768 = vadd.f32 0.0, %v5767
        %v5769 = vpop.f32.mrf.mxu0
        %v5770 = vadd.f32 0.0, %v5769
        %5771 = vmatmul.bf16.gmra.mxu0 %v5683
        %v5772 = vpop.f32.mrf.mxu0
        %v5773 = vadd.f32 0.0, %v5772
        %v5774 = vpop.f32.mrf.mxu0
        %v5775 = vadd.f32 0.0, %v5774
        %5776 = vmatmul.bf16.gmra.mxu0 %v5686
        %v5777 = vpop.f32.mrf.mxu0
        %v5778 = vadd.f32 0.0, %v5777
        %v5779 = vpop.f32.mrf.mxu0
        %v5780 = vadd.f32 0.0, %v5779
        %5781 = vmatmul.bf16.gmra.mxu0 %v5689
        %v5782 = vpop.f32.mrf.mxu0
        %v5783 = vadd.f32 0.0, %v5782
        %v5784 = vpop.f32.mrf.mxu0
        %v5785 = vadd.f32 0.0, %v5784
        %5786 = vmatmul.bf16.gmra.mxu0 %v5692
        %v5787 = vpop.f32.mrf.mxu0
        %v5788 = vadd.f32 0.0, %v5787
        %v5789 = vpop.f32.mrf.mxu0
        %v5790 = vadd.f32 0.0, %v5789
        %5791 = vdwg.mxu0
        %5792 = vmatpush.bf16.msra.mxu0 0
        %5793 = vmatpush.bf16.msra.mxu0 0
        %5794 = vmatpush.bf16.msra.mxu0 0
        %5795 = vmatpush.bf16.msra.mxu0 0
        %5796 = vmatpush.bf16.msra.mxu0 %v5657
        %5797 = vmatpush.bf16.msra.mxu0 %v5654
        %5798 = vmatpush.bf16.msra.mxu0 %v5651
        %5799 = vmatpush.bf16.msra.mxu0 %v5648
        %5800 = vmatmul.bf16.gmra.mxu0 %v5671
        %v5801 = vpop.f32.mrf.mxu0
        %v5802 = vadd.f32 0.0, %v5801
        %v5803 = vpop.f32.mrf.mxu0
        %v5804 = vadd.f32 0.0, %v5803
        %5805 = vmatmul.bf16.gmra.mxu0 %v5674
        %v5806 = vpop.f32.mrf.mxu0
        %v5807 = vadd.f32 0.0, %v5806
        %v5808 = vpop.f32.mrf.mxu0
        %v5809 = vadd.f32 0.0, %v5808
        %5810 = vmatmul.bf16.gmra.mxu0 %v5677
        %v5811 = vpop.f32.mrf.mxu0
        %v5812 = vadd.f32 0.0, %v5811
        %v5813 = vpop.f32.mrf.mxu0
        %v5814 = vadd.f32 0.0, %v5813
        %5815 = vmatmul.bf16.gmra.mxu0 %v5680
        %v5816 = vpop.f32.mrf.mxu0
        %v5817 = vadd.f32 0.0, %v5816
        %v5818 = vpop.f32.mrf.mxu0
        %v5819 = vadd.f32 0.0, %v5818
        %5820 = vmatmul.bf16.gmra.mxu0 %v5683
        %v5821 = vpop.f32.mrf.mxu0
        %v5822 = vadd.f32 0.0, %v5821
        %v5823 = vpop.f32.mrf.mxu0
        %v5824 = vadd.f32 0.0, %v5823
        %5825 = vmatmul.bf16.gmra.mxu0 %v5686
        %v5826 = vpop.f32.mrf.mxu0
        %v5827 = vadd.f32 0.0, %v5826
        %v5828 = vpop.f32.mrf.mxu0
        %v5829 = vadd.f32 0.0, %v5828
        %5830 = vmatmul.bf16.gmra.mxu0 %v5689
        %v5831 = vpop.f32.mrf.mxu0
        %v5832 = vadd.f32 0.0, %v5831
        %v5833 = vpop.f32.mrf.mxu0
        %v5834 = vadd.f32 0.0, %v5833
        %5835 = vmatmul.bf16.gmra.mxu0 %v5692
        %v5836 = vpop.f32.mrf.mxu0
        %v5837 = vadd.f32 0.0, %v5836
        %v5838 = vpop.f32.mrf.mxu0
        %v5839 = vadd.f32 0.0, %v5838
        %5840 = vdwg.mxu0
        %v5841 = vadd.f32 %v5179, %v5704
        %v5842 = vadd.f32 %v5180, %v5753
        %v5843 = vadd.f32 %v5181, %v5802
        %v5844 = vadd.f32 %v5182, %v5706
        %v5845 = vadd.f32 %v5183, %v5755
        %v5846 = vadd.f32 %v5184, %v5804
        %v5847 = vadd.f32 %v5185, %v5709
        %v5848 = vadd.f32 %v5186, %v5758
        %v5849 = vadd.f32 %v5187, %v5807
        %v5850 = vadd.f32 %v5188, %v5711
        %v5851 = vadd.f32 %v5189, %v5760
        %v5852 = vadd.f32 %v5190, %v5809
        %v5853 = vadd.f32 %v5191, %v5714
        %v5854 = vadd.f32 %v5192, %v5763
        %v5855 = vadd.f32 %v5193, %v5812
        %v5856 = vadd.f32 %v5194, %v5716
        %v5857 = vadd.f32 %v5195, %v5765
        %v5858 = vadd.f32 %v5196, %v5814
        %v5859 = vadd.f32 %v5197, %v5719
        %v5860 = vadd.f32 %v5198, %v5768
        %v5861 = vadd.f32 %v5199, %v5817
        %v5862 = vadd.f32 %v5200, %v5721
        %v5863 = vadd.f32 %v5201, %v5770
        %v5864 = vadd.f32 %v5202, %v5819
        %v5865 = vadd.f32 %v5203, %v5724
        %v5866 = vadd.f32 %v5204, %v5773
        %v5867 = vadd.f32 %v5205, %v5822
        %v5868 = vadd.f32 %v5206, %v5726
        %v5869 = vadd.f32 %v5207, %v5775
        %v5870 = vadd.f32 %v5208, %v5824
        %v5871 = vadd.f32 %v5209, %v5729
        %v5872 = vadd.f32 %v5210, %v5778
        %v5873 = vadd.f32 %v5211, %v5827
        %v5874 = vadd.f32 %v5212, %v5731
        %v5875 = vadd.f32 %v5213, %v5780
        %v5876 = vadd.f32 %v5214, %v5829
        %v5877 = vadd.f32 %v5215, %v5734
        %v5878 = vadd.f32 %v5216, %v5783
        %v5879 = vadd.f32 %v5217, %v5832
        %v5880 = vadd.f32 %v5218, %v5736
        %v5881 = vadd.f32 %v5219, %v5785
        %v5882 = vadd.f32 %v5220, %v5834
        %v5883 = vadd.f32 %v5221, %v5739
        %v5884 = vadd.f32 %v5222, %v5788
        %v5885 = vadd.f32 %v5223, %v5837
        %v5886 = vadd.f32 %v5224, %v5741
        %v5887 = vadd.f32 %v5225, %v5790
        %v5888 = vadd.f32 %v5226, %v5839
        %v5889 = vunpack.c.l.b16 %v3095
        %v5890 = vunpack.c.l.b16 %v3100
        %v5891 = vunpack.c.l.b16 %v3105
        %v5892 = vunpack.c.l.b16 %v3110
        %v5893 = vunpack.c.l.b16 %v3115
        %v5894 = vunpack.c.l.b16 %v3120
        %v5895 = vunpack.c.l.b16 %v3125
        %v5896 = vunpack.c.l.b16 %v3130
        %v5897 = vunpack.c.l.b16 %v3135
        %v5898 = vunpack.c.l.b16 %v3140
        %v5899 = vunpack.c.l.b16 %v3145
        %v5900 = vunpack.c.l.b16 %v3150
        %v5901 = vunpack.c.l.b16 %v3155
        %v5902 = vunpack.c.l.b16 %v3160
        %v5903 = vunpack.c.l.b16 %v3165
        %v5904 = vunpack.c.l.b16 %v3170
        %v5905 = vpack.c.b16 %v5890, %v5889
        %v5906 = vpack.c.b16 %v5892, %v5891
        %v5907 = vpack.c.b16 %v5894, %v5893
        %v5908 = vpack.c.b16 %v5896, %v5895
        %v5909 = vpack.c.b16 %v5898, %v5897
        %v5910 = vpack.c.b16 %v5900, %v5899
        %v5911 = vpack.c.b16 %v5902, %v5901
        %v5912 = vpack.c.b16 %v5904, %v5903
        %v5913 = vunpack.c.h.b16 %v3096
        %v5914 = vunpack.c.h.b16 %v3101
        %v5915 = vunpack.c.h.b16 %v3106
        %v5916 = vunpack.c.h.b16 %v3111
        %v5917 = vunpack.c.h.b16 %v3116
        %v5918 = vunpack.c.h.b16 %v3121
        %v5919 = vunpack.c.h.b16 %v3126
        %v5920 = vunpack.c.h.b16 %v3131
        %v5921 = vunpack.c.h.b16 %v3136
        %v5922 = vunpack.c.h.b16 %v3141
        %v5923 = vunpack.c.h.b16 %v3146
        %v5924 = vunpack.c.h.b16 %v3151
        %v5925 = vunpack.c.h.b16 %v3156
        %v5926 = vunpack.c.h.b16 %v3161
        %v5927 = vunpack.c.h.b16 %v3166
        %v5928 = vunpack.c.h.b16 %v3171
        %v5929 = vpack.c.b16 %v5914, %v5913
        %v5930 = vpack.c.b16 %v5916, %v5915
        %v5931 = vpack.c.b16 %v5918, %v5917
        %v5932 = vpack.c.b16 %v5920, %v5919
        %v5933 = vpack.c.b16 %v5922, %v5921
        %v5934 = vpack.c.b16 %v5924, %v5923
        %v5935 = vpack.c.b16 %v5926, %v5925
        %v5936 = vpack.c.b16 %v5928, %v5927
        %v5938 = vsel %vm3305, %v5905, 0
        %v5941 = vsel %vm3305, %v5906, 0
        %v5944 = vsel %vm3305, %v5907, 0
        %v5947 = vsel %vm3305, %v5908, 0
        %v5950 = vsel %vm3305, %v5909, 0
        %v5953 = vsel %vm3305, %v5910, 0
        %v5956 = vsel %vm3305, %v5911, 0
        %v5959 = vsel %vm3305, %v5912, 0
        %v5962 = vsel %vm3305, %v5929, 0
        %v5965 = vsel %vm3305, %v5930, 0
        %v5968 = vsel %vm3305, %v5931, 0
        %v5971 = vsel %vm3305, %v5932, 0
        %v5974 = vsel %vm3305, %v5933, 0
        %v5977 = vsel %vm3305, %v5934, 0
        %v5980 = vsel %vm3305, %v5935, 0
        %v5983 = vsel %vm3305, %v5936, 0
        %5985 = vmatpush.bf16.xpose.msra.mxu0 %v5983
        %5986 = vmatpush.bf16.xpose.msra.mxu0 %v5980
        %5987 = vmatpush.bf16.xpose.msra.mxu0 %v5977
        %5988 = vmatpush.bf16.xpose.msra.mxu0 %v5974
        %5989 = vmatpush.bf16.xpose.msra.mxu0 %v5971
        %5990 = vmatpush.bf16.xpose.msra.mxu0 %v5968
        %5991 = vmatpush.bf16.xpose.msra.mxu0 %v5965
        %5992 = vmatpush.bf16.xpose.msra.mxu0 %v5962
        %5993 = vmatmul.bf16.gmra.mxu0 %v5938
        %v5994 = vpop.f32.mrf.mxu0
        %v5995 = vadd.f32 %v3209, %v5994
        %v5996 = vpop.f32.mrf.mxu0
        %v5997 = vadd.f32 %v3210, %v5996
        %5998 = vmatmul.bf16.gmra.mxu0 %v5941
        %v5999 = vpop.f32.mrf.mxu0
        %v6000 = vadd.f32 %v3211, %v5999
        %v6001 = vpop.f32.mrf.mxu0
        %v6002 = vadd.f32 %v3212, %v6001
        %6003 = vmatmul.bf16.gmra.mxu0 %v5944
        %v6004 = vpop.f32.mrf.mxu0
        %v6005 = vadd.f32 %v3213, %v6004
        %v6006 = vpop.f32.mrf.mxu0
        %v6007 = vadd.f32 %v3214, %v6006
        %6008 = vmatmul.bf16.gmra.mxu0 %v5947
        %v6009 = vpop.f32.mrf.mxu0
        %v6010 = vadd.f32 %v3215, %v6009
        %v6011 = vpop.f32.mrf.mxu0
        %v6012 = vadd.f32 %v3216, %v6011
        %6013 = vmatmul.bf16.gmra.mxu0 %v5950
        %v6014 = vpop.f32.mrf.mxu0
        %v6015 = vadd.f32 %v3217, %v6014
        %v6016 = vpop.f32.mrf.mxu0
        %v6017 = vadd.f32 %v3218, %v6016
        %6018 = vmatmul.bf16.gmra.mxu0 %v5953
        %v6019 = vpop.f32.mrf.mxu0
        %v6020 = vadd.f32 %v3219, %v6019
        %v6021 = vpop.f32.mrf.mxu0
        %v6022 = vadd.f32 %v3220, %v6021
        %6023 = vmatmul.bf16.gmra.mxu0 %v5956
        %v6024 = vpop.f32.mrf.mxu0
        %v6025 = vadd.f32 %v3221, %v6024
        %v6026 = vpop.f32.mrf.mxu0
        %v6027 = vadd.f32 %v3222, %v6026
        %6028 = vmatmul.bf16.gmra.mxu0 %v5959
        %v6029 = vpop.f32.mrf.mxu0
        %v6030 = vadd.f32 %v3223, %v6029
        %v6031 = vpop.f32.mrf.mxu0
        %v6032 = vadd.f32 %v3224, %v6031
        %6033 = vdwg.mxu0
        %6034 = vmax.xlane.f32.xlu0 %v5995
        %v6035 = vpop.xlane.xlu0 %6034
        %6036 = vmax.xlane.f32.xlu0 %v5997
        %v6037 = vpop.xlane.xlu0 %6036
        %6038 = vmax.xlane.f32.xlu0 %v6000
        %v6039 = vpop.xlane.xlu0 %6038
        %6040 = vmax.xlane.f32.xlu0 %v6002
        %v6041 = vpop.xlane.xlu0 %6040
        %6042 = vmax.xlane.f32.xlu0 %v6005
        %v6043 = vpop.xlane.xlu0 %6042
        %6044 = vmax.xlane.f32.xlu0 %v6007
        %v6045 = vpop.xlane.xlu0 %6044
        %6046 = vmax.xlane.f32.xlu0 %v6010
        %v6047 = vpop.xlane.xlu0 %6046
        %6048 = vmax.xlane.f32.xlu0 %v6012
        %v6049 = vpop.xlane.xlu0 %6048
        %6050 = vmax.xlane.f32.xlu0 %v6015
        %v6051 = vpop.xlane.xlu0 %6050
        %6052 = vmax.xlane.f32.xlu0 %v6017
        %v6053 = vpop.xlane.xlu0 %6052
        %6054 = vmax.xlane.f32.xlu0 %v6020
        %v6055 = vpop.xlane.xlu0 %6054
        %6056 = vmax.xlane.f32.xlu0 %v6022
        %v6057 = vpop.xlane.xlu0 %6056
        %6058 = vmax.xlane.f32.xlu0 %v6025
        %v6059 = vpop.xlane.xlu0 %6058
        %6060 = vmax.xlane.f32.xlu0 %v6027
        %v6061 = vpop.xlane.xlu0 %6060
        %6062 = vmax.xlane.f32.xlu0 %v6030
        %v6063 = vpop.xlane.xlu0 %6062
        %6064 = vmax.xlane.f32.xlu0 %v6032
        %v6065 = vpop.xlane.xlu0 %6064
        %v6066 = vsub.f32 %v5995, %v6035
        %v6067 = vsub.f32 %v5997, %v6037
        %v6068 = vsub.f32 %v6000, %v6039
        %v6069 = vsub.f32 %v6002, %v6041
        %v6070 = vsub.f32 %v6005, %v6043
        %v6071 = vsub.f32 %v6007, %v6045
        %v6072 = vsub.f32 %v6010, %v6047
        %v6073 = vsub.f32 %v6012, %v6049
        %v6074 = vsub.f32 %v6015, %v6051
        %v6075 = vsub.f32 %v6017, %v6053
        %v6076 = vsub.f32 %v6020, %v6055
        %v6077 = vsub.f32 %v6022, %v6057
        %v6078 = vsub.f32 %v6025, %v6059
        %v6079 = vsub.f32 %v6027, %v6061
        %v6080 = vsub.f32 %v6030, %v6063
        %v6081 = vsub.f32 %v6032, %v6065
        %v6082 = vmul.f32 %v6066, 1.442695
        %v6083 = vpow.pop %v6082
        %v6084 = vmul.f32 %v6067, 1.442695
        %v6085 = vpow.pop %v6084
        %v6086 = vmul.f32 %v6068, 1.442695
        %v6087 = vpow.pop %v6086
        %v6088 = vmul.f32 %v6069, 1.442695
        %v6089 = vpow.pop %v6088
        %v6090 = vmul.f32 %v6070, 1.442695
        %v6091 = vpow.pop %v6090
        %v6092 = vmul.f32 %v6071, 1.442695
        %v6093 = vpow.pop %v6092
        %v6094 = vmul.f32 %v6072, 1.442695
        %v6095 = vpow.pop %v6094
        %v6096 = vmul.f32 %v6073, 1.442695
        %v6097 = vpow.pop %v6096
        %v6098 = vmul.f32 %v6074, 1.442695
        %v6099 = vpow.pop %v6098
        %v6100 = vmul.f32 %v6075, 1.442695
        %v6101 = vpow.pop %v6100
        %v6102 = vmul.f32 %v6076, 1.442695
        %v6103 = vpow.pop %v6102
        %v6104 = vmul.f32 %v6077, 1.442695
        %v6105 = vpow.pop %v6104
        %v6106 = vmul.f32 %v6078, 1.442695
        %v6107 = vpow.pop %v6106
        %v6108 = vmul.f32 %v6079, 1.442695
        %v6109 = vpow.pop %v6108
        %v6110 = vmul.f32 %v6080, 1.442695
        %v6111 = vpow.pop %v6110
        %v6112 = vmul.f32 %v6081, 1.442695
        %v6113 = vpow.pop %v6112
        %6114 = vadd.xlane.f32.xlu0 %v6083
        %v6115 = vpop.xlane.xlu0 %6114
        %6116 = vadd.xlane.f32.xlu0 %v6085
        %v6117 = vpop.xlane.xlu0 %6116
        %6118 = vadd.xlane.f32.xlu0 %v6087
        %v6119 = vpop.xlane.xlu0 %6118
        %6120 = vadd.xlane.f32.xlu0 %v6089
        %v6121 = vpop.xlane.xlu0 %6120
        %6122 = vadd.xlane.f32.xlu0 %v6091
        %v6123 = vpop.xlane.xlu0 %6122
        %6124 = vadd.xlane.f32.xlu0 %v6093
        %v6125 = vpop.xlane.xlu0 %6124
        %6126 = vadd.xlane.f32.xlu0 %v6095
        %v6127 = vpop.xlane.xlu0 %6126
        %6128 = vadd.xlane.f32.xlu0 %v6097
        %v6129 = vpop.xlane.xlu0 %6128
        %6130 = vadd.xlane.f32.xlu0 %v6099
        %v6131 = vpop.xlane.xlu0 %6130
        %6132 = vadd.xlane.f32.xlu0 %v6101
        %v6133 = vpop.xlane.xlu0 %6132
        %6134 = vadd.xlane.f32.xlu0 %v6103
        %v6135 = vpop.xlane.xlu0 %6134
        %6136 = vadd.xlane.f32.xlu0 %v6105
        %v6137 = vpop.xlane.xlu0 %6136
        %6138 = vadd.xlane.f32.xlu0 %v6107
        %v6139 = vpop.xlane.xlu0 %6138
        %6140 = vadd.xlane.f32.xlu0 %v6109
        %v6141 = vpop.xlane.xlu0 %6140
        %6142 = vadd.xlane.f32.xlu0 %v6111
        %v6143 = vpop.xlane.xlu0 %6142
        %6144 = vadd.xlane.f32.xlu0 %v6113
        %v6145 = vpop.xlane.xlu0 %6144
        %v6146 = vrcp.pop %v6115
        %v6147 = vrcp.pop %v6117
        %v6148 = vrcp.pop %v6119
        %v6149 = vrcp.pop %v6121
        %v6150 = vrcp.pop %v6123
        %v6151 = vrcp.pop %v6125
        %v6152 = vrcp.pop %v6127
        %v6153 = vrcp.pop %v6129
        %v6154 = vrcp.pop %v6131
        %v6155 = vrcp.pop %v6133
        %v6156 = vrcp.pop %v6135
        %v6157 = vrcp.pop %v6137
        %v6158 = vrcp.pop %v6139
        %v6159 = vrcp.pop %v6141
        %v6160 = vrcp.pop %v6143
        %v6161 = vrcp.pop %v6145
        %v6162 = vmul.f32 %v6083, %v6146
        %v6163 = vmul.f32 %v6085, %v6147
        %v6164 = vmul.f32 %v6087, %v6148
        %v6165 = vmul.f32 %v6089, %v6149
        %v6166 = vmul.f32 %v6091, %v6150
        %v6167 = vmul.f32 %v6093, %v6151
        %v6168 = vmul.f32 %v6095, %v6152
        %v6169 = vmul.f32 %v6097, %v6153
        %v6170 = vmul.f32 %v6099, %v6154
        %v6171 = vmul.f32 %v6101, %v6155
        %v6172 = vmul.f32 %v6103, %v6156
        %v6173 = vmul.f32 %v6105, %v6157
        %v6174 = vmul.f32 %v6107, %v6158
        %v6175 = vmul.f32 %v6109, %v6159
        %v6176 = vmul.f32 %v6111, %v6160
        %v6177 = vmul.f32 %v6113, %v6161
        %v6178 = vpack.c.bf16 %v6163, %v6162
        %v6179 = vpack.c.bf16 %v6165, %v6164
        %v6180 = vpack.c.bf16 %v6167, %v6166
        %v6181 = vpack.c.bf16 %v6169, %v6168
        %v6182 = vpack.c.bf16 %v6171, %v6170
        %v6183 = vpack.c.bf16 %v6173, %v6172
        %v6184 = vpack.c.bf16 %v6175, %v6174
        %v6185 = vpack.c.bf16 %v6177, %v6176
        %v6202 = vunpack.c.l.b16 %v3098
        %v6203 = vunpack.c.l.b16 %v3103
        %v6204 = vunpack.c.l.b16 %v3108
        %v6205 = vunpack.c.l.b16 %v3113
        %v6206 = vunpack.c.l.b16 %v3118
        %v6207 = vunpack.c.l.b16 %v3123
        %v6208 = vunpack.c.l.b16 %v3128
        %v6209 = vunpack.c.l.b16 %v3133
        %v6210 = vunpack.c.l.b16 %v3138
        %v6211 = vunpack.c.l.b16 %v3143
        %v6212 = vunpack.c.l.b16 %v3148
        %v6213 = vunpack.c.l.b16 %v3153
        %v6214 = vunpack.c.l.b16 %v3158
        %v6215 = vunpack.c.l.b16 %v3163
        %v6216 = vunpack.c.l.b16 %v3168
        %v6217 = vunpack.c.l.b16 %v3173
        %v6218 = vpack.c.b16 %v6203, %v6202
        %v6219 = vpack.c.b16 %v6205, %v6204
        %v6220 = vpack.c.b16 %v6207, %v6206
        %v6221 = vpack.c.b16 %v6209, %v6208
        %v6222 = vpack.c.b16 %v6211, %v6210
        %v6223 = vpack.c.b16 %v6213, %v6212
        %v6224 = vpack.c.b16 %v6215, %v6214
        %v6225 = vpack.c.b16 %v6217, %v6216
        %6234 = vmatpush.bf16.msra.mxu0 %v6225
        %6235 = vmatpush.bf16.msra.mxu0 %v6224
        %6236 = vmatpush.bf16.msra.mxu0 %v6223
        %6237 = vmatpush.bf16.msra.mxu0 %v6222
        %6238 = vmatpush.bf16.msra.mxu0 %v6221
        %6239 = vmatpush.bf16.msra.mxu0 %v6220
        %6240 = vmatpush.bf16.msra.mxu0 %v6219
        %6241 = vmatpush.bf16.msra.mxu0 %v6218
        %6242 = vmatmul.bf16.gmra.mxu0 %v6178
        %v6243 = vpop.f32.mrf.mxu0
        %v6244 = vadd.f32 0.0, %v6243
        %v6245 = vpop.f32.mrf.mxu0
        %v6246 = vadd.f32 0.0, %v6245
        %6247 = vmatmul.bf16.gmra.mxu0 %v6179
        %v6248 = vpop.f32.mrf.mxu0
        %v6249 = vadd.f32 0.0, %v6248
        %v6250 = vpop.f32.mrf.mxu0
        %v6251 = vadd.f32 0.0, %v6250
        %6252 = vmatmul.bf16.gmra.mxu0 %v6180
        %v6253 = vpop.f32.mrf.mxu0
        %v6254 = vadd.f32 0.0, %v6253
        %v6255 = vpop.f32.mrf.mxu0
        %v6256 = vadd.f32 0.0, %v6255
        %6257 = vmatmul.bf16.gmra.mxu0 %v6181
        %v6258 = vpop.f32.mrf.mxu0
        %v6259 = vadd.f32 0.0, %v6258
        %v6260 = vpop.f32.mrf.mxu0
        %v6261 = vadd.f32 0.0, %v6260
        %6262 = vmatmul.bf16.gmra.mxu0 %v6182
        %v6263 = vpop.f32.mrf.mxu0
        %v6264 = vadd.f32 0.0, %v6263
        %v6265 = vpop.f32.mrf.mxu0
        %v6266 = vadd.f32 0.0, %v6265
        %6267 = vmatmul.bf16.gmra.mxu0 %v6183
        %v6268 = vpop.f32.mrf.mxu0
        %v6269 = vadd.f32 0.0, %v6268
        %v6270 = vpop.f32.mrf.mxu0
        %v6271 = vadd.f32 0.0, %v6270
        %6272 = vmatmul.bf16.gmra.mxu0 %v6184
        %v6273 = vpop.f32.mrf.mxu0
        %v6274 = vadd.f32 0.0, %v6273
        %v6275 = vpop.f32.mrf.mxu0
        %v6276 = vadd.f32 0.0, %v6275
        %6277 = vmatmul.bf16.gmra.mxu0 %v6185
        %v6278 = vpop.f32.mrf.mxu0
        %v6279 = vadd.f32 0.0, %v6278
        %v6280 = vpop.f32.mrf.mxu0
        %v6281 = vadd.f32 0.0, %v6280
        %6282 = vdwg.mxu0
        %v6283 = vpack.c.bf16 %v6246, %v6244
        %v6284 = vpack.c.bf16 %v6251, %v6249
        %v6285 = vpack.c.bf16 %v6256, %v6254
        %v6286 = vpack.c.bf16 %v6261, %v6259
        %v6287 = vpack.c.bf16 %v6266, %v6264
        %v6288 = vpack.c.bf16 %v6271, %v6269
        %v6289 = vpack.c.bf16 %v6276, %v6274
        %v6290 = vpack.c.bf16 %v6281, %v6279
        %s6291 = scalar_lea.vmem [#allocation7], 384
        %v6292 = vld [vmem:[%s6291] sm:$0xff]
        %v6293 = vld [vmem:[%s6291 + $0x8] sm:$0xf]
        %v6294 = vld [vmem:[%s6291 + $0xc] sm:$0xff]
        %v6295 = vld [vmem:[%s6291 + $0x14] sm:$0xf]
        %v6296 = vld [vmem:[%s6291 + $0x18] sm:$0xff]
        %v6297 = vld [vmem:[%s6291 + $0x20] sm:$0xf]
        %v6298 = vld [vmem:[%s6291 + $0x24] sm:$0xff]
        %v6299 = vld [vmem:[%s6291 + $0x2c] sm:$0xf]
        %v6300 = vld [vmem:[%s6291 + $0x30] sm:$0xff]
        %v6301 = vld [vmem:[%s6291 + $0x38] sm:$0xf]
        %v6302 = vld [vmem:[%s6291 + $0x3c] sm:$0xff]
        %v6303 = vld [vmem:[%s6291 + $0x44] sm:$0xf]
        %v6304 = vld [vmem:[%s6291 + $0x48] sm:$0xff]
        %v6305 = vld [vmem:[%s6291 + $0x50] sm:$0xf]
        %v6306 = vld [vmem:[%s6291 + $0x54] sm:$0xff]
        %v6307 = vld [vmem:[%s6291 + $0x5c] sm:$0xf]
        %v6324 = vunpack.c.l.b16 %v6292
        %v6325 = vunpack.c.h.b16 %v6292
        %v6326 = vunpack.c.l.b16 %v6293
        %v6327 = vunpack.c.l.b16 %v6294
        %v6328 = vunpack.c.h.b16 %v6294
        %v6329 = vunpack.c.l.b16 %v6295
        %v6330 = vunpack.c.l.b16 %v6296
        %v6331 = vunpack.c.h.b16 %v6296
        %v6332 = vunpack.c.l.b16 %v6297
        %v6333 = vunpack.c.l.b16 %v6298
        %v6334 = vunpack.c.h.b16 %v6298
        %v6335 = vunpack.c.l.b16 %v6299
        %v6336 = vunpack.c.l.b16 %v6300
        %v6337 = vunpack.c.h.b16 %v6300
        %v6338 = vunpack.c.l.b16 %v6301
        %v6339 = vunpack.c.l.b16 %v6302
        %v6340 = vunpack.c.h.b16 %v6302
        %v6341 = vunpack.c.l.b16 %v6303
        %v6342 = vunpack.c.l.b16 %v6304
        %v6343 = vunpack.c.h.b16 %v6304
        %v6344 = vunpack.c.l.b16 %v6305
        %v6345 = vunpack.c.l.b16 %v6306
        %v6346 = vunpack.c.h.b16 %v6306
        %v6347 = vunpack.c.l.b16 %v6307
        %v6348 = vpack.c.b16 %v6327, %v6324
        %v6349 = vpack.c.b16 %v6328, %v6325
        %v6350 = vpack.c.b16 %v6329, %v6326
        %v6351 = vpack.c.b16 %v6333, %v6330
        %v6352 = vpack.c.b16 %v6334, %v6331
        %v6353 = vpack.c.b16 %v6335, %v6332
        %v6354 = vpack.c.b16 %v6339, %v6336
        %v6355 = vpack.c.b16 %v6340, %v6337
        %v6356 = vpack.c.b16 %v6341, %v6338
        %v6357 = vpack.c.b16 %v6345, %v6342
        %v6358 = vpack.c.b16 %v6346, %v6343
        %v6359 = vpack.c.b16 %v6347, %v6344
        %v6373 = vsel %vm3305, %v6283, 0
        %v6376 = vsel %vm3305, %v6284, 0
        %v6379 = vsel %vm3305, %v6285, 0
        %v6382 = vsel %vm3305, %v6286, 0
        %v6385 = vsel %vm3305, %v6287, 0
        %v6388 = vsel %vm3305, %v6288, 0
        %v6391 = vsel %vm3305, %v6289, 0
        %v6394 = vsel %vm3305, %v6290, 0
        %6396 = vmatpush.bf16.msra.mxu0 0
        %6397 = vmatpush.bf16.msra.mxu0 0
        %6398 = vmatpush.bf16.msra.mxu0 0
        %6399 = vmatpush.bf16.msra.mxu0 0
        %6400 = vmatpush.bf16.msra.mxu0 %v6357
        %6401 = vmatpush.bf16.msra.mxu0 %v6354
        %6402 = vmatpush.bf16.msra.mxu0 %v6351
        %6403 = vmatpush.bf16.msra.mxu0 %v6348
        %6404 = vmatmul.bf16.gmra.mxu0 %v6373
        %v6405 = vpop.f32.mrf.mxu0
        %v6406 = vadd.f32 0.0, %v6405
        %v6407 = vpop.f32.mrf.mxu0
        %v6408 = vadd.f32 0.0, %v6407
        %6409 = vmatmul.bf16.gmra.mxu0 %v6376
        %v6410 = vpop.f32.mrf.mxu0
        %v6411 = vadd.f32 0.0, %v6410
        %v6412 = vpop.f32.mrf.mxu0
        %v6413 = vadd.f32 0.0, %v6412
        %6414 = vmatmul.bf16.gmra.mxu0 %v6379
        %v6415 = vpop.f32.mrf.mxu0
        %v6416 = vadd.f32 0.0, %v6415
        %v6417 = vpop.f32.mrf.mxu0
        %v6418 = vadd.f32 0.0, %v6417
        %6419 = vmatmul.bf16.gmra.mxu0 %v6382
        %v6420 = vpop.f32.mrf.mxu0
        %v6421 = vadd.f32 0.0, %v6420
        %v6422 = vpop.f32.mrf.mxu0
        %v6423 = vadd.f32 0.0, %v6422
        %6424 = vmatmul.bf16.gmra.mxu0 %v6385
        %v6425 = vpop.f32.mrf.mxu0
        %v6426 = vadd.f32 0.0, %v6425
        %v6427 = vpop.f32.mrf.mxu0
        %v6428 = vadd.f32 0.0, %v6427
        %6429 = vmatmul.bf16.gmra.mxu0 %v6388
        %v6430 = vpop.f32.mrf.mxu0
        %v6431 = vadd.f32 0.0, %v6430
        %v6432 = vpop.f32.mrf.mxu0
        %v6433 = vadd.f32 0.0, %v6432
        %6434 = vmatmul.bf16.gmra.mxu0 %v6391
        %v6435 = vpop.f32.mrf.mxu0
        %v6436 = vadd.f32 0.0, %v6435
        %v6437 = vpop.f32.mrf.mxu0
        %v6438 = vadd.f32 0.0, %v6437
        %6439 = vmatmul.bf16.gmra.mxu0 %v6394
        %v6440 = vpop.f32.mrf.mxu0
        %v6441 = vadd.f32 0.0, %v6440
        %v6442 = vpop.f32.mrf.mxu0
        %v6443 = vadd.f32 0.0, %v6442
        %6444 = vdwg.mxu0
        %6445 = vmatpush.bf16.msra.mxu0 0
        %6446 = vmatpush.bf16.msra.mxu0 0
        %6447 = vmatpush.bf16.msra.mxu0 0
        %6448 = vmatpush.bf16.msra.mxu0 0
        %6449 = vmatpush.bf16.msra.mxu0 %v6358
        %6450 = vmatpush.bf16.msra.mxu0 %v6355
        %6451 = vmatpush.bf16.msra.mxu0 %v6352
        %6452 = vmatpush.bf16.msra.mxu0 %v6349
        %6453 = vmatmul.bf16.gmra.mxu0 %v6373
        %v6454 = vpop.f32.mrf.mxu0
        %v6455 = vadd.f32 0.0, %v6454
        %v6456 = vpop.f32.mrf.mxu0
        %v6457 = vadd.f32 0.0, %v6456
        %6458 = vmatmul.bf16.gmra.mxu0 %v6376
        %v6459 = vpop.f32.mrf.mxu0
        %v6460 = vadd.f32 0.0, %v6459
        %v6461 = vpop.f32.mrf.mxu0
        %v6462 = vadd.f32 0.0, %v6461
        %6463 = vmatmul.bf16.gmra.mxu0 %v6379
        %v6464 = vpop.f32.mrf.mxu0
        %v6465 = vadd.f32 0.0, %v6464
        %v6466 = vpop.f32.mrf.mxu0
        %v6467 = vadd.f32 0.0, %v6466
        %6468 = vmatmul.bf16.gmra.mxu0 %v6382
        %v6469 = vpop.f32.mrf.mxu0
        %v6470 = vadd.f32 0.0, %v6469
        %v6471 = vpop.f32.mrf.mxu0
        %v6472 = vadd.f32 0.0, %v6471
        %6473 = vmatmul.bf16.gmra.mxu0 %v6385
        %v6474 = vpop.f32.mrf.mxu0
        %v6475 = vadd.f32 0.0, %v6474
        %v6476 = vpop.f32.mrf.mxu0
        %v6477 = vadd.f32 0.0, %v6476
        %6478 = vmatmul.bf16.gmra.mxu0 %v6388
        %v6479 = vpop.f32.mrf.mxu0
        %v6480 = vadd.f32 0.0, %v6479
        %v6481 = vpop.f32.mrf.mxu0
        %v6482 = vadd.f32 0.0, %v6481
        %6483 = vmatmul.bf16.gmra.mxu0 %v6391
        %v6484 = vpop.f32.mrf.mxu0
        %v6485 = vadd.f32 0.0, %v6484
        %v6486 = vpop.f32.mrf.mxu0
        %v6487 = vadd.f32 0.0, %v6486
        %6488 = vmatmul.bf16.gmra.mxu0 %v6394
        %v6489 = vpop.f32.mrf.mxu0
        %v6490 = vadd.f32 0.0, %v6489
        %v6491 = vpop.f32.mrf.mxu0
        %v6492 = vadd.f32 0.0, %v6491
        %6493 = vdwg.mxu0
        %6494 = vmatpush.bf16.msra.mxu0 0
        %6495 = vmatpush.bf16.msra.mxu0 0
        %6496 = vmatpush.bf16.msra.mxu0 0
        %6497 = vmatpush.bf16.msra.mxu0 0
        %6498 = vmatpush.bf16.msra.mxu0 %v6359
        %6499 = vmatpush.bf16.msra.mxu0 %v6356
        %6500 = vmatpush.bf16.msra.mxu0 %v6353
        %6501 = vmatpush.bf16.msra.mxu0 %v6350
        %6502 = vmatmul.bf16.gmra.mxu0 %v6373
        %v6503 = vpop.f32.mrf.mxu0
        %v6504 = vadd.f32 0.0, %v6503
        %v6505 = vpop.f32.mrf.mxu0
        %v6506 = vadd.f32 0.0, %v6505
        %6507 = vmatmul.bf16.gmra.mxu0 %v6376
        %v6508 = vpop.f32.mrf.mxu0
        %v6509 = vadd.f32 0.0, %v6508
        %v6510 = vpop.f32.mrf.mxu0
        %v6511 = vadd.f32 0.0, %v6510
        %6512 = vmatmul.bf16.gmra.mxu0 %v6379
        %v6513 = vpop.f32.mrf.mxu0
        %v6514 = vadd.f32 0.0, %v6513
        %v6515 = vpop.f32.mrf.mxu0
        %v6516 = vadd.f32 0.0, %v6515
        %6517 = vmatmul.bf16.gmra.mxu0 %v6382
        %v6518 = vpop.f32.mrf.mxu0
        %v6519 = vadd.f32 0.0, %v6518
        %v6520 = vpop.f32.mrf.mxu0
        %v6521 = vadd.f32 0.0, %v6520
        %6522 = vmatmul.bf16.gmra.mxu0 %v6385
        %v6523 = vpop.f32.mrf.mxu0
        %v6524 = vadd.f32 0.0, %v6523
        %v6525 = vpop.f32.mrf.mxu0
        %v6526 = vadd.f32 0.0, %v6525
        %6527 = vmatmul.bf16.gmra.mxu0 %v6388
        %v6528 = vpop.f32.mrf.mxu0
        %v6529 = vadd.f32 0.0, %v6528
        %v6530 = vpop.f32.mrf.mxu0
        %v6531 = vadd.f32 0.0, %v6530
        %6532 = vmatmul.bf16.gmra.mxu0 %v6391
        %v6533 = vpop.f32.mrf.mxu0
        %v6534 = vadd.f32 0.0, %v6533
        %v6535 = vpop.f32.mrf.mxu0
        %v6536 = vadd.f32 0.0, %v6535
        %6537 = vmatmul.bf16.gmra.mxu0 %v6394
        %v6538 = vpop.f32.mrf.mxu0
        %v6539 = vadd.f32 0.0, %v6538
        %v6540 = vpop.f32.mrf.mxu0
        %v6541 = vadd.f32 0.0, %v6540
        %6542 = vdwg.mxu0
        %v6543 = vadd.f32 %v5841, %v6406
        %v6544 = vadd.f32 %v5842, %v6455
        %v6545 = vadd.f32 %v5843, %v6504
        %v6546 = vadd.f32 %v5844, %v6408
        %v6547 = vadd.f32 %v5845, %v6457
        %v6548 = vadd.f32 %v5846, %v6506
        %v6549 = vadd.f32 %v5847, %v6411
        %v6550 = vadd.f32 %v5848, %v6460
        %v6551 = vadd.f32 %v5849, %v6509
        %v6552 = vadd.f32 %v5850, %v6413
        %v6553 = vadd.f32 %v5851, %v6462
        %v6554 = vadd.f32 %v5852, %v6511
        %v6555 = vadd.f32 %v5853, %v6416
        %v6556 = vadd.f32 %v5854, %v6465
        %v6557 = vadd.f32 %v5855, %v6514
        %v6558 = vadd.f32 %v5856, %v6418
        %v6559 = vadd.f32 %v5857, %v6467
        %v6560 = vadd.f32 %v5858, %v6516
        %v6561 = vadd.f32 %v5859, %v6421
        %v6562 = vadd.f32 %v5860, %v6470
        %v6563 = vadd.f32 %v5861, %v6519
        %v6564 = vadd.f32 %v5862, %v6423
        %v6565 = vadd.f32 %v5863, %v6472
        %v6566 = vadd.f32 %v5864, %v6521
        %v6567 = vadd.f32 %v5865, %v6426
        %v6568 = vadd.f32 %v5866, %v6475
        %v6569 = vadd.f32 %v5867, %v6524
        %v6570 = vadd.f32 %v5868, %v6428
        %v6571 = vadd.f32 %v5869, %v6477
        %v6572 = vadd.f32 %v5870, %v6526
        %v6573 = vadd.f32 %v5871, %v6431
        %v6574 = vadd.f32 %v5872, %v6480
        %v6575 = vadd.f32 %v5873, %v6529
        %v6576 = vadd.f32 %v5874, %v6433
        %v6577 = vadd.f32 %v5875, %v6482
        %v6578 = vadd.f32 %v5876, %v6531
        %v6579 = vadd.f32 %v5877, %v6436
        %v6580 = vadd.f32 %v5878, %v6485
        %v6581 = vadd.f32 %v5879, %v6534
        %v6582 = vadd.f32 %v5880, %v6438
        %v6583 = vadd.f32 %v5881, %v6487
        %v6584 = vadd.f32 %v5882, %v6536
        %v6585 = vadd.f32 %v5883, %v6441
        %v6586 = vadd.f32 %v5884, %v6490
        %v6587 = vadd.f32 %v5885, %v6539
        %v6588 = vadd.f32 %v5886, %v6443
        %v6589 = vadd.f32 %v5887, %v6492
        %v6590 = vadd.f32 %v5888, %v6541
        %6591 = vrot.lane.b32.xlu0 %v5905, 64
        %v6592 = vpop.permute.xlu0 %6591
        %6593 = vrot.lane.b32.xlu0 %v5906, 64
        %v6594 = vpop.permute.xlu0 %6593
        %6595 = vrot.lane.b32.xlu0 %v5907, 64
        %v6596 = vpop.permute.xlu0 %6595
        %6597 = vrot.lane.b32.xlu0 %v5908, 64
        %v6598 = vpop.permute.xlu0 %6597
        %6599 = vrot.lane.b32.xlu0 %v5909, 64
        %v6600 = vpop.permute.xlu0 %6599
        %6601 = vrot.lane.b32.xlu0 %v5910, 64
        %v6602 = vpop.permute.xlu0 %6601
        %6603 = vrot.lane.b32.xlu0 %v5911, 64
        %v6604 = vpop.permute.xlu0 %6603
        %6605 = vrot.lane.b32.xlu0 %v5912, 64
        %v6606 = vpop.permute.xlu0 %6605
        %6607 = vrot.lane.b32.xlu0 %v5929, 64
        %v6608 = vpop.permute.xlu0 %6607
        %6609 = vrot.lane.b32.xlu0 %v5930, 64
        %v6610 = vpop.permute.xlu0 %6609
        %6611 = vrot.lane.b32.xlu0 %v5931, 64
        %v6612 = vpop.permute.xlu0 %6611
        %6613 = vrot.lane.b32.xlu0 %v5932, 64
        %v6614 = vpop.permute.xlu0 %6613
        %6615 = vrot.lane.b32.xlu0 %v5933, 64
        %v6616 = vpop.permute.xlu0 %6615
        %6617 = vrot.lane.b32.xlu0 %v5934, 64
        %v6618 = vpop.permute.xlu0 %6617
        %6619 = vrot.lane.b32.xlu0 %v5935, 64
        %v6620 = vpop.permute.xlu0 %6619
        %6621 = vrot.lane.b32.xlu0 %v5936, 64
        %v6622 = vpop.permute.xlu0 %6621
        %v6624 = vsel %vm3305, %v6592, 0
        %v6627 = vsel %vm3305, %v6594, 0
        %v6630 = vsel %vm3305, %v6596, 0
        %v6633 = vsel %vm3305, %v6598, 0
        %v6636 = vsel %vm3305, %v6600, 0
        %v6639 = vsel %vm3305, %v6602, 0
        %v6642 = vsel %vm3305, %v6604, 0
        %v6645 = vsel %vm3305, %v6606, 0
        %v6648 = vsel %vm3305, %v6608, 0
        %v6651 = vsel %vm3305, %v6610, 0
        %v6654 = vsel %vm3305, %v6612, 0
        %v6657 = vsel %vm3305, %v6614, 0
        %v6660 = vsel %vm3305, %v6616, 0
        %v6663 = vsel %vm3305, %v6618, 0
        %v6666 = vsel %vm3305, %v6620, 0
        %v6669 = vsel %vm3305, %v6622, 0
        %6671 = vmatpush.bf16.xpose.msra.mxu0 %v6669
        %6672 = vmatpush.bf16.xpose.msra.mxu0 %v6666
        %6673 = vmatpush.bf16.xpose.msra.mxu0 %v6663
        %6674 = vmatpush.bf16.xpose.msra.mxu0 %v6660
        %6675 = vmatpush.bf16.xpose.msra.mxu0 %v6657
        %6676 = vmatpush.bf16.xpose.msra.mxu0 %v6654
        %6677 = vmatpush.bf16.xpose.msra.mxu0 %v6651
        %6678 = vmatpush.bf16.xpose.msra.mxu0 %v6648
        %6679 = vmatmul.bf16.gmra.mxu0 %v6624
        %v6680 = vpop.f32.mrf.mxu0
        %v6681 = vadd.f32 %v3209, %v6680
        %v6682 = vpop.f32.mrf.mxu0
        %v6683 = vadd.f32 %v3210, %v6682
        %6684 = vmatmul.bf16.gmra.mxu0 %v6627
        %v6685 = vpop.f32.mrf.mxu0
        %v6686 = vadd.f32 %v3211, %v6685
        %v6687 = vpop.f32.mrf.mxu0
        %v6688 = vadd.f32 %v3212, %v6687
        %6689 = vmatmul.bf16.gmra.mxu0 %v6630
        %v6690 = vpop.f32.mrf.mxu0
        %v6691 = vadd.f32 %v3213, %v6690
        %v6692 = vpop.f32.mrf.mxu0
        %v6693 = vadd.f32 %v3214, %v6692
        %6694 = vmatmul.bf16.gmra.mxu0 %v6633
        %v6695 = vpop.f32.mrf.mxu0
        %v6696 = vadd.f32 %v3215, %v6695
        %v6697 = vpop.f32.mrf.mxu0
        %v6698 = vadd.f32 %v3216, %v6697
        %6699 = vmatmul.bf16.gmra.mxu0 %v6636
        %v6700 = vpop.f32.mrf.mxu0
        %v6701 = vadd.f32 %v3217, %v6700
        %v6702 = vpop.f32.mrf.mxu0
        %v6703 = vadd.f32 %v3218, %v6702
        %6704 = vmatmul.bf16.gmra.mxu0 %v6639
        %v6705 = vpop.f32.mrf.mxu0
        %v6706 = vadd.f32 %v3219, %v6705
        %v6707 = vpop.f32.mrf.mxu0
        %v6708 = vadd.f32 %v3220, %v6707
        %6709 = vmatmul.bf16.gmra.mxu0 %v6642
        %v6710 = vpop.f32.mrf.mxu0
        %v6711 = vadd.f32 %v3221, %v6710
        %v6712 = vpop.f32.mrf.mxu0
        %v6713 = vadd.f32 %v3222, %v6712
        %6714 = vmatmul.bf16.gmra.mxu0 %v6645
        %v6715 = vpop.f32.mrf.mxu0
        %v6716 = vadd.f32 %v3223, %v6715
        %v6717 = vpop.f32.mrf.mxu0
        %v6718 = vadd.f32 %v3224, %v6717
        %6719 = vdwg.mxu0
        %6720 = vmax.xlane.f32.xlu0 %v6681
        %v6721 = vpop.xlane.xlu0 %6720
        %6722 = vmax.xlane.f32.xlu0 %v6683
        %v6723 = vpop.xlane.xlu0 %6722
        %6724 = vmax.xlane.f32.xlu0 %v6686
        %v6725 = vpop.xlane.xlu0 %6724
        %6726 = vmax.xlane.f32.xlu0 %v6688
        %v6727 = vpop.xlane.xlu0 %6726
        %6728 = vmax.xlane.f32.xlu0 %v6691
        %v6729 = vpop.xlane.xlu0 %6728
        %6730 = vmax.xlane.f32.xlu0 %v6693
        %v6731 = vpop.xlane.xlu0 %6730
        %6732 = vmax.xlane.f32.xlu0 %v6696
        %v6733 = vpop.xlane.xlu0 %6732
        %6734 = vmax.xlane.f32.xlu0 %v6698
        %v6735 = vpop.xlane.xlu0 %6734
        %6736 = vmax.xlane.f32.xlu0 %v6701
        %v6737 = vpop.xlane.xlu0 %6736
        %6738 = vmax.xlane.f32.xlu0 %v6703
        %v6739 = vpop.xlane.xlu0 %6738
        %6740 = vmax.xlane.f32.xlu0 %v6706
        %v6741 = vpop.xlane.xlu0 %6740
        %6742 = vmax.xlane.f32.xlu0 %v6708
        %v6743 = vpop.xlane.xlu0 %6742
        %6744 = vmax.xlane.f32.xlu0 %v6711
        %v6745 = vpop.xlane.xlu0 %6744
        %6746 = vmax.xlane.f32.xlu0 %v6713
        %v6747 = vpop.xlane.xlu0 %6746
        %6748 = vmax.xlane.f32.xlu0 %v6716
        %v6749 = vpop.xlane.xlu0 %6748
        %6750 = vmax.xlane.f32.xlu0 %v6718
        %v6751 = vpop.xlane.xlu0 %6750
        %v6752 = vsub.f32 %v6681, %v6721
        %v6753 = vsub.f32 %v6683, %v6723
        %v6754 = vsub.f32 %v6686, %v6725
        %v6755 = vsub.f32 %v6688, %v6727
        %v6756 = vsub.f32 %v6691, %v6729
        %v6757 = vsub.f32 %v6693, %v6731
        %v6758 = vsub.f32 %v6696, %v6733
        %v6759 = vsub.f32 %v6698, %v6735
        %v6760 = vsub.f32 %v6701, %v6737
        %v6761 = vsub.f32 %v6703, %v6739
        %v6762 = vsub.f32 %v6706, %v6741
        %v6763 = vsub.f32 %v6708, %v6743
        %v6764 = vsub.f32 %v6711, %v6745
        %v6765 = vsub.f32 %v6713, %v6747
        %v6766 = vsub.f32 %v6716, %v6749
        %v6767 = vsub.f32 %v6718, %v6751
        %v6768 = vmul.f32 %v6752, 1.442695
        %v6769 = vpow.pop %v6768
        %v6770 = vmul.f32 %v6753, 1.442695
        %v6771 = vpow.pop %v6770
        %v6772 = vmul.f32 %v6754, 1.442695
        %v6773 = vpow.pop %v6772
        %v6774 = vmul.f32 %v6755, 1.442695
        %v6775 = vpow.pop %v6774
        %v6776 = vmul.f32 %v6756, 1.442695
        %v6777 = vpow.pop %v6776
        %v6778 = vmul.f32 %v6757, 1.442695
        %v6779 = vpow.pop %v6778
        %v6780 = vmul.f32 %v6758, 1.442695
        %v6781 = vpow.pop %v6780
        %v6782 = vmul.f32 %v6759, 1.442695
        %v6783 = vpow.pop %v6782
        %v6784 = vmul.f32 %v6760, 1.442695
        %v6785 = vpow.pop %v6784
        %v6786 = vmul.f32 %v6761, 1.442695
        %v6787 = vpow.pop %v6786
        %v6788 = vmul.f32 %v6762, 1.442695
        %v6789 = vpow.pop %v6788
        %v6790 = vmul.f32 %v6763, 1.442695
        %v6791 = vpow.pop %v6790
        %v6792 = vmul.f32 %v6764, 1.442695
        %v6793 = vpow.pop %v6792
        %v6794 = vmul.f32 %v6765, 1.442695
        %v6795 = vpow.pop %v6794
        %v6796 = vmul.f32 %v6766, 1.442695
        %v6797 = vpow.pop %v6796
        %v6798 = vmul.f32 %v6767, 1.442695
        %v6799 = vpow.pop %v6798
        %6800 = vadd.xlane.f32.xlu0 %v6769
        %v6801 = vpop.xlane.xlu0 %6800
        %6802 = vadd.xlane.f32.xlu0 %v6771
        %v6803 = vpop.xlane.xlu0 %6802
        %6804 = vadd.xlane.f32.xlu0 %v6773
        %v6805 = vpop.xlane.xlu0 %6804
        %6806 = vadd.xlane.f32.xlu0 %v6775
        %v6807 = vpop.xlane.xlu0 %6806
        %6808 = vadd.xlane.f32.xlu0 %v6777
        %v6809 = vpop.xlane.xlu0 %6808
        %6810 = vadd.xlane.f32.xlu0 %v6779
        %v6811 = vpop.xlane.xlu0 %6810
        %6812 = vadd.xlane.f32.xlu0 %v6781
        %v6813 = vpop.xlane.xlu0 %6812
        %6814 = vadd.xlane.f32.xlu0 %v6783
        %v6815 = vpop.xlane.xlu0 %6814
        %6816 = vadd.xlane.f32.xlu0 %v6785
        %v6817 = vpop.xlane.xlu0 %6816
        %6818 = vadd.xlane.f32.xlu0 %v6787
        %v6819 = vpop.xlane.xlu0 %6818
        %6820 = vadd.xlane.f32.xlu0 %v6789
        %v6821 = vpop.xlane.xlu0 %6820
        %6822 = vadd.xlane.f32.xlu0 %v6791
        %v6823 = vpop.xlane.xlu0 %6822
        %6824 = vadd.xlane.f32.xlu0 %v6793
        %v6825 = vpop.xlane.xlu0 %6824
        %6826 = vadd.xlane.f32.xlu0 %v6795
        %v6827 = vpop.xlane.xlu0 %6826
        %6828 = vadd.xlane.f32.xlu0 %v6797
        %v6829 = vpop.xlane.xlu0 %6828
        %6830 = vadd.xlane.f32.xlu0 %v6799
        %v6831 = vpop.xlane.xlu0 %6830
        %v6832 = vrcp.pop %v6801
        %v6833 = vrcp.pop %v6803
        %v6834 = vrcp.pop %v6805
        %v6835 = vrcp.pop %v6807
        %v6836 = vrcp.pop %v6809
        %v6837 = vrcp.pop %v6811
        %v6838 = vrcp.pop %v6813
        %v6839 = vrcp.pop %v6815
        %v6840 = vrcp.pop %v6817
        %v6841 = vrcp.pop %v6819
        %v6842 = vrcp.pop %v6821
        %v6843 = vrcp.pop %v6823
        %v6844 = vrcp.pop %v6825
        %v6845 = vrcp.pop %v6827
        %v6846 = vrcp.pop %v6829
        %v6847 = vrcp.pop %v6831
        %v6848 = vmul.f32 %v6769, %v6832
        %v6849 = vmul.f32 %v6771, %v6833
        %v6850 = vmul.f32 %v6773, %v6834
        %v6851 = vmul.f32 %v6775, %v6835
        %v6852 = vmul.f32 %v6777, %v6836
        %v6853 = vmul.f32 %v6779, %v6837
        %v6854 = vmul.f32 %v6781, %v6838
        %v6855 = vmul.f32 %v6783, %v6839
        %v6856 = vmul.f32 %v6785, %v6840
        %v6857 = vmul.f32 %v6787, %v6841
        %v6858 = vmul.f32 %v6789, %v6842
        %v6859 = vmul.f32 %v6791, %v6843
        %v6860 = vmul.f32 %v6793, %v6844
        %v6861 = vmul.f32 %v6795, %v6845
        %v6862 = vmul.f32 %v6797, %v6846
        %v6863 = vmul.f32 %v6799, %v6847
        %v6864 = vpack.c.bf16 %v6849, %v6848
        %v6865 = vpack.c.bf16 %v6851, %v6850
        %v6866 = vpack.c.bf16 %v6853, %v6852
        %v6867 = vpack.c.bf16 %v6855, %v6854
        %v6868 = vpack.c.bf16 %v6857, %v6856
        %v6869 = vpack.c.bf16 %v6859, %v6858
        %v6870 = vpack.c.bf16 %v6861, %v6860
        %v6871 = vpack.c.bf16 %v6863, %v6862
        %6872 = vrot.lane.b32.xlu0 %v6218, 64
        %v6873 = vpop.permute.xlu0 %6872
        %6874 = vrot.lane.b32.xlu0 %v6219, 64
        %v6875 = vpop.permute.xlu0 %6874
        %6876 = vrot.lane.b32.xlu0 %v6220, 64
        %v6877 = vpop.permute.xlu0 %6876
        %6878 = vrot.lane.b32.xlu0 %v6221, 64
        %v6879 = vpop.permute.xlu0 %6878
        %6880 = vrot.lane.b32.xlu0 %v6222, 64
        %v6881 = vpop.permute.xlu0 %6880
        %6882 = vrot.lane.b32.xlu0 %v6223, 64
        %v6883 = vpop.permute.xlu0 %6882
        %6884 = vrot.lane.b32.xlu0 %v6224, 64
        %v6885 = vpop.permute.xlu0 %6884
        %6886 = vrot.lane.b32.xlu0 %v6225, 64
        %v6887 = vpop.permute.xlu0 %6886
        %6896 = vmatpush.bf16.msra.mxu0 %v6887
        %6897 = vmatpush.bf16.msra.mxu0 %v6885
        %6898 = vmatpush.bf16.msra.mxu0 %v6883
        %6899 = vmatpush.bf16.msra.mxu0 %v6881
        %6900 = vmatpush.bf16.msra.mxu0 %v6879
        %6901 = vmatpush.bf16.msra.mxu0 %v6877
        %6902 = vmatpush.bf16.msra.mxu0 %v6875
        %6903 = vmatpush.bf16.msra.mxu0 %v6873
        %6904 = vmatmul.bf16.gmra.mxu0 %v6864
        %v6905 = vpop.f32.mrf.mxu0
        %v6906 = vadd.f32 0.0, %v6905
        %v6907 = vpop.f32.mrf.mxu0
        %v6908 = vadd.f32 0.0, %v6907
        %6909 = vmatmul.bf16.gmra.mxu0 %v6865
        %v6910 = vpop.f32.mrf.mxu0
        %v6911 = vadd.f32 0.0, %v6910
        %v6912 = vpop.f32.mrf.mxu0
        %v6913 = vadd.f32 0.0, %v6912
        %6914 = vmatmul.bf16.gmra.mxu0 %v6866
        %v6915 = vpop.f32.mrf.mxu0
        %v6916 = vadd.f32 0.0, %v6915
        %v6917 = vpop.f32.mrf.mxu0
        %v6918 = vadd.f32 0.0, %v6917
        %6919 = vmatmul.bf16.gmra.mxu0 %v6867
        %v6920 = vpop.f32.mrf.mxu0
        %v6921 = vadd.f32 0.0, %v6920
        %v6922 = vpop.f32.mrf.mxu0
        %v6923 = vadd.f32 0.0, %v6922
        %6924 = vmatmul.bf16.gmra.mxu0 %v6868
        %v6925 = vpop.f32.mrf.mxu0
        %v6926 = vadd.f32 0.0, %v6925
        %v6927 = vpop.f32.mrf.mxu0
        %v6928 = vadd.f32 0.0, %v6927
        %6929 = vmatmul.bf16.gmra.mxu0 %v6869
        %v6930 = vpop.f32.mrf.mxu0
        %v6931 = vadd.f32 0.0, %v6930
        %v6932 = vpop.f32.mrf.mxu0
        %v6933 = vadd.f32 0.0, %v6932
        %6934 = vmatmul.bf16.gmra.mxu0 %v6870
        %v6935 = vpop.f32.mrf.mxu0
        %v6936 = vadd.f32 0.0, %v6935
        %v6937 = vpop.f32.mrf.mxu0
        %v6938 = vadd.f32 0.0, %v6937
        %6939 = vmatmul.bf16.gmra.mxu0 %v6871
        %v6940 = vpop.f32.mrf.mxu0
        %v6941 = vadd.f32 0.0, %v6940
        %v6942 = vpop.f32.mrf.mxu0
        %v6943 = vadd.f32 0.0, %v6942
        %6944 = vdwg.mxu0
        %v6945 = vpack.c.bf16 %v6908, %v6906
        %v6946 = vpack.c.bf16 %v6913, %v6911
        %v6947 = vpack.c.bf16 %v6918, %v6916
        %v6948 = vpack.c.bf16 %v6923, %v6921
        %v6949 = vpack.c.bf16 %v6928, %v6926
        %v6950 = vpack.c.bf16 %v6933, %v6931
        %v6951 = vpack.c.bf16 %v6938, %v6936
        %v6952 = vpack.c.bf16 %v6943, %v6941
        %s6953 = scalar_lea.vmem [#allocation7], 480
        %v6954 = vld [vmem:[%s6953] sm:$0xff]
        %v6955 = vld [vmem:[%s6953 + $0x8] sm:$0xf]
        %v6956 = vld [vmem:[%s6953 + $0xc] sm:$0xff]
        %v6957 = vld [vmem:[%s6953 + $0x14] sm:$0xf]
        %v6958 = vld [vmem:[%s6953 + $0x18] sm:$0xff]
        %v6959 = vld [vmem:[%s6953 + $0x20] sm:$0xf]
        %v6960 = vld [vmem:[%s6953 + $0x24] sm:$0xff]
        %v6961 = vld [vmem:[%s6953 + $0x2c] sm:$0xf]
        %v6962 = vld [vmem:[%s6953 + $0x30] sm:$0xff]
        %v6963 = vld [vmem:[%s6953 + $0x38] sm:$0xf]
        %v6964 = vld [vmem:[%s6953 + $0x3c] sm:$0xff]
        %v6965 = vld [vmem:[%s6953 + $0x44] sm:$0xf]
        %v6966 = vld [vmem:[%s6953 + $0x48] sm:$0xff]
        %v6967 = vld [vmem:[%s6953 + $0x50] sm:$0xf]
        %v6968 = vld [vmem:[%s6953 + $0x54] sm:$0xff]
        %v6969 = vld [vmem:[%s6953 + $0x5c] sm:$0xf]
        %v6986 = vunpack.c.l.b16 %v6954
        %v6987 = vunpack.c.h.b16 %v6954
        %v6988 = vunpack.c.l.b16 %v6955
        %v6989 = vunpack.c.l.b16 %v6956
        %v6990 = vunpack.c.h.b16 %v6956
        %v6991 = vunpack.c.l.b16 %v6957
        %v6992 = vunpack.c.l.b16 %v6958
        %v6993 = vunpack.c.h.b16 %v6958
        %v6994 = vunpack.c.l.b16 %v6959
        %v6995 = vunpack.c.l.b16 %v6960
        %v6996 = vunpack.c.h.b16 %v6960
        %v6997 = vunpack.c.l.b16 %v6961
        %v6998 = vunpack.c.l.b16 %v6962
        %v6999 = vunpack.c.h.b16 %v6962
        %v7000 = vunpack.c.l.b16 %v6963
        %v7001 = vunpack.c.l.b16 %v6964
        %v7002 = vunpack.c.h.b16 %v6964
        %v7003 = vunpack.c.l.b16 %v6965
        %v7004 = vunpack.c.l.b16 %v6966
        %v7005 = vunpack.c.h.b16 %v6966
        %v7006 = vunpack.c.l.b16 %v6967
        %v7007 = vunpack.c.l.b16 %v6968
        %v7008 = vunpack.c.h.b16 %v6968
        %v7009 = vunpack.c.l.b16 %v6969
        %v7010 = vpack.c.b16 %v6989, %v6986
        %v7011 = vpack.c.b16 %v6990, %v6987
        %v7012 = vpack.c.b16 %v6991, %v6988
        %v7013 = vpack.c.b16 %v6995, %v6992
        %v7014 = vpack.c.b16 %v6996, %v6993
        %v7015 = vpack.c.b16 %v6997, %v6994
        %v7016 = vpack.c.b16 %v7001, %v6998
        %v7017 = vpack.c.b16 %v7002, %v6999
        %v7018 = vpack.c.b16 %v7003, %v7000
        %v7019 = vpack.c.b16 %v7007, %v7004
        %v7020 = vpack.c.b16 %v7008, %v7005
        %v7021 = vpack.c.b16 %v7009, %v7006
        %v7035 = vsel %vm3305, %v6945, 0
        %v7038 = vsel %vm3305, %v6946, 0
        %v7041 = vsel %vm3305, %v6947, 0
        %v7044 = vsel %vm3305, %v6948, 0
        %v7047 = vsel %vm3305, %v6949, 0
        %v7050 = vsel %vm3305, %v6950, 0
        %v7053 = vsel %vm3305, %v6951, 0
        %v7056 = vsel %vm3305, %v6952, 0
        %7058 = vmatpush.bf16.msra.mxu0 0
        %7059 = vmatpush.bf16.msra.mxu0 0
        %7060 = vmatpush.bf16.msra.mxu0 0
        %7061 = vmatpush.bf16.msra.mxu0 0
        %7062 = vmatpush.bf16.msra.mxu0 %v7019
        %7063 = vmatpush.bf16.msra.mxu0 %v7016
        %7064 = vmatpush.bf16.msra.mxu0 %v7013
        %7065 = vmatpush.bf16.msra.mxu0 %v7010
        %7066 = vmatmul.bf16.gmra.mxu0 %v7035
        %v7067 = vpop.f32.mrf.mxu0
        %v7068 = vadd.f32 0.0, %v7067
        %v7069 = vpop.f32.mrf.mxu0
        %v7070 = vadd.f32 0.0, %v7069
        %7071 = vmatmul.bf16.gmra.mxu0 %v7038
        %v7072 = vpop.f32.mrf.mxu0
        %v7073 = vadd.f32 0.0, %v7072
        %v7074 = vpop.f32.mrf.mxu0
        %v7075 = vadd.f32 0.0, %v7074
        %7076 = vmatmul.bf16.gmra.mxu0 %v7041
        %v7077 = vpop.f32.mrf.mxu0
        %v7078 = vadd.f32 0.0, %v7077
        %v7079 = vpop.f32.mrf.mxu0
        %v7080 = vadd.f32 0.0, %v7079
        %7081 = vmatmul.bf16.gmra.mxu0 %v7044
        %v7082 = vpop.f32.mrf.mxu0
        %v7083 = vadd.f32 0.0, %v7082
        %v7084 = vpop.f32.mrf.mxu0
        %v7085 = vadd.f32 0.0, %v7084
        %7086 = vmatmul.bf16.gmra.mxu0 %v7047
        %v7087 = vpop.f32.mrf.mxu0
        %v7088 = vadd.f32 0.0, %v7087
        %v7089 = vpop.f32.mrf.mxu0
        %v7090 = vadd.f32 0.0, %v7089
        %7091 = vmatmul.bf16.gmra.mxu0 %v7050
        %v7092 = vpop.f32.mrf.mxu0
        %v7093 = vadd.f32 0.0, %v7092
        %v7094 = vpop.f32.mrf.mxu0
        %v7095 = vadd.f32 0.0, %v7094
        %7096 = vmatmul.bf16.gmra.mxu0 %v7053
        %v7097 = vpop.f32.mrf.mxu0
        %v7098 = vadd.f32 0.0, %v7097
        %v7099 = vpop.f32.mrf.mxu0
        %v7100 = vadd.f32 0.0, %v7099
        %7101 = vmatmul.bf16.gmra.mxu0 %v7056
        %v7102 = vpop.f32.mrf.mxu0
        %v7103 = vadd.f32 0.0, %v7102
        %v7104 = vpop.f32.mrf.mxu0
        %v7105 = vadd.f32 0.0, %v7104
        %7106 = vdwg.mxu0
        %7107 = vmatpush.bf16.msra.mxu0 0
        %7108 = vmatpush.bf16.msra.mxu0 0
        %7109 = vmatpush.bf16.msra.mxu0 0
        %7110 = vmatpush.bf16.msra.mxu0 0
        %7111 = vmatpush.bf16.msra.mxu0 %v7020
        %7112 = vmatpush.bf16.msra.mxu0 %v7017
        %7113 = vmatpush.bf16.msra.mxu0 %v7014
        %7114 = vmatpush.bf16.msra.mxu0 %v7011
        %7115 = vmatmul.bf16.gmra.mxu0 %v7035
        %v7116 = vpop.f32.mrf.mxu0
        %v7117 = vadd.f32 0.0, %v7116
        %v7118 = vpop.f32.mrf.mxu0
        %v7119 = vadd.f32 0.0, %v7118
        %7120 = vmatmul.bf16.gmra.mxu0 %v7038
        %v7121 = vpop.f32.mrf.mxu0
        %v7122 = vadd.f32 0.0, %v7121
        %v7123 = vpop.f32.mrf.mxu0
        %v7124 = vadd.f32 0.0, %v7123
        %7125 = vmatmul.bf16.gmra.mxu0 %v7041
        %v7126 = vpop.f32.mrf.mxu0
        %v7127 = vadd.f32 0.0, %v7126
        %v7128 = vpop.f32.mrf.mxu0
        %v7129 = vadd.f32 0.0, %v7128
        %7130 = vmatmul.bf16.gmra.mxu0 %v7044
        %v7131 = vpop.f32.mrf.mxu0
        %v7132 = vadd.f32 0.0, %v7131
        %v7133 = vpop.f32.mrf.mxu0
        %v7134 = vadd.f32 0.0, %v7133
        %7135 = vmatmul.bf16.gmra.mxu0 %v7047
        %v7136 = vpop.f32.mrf.mxu0
        %v7137 = vadd.f32 0.0, %v7136
        %v7138 = vpop.f32.mrf.mxu0
        %v7139 = vadd.f32 0.0, %v7138
        %7140 = vmatmul.bf16.gmra.mxu0 %v7050
        %v7141 = vpop.f32.mrf.mxu0
        %v7142 = vadd.f32 0.0, %v7141
        %v7143 = vpop.f32.mrf.mxu0
        %v7144 = vadd.f32 0.0, %v7143
        %7145 = vmatmul.bf16.gmra.mxu0 %v7053
        %v7146 = vpop.f32.mrf.mxu0
        %v7147 = vadd.f32 0.0, %v7146
        %v7148 = vpop.f32.mrf.mxu0
        %v7149 = vadd.f32 0.0, %v7148
        %7150 = vmatmul.bf16.gmra.mxu0 %v7056
        %v7151 = vpop.f32.mrf.mxu0
        %v7152 = vadd.f32 0.0, %v7151
        %v7153 = vpop.f32.mrf.mxu0
        %v7154 = vadd.f32 0.0, %v7153
        %7155 = vdwg.mxu0
        %7156 = vmatpush.bf16.msra.mxu0 0
        %7157 = vmatpush.bf16.msra.mxu0 0
        %7158 = vmatpush.bf16.msra.mxu0 0
        %7159 = vmatpush.bf16.msra.mxu0 0
        %7160 = vmatpush.bf16.msra.mxu0 %v7021
        %7161 = vmatpush.bf16.msra.mxu0 %v7018
        %7162 = vmatpush.bf16.msra.mxu0 %v7015
        %7163 = vmatpush.bf16.msra.mxu0 %v7012
        %7164 = vmatmul.bf16.gmra.mxu0 %v7035
        %v7165 = vpop.f32.mrf.mxu0
        %v7166 = vadd.f32 0.0, %v7165
        %v7167 = vpop.f32.mrf.mxu0
        %v7168 = vadd.f32 0.0, %v7167
        %7169 = vmatmul.bf16.gmra.mxu0 %v7038
        %v7170 = vpop.f32.mrf.mxu0
        %v7171 = vadd.f32 0.0, %v7170
        %v7172 = vpop.f32.mrf.mxu0
        %v7173 = vadd.f32 0.0, %v7172
        %7174 = vmatmul.bf16.gmra.mxu0 %v7041
        %v7175 = vpop.f32.mrf.mxu0
        %v7176 = vadd.f32 0.0, %v7175
        %v7177 = vpop.f32.mrf.mxu0
        %v7178 = vadd.f32 0.0, %v7177
        %7179 = vmatmul.bf16.gmra.mxu0 %v7044
        %v7180 = vpop.f32.mrf.mxu0
        %v7181 = vadd.f32 0.0, %v7180
        %v7182 = vpop.f32.mrf.mxu0
        %v7183 = vadd.f32 0.0, %v7182
        %7184 = vmatmul.bf16.gmra.mxu0 %v7047
        %v7185 = vpop.f32.mrf.mxu0
        %v7186 = vadd.f32 0.0, %v7185
        %v7187 = vpop.f32.mrf.mxu0
        %v7188 = vadd.f32 0.0, %v7187
        %7189 = vmatmul.bf16.gmra.mxu0 %v7050
        %v7190 = vpop.f32.mrf.mxu0
        %v7191 = vadd.f32 0.0, %v7190
        %v7192 = vpop.f32.mrf.mxu0
        %v7193 = vadd.f32 0.0, %v7192
        %7194 = vmatmul.bf16.gmra.mxu0 %v7053
        %v7195 = vpop.f32.mrf.mxu0
        %v7196 = vadd.f32 0.0, %v7195
        %v7197 = vpop.f32.mrf.mxu0
        %v7198 = vadd.f32 0.0, %v7197
        %7199 = vmatmul.bf16.gmra.mxu0 %v7056
        %v7200 = vpop.f32.mrf.mxu0
        %v7201 = vadd.f32 0.0, %v7200
        %v7202 = vpop.f32.mrf.mxu0
        %v7203 = vadd.f32 0.0, %v7202
        %7204 = vdwg.mxu0
        %v7205 = vadd.f32 %v6543, %v7068
        %v7206 = vadd.f32 %v6544, %v7117
        %v7207 = vadd.f32 %v6545, %v7166
        %v7208 = vadd.f32 %v6546, %v7070
        %v7209 = vadd.f32 %v6547, %v7119
        %v7210 = vadd.f32 %v6548, %v7168
        %v7211 = vadd.f32 %v6549, %v7073
        %v7212 = vadd.f32 %v6550, %v7122
        %v7213 = vadd.f32 %v6551, %v7171
        %v7214 = vadd.f32 %v6552, %v7075
        %v7215 = vadd.f32 %v6553, %v7124
        %v7216 = vadd.f32 %v6554, %v7173
        %v7217 = vadd.f32 %v6555, %v7078
        %v7218 = vadd.f32 %v6556, %v7127
        %v7219 = vadd.f32 %v6557, %v7176
        %v7220 = vadd.f32 %v6558, %v7080
        %v7221 = vadd.f32 %v6559, %v7129
        %v7222 = vadd.f32 %v6560, %v7178
        %v7223 = vadd.f32 %v6561, %v7083
        %v7224 = vadd.f32 %v6562, %v7132
        %v7225 = vadd.f32 %v6563, %v7181
        %v7226 = vadd.f32 %v6564, %v7085
        %v7227 = vadd.f32 %v6565, %v7134
        %v7228 = vadd.f32 %v6566, %v7183
        %v7229 = vadd.f32 %v6567, %v7088
        %v7230 = vadd.f32 %v6568, %v7137
        %v7231 = vadd.f32 %v6569, %v7186
        %v7232 = vadd.f32 %v6570, %v7090
        %v7233 = vadd.f32 %v6571, %v7139
        %v7234 = vadd.f32 %v6572, %v7188
        %v7235 = vadd.f32 %v6573, %v7093
        %v7236 = vadd.f32 %v6574, %v7142
        %v7237 = vadd.f32 %v6575, %v7191
        %v7238 = vadd.f32 %v6576, %v7095
        %v7239 = vadd.f32 %v6577, %v7144
        %v7240 = vadd.f32 %v6578, %v7193
        %v7241 = vadd.f32 %v6579, %v7098
        %v7242 = vadd.f32 %v6580, %v7147
        %v7243 = vadd.f32 %v6581, %v7196
        %v7244 = vadd.f32 %v6582, %v7100
        %v7245 = vadd.f32 %v6583, %v7149
        %v7246 = vadd.f32 %v6584, %v7198
        %v7247 = vadd.f32 %v6585, %v7103
        %v7248 = vadd.f32 %v6586, %v7152
        %v7249 = vadd.f32 %v6587, %v7201
        %v7250 = vadd.f32 %v6588, %v7105
        %v7251 = vadd.f32 %v6589, %v7154
        %v7252 = vadd.f32 %v6590, %v7203
        %v7253 = vld [vmem:[#allocation8] sm:$0x7]
        %v7255 = vperm.slane %v7253, 0
        %v7256 = vperm.slane %v7253, 1
        %v7257 = vperm.slane %v7253, 2
        %v7261 = vadd.f32 %v7205, %v7255
        %v7262 = vadd.f32 %v7206, %v7256
        %v7263 = vadd.f32 %v7207, %v7257
        %v7264 = vadd.f32 %v7208, %v7255
        %v7265 = vadd.f32 %v7209, %v7256
        %v7266 = vadd.f32 %v7210, %v7257
        %v7267 = vadd.f32 %v7211, %v7255
        %v7268 = vadd.f32 %v7212, %v7256
        %v7269 = vadd.f32 %v7213, %v7257
        %v7270 = vadd.f32 %v7214, %v7255
        %v7271 = vadd.f32 %v7215, %v7256
        %v7272 = vadd.f32 %v7216, %v7257
        %v7273 = vadd.f32 %v7217, %v7255
        %v7274 = vadd.f32 %v7218, %v7256
        %v7275 = vadd.f32 %v7219, %v7257
        %v7276 = vadd.f32 %v7220, %v7255
        %v7277 = vadd.f32 %v7221, %v7256
        %v7278 = vadd.f32 %v7222, %v7257
        %v7279 = vadd.f32 %v7223, %v7255
        %v7280 = vadd.f32 %v7224, %v7256
        %v7281 = vadd.f32 %v7225, %v7257
        %v7282 = vadd.f32 %v7226, %v7255
        %v7283 = vadd.f32 %v7227, %v7256
        %v7284 = vadd.f32 %v7228, %v7257
        %v7285 = vadd.f32 %v7229, %v7255
        %v7286 = vadd.f32 %v7230, %v7256
        %v7287 = vadd.f32 %v7231, %v7257
        %v7288 = vadd.f32 %v7232, %v7255
        %v7289 = vadd.f32 %v7233, %v7256
        %v7290 = vadd.f32 %v7234, %v7257
        %v7291 = vadd.f32 %v7235, %v7255
        %v7292 = vadd.f32 %v7236, %v7256
        %v7293 = vadd.f32 %v7237, %v7257
        %v7294 = vadd.f32 %v7238, %v7255
        %v7295 = vadd.f32 %v7239, %v7256
        %v7296 = vadd.f32 %v7240, %v7257
        %v7297 = vadd.f32 %v7241, %v7255
        %v7298 = vadd.f32 %v7242, %v7256
        %v7299 = vadd.f32 %v7243, %v7257
        %v7300 = vadd.f32 %v7244, %v7255
        %v7301 = vadd.f32 %v7245, %v7256
        %v7302 = vadd.f32 %v7246, %v7257
        %v7303 = vadd.f32 %v7247, %v7255
        %v7304 = vadd.f32 %v7248, %v7256
        %v7305 = vadd.f32 %v7249, %v7257
        %v7306 = vadd.f32 %v7250, %v7255
        %v7307 = vadd.f32 %v7251, %v7256
        %v7308 = vadd.f32 %v7252, %v7257
        %7309 = vst [vmem:[%s265] sm:$0xff] %v7261
        %7310 = vst [vmem:[%s265 + $0x8] sm:$0xff] %v7262
        %7311 = vst [vmem:[%s265 + $0x10] sm:$0xff] %v7263
        %7312 = vst [vmem:[%s265 + $0x18] sm:$0xff] %v7264
        %7313 = vst [vmem:[%s265 + $0x20] sm:$0xff] %v7265
        %7314 = vst [vmem:[%s265 + $0x28] sm:$0xff] %v7266
        %7315 = vst [vmem:[%s265 + $0x30] sm:$0xff] %v7267
        %7316 = vst [vmem:[%s265 + $0x38] sm:$0xff] %v7268
        %7317 = vst [vmem:[%s265 + $0x40] sm:$0xff] %v7269
        %7318 = vst [vmem:[%s265 + $0x48] sm:$0xff] %v7270
        %7319 = vst [vmem:[%s265 + $0x50] sm:$0xff] %v7271
        %7320 = vst [vmem:[%s265 + $0x58] sm:$0xff] %v7272
        %7321 = vst [vmem:[%s265 + $0x60] sm:$0xff] %v7273
        %7322 = vst [vmem:[%s265 + $0x68] sm:$0xff] %v7274
        %7323 = vst [vmem:[%s265 + $0x70] sm:$0xff] %v7275
        %7324 = vst [vmem:[%s265 + $0x78] sm:$0xff] %v7276
        %7325 = vst [vmem:[%s265 + $0x80] sm:$0xff] %v7277
        %7326 = vst [vmem:[%s265 + $0x88] sm:$0xff] %v7278
        %7327 = vst [vmem:[%s265 + $0x90] sm:$0xff] %v7279
        %7328 = vst [vmem:[%s265 + $0x98] sm:$0xff] %v7280
        %7329 = vst [vmem:[%s265 + $0xa0] sm:$0xff] %v7281
        %7330 = vst [vmem:[%s265 + $0xa8] sm:$0xff] %v7282
        %7331 = vst [vmem:[%s265 + $0xb0] sm:$0xff] %v7283
        %7332 = vst [vmem:[%s265 + $0xb8] sm:$0xff] %v7284
        %7333 = vst [vmem:[%s265 + $0xc0] sm:$0xff] %v7285
        %7334 = vst [vmem:[%s265 + $0xc8] sm:$0xff] %v7286
        %7335 = vst [vmem:[%s265 + $0xd0] sm:$0xff] %v7287
        %7336 = vst [vmem:[%s265 + $0xd8] sm:$0xff] %v7288
        %7337 = vst [vmem:[%s265 + $0xe0] sm:$0xff] %v7289
        %7338 = vst [vmem:[%s265 + $0xe8] sm:$0xff] %v7290
        %7339 = vst [vmem:[%s265 + $0xf0] sm:$0xff] %v7291
        %7340 = vst [vmem:[%s265 + $0xf8] sm:$0xff] %v7292
        %7341 = vst [vmem:[%s265 + $0x100] sm:$0xff] %v7293
        %7342 = vst [vmem:[%s265 + $0x108] sm:$0xff] %v7294
        %7343 = vst [vmem:[%s265 + $0x110] sm:$0xff] %v7295
        %7344 = vst [vmem:[%s265 + $0x118] sm:$0xff] %v7296
        %7345 = vst [vmem:[%s265 + $0x120] sm:$0xff] %v7297
        %7346 = vst [vmem:[%s265 + $0x128] sm:$0xff] %v7298
        %7347 = vst [vmem:[%s265 + $0x130] sm:$0xff] %v7299
        %7348 = vst [vmem:[%s265 + $0x138] sm:$0xff] %v7300
        %7349 = vst [vmem:[%s265 + $0x140] sm:$0xff] %v7301
        %7350 = vst [vmem:[%s265 + $0x148] sm:$0xff] %v7302
        %7351 = vst [vmem:[%s265 + $0x150] sm:$0xff] %v7303
        %7352 = vst [vmem:[%s265 + $0x158] sm:$0xff] %v7304
        %7353 = vst [vmem:[%s265 + $0x160] sm:$0xff] %v7305
        %7354 = vst [vmem:[%s265 + $0x168] sm:$0xff] %v7306
        %7355 = vst [vmem:[%s265 + $0x170] sm:$0xff] %v7307
        %7356 = vst [vmem:[%s265 + $0x178] sm:$0xff] %v7308
        %s7357 = sand.u32 %s120, 1
        %s7358 = scalar_lea.sflag [#allocation4], %s7357
        %s7359 = sand.u32 %s120, 1
        %s7360 = smul.addr %s7359, 384
        %s7361 = scalar_lea.vmem [#allocation10], %s7360
        // Predicated region
        $region53: #{tpu_custom_call.1} parent=35 // pred_check
          %p7362 = pneg %p130
        $region54: #{tpu_custom_call.1} parent=35 // pred_check_branch
          %7364 = sbr.rel (%p7362) target = $region56
        $region55: #{tpu_custom_call.1} parent=35 // pred_region
          %7366 = vsyncadd %s7358, 0
          %s7367 = smul.addr %s23, 48
          %s7368 = smul.addr %s7367, 8
          %s7369 = scalar_lea.hbm %s4, %s7368
          %s7370 = sshll.u32 %s7361, 4
          %s7371 = int_to_ptr.vmem [resolvable:$true] %s7370
          %s7372 = sshll.u32 %s7369, 4
          %s7373 = int_to_ptr.hbm [resolvable:$true] %s7372
          %7378 = dma.vmem_to_hbm [thread:$0]  %s7371, 6144, %s7373, %s7358, 384, 384, 24
        $region56: #{tpu_custom_call.1} parent=35 // pred_fallthru
          _
      $region36: #{tpu_custom_call.1} parent=5 // pred_fallthru
        _
      %p7379 = scmp.le.s32.totalorder 2, %s18
      // Predicated region
      $region57: #{tpu_custom_call.1} parent=5 // pred_check
        %p7380 = pneg %p7379
      $region58: #{tpu_custom_call.1} parent=5 // pred_check_branch
        %7382 = sbr.rel (%p7380) target = $region60
      $region59: #{tpu_custom_call.1} parent=5 // pred_region
        %s7383 = ssub.s32 %s18, 2
        // Predicated region
        $region61: #{tpu_custom_call.1} parent=59 // pred_check
          %p7384 = pneg %p136
        $region62: #{tpu_custom_call.1} parent=59 // pred_check_branch
          %7386 = sbr.rel (%p7384) target = $region64
        $region63: #{tpu_custom_call.1} parent=59 // pred_region
          %s7387 = sand.u32 %s121, 1
          %s7388 = scalar_lea.sflag [#allocation4], %s7387
          %s7389 = sand.u32 %s121, 1
          %s7390 = smul.addr %s7389, 384
          %s7391 = scalar_lea.vmem [#allocation10], %s7390
          %7393 = dma.done %s7388, 6144
        $region64: #{tpu_custom_call.1} parent=59 // pred_fallthru
          _
      $region60: #{tpu_custom_call.1} parent=5 // pred_fallthru
        _
    $region6: #{tpu_custom_call.1} parent=1 // loop_footer
      %s22 = sadd.s32 1, %s18
    $region7: #{tpu_custom_call.1} parent=1 // loop_footer_branch
      %17 = sbr.rel target = $region3
    $region8: #{tpu_custom_call.1} parent=1 // loop_exit
      _
    %7394 = vsyncpa [#allocation3], 1
    %s7395 = scalar_lea.sflag [#allocation3], 1
    %7396 = vsyncpa %s7395, 1
    %7397 = vsyncpa [#allocation6], 1
    %7398 = vsyncpa [#allocation9], 1
    %7399 = vsyncpa [#allocation4], 1
    %s7400 = scalar_lea.sflag [#allocation4], 1
    %7401 = vsyncpa %s7400, 1

</llo_original>
